<compile_context>
chip_gen: v6e
topology: v6e:2x2x1
jax: 0.10.0
libtpu: 0.0.40
codegen_flags: <defaults>
</compile_context>

<pallas_src>
import functools
import math

import jax
import jax.numpy as jnp
from jax import lax
from jax.experimental import pallas as pl
from jax.experimental.pallas import tpu as pltpu


# ---------------------------------------------------------------------------
# Kernel
# ---------------------------------------------------------------------------
def _tsa_kernel(x_ref, wqkv_ref, w1_ref, w2_ref, wg_ref, bg_ref, wo_ref,
                bo_ref, gamma_ref, beta_ref, o_ref, *, num_heads, d_k, causal):
    # x_ref: (P, Tn, D) block — one batch element, a tile of Tn nodes, full P.
    P, Tn, D = x_ref.shape
    H, dk = num_heads, d_k
    HK = H * dk
    R = Tn * P
    scale = 1.0 / math.sqrt(dk)

    # On-chip relayout (P, Tn, D) -> (Tn, P, D): the node axis becomes the
    # attention batch axis.  Cheap in VMEM vs. two full HBM transposes.
    x = jnp.swapaxes(x_ref[...], 0, 1)
    dt = x.dtype                       # model dtype for MXU operands
    x2 = x.reshape(R, D)               # rows ordered (node, time)

    # Fused Q/K/V projection: one wide matmul, f32 accumulate, back to model
    # dtype so the score / PV / gating matmuls run at bf16 MXU peak.
    qkv = jnp.dot(x2, wqkv_ref[...],
                  preferred_element_type=jnp.float32).astype(dt)   # (R, 3*H*dk)

    if causal:
        row = lax.broadcasted_iota(jnp.int32, (P, P), 0)
        col = lax.broadcasted_iota(jnp.int32, (P, P), 1)
        causal_bias = jnp.where(col > row, jnp.float32(-jnp.inf),
                                jnp.float32(0.0))

    # Per-head attention + ONLINE softmax-over-heads for the gated connection.
    # Only 3 live (R, D) f32 accumulators (num / den / m) instead of 2*H.
    num = den = m = None
    for h in range(H):
        q = qkv[:, h * dk:(h + 1) * dk].reshape(Tn, P, dk)
        k = qkv[:, HK + h * dk:HK + (h + 1) * dk].reshape(Tn, P, dk)
        v = qkv[:, 2 * HK + h * dk:2 * HK + (h + 1) * dk].reshape(Tn, P, dk)

        # Scores batched over the node tile (Mosaic pipelines the MXU pushes).
        s = jnp.einsum("bqd,bkd->bqk", q, k,
                       preferred_element_type=jnp.float32) * scale  # (Tn, P, P)
        if causal:
            s = s + causal_bias[None, :, :]
        s = s - jnp.max(s, axis=-1, keepdims=True)
        e = jnp.exp(s)
        alpha = (e * pl.reciprocal(jnp.sum(e, axis=-1, keepdims=True),
                                   approx=True)).astype(dt)
        a = jnp.einsum("bqk,bkd->bqd", alpha, v,
                       preferred_element_type=jnp.float32)          # (Tn, P, dk)
        a2 = a.reshape(R, dk).astype(w1_ref.dtype)

        g1 = jnp.dot(a2, w1_ref[h], preferred_element_type=jnp.float32)  # (R, D)
        g2 = jnp.maximum(
            jnp.dot(a2, w2_ref[h], preferred_element_type=jnp.float32), 0.0)

        if h == 0:
            m, num, den = g2, g1, jnp.ones_like(g2)
        else:
            m_new = jnp.maximum(m, g2)
            r_old = jnp.exp(m - m_new)
            w = jnp.exp(g2 - m_new)
            num = num * r_old + g1 * w
            den = den * r_old + w
            m = m_new

    gat = num * pl.reciprocal(den, approx=True)                     # (R, D)

    # Swish gate:  Wo( swish( Wg(x) * gat ) )
    g = jnp.dot(x2, wg_ref[...], preferred_element_type=jnp.float32) + bg_ref[...]
    t = g * gat
    sig = pl.reciprocal(1.0 + jnp.exp(-t), approx=True)
    sw = t * sig
    y = jnp.dot(sw.astype(dt), wo_ref[...],
                preferred_element_type=jnp.float32) + bo_ref[...]

    # Residual + LayerNorm (eps=1e-5, biased variance — matches nn.LayerNorm).
    z = y + x2.astype(jnp.float32)
    mean = jnp.mean(z, axis=-1, keepdims=True)
    var = jnp.mean((z - mean) ** 2, axis=-1, keepdims=True)
    zn = (z - mean) * lax.rsqrt(var + 1e-5)
    out = zn * gamma_ref[...] + beta_ref[...]                       # (R, D)

    # (Tn, P, D) -> (P, Tn, D) block layout for the store.
    o_ref[...] = jnp.swapaxes(out.reshape(Tn, P, D), 0, 1).astype(o_ref.dtype)


# ---------------------------------------------------------------------------
# Wrapper helpers
# ---------------------------------------------------------------------------
def _vmem_capacity_bytes():
    try:
        return int(pltpu.get_tpu_info().vmem_capacity_bytes)
    except Exception:
        return 64 * 2**20          # conservative: v7x per-core VMEM


def _pick_n_tile(n, p, b, target_rows, min_steps=4):
    """Node-tile size: a multiple-of-8 divisor of n (or n itself).

    Prefer the largest tile with p*tile <= target_rows, then shrink (among
    valid candidates) until there are >= min_steps total grid steps so both
    v7x TensorCores get work and the input/output DMA overlaps with compute.
    Worst case (awkward n) falls back to one full-N block — never tile=1.
    """
    cands = sorted({c for c in range(8, n + 1, 8) if n % c == 0} | {n})
    fitting = [c for c in cands if p * c <= target_rows]
    best = max(fitting) if fitting else cands[0]
    for c in sorted(fitting, reverse=True):
        if b * (n // c) >= min_steps:
            best = c
            break
    return best


def _probe_copy_kernel(x_ref, o_ref):
    o_ref[...] = x_ref[...]


@functools.lru_cache(maxsize=None)
def _single_buffered_weights_supported():
    """Probe once whether this jax build accepts pipeline_mode=pl.Buffered(1)
    (single-buffered resident operands) on a pallas_call BlockSpec."""
    try:
        fn = pl.pallas_call(
            _probe_copy_kernel,
            out_shape=jax.ShapeDtypeStruct((8, 128), jnp.float32),
            grid=(1,),
            in_specs=[pl.BlockSpec((8, 128), lambda i: (0, 0),
                                   pipeline_mode=pl.Buffered(1))],
            out_specs=pl.BlockSpec((8, 128), lambda i: (0, 0)),
        )
        jax.block_until_ready(fn(jnp.zeros((8, 128), jnp.float32)))
        return True
    except Exception:
        return False


# ---------------------------------------------------------------------------
# Public wrapper
# ---------------------------------------------------------------------------
def temporal_self_attention(inputs, c_inputs, params, *, num_heads, d_k,
                            causal=False):
    """inputs, c_inputs: (B, P, N, d_model) -> (B, P, N, d_model).

    c_inputs is only used by the MetaLearner (noML=False) branch, which is not
    implemented here; it is accepted for signature parity and ignored.
    """
    single_buf = _single_buffered_weights_supported()
    return _tsa_impl(inputs, c_inputs, params, num_heads=num_heads, d_k=d_k,
                     causal=causal, single_buffer_weights=single_buf)


@functools.partial(jax.jit, static_argnames=("num_heads", "d_k", "causal",
                                             "single_buffer_weights"))
def _tsa_impl(inputs, c_inputs, params, *, num_heads, d_k, causal,
              single_buffer_weights):
    del c_inputs                                   # noML=True path
    B, P, N, D = inputs.shape
    H, dk = num_heads, d_k
    HK = H * dk
    itemsize = jnp.dtype(inputs.dtype).itemsize

    vmem_cap = _vmem_capacity_bytes()
    # v5e/v6e (128 MiB VMEM) -> bigger blocks; v7x (64 MiB) stays smaller.
    target_rows = 2048 if vmem_cap >= 96 * 2**20 else 1024
    tile_n = _pick_n_tile(N, P, B, target_rows)
    grid = (B, N // tile_n)
    rows = P * tile_n

    # Weight layouts (already transposed vs PyTorch: (in_features, out_features)).
    # Fused [Wq | Wk | Wv] for a single wide projection matmul.
    wqkv = jnp.concatenate([params["wq"], params["wk"], params["wv"]], axis=1)
    w1 = params["w1"]                              # (H, dk, D)
    w2 = params["w2"]
    wg = params["wg"]                              # (D, D)
    wo = params["wo"]
    bg2 = params["bg"].reshape(1, D)
    bo2 = params["bo"].reshape(1, D)
    gamma2 = params["gamma"].reshape(1, D)
    beta2 = params["beta"].reshape(1, D)

    weights = [wqkv, w1, w2, wg, bg2, wo, bo2, gamma2, beta2]
    weight_bytes = sum(int(w.size) * jnp.dtype(w.dtype).itemsize for w in weights)

    # Single-buffered resident weights when supported (probed above).
    wmode = ({"pipeline_mode": pl.Buffered(1)} if single_buffer_weights else {})

    # VMEM budget: double-buffered x/out blocks + resident weights + f32
    # intermediates, with headroom; never request the full physical VMEM.
    io_bytes = 2 * 2 * rows * D * itemsize
    interm_bytes = rows * (3 * HK + 12 * D) * 4 + 2 * tile_n * P * P * 4
    footprint = io_bytes + (1 if single_buffer_weights else 2) * weight_bytes \
        + interm_bytes
    vmem_limit = int(min(0.75 * vmem_cap, max(16 * 2**20, 2 * footprint)))

    # Advisory cost estimate for the XLA scheduler.
    M = B * N * P
    flops = int(2 * M * D * 3 * HK                 # fused QKV projection
                + 4 * B * N * H * P * P * dk       # scores + alpha @ V
                + 4 * M * H * dk * D               # gated-connection matmuls
                + 4 * M * D * D)                   # swish-gate linears
    transcendentals = int(B * N * H * P * P + 2 * M * H * D + 2 * M * D)
    bytes_accessed = int(2 * M * D * itemsize + weight_bytes)

    kernel = functools.partial(_tsa_kernel, num_heads=H, d_k=dk, causal=causal)

    return pl.pallas_call(
        kernel,
        out_shape=jax.ShapeDtypeStruct((B, P, N, D), inputs.dtype),
        grid_spec=pltpu.PrefetchScalarGridSpec(
            num_scalar_prefetch=0,
            grid=grid,
            in_specs=[
                # x: (B, P, N, D) tiled directly — no wrapper transposes.
                pl.BlockSpec((None, P, tile_n, D), lambda b, j: (b, 0, j, 0)),
                pl.BlockSpec((D, 3 * HK), lambda b, j: (0, 0), **wmode),   # Wqkv
                pl.BlockSpec((H, dk, D), lambda b, j: (0, 0, 0), **wmode),  # gat W1
                pl.BlockSpec((H, dk, D), lambda b, j: (0, 0, 0), **wmode),  # gat W2
                pl.BlockSpec((D, D), lambda b, j: (0, 0), **wmode),         # swish Wg
                pl.BlockSpec((1, D), lambda b, j: (0, 0), **wmode),         # swish bg
                pl.BlockSpec((D, D), lambda b, j: (0, 0), **wmode),         # swish Wo
                pl.BlockSpec((1, D), lambda b, j: (0, 0), **wmode),         # swish bo
                pl.BlockSpec((1, D), lambda b, j: (0, 0), **wmode),         # LN gamma
                pl.BlockSpec((1, D), lambda b, j: (0, 0), **wmode),         # LN beta
            ],
            out_specs=pl.BlockSpec((None, P, tile_n, D),
                                   lambda b, j: (b, 0, j, 0)),
        ),
        compiler_params=pltpu.CompilerParams(
            dimension_semantics=("parallel", "parallel"),
            vmem_limit_bytes=vmem_limit,
        ),
        cost_estimate=pl.CostEstimate(
            flops=flops, transcendentals=transcendentals,
            bytes_accessed=bytes_accessed),
    )(inputs, wqkv, w1, w2, wg, bg2, wo, bo2, gamma2, beta2)


# ---------------------------------------------------------------------------
# Parameter init (mimics the PyTorch module defaults) and pure-JAX reference
# ---------------------------------------------------------------------------
def init_params(key, d_model, d_k, num_heads, dtype=jnp.float32):
    D, H, dk = d_model, num_heads, d_k
    ks = jax.random.split(key, 9)
    lim = 1.0 / math.sqrt(D)
    # bias-free Q/K/V projections, stored (in_features, out_features)
    wq = jax.random.uniform(ks[0], (D, H * dk), dtype, -lim, lim)
    wk = jax.random.uniform(ks[1], (D, H * dk), dtype, -lim, lim)
    wv = jax.random.uniform(ks[2], (D, H * dk), dtype, -lim, lim)
    # gated-dynamic-connection weights (xavier-normal-ish)
    xav = math.sqrt(2.0 / (dk + D))
    w1 = (xav * jax.random.normal(ks[3], (H, dk, D))).astype(dtype)
    w2 = (xav * jax.random.normal(ks[4], (H, dk, D))).astype(dtype)
    # swish gate linears (with bias), stored (in_features, out_features)
    wg = jax.random.uniform(ks[5], (D, D), dtype, -lim, lim)
    bg = jax.random.uniform(ks[6], (D,), dtype, -lim, lim)
    wo = jax.random.uniform(ks[7], (D, D), dtype, -lim, lim)
    bo = jax.random.uniform(ks[8], (D,), dtype, -lim, lim)
    gamma = jnp.ones((D,), dtype)
    beta = jnp.zeros((D,), dtype)
    return dict(wq=wq, wk=wk, wv=wv, w1=w1, w2=w2, wg=wg, bg=bg, wo=wo, bo=bo,
                gamma=gamma, beta=beta)


def temporal_self_attention_ref(inputs, params, *, num_heads, d_k, causal):
    """Pure-JAX reference mirroring the PyTorch forward (noML=True, noGC=False)."""
    B, P, N, D = inputs.shape
    H, dk = num_heads, d_k
    Q = (inputs @ params["wq"]).reshape(B, P, N, H, dk)
    K = (inputs @ params["wk"]).reshape(B, P, N, H, dk)
    V = (inputs @ params["wv"]).reshape(B, P, N, H, dk)
    Qp = jnp.transpose(Q, (0, 2, 3, 1, 4))            # (B,N,H,P,dk)
    Kp = jnp.transpose(K, (0, 2, 3, 4, 1))            # (B,N,H,dk,P)
    s = jnp.matmul(Qp, Kp) / math.sqrt(dk)
    if causal:
        mask = jnp.where(jnp.arange(P)[None, :] > jnp.arange(P)[:, None],
                         -jnp.inf, 0.0)
        s = s + mask
    s = s - jnp.max(s, axis=-1, keepdims=True)
    alpha = jax.nn.softmax(s, axis=-1)
    Vp = jnp.transpose(V, (0, 2, 3, 1, 4))
    out = jnp.matmul(alpha, Vp)                       # (B,N,H,P,dk)
    out = jnp.transpose(out, (2, 0, 3, 1, 4))         # (H,B,P,N,dk)
    # Gated_Dynamic_Connection (noGC=False)
    data = jnp.transpose(out, (1, 2, 3, 0, 4))[..., None, :]       # (B,P,N,H,1,dk)
    d_out = jnp.swapaxes(jnp.matmul(data, params["w1"]), -1, -3)   # (B,P,N,D,1,H)
    d_soft = jnp.maximum(jnp.matmul(data, params["w2"]), 0.0)
    d_soft = jnp.swapaxes(d_soft, -1, -3)
    d_soft = jax.nn.softmax(d_soft - jnp.max(d_soft, axis=-1, keepdims=True),
                            axis=-1)
    d_soft = jnp.swapaxes(d_soft, -1, -2)                          # (B,P,N,D,H,1)
    gat = jnp.matmul(d_out, d_soft)[..., 0, 0]                     # (B,P,N,D)
    # Swish
    g = inputs @ params["wg"] + params["bg"]
    t = g * gat
    sw = t * jax.nn.sigmoid(t)
    y = sw @ params["wo"] + params["bo"]
    # Residual + LayerNorm
    z = y + inputs
    mean = jnp.mean(z, axis=-1, keepdims=True)
    var = jnp.mean((z - mean) ** 2, axis=-1, keepdims=True)
    zn = (z - mean) * lax.rsqrt(var + 1e-5)
    return zn * params["gamma"] + params["beta"]


if __name__ == "__main__":
    B, P, N = 2, 8, 16
    d_model, d_k, num_heads = 32, 8, 4
    causal = True

    key = jax.random.PRNGKey(0)
    kx, kc, kp = jax.random.split(key, 3)
    inputs = jax.random.normal(kx, (B, P, N, d_model), jnp.float32)
    c_inputs = jax.random.normal(kc, (B, P, N, d_model), jnp.float32)  # unused (noML)
    params = init_params(kp, d_model, d_k, num_heads)

    out = temporal_self_attention(inputs, c_inputs, params,
                                  num_heads=num_heads, d_k=d_k, causal=causal)
    out = jax.block_until_ready(out)

    ref = temporal_self_attention_ref(inputs, params, num_heads=num_heads,
                                      d_k=d_k, causal=causal)
    assert out.shape == inputs.shape
    # approx-EUP reciprocals (softmax / head-gate / sigmoid) trade a little
    # precision for VALU relief; keep a sanity-level tolerance.
    err = float(jnp.max(jnp.abs(out - ref)))
    assert err < 2e-2, f"mismatch vs reference: max abs err {err:.3e}"

    print("KERNEL_OK")
</pallas_src>

<mosaic_0001>
module attributes {stable_mosaic.version = 11 : i64} {
  func.func @_probe_copy_kernel(%arg0: i32, %arg1: memref<8x128xf32, #tpu.memory_space<vmem>>, %arg2: memref<8x128xf32, #tpu.memory_space<vmem>>) attributes {dimension_semantics = [#tpu.dimension_semantics<arbitrary>], iteration_bounds = array<i64: 1>, scalar_prefetch = 0 : i64, scratch_operands = 0 : i64, tpu.core_type = #tpu.core_type<tc>, window_params = [{pipeline_mode = #tpu.pipeline_mode<synchronous>, transform_indices = @transform_0, window_bounds = array<i64: 8, 128>}, {pipeline_mode = #tpu.pipeline_mode<synchronous>, transform_indices = @transform_1, window_bounds = array<i64: 8, 128>}]} {
    %c0 = arith.constant 0 : index
    %c0_0 = arith.constant 0 : index
    %0 = vector.load %arg1[%c0, %c0_0] : memref<8x128xf32, #tpu.memory_space<vmem>>, vector<8x128xf32>
    %c0_1 = arith.constant 0 : index
    %c0_2 = arith.constant 0 : index
    %1 = vector.load %arg2[%c0_1, %c0_2] : memref<8x128xf32, #tpu.memory_space<vmem>>, vector<8x128xf32>
    tpu.vector_store %arg2[%c0_1, %c0_2], %0 {strides = array<i32>} : memref<8x128xf32, #tpu.memory_space<vmem>>, vector<8x128xf32>,
    return
  }
  func.func @transform_0(%arg0: i32) -> (i32, i32) {
    %c0_i32 = arith.constant 0 : i32
    %c0_i32_0 = arith.constant 0 : i32
    %c0_i32_1 = arith.constant 0 : i32
    return %c0_i32, %c0_i32_0 : i32, i32
  }
  func.func @transform_1(%arg0: i32) -> (i32, i32) {
    %c0_i32 = arith.constant 0 : i32
    %c0_i32_0 = arith.constant 0 : i32
    %c0_i32_1 = arith.constant 0 : i32
    return %c0_i32, %c0_i32_0 : i32, i32
  }
}

module attributes {stable_mosaic.version = 11 : i64} {
  func.func @_tsa_kernel(%arg0: i32, %arg1: i32, %arg2: memref<1x8x8x32xf32, #tpu.memory_space<vmem>>, %arg3: memref<32x96xf32, #tpu.memory_space<vmem>>, %arg4: memref<4x8x32xf32, #tpu.memory_space<vmem>>, %arg5: memref<4x8x32xf32, #tpu.memory_space<vmem>>, %arg6: memref<32x32xf32, #tpu.memory_space<vmem>>, %arg7: memref<1x32xf32, #tpu.memory_space<vmem>>, %arg8: memref<32x32xf32, #tpu.memory_space<vmem>>, %arg9: memref<1x32xf32, #tpu.memory_space<vmem>>, %arg10: memref<1x32xf32, #tpu.memory_space<vmem>>, %arg11: memref<1x32xf32, #tpu.memory_space<vmem>>, %arg12: memref<1x8x8x32xf32, #tpu.memory_space<vmem>>) attributes {dimension_semantics = [#tpu.dimension_semantics<parallel>, #tpu.dimension_semantics<parallel>], iteration_bounds = array<i64: 2, 2>, scalar_prefetch = 0 : i64, scratch_operands = 0 : i64, tpu.core_type = #tpu.core_type<tc>, window_params = [{transform_indices = @transform_0, window_bounds = array<i64: 1, 8, 8, 32>}, {pipeline_mode = #tpu.pipeline_mode<synchronous>, transform_indices = @transform_1, window_bounds = array<i64: 32, 96>}, {pipeline_mode = #tpu.pipeline_mode<synchronous>, transform_indices = @transform_2, window_bounds = array<i64: 4, 8, 32>}, {pipeline_mode = #tpu.pipeline_mode<synchronous>, transform_indices = @transform_3, window_bounds = array<i64: 4, 8, 32>}, {pipeline_mode = #tpu.pipeline_mode<synchronous>, transform_indices = @transform_4, window_bounds = array<i64: 32, 32>}, {pipeline_mode = #tpu.pipeline_mode<synchronous>, transform_indices = @transform_5, window_bounds = array<i64: 1, 32>}, {pipeline_mode = #tpu.pipeline_mode<synchronous>, transform_indices = @transform_6, window_bounds = array<i64: 32, 32>}, {pipeline_mode = #tpu.pipeline_mode<synchronous>, transform_indices = @transform_7, window_bounds = array<i64: 1, 32>}, {pipeline_mode = #tpu.pipeline_mode<synchronous>, transform_indices = @transform_8, window_bounds = array<i64: 1, 32>}, {pipeline_mode = #tpu.pipeline_mode<synchronous>, transform_indices = @transform_9, window_bounds = array<i64: 1, 32>}, {transform_indices = @transform_10, window_bounds = array<i64: 1, 8, 8, 32>}]} {
    %c0 = arith.constant 0 : index
    %c0_0 = arith.constant 0 : index
    %c0_1 = arith.constant 0 : index
    %c0_2 = arith.constant 0 : index
    %0 = vector.load %arg2[%c0, %c0_0, %c0_1, %c0_2] : memref<1x8x8x32xf32, #tpu.memory_space<vmem>>, vector<1x8x8x32xf32>
    %1 = vector.shape_cast %0 : vector<1x8x8x32xf32> to vector<8x8x32xf32>
    %2 = tpu.transpose %1, [1, 0, 2] : vector<8x8x32xf32> -> vector<8x8x32xf32>
    %3 = vector.shape_cast %2 : vector<8x8x32xf32> to vector<64x32xf32>
    %c0_3 = arith.constant 0 : index
    %c0_4 = arith.constant 0 : index
    %4 = vector.load %arg3[%c0_3, %c0_4] : memref<32x96xf32, #tpu.memory_space<vmem>>, vector<32x96xf32>
    %cst = arith.constant dense<0.000000e+00> : vector<64x96xf32>
    %5 = tpu.matmul %3, %4, %cst {dimension_numbers = #tpu.dot_dimension_numbers<[1], [0], [0], [1], [0, 0, 1, 1], [], []>} : vector<64x32xf32>, vector<32x96xf32>, vector<64x96xf32> -> vector<64x96xf32>
    %6 = tpu.iota {dimensions = array<i32: 0>} : vector<8x8xi32>
    %7 = tpu.iota {dimensions = array<i32: 1>} : vector<8x8xi32>
    %8 = arith.cmpi sgt, %7, %6 : vector<8x8xi32>
    %cst_5 = arith.constant 0xFF800000 : f32
    %cst_6 = arith.constant 0.000000e+00 : f32
    %9 = vector.broadcast %cst_5 : f32 to vector<8x8xf32>
    %10 = vector.broadcast %cst_6 : f32 to vector<8x8xf32>
    %11 = arith.select %8, %9, %10 : vector<8x8xi1>, vector<8x8xf32>
    %12 = vector.extract_strided_slice %5 {offsets = [0, 0], sizes = [64, 8], strides = [1, 1]} : vector<64x96xf32> to vector<64x8xf32>
    %13 = vector.shape_cast %12 : vector<64x8xf32> to vector<8x8x8xf32>
    %14 = vector.extract_strided_slice %5 {offsets = [0, 32], sizes = [64, 8], strides = [1, 1]} : vector<64x96xf32> to vector<64x8xf32>
    %15 = vector.shape_cast %14 : vector<64x8xf32> to vector<8x8x8xf32>
    %16 = vector.extract_strided_slice %5 {offsets = [0, 64], sizes = [64, 8], strides = [1, 1]} : vector<64x96xf32> to vector<64x8xf32>
    %17 = vector.shape_cast %16 : vector<64x8xf32> to vector<8x8x8xf32>
    "tpu.trace_start"() <{level = 10 : i32, message = "bqd,bkd->bqk"}> : () -> ()
    %cst_7 = arith.constant dense<0.000000e+00> : vector<8x8x8xf32>
    %18 = tpu.matmul %13, %15, %cst_7 {dimension_numbers = #tpu.dot_dimension_numbers<[2], [2], [1], [1], [0, 0, 0, 1, 1, 1], [0], [0]>} : vector<8x8x8xf32>, vector<8x8x8xf32>, vector<8x8x8xf32> -> vector<8x8x8xf32>
    "tpu.trace_stop"() : () -> ()
    %cst_8 = arith.constant 0.353553385 : f32
    %19 = vector.broadcast %cst_8 : f32 to vector<8x8x8xf32>
    %20 = arith.mulf %18, %19 : vector<8x8x8xf32>
    %21 = vector.shape_cast %11 : vector<8x8xf32> to vector<1x8x8xf32>
    %22 = vector.broadcast %21 : vector<1x8x8xf32> to vector<8x8x8xf32>
    %23 = arith.addf %20, %22 : vector<8x8x8xf32>
    %cst_9 = arith.constant dense<0xFF800000> : vector<8x8xf32>
    %24 = vector.multi_reduction <maximumf>, %23, %cst_9 [2] : vector<8x8x8xf32> to vector<8x8xf32>
    %25 = vector.shape_cast %24 : vector<8x8xf32> to vector<8x8x1xf32>
    %26 = vector.broadcast %25 : vector<8x8x1xf32> to vector<8x8x8xf32>
    %27 = arith.subf %23, %26 : vector<8x8x8xf32>
    %28 = math.exp %27 : vector<8x8x8xf32>
    %cst_10 = arith.constant dense<0.000000e+00> : vector<8x8xf32>
    %29 = vector.multi_reduction <add>, %28, %cst_10 [2] : vector<8x8x8xf32> to vector<8x8xf32>
    %30 = vector.shape_cast %29 : vector<8x8xf32> to vector<8x8x1xf32>
    %31 = tpu.reciprocal %30 {approx = true} : vector<8x8x1xf32> -> vector<8x8x1xf32>
    %32 = vector.broadcast %31 : vector<8x8x1xf32> to vector<8x8x8xf32>
    %33 = arith.mulf %28, %32 : vector<8x8x8xf32>
    "tpu.trace_start"() <{level = 10 : i32, message = "bqk,bkd->bqd"}> : () -> ()
    %cst_11 = arith.constant dense<0.000000e+00> : vector<8x8x8xf32>
    %34 = tpu.matmul %33, %17, %cst_11 {dimension_numbers = #tpu.dot_dimension_numbers<[2], [1], [1], [2], [0, 0, 0, 1, 1, 2], [0], [0]>} : vector<8x8x8xf32>, vector<8x8x8xf32>, vector<8x8x8xf32> -> vector<8x8x8xf32>
    "tpu.trace_stop"() : () -> ()
    %35 = vector.shape_cast %34 : vector<8x8x8xf32> to vector<64x8xf32>
    %c0_12 = arith.constant 0 : index
    %c0_13 = arith.constant 0 : index
    %c0_14 = arith.constant 0 : index
    %36 = vector.load %arg4[%c0_12, %c0_13, %c0_14] : memref<4x8x32xf32, #tpu.memory_space<vmem>>, vector<1x8x32xf32>
    %37 = vector.shape_cast %36 : vector<1x8x32xf32> to vector<8x32xf32>
    %cst_15 = arith.constant dense<0.000000e+00> : vector<64x32xf32>
    %38 = tpu.matmul %35, %37, %cst_15 {dimension_numbers = #tpu.dot_dimension_numbers<[1], [0], [0], [1], [0, 0, 1, 1], [], []>} : vector<64x8xf32>, vector<8x32xf32>, vector<64x32xf32> -> vector<64x32xf32>
    %c0_16 = arith.constant 0 : index
    %c0_17 = arith.constant 0 : index
    %c0_18 = arith.constant 0 : index
    %39 = vector.load %arg5[%c0_16, %c0_17, %c0_18] : memref<4x8x32xf32, #tpu.memory_space<vmem>>, vector<1x8x32xf32>
    %40 = vector.shape_cast %39 : vector<1x8x32xf32> to vector<8x32xf32>
    %cst_19 = arith.constant dense<0.000000e+00> : vector<64x32xf32>
    %41 = tpu.matmul %35, %40, %cst_19 {dimension_numbers = #tpu.dot_dimension_numbers<[1], [0], [0], [1], [0, 0, 1, 1], [], []>} : vector<64x8xf32>, vector<8x32xf32>, vector<64x32xf32> -> vector<64x32xf32>
    %cst_20 = arith.constant 0.000000e+00 : f32
    %42 = vector.broadcast %cst_20 : f32 to vector<64x32xf32>
    %43 = arith.maximumf %41, %42 : vector<64x32xf32>
    %cst_21 = arith.constant 1.000000e+00 : f32
    %44 = vector.broadcast %cst_21 : f32 to vector<64x32xf32>
    %45 = vector.extract_strided_slice %5 {offsets = [0, 8], sizes = [64, 8], strides = [1, 1]} : vector<64x96xf32> to vector<64x8xf32>
    %46 = vector.shape_cast %45 : vector<64x8xf32> to vector<8x8x8xf32>
    %47 = vector.extract_strided_slice %5 {offsets = [0, 40], sizes = [64, 8], strides = [1, 1]} : vector<64x96xf32> to vector<64x8xf32>
    %48 = vector.shape_cast %47 : vector<64x8xf32> to vector<8x8x8xf32>
    %49 = vector.extract_strided_slice %5 {offsets = [0, 72], sizes = [64, 8], strides = [1, 1]} : vector<64x96xf32> to vector<64x8xf32>
    %50 = vector.shape_cast %49 : vector<64x8xf32> to vector<8x8x8xf32>
    "tpu.trace_start"() <{level = 10 : i32, message = "bqd,bkd->bqk"}> : () -> ()
    %cst_22 = arith.constant dense<0.000000e+00> : vector<8x8x8xf32>
    %51 = tpu.matmul %46, %48, %cst_22 {dimension_numbers = #tpu.dot_dimension_numbers<[2], [2], [1], [1], [0, 0, 0, 1, 1, 1], [0], [0]>} : vector<8x8x8xf32>, vector<8x8x8xf32>, vector<8x8x8xf32> -> vector<8x8x8xf32>
    "tpu.trace_stop"() : () -> ()
    %cst_23 = arith.constant 0.353553385 : f32
    %52 = vector.broadcast %cst_23 : f32 to vector<8x8x8xf32>
    %53 = arith.mulf %51, %52 : vector<8x8x8xf32>
    %54 = vector.shape_cast %11 : vector<8x8xf32> to vector<1x8x8xf32>
    %55 = vector.broadcast %54 : vector<1x8x8xf32> to vector<8x8x8xf32>
    %56 = arith.addf %53, %55 : vector<8x8x8xf32>
    %cst_24 = arith.constant dense<0xFF800000> : vector<8x8xf32>
    %57 = vector.multi_reduction <maximumf>, %56, %cst_24 [2] : vector<8x8x8xf32> to vector<8x8xf32>
    %58 = vector.shape_cast %57 : vector<8x8xf32> to vector<8x8x1xf32>
    %59 = vector.broadcast %58 : vector<8x8x1xf32> to vector<8x8x8xf32>
    %60 = arith.subf %56, %59 : vector<8x8x8xf32>
    %61 = math.exp %60 : vector<8x8x8xf32>
    %cst_25 = arith.constant dense<0.000000e+00> : vector<8x8xf32>
    %62 = vector.multi_reduction <add>, %61, %cst_25 [2] : vector<8x8x8xf32> to vector<8x8xf32>
    %63 = vector.shape_cast %62 : vector<8x8xf32> to vector<8x8x1xf32>
    %64 = tpu.reciprocal %63 {approx = true} : vector<8x8x1xf32> -> vector<8x8x1xf32>
    %65 = vector.broadcast %64 : vector<8x8x1xf32> to vector<8x8x8xf32>
    %66 = arith.mulf %61, %65 : vector<8x8x8xf32>
    "tpu.trace_start"() <{level = 10 : i32, message = "bqk,bkd->bqd"}> : () -> ()
    %cst_26 = arith.constant dense<0.000000e+00> : vector<8x8x8xf32>
    %67 = tpu.matmul %66, %50, %cst_26 {dimension_numbers = #tpu.dot_dimension_numbers<[2], [1], [1], [2], [0, 0, 0, 1, 1, 2], [0], [0]>} : vector<8x8x8xf32>, vector<8x8x8xf32>, vector<8x8x8xf32> -> vector<8x8x8xf32>
    "tpu.trace_stop"() : () -> ()
    %68 = vector.shape_cast %67 : vector<8x8x8xf32> to vector<64x8xf32>
    %c1 = arith.constant 1 : index
    %c0_27 = arith.constant 0 : index
    %c0_28 = arith.constant 0 : index
    %69 = vector.load %arg4[%c1, %c0_27, %c0_28] : memref<4x8x32xf32, #tpu.memory_space<vmem>>, vector<1x8x32xf32>
    %70 = vector.shape_cast %69 : vector<1x8x32xf32> to vector<8x32xf32>
    %cst_29 = arith.constant dense<0.000000e+00> : vector<64x32xf32>
    %71 = tpu.matmul %68, %70, %cst_29 {dimension_numbers = #tpu.dot_dimension_numbers<[1], [0], [0], [1], [0, 0, 1, 1], [], []>} : vector<64x8xf32>, vector<8x32xf32>, vector<64x32xf32> -> vector<64x32xf32>
    %c1_30 = arith.constant 1 : index
    %c0_31 = arith.constant 0 : index
    %c0_32 = arith.constant 0 : index
    %72 = vector.load %arg5[%c1_30, %c0_31, %c0_32] : memref<4x8x32xf32, #tpu.memory_space<vmem>>, vector<1x8x32xf32>
    %73 = vector.shape_cast %72 : vector<1x8x32xf32> to vector<8x32xf32>
    %cst_33 = arith.constant dense<0.000000e+00> : vector<64x32xf32>
    %74 = tpu.matmul %68, %73, %cst_33 {dimension_numbers = #tpu.dot_dimension_numbers<[1], [0], [0], [1], [0, 0, 1, 1], [], []>} : vector<64x8xf32>, vector<8x32xf32>, vector<64x32xf32> -> vector<64x32xf32>
    %cst_34 = arith.constant 0.000000e+00 : f32
    %75 = vector.broadcast %cst_34 : f32 to vector<64x32xf32>
    %76 = arith.maximumf %74, %75 : vector<64x32xf32>
    %77 = arith.maximumf %43, %76 : vector<64x32xf32>
    %78 = arith.subf %43, %77 : vector<64x32xf32>
    %79 = math.exp %78 : vector<64x32xf32>
    %80 = arith.subf %76, %77 : vector<64x32xf32>
    %81 = math.exp %80 : vector<64x32xf32>
    %82 = arith.mulf %38, %79 : vector<64x32xf32>
    %83 = arith.mulf %71, %81 : vector<64x32xf32>
    %84 = arith.addf %82, %83 : vector<64x32xf32>
    %85 = arith.mulf %44, %79 : vector<64x32xf32>
    %86 = arith.addf %85, %81 : vector<64x32xf32>
    %87 = vector.extract_strided_slice %5 {offsets = [0, 16], sizes = [64, 8], strides = [1, 1]} : vector<64x96xf32> to vector<64x8xf32>
    %88 = vector.shape_cast %87 : vector<64x8xf32> to vector<8x8x8xf32>
    %89 = vector.extract_strided_slice %5 {offsets = [0, 48], sizes = [64, 8], strides = [1, 1]} : vector<64x96xf32> to vector<64x8xf32>
    %90 = vector.shape_cast %89 : vector<64x8xf32> to vector<8x8x8xf32>
    %91 = vector.extract_strided_slice %5 {offsets = [0, 80], sizes = [64, 8], strides = [1, 1]} : vector<64x96xf32> to vector<64x8xf32>
    %92 = vector.shape_cast %91 : vector<64x8xf32> to vector<8x8x8xf32>
    "tpu.trace_start"() <{level = 10 : i32, message = "bqd,bkd->bqk"}> : () -> ()
    %cst_35 = arith.constant dense<0.000000e+00> : vector<8x8x8xf32>
    %93 = tpu.matmul %88, %90, %cst_35 {dimension_numbers = #tpu.dot_dimension_numbers<[2], [2], [1], [1], [0, 0, 0, 1, 1, 1], [0], [0]>} : vector<8x8x8xf32>, vector<8x8x8xf32>, vector<8x8x8xf32> -> vector<8x8x8xf32>
    "tpu.trace_stop"() : () -> ()
    %cst_36 = arith.constant 0.353553385 : f32
    %94 = vector.broadcast %cst_36 : f32 to vector<8x8x8xf32>
    %95 = arith.mulf %93, %94 : vector<8x8x8xf32>
    %96 = vector.shape_cast %11 : vector<8x8xf32> to vector<1x8x8xf32>
    %97 = vector.broadcast %96 : vector<1x8x8xf32> to vector<8x8x8xf32>
    %98 = arith.addf %95, %97 : vector<8x8x8xf32>
    %cst_37 = arith.constant dense<0xFF800000> : vector<8x8xf32>
    %99 = vector.multi_reduction <maximumf>, %98, %cst_37 [2] : vector<8x8x8xf32> to vector<8x8xf32>
    %100 = vector.shape_cast %99 : vector<8x8xf32> to vector<8x8x1xf32>
    %101 = vector.broadcast %100 : vector<8x8x1xf32> to vector<8x8x8xf32>
    %102 = arith.subf %98, %101 : vector<8x8x8xf32>
    %103 = math.exp %102 : vector<8x8x8xf32>
    %cst_38 = arith.constant dense<0.000000e+00> : vector<8x8xf32>
    %104 = vector.multi_reduction <add>, %103, %cst_38 [2] : vector<8x8x8xf32> to vector<8x8xf32>
    %105 = vector.shape_cast %104 : vector<8x8xf32> to vector<8x8x1xf32>
    %106 = tpu.reciprocal %105 {approx = true} : vector<8x8x1xf32> -> vector<8x8x1xf32>
    %107 = vector.broadcast %106 : vector<8x8x1xf32> to vector<8x8x8xf32>
    %108 = arith.mulf %103, %107 : vector<8x8x8xf32>
    "tpu.trace_start"() <{level = 10 : i32, message = "bqk,bkd->bqd"}> : () -> ()
    %cst_39 = arith.constant dense<0.000000e+00> : vector<8x8x8xf32>
    %109 = tpu.matmul %108, %92, %cst_39 {dimension_numbers = #tpu.dot_dimension_numbers<[2], [1], [1], [2], [0, 0, 0, 1, 1, 2], [0], [0]>} : vector<8x8x8xf32>, vector<8x8x8xf32>, vector<8x8x8xf32> -> vector<8x8x8xf32>
    "tpu.trace_stop"() : () -> ()
    %110 = vector.shape_cast %109 : vector<8x8x8xf32> to vector<64x8xf32>
    %c2 = arith.constant 2 : index
    %c0_40 = arith.constant 0 : index
    %c0_41 = arith.constant 0 : index
    %111 = vector.load %arg4[%c2, %c0_40, %c0_41] : memref<4x8x32xf32, #tpu.memory_space<vmem>>, vector<1x8x32xf32>
    %112 = vector.shape_cast %111 : vector<1x8x32xf32> to vector<8x32xf32>
    %cst_42 = arith.constant dense<0.000000e+00> : vector<64x32xf32>
    %113 = tpu.matmul %110, %112, %cst_42 {dimension_numbers = #tpu.dot_dimension_numbers<[1], [0], [0], [1], [0, 0, 1, 1], [], []>} : vector<64x8xf32>, vector<8x32xf32>, vector<64x32xf32> -> vector<64x32xf32>
    %c2_43 = arith.constant 2 : index
    %c0_44 = arith.constant 0 : index
    %c0_45 = arith.constant 0 : index
    %114 = vector.load %arg5[%c2_43, %c0_44, %c0_45] : memref<4x8x32xf32, #tpu.memory_space<vmem>>, vector<1x8x32xf32>
    %115 = vector.shape_cast %114 : vector<1x8x32xf32> to vector<8x32xf32>
    %cst_46 = arith.constant dense<0.000000e+00> : vector<64x32xf32>
    %116 = tpu.matmul %110, %115, %cst_46 {dimension_numbers = #tpu.dot_dimension_numbers<[1], [0], [0], [1], [0, 0, 1, 1], [], []>} : vector<64x8xf32>, vector<8x32xf32>, vector<64x32xf32> -> vector<64x32xf32>
    %cst_47 = arith.constant 0.000000e+00 : f32
    %117 = vector.broadcast %cst_47 : f32 to vector<64x32xf32>
    %118 = arith.maximumf %116, %117 : vector<64x32xf32>
    %119 = arith.maximumf %77, %118 : vector<64x32xf32>
    %120 = arith.subf %77, %119 : vector<64x32xf32>
    %121 = math.exp %120 : vector<64x32xf32>
    %122 = arith.subf %118, %119 : vector<64x32xf32>
    %123 = math.exp %122 : vector<64x32xf32>
    %124 = arith.mulf %84, %121 : vector<64x32xf32>
    %125 = arith.mulf %113, %123 : vector<64x32xf32>
    %126 = arith.addf %124, %125 : vector<64x32xf32>
    %127 = arith.mulf %86, %121 : vector<64x32xf32>
    %128 = arith.addf %127, %123 : vector<64x32xf32>
    %129 = vector.extract_strided_slice %5 {offsets = [0, 24], sizes = [64, 8], strides = [1, 1]} : vector<64x96xf32> to vector<64x8xf32>
    %130 = vector.shape_cast %129 : vector<64x8xf32> to vector<8x8x8xf32>
    %131 = vector.extract_strided_slice %5 {offsets = [0, 56], sizes = [64, 8], strides = [1, 1]} : vector<64x96xf32> to vector<64x8xf32>
    %132 = vector.shape_cast %131 : vector<64x8xf32> to vector<8x8x8xf32>
    %133 = vector.extract_strided_slice %5 {offsets = [0, 88], sizes = [64, 8], strides = [1, 1]} : vector<64x96xf32> to vector<64x8xf32>
    %134 = vector.shape_cast %133 : vector<64x8xf32> to vector<8x8x8xf32>
    "tpu.trace_start"() <{level = 10 : i32, message = "bqd,bkd->bqk"}> : () -> ()
    %cst_48 = arith.constant dense<0.000000e+00> : vector<8x8x8xf32>
    %135 = tpu.matmul %130, %132, %cst_48 {dimension_numbers = #tpu.dot_dimension_numbers<[2], [2], [1], [1], [0, 0, 0, 1, 1, 1], [0], [0]>} : vector<8x8x8xf32>, vector<8x8x8xf32>, vector<8x8x8xf32> -> vector<8x8x8xf32>
    "tpu.trace_stop"() : () -> ()
    %cst_49 = arith.constant 0.353553385 : f32
    %136 = vector.broadcast %cst_49 : f32 to vector<8x8x8xf32>
    %137 = arith.mulf %135, %136 : vector<8x8x8xf32>
    %138 = vector.shape_cast %11 : vector<8x8xf32> to vector<1x8x8xf32>
    %139 = vector.broadcast %138 : vector<1x8x8xf32> to vector<8x8x8xf32>
    %140 = arith.addf %137, %139 : vector<8x8x8xf32>
    %cst_50 = arith.constant dense<0xFF800000> : vector<8x8xf32>
    %141 = vector.multi_reduction <maximumf>, %140, %cst_50 [2] : vector<8x8x8xf32> to vector<8x8xf32>
    %142 = vector.shape_cast %141 : vector<8x8xf32> to vector<8x8x1xf32>
    %143 = vector.broadcast %142 : vector<8x8x1xf32> to vector<8x8x8xf32>
    %144 = arith.subf %140, %143 : vector<8x8x8xf32>
    %145 = math.exp %144 : vector<8x8x8xf32>
    %cst_51 = arith.constant dense<0.000000e+00> : vector<8x8xf32>
    %146 = vector.multi_reduction <add>, %145, %cst_51 [2] : vector<8x8x8xf32> to vector<8x8xf32>
    %147 = vector.shape_cast %146 : vector<8x8xf32> to vector<8x8x1xf32>
    %148 = tpu.reciprocal %147 {approx = true} : vector<8x8x1xf32> -> vector<8x8x1xf32>
    %149 = vector.broadcast %148 : vector<8x8x1xf32> to vector<8x8x8xf32>
    %150 = arith.mulf %145, %149 : vector<8x8x8xf32>
    "tpu.trace_start"() <{level = 10 : i32, message = "bqk,bkd->bqd"}> : () -> ()
    %cst_52 = arith.constant dense<0.000000e+00> : vector<8x8x8xf32>
    %151 = tpu.matmul %150, %134, %cst_52 {dimension_numbers = #tpu.dot_dimension_numbers<[2], [1], [1], [2], [0, 0, 0, 1, 1, 2], [0], [0]>} : vector<8x8x8xf32>, vector<8x8x8xf32>, vector<8x8x8xf32> -> vector<8x8x8xf32>
    "tpu.trace_stop"() : () -> ()
    %152 = vector.shape_cast %151 : vector<8x8x8xf32> to vector<64x8xf32>
    %c3 = arith.constant 3 : index
    %c0_53 = arith.constant 0 : index
    %c0_54 = arith.constant 0 : index
    %153 = vector.load %arg4[%c3, %c0_53, %c0_54] : memref<4x8x32xf32, #tpu.memory_space<vmem>>, vector<1x8x32xf32>
    %154 = vector.shape_cast %153 : vector<1x8x32xf32> to vector<8x32xf32>
    %cst_55 = arith.constant dense<0.000000e+00> : vector<64x32xf32>
    %155 = tpu.matmul %152, %154, %cst_55 {dimension_numbers = #tpu.dot_dimension_numbers<[1], [0], [0], [1], [0, 0, 1, 1], [], []>} : vector<64x8xf32>, vector<8x32xf32>, vector<64x32xf32> -> vector<64x32xf32>
    %c3_56 = arith.constant 3 : index
    %c0_57 = arith.constant 0 : index
    %c0_58 = arith.constant 0 : index
    %156 = vector.load %arg5[%c3_56, %c0_57, %c0_58] : memref<4x8x32xf32, #tpu.memory_space<vmem>>, vector<1x8x32xf32>
    %157 = vector.shape_cast %156 : vector<1x8x32xf32> to vector<8x32xf32>
    %cst_59 = arith.constant dense<0.000000e+00> : vector<64x32xf32>
    %158 = tpu.matmul %152, %157, %cst_59 {dimension_numbers = #tpu.dot_dimension_numbers<[1], [0], [0], [1], [0, 0, 1, 1], [], []>} : vector<64x8xf32>, vector<8x32xf32>, vector<64x32xf32> -> vector<64x32xf32>
    %cst_60 = arith.constant 0.000000e+00 : f32
    %159 = vector.broadcast %cst_60 : f32 to vector<64x32xf32>
    %160 = arith.maximumf %158, %159 : vector<64x32xf32>
    %161 = arith.maximumf %119, %160 : vector<64x32xf32>
    %162 = arith.subf %119, %161 : vector<64x32xf32>
    %163 = math.exp %162 : vector<64x32xf32>
    %164 = arith.subf %160, %161 : vector<64x32xf32>
    %165 = math.exp %164 : vector<64x32xf32>
    %166 = arith.mulf %126, %163 : vector<64x32xf32>
    %167 = arith.mulf %155, %165 : vector<64x32xf32>
    %168 = arith.addf %166, %167 : vector<64x32xf32>
    %169 = arith.mulf %128, %163 : vector<64x32xf32>
    %170 = arith.addf %169, %165 : vector<64x32xf32>
    %171 = tpu.reciprocal %170 {approx = true} : vector<64x32xf32> -> vector<64x32xf32>
    %172 = arith.mulf %168, %171 : vector<64x32xf32>
    %c0_61 = arith.constant 0 : index
    %c0_62 = arith.constant 0 : index
    %173 = vector.load %arg6[%c0_61, %c0_62] : memref<32x32xf32, #tpu.memory_space<vmem>>, vector<32x32xf32>
    %cst_63 = arith.constant dense<0.000000e+00> : vector<64x32xf32>
    %174 = tpu.matmul %3, %173, %cst_63 {dimension_numbers = #tpu.dot_dimension_numbers<[1], [0], [0], [1], [0, 0, 1, 1], [], []>} : vector<64x32xf32>, vector<32x32xf32>, vector<64x32xf32> -> vector<64x32xf32>
    %c0_64 = arith.constant 0 : index
    %c0_65 = arith.constant 0 : index
    %175 = vector.load %arg7[%c0_64, %c0_65] : memref<1x32xf32, #tpu.memory_space<vmem>>, vector<1x32xf32>
    %176 = vector.broadcast %175 : vector<1x32xf32> to vector<64x32xf32>
    %177 = arith.addf %174, %176 : vector<64x32xf32>
    %178 = arith.mulf %177, %172 : vector<64x32xf32>
    %cst_66 = arith.constant 0.000000e+00 : f32
    %179 = vector.broadcast %cst_66 : f32 to vector<64x32xf32>
    %180 = arith.subf %179, %178 : vector<64x32xf32>
    %181 = math.exp %180 : vector<64x32xf32>
    %cst_67 = arith.constant 1.000000e+00 : f32
    %182 = vector.broadcast %cst_67 : f32 to vector<64x32xf32>
    %183 = arith.addf %182, %181 : vector<64x32xf32>
    %184 = tpu.reciprocal %183 {approx = true} : vector<64x32xf32> -> vector<64x32xf32>
    %185 = arith.mulf %178, %184 : vector<64x32xf32>
    %c0_68 = arith.constant 0 : index
    %c0_69 = arith.constant 0 : index
    %186 = vector.load %arg8[%c0_68, %c0_69] : memref<32x32xf32, #tpu.memory_space<vmem>>, vector<32x32xf32>
    %cst_70 = arith.constant dense<0.000000e+00> : vector<64x32xf32>
    %187 = tpu.matmul %185, %186, %cst_70 {dimension_numbers = #tpu.dot_dimension_numbers<[1], [0], [0], [1], [0, 0, 1, 1], [], []>} : vector<64x32xf32>, vector<32x32xf32>, vector<64x32xf32> -> vector<64x32xf32>
    %c0_71 = arith.constant 0 : index
    %c0_72 = arith.constant 0 : index
    %188 = vector.load %arg9[%c0_71, %c0_72] : memref<1x32xf32, #tpu.memory_space<vmem>>, vector<1x32xf32>
    %189 = vector.broadcast %188 : vector<1x32xf32> to vector<64x32xf32>
    %190 = arith.addf %187, %189 : vector<64x32xf32>
    %191 = arith.addf %190, %3 : vector<64x32xf32>
    %cst_73 = arith.constant dense<0.000000e+00> : vector<64xf32>
    %192 = vector.multi_reduction <add>, %191, %cst_73 [1] : vector<64x32xf32> to vector<64xf32>
    %193 = vector.shape_cast %192 : vector<64xf32> to vector<64x1xf32>
    %cst_74 = arith.constant 3.200000e+01 : f32
    %194 = vector.broadcast %cst_74 : f32 to vector<64x1xf32>
    %195 = arith.divf %193, %194 : vector<64x1xf32>
    %196 = vector.broadcast %195 : vector<64x1xf32> to vector<64x32xf32>
    %197 = arith.subf %191, %196 : vector<64x32xf32>
    %198 = arith.mulf %197, %197 : vector<64x32xf32>
    %cst_75 = arith.constant dense<0.000000e+00> : vector<64xf32>
    %199 = vector.multi_reduction <add>, %198, %cst_75 [1] : vector<64x32xf32> to vector<64xf32>
    %200 = vector.shape_cast %199 : vector<64xf32> to vector<64x1xf32>
    %cst_76 = arith.constant 3.200000e+01 : f32
    %201 = vector.broadcast %cst_76 : f32 to vector<64x1xf32>
    %202 = arith.divf %200, %201 : vector<64x1xf32>
    %203 = vector.broadcast %195 : vector<64x1xf32> to vector<64x32xf32>
    %204 = arith.subf %191, %203 : vector<64x32xf32>
    %cst_77 = arith.constant 9.99999974E-6 : f32
    %205 = vector.broadcast %cst_77 : f32 to vector<64x1xf32>
    %206 = arith.addf %202, %205 : vector<64x1xf32>
    %207 = math.rsqrt %206 : vector<64x1xf32>
    %208 = vector.broadcast %207 : vector<64x1xf32> to vector<64x32xf32>
    %209 = arith.mulf %204, %208 : vector<64x32xf32>
    %c0_78 = arith.constant 0 : index
    %c0_79 = arith.constant 0 : index
    %210 = vector.load %arg10[%c0_78, %c0_79] : memref<1x32xf32, #tpu.memory_space<vmem>>, vector<1x32xf32>
    %211 = vector.broadcast %210 : vector<1x32xf32> to vector<64x32xf32>
    %212 = arith.mulf %209, %211 : vector<64x32xf32>
    %c0_80 = arith.constant 0 : index
    %c0_81 = arith.constant 0 : index
    %213 = vector.load %arg11[%c0_80, %c0_81] : memref<1x32xf32, #tpu.memory_space<vmem>>, vector<1x32xf32>
    %214 = vector.broadcast %213 : vector<1x32xf32> to vector<64x32xf32>
    %215 = arith.addf %212, %214 : vector<64x32xf32>
    %216 = vector.shape_cast %215 : vector<64x32xf32> to vector<8x8x32xf32>
    %217 = tpu.transpose %216, [1, 0, 2] : vector<8x8x32xf32> -> vector<8x8x32xf32>
    %c0_82 = arith.constant 0 : index
    %c0_83 = arith.constant 0 : index
    %c0_84 = arith.constant 0 : index
    %c0_85 = arith.constant 0 : index
    %218 = vector.load %arg12[%c0_82, %c0_83, %c0_84, %c0_85] : memref<1x8x8x32xf32, #tpu.memory_space<vmem>>, vector<1x8x8x32xf32>
    %219 = vector.shape_cast %218 : vector<1x8x8x32xf32> to vector<8x8x32xf32>
    %220 = vector.shape_cast %217 : vector<8x8x32xf32> to vector<1x8x8x32xf32>
    tpu.vector_store %arg12[%c0_82, %c0_83, %c0_84, %c0_85], %220 {strides = array<i32>} : memref<1x8x8x32xf32, #tpu.memory_space<vmem>>, vector<1x8x8x32xf32>,
    return
  }
  func.func @transform_0(%arg0: i32, %arg1: i32) -> (i32, i32, i32, i32) {
    %c0_i32 = arith.constant 0 : i32
    %c0_i32_0 = arith.constant 0 : i32
    %c0_i32_1 = arith.constant 0 : i32
    return %arg0, %c0_i32, %arg1, %c0_i32_0 : i32, i32, i32, i32
  }
  func.func @transform_1(%arg0: i32, %arg1: i32) -> (i32, i32) {
    %c0_i32 = arith.constant 0 : i32
    %c0_i32_0 = arith.constant 0 : i32
    %c0_i32_1 = arith.constant 0 : i32
    return %c0_i32, %c0_i32_0 : i32, i32
  }
  func.func @transform_2(%arg0: i32, %arg1: i32) -> (i32, i32, i32) {
    %c0_i32 = arith.constant 0 : i32
    %c0_i32_0 = arith.constant 0 : i32
    %c0_i32_1 = arith.constant 0 : i32
    %c0_i32_2 = arith.constant 0 : i32
    return %c0_i32, %c0_i32_0, %c0_i32_1 : i32, i32, i32
  }
  func.func @transform_3(%arg0: i32, %arg1: i32) -> (i32, i32, i32) {
    %c0_i32 = arith.constant 0 : i32
    %c0_i32_0 = arith.constant 0 : i32
    %c0_i32_1 = arith.constant 0 : i32
    %c0_i32_2 = arith.constant 0 : i32
    return %c0_i32, %c0_i32_0, %c0_i32_1 : i32, i32, i32
  }
  func.func @transform_4(%arg0: i32, %arg1: i32) -> (i32, i32) {
    %c0_i32 = arith.constant 0 : i32
    %c0_i32_0 = arith.constant 0 : i32
    %c0_i32_1 = arith.constant 0 : i32
    return %c0_i32, %c0_i32_0 : i32, i32
  }
  func.func @transform_5(%arg0: i32, %arg1: i32) -> (i32, i32) {
    %c0_i32 = arith.constant 0 : i32
    %c0_i32_0 = arith.constant 0 : i32
    %c0_i32_1 = arith.constant 0 : i32
    return %c0_i32, %c0_i32_0 : i32, i32
  }
  func.func @transform_6(%arg0: i32, %arg1: i32) -> (i32, i32) {
    %c0_i32 = arith.constant 0 : i32
    %c0_i32_0 = arith.constant 0 : i32
    %c0_i32_1 = arith.constant 0 : i32
    return %c0_i32, %c0_i32_0 : i32, i32
  }
  func.func @transform_7(%arg0: i32, %arg1: i32) -> (i32, i32) {
    %c0_i32 = arith.constant 0 : i32
    %c0_i32_0 = arith.constant 0 : i32
    %c0_i32_1 = arith.constant 0 : i32
    return %c0_i32, %c0_i32_0 : i32, i32
  }
  func.func @transform_8(%arg0: i32, %arg1: i32) -> (i32, i32) {
    %c0_i32 = arith.constant 0 : i32
    %c0_i32_0 = arith.constant 0 : i32
    %c0_i32_1 = arith.constant 0 : i32
    return %c0_i32, %c0_i32_0 : i32, i32
  }
  func.func @transform_9(%arg0: i32, %arg1: i32) -> (i32, i32) {
    %c0_i32 = arith.constant 0 : i32
    %c0_i32_0 = arith.constant 0 : i32
    %c0_i32_1 = arith.constant 0 : i32
    return %c0_i32, %c0_i32_0 : i32, i32
  }
  func.func @transform_10(%arg0: i32, %arg1: i32) -> (i32, i32, i32, i32) {
    %c0_i32 = arith.constant 0 : i32
    %c0_i32_0 = arith.constant 0 : i32
    %c0_i32_1 = arith.constant 0 : i32
    return %arg0, %c0_i32, %arg1, %c0_i32_0 : i32, i32, i32, i32
  }
}

</mosaic_0001>

<llo_original>
// kernel: tpu_custom_call.1
$region0: #{tpu_custom_call.1}
  #allocation0 [shape = 'u32[]', space=smem, size = 0x4, offset = 0x4, fixed_abs, tag = 'smem constant byte address 0x4 - core index']
  #allocation1 [shape = 'u32[144,128]{1,0:T(1,128)}', space=vmem, size = 0x12000, scoped, tag = 'internal scratch']
  %s0 = inlined_call_operand.hbm [shape: f32[8,128], index: 0, kind: input, shape index: {}]
  %s1 = inlined_call_operand.hbm [shape: f32[8,128], index: 1, kind: output, shape index: {}]
  %s2 = sld [smem:[#allocation0]]
  $region18: #{tpu_custom_call.1} parent=0
    _
  %s4 = ssub.s32 1, %s2
  %s5 = scalar_select 0, %s4, %s2
  $region1: #{tpu_custom_call.1} parent=0
    #allocation2 [shape = 'u8[4096]{0}', space=vmem, size = 0x1000, scoped, tag = 'input window, operand 0, single buffered']
    #allocation3 [shape = 's32[1]{0}', space=sflag, size = 0x4, scoped, tag = 'scoped memory for tpu_custom_call.1']
    #allocation4 [shape = 's32[1]{0}', space=sflag, size = 0x4, scoped, tag = 'scoped memory for tpu_custom_call.1']
    #allocation5 [shape = 'u8[4096]{0}', space=vmem, size = 0x1000, scoped, tag = 'output window, operand 0, single buffered']
    %6 = vsyncpa [#allocation3], 0
    %7 = vsyncpa [#allocation4], 0
    // Predicated region
    $region2: #{tpu_custom_call.1} parent=1 // pred_check
      _
    $region3: #{tpu_custom_call.1} parent=1 // pred_check_branch
      %9 = sbr.rel (0) target = $region5
    $region4: #{tpu_custom_call.1} parent=1 // pred_region
      %s11 = ssub.s32 128, 128
      %12 = vsyncadd [#allocation3], %s11
      %s14 = sshll.u32 [#allocation2], 4
      %s15 = int_to_ptr.vmem [resolvable:$true] %s14
      %17 = dma.hbm_to_vmem [thread:$0]  %s0, 128, %s15, [#allocation3]
    $region5: #{tpu_custom_call.1} parent=1 // pred_fallthru
      _
    // Predicated region
    $region6: #{tpu_custom_call.1} parent=1 // pred_check
      _
    $region7: #{tpu_custom_call.1} parent=1 // pred_check_branch
      %19 = sbr.rel (0) target = $region9
    $region8: #{tpu_custom_call.1} parent=1 // pred_region
      %20 = dma.done [#allocation3], 128
    $region9: #{tpu_custom_call.1} parent=1 // pred_fallthru
      _
    %v21 = vld [vmem:[#allocation2] sm:$0xff]
    %22 = vst [vmem:[#allocation5] sm:$0xff] %v21
    // Predicated region
    $region10: #{tpu_custom_call.1} parent=1 // pred_check
      _
    $region11: #{tpu_custom_call.1} parent=1 // pred_check_branch
      %24 = sbr.rel (0) target = $region13
    $region12: #{tpu_custom_call.1} parent=1 // pred_region
      %s26 = ssub.s32 128, 128
      %27 = vsyncadd [#allocation4], %s26
      %s29 = sshll.u32 [#allocation5], 4
      %s30 = int_to_ptr.vmem [resolvable:$true] %s29
      %32 = dma.vmem_to_hbm [thread:$0]  %s30, 128, %s1, [#allocation4]
    $region13: #{tpu_custom_call.1} parent=1 // pred_fallthru
      _
    // Predicated region
    $region14: #{tpu_custom_call.1} parent=1 // pred_check
      _
    $region15: #{tpu_custom_call.1} parent=1 // pred_check_branch
      %34 = sbr.rel (0) target = $region17
    $region16: #{tpu_custom_call.1} parent=1 // pred_region
      %35 = dma.done [#allocation4], 128
    $region17: #{tpu_custom_call.1} parent=1 // pred_fallthru
      _
    %36 = vsyncpa [#allocation3], 1
    %37 = vsyncpa [#allocation4], 1

// kernel: _tsa_impl.1
$region0: #{_tsa_impl.1}
  #allocation0 [shape = 'u32[]', space=smem, size = 0x4, offset = 0x4, fixed_abs, tag = 'smem constant byte address 0x4 - core index']
  #allocation1 [shape = 'u32[144,128]{1,0:T(1,128)}', space=vmem, size = 0x12000, scoped, tag = 'internal scratch']
  %s0 = inlined_call_operand.hbm [shape: f32[2,8,16,32], index: 0, kind: input, shape index: {}]
  %s1 = inlined_call_operand.vmem [shape: f32[32,96], index: 1, kind: input, shape index: {}]
  %s2 = inlined_call_operand.vmem [shape: f32[4,8,32], index: 2, kind: input, shape index: {}]
  %s3 = inlined_call_operand.vmem [shape: f32[4,8,32], index: 3, kind: input, shape index: {}]
  %s4 = inlined_call_operand.vmem [shape: f32[32,32], index: 4, kind: input, shape index: {}]
  %s5 = inlined_call_operand.vmem [shape: f32[1,32], index: 5, kind: input, shape index: {}]
  %s6 = inlined_call_operand.vmem [shape: f32[32,32], index: 6, kind: input, shape index: {}]
  %s7 = inlined_call_operand.vmem [shape: f32[1,32], index: 7, kind: input, shape index: {}]
  %s8 = inlined_call_operand.vmem [shape: f32[1,32], index: 8, kind: input, shape index: {}]
  %s9 = inlined_call_operand.vmem [shape: f32[1,32], index: 9, kind: input, shape index: {}]
  %s10 = inlined_call_operand.hbm [shape: f32[2,8,16,32], index: 10, kind: output, shape index: {}]
  %s11 = sld [smem:[#allocation0]]
  $region77: #{_tsa_impl.1} parent=0
    _
  %s13 = ssub.s32 1, %s11
  %s14 = scalar_select 0, %s13, %s11
  $region1: #{_tsa_impl.1} parent=0
    #allocation2 [shape = 'u8[65536]{0}', space=vmem, size = 0x10000, scoped, tag = 'input window, operand 0']
    #allocation3 [shape = 's32[2]{0}', space=sflag, size = 0x8, scoped, tag = 'scoped memory for _tsa_impl.1']
    #allocation4 [shape = 's32[2]{0}', space=sflag, size = 0x8, scoped, tag = 'scoped memory for _tsa_impl.1']
    #allocation5 [shape = 'u8[65536]{0}', space=vmem, size = 0x10000, scoped, tag = 'output window, operand 0']
    %15 = vsyncpa [#allocation3], 0
    %s16 = scalar_lea.sflag [#allocation3], 1
    %17 = vsyncpa %s16, 0
    %18 = vsyncpa [#allocation4], 0
    %s19 = scalar_lea.sflag [#allocation4], 1
    %20 = vsyncpa %s19, 0
    loop: start=0, step=1, limit=6
    $region2: #{_tsa_impl.1} parent=1 // loop_pre_header
      _
    $region3: #{_tsa_impl.1} parent=1 // loop_header
      %s22 = sphi 0, %s26
      %p23 = scmp.ge.s32.totalorder %s22, 6
      %s29 = sphi 0, %s41
      %s30 = sphi 0, %s37
      %s31 = sphi 0, %s29
      %s32 = sphi 0, %s30
      %s33 = sphi 0, %s31
      %s34 = sphi 0, %s32
      %s46 = sphi 0, %s48
      %s49 = sphi 0, %s46
      %s50 = sphi 0, %s49
      %s66 = sphi 0, %s50
      %s70 = sphi 0, %s70
      %s72 = sphi 0, %s70
      %s73 = sphi 0, %s72
      %s87 = sphi 0, %s73
      %s91 = sphi 0, %s91
      %s93 = sphi 0, %s91
      %s94 = sphi 0, %s93
      %s108 = sphi 0, %s94
      %s112 = sphi 0, %s112
      %s114 = sphi 0, %s112
      %s115 = sphi 0, %s114
      %s129 = sphi 0, %s115
      %s133 = sphi 0, %s133
      %s135 = sphi 0, %s133
      %s136 = sphi 0, %s135
      %s150 = sphi 0, %s136
      %s154 = sphi 0, %s154
      %s156 = sphi 0, %s154
      %s157 = sphi 0, %s156
      %s171 = sphi 0, %s157
      %s175 = sphi 0, %s175
      %s177 = sphi 0, %s175
      %s178 = sphi 0, %s177
      %s192 = sphi 0, %s178
      %s196 = sphi 0, %s196
      %s198 = sphi 0, %s196
      %s199 = sphi 0, %s198
      %s213 = sphi 0, %s199
      %s217 = sphi 0, %s217
      %s219 = sphi 0, %s217
      %s220 = sphi 0, %s219
      %s234 = sphi 0, %s220
      %s238 = sphi 0, %s238
      %s240 = sphi 0, %s238
      %s241 = sphi 0, %s240
      %s255 = sphi 0, %s241
      %s263 = sphi 0, %s265
      %s266 = sphi 0, %s263
      %s267 = sphi 0, %s266
      %s283 = sphi 0, %s267
    $region4: #{_tsa_impl.1} parent=1 // loop_header_branch
      %25 = sbr.rel (%p23) target = $region8
    $region5: #{_tsa_impl.1} parent=1 // loop_body
      %s27 = ssub.s32 %s22, 1
      %s28 = ssub.s32 %s22, 2
      %s35 = sadd.s32 1, %s30
      %p36 = scmp.ge.s32.totalorder %s35, 2
      %s37 = scalar_select %p36, 0, %s35
      %s38 = sadd.s32 1, %s29
      %s39 = scalar_select %p36, %s38, %s29
      %p40 = scmp.ge.s32.totalorder %s39, 2
      %s41 = scalar_select %p40, 0, %s39
      %s42 = ssub.s32 %s29, %s41
      %s43 = ssub.s32 %s30, %s37
      %s44 = sor.u32 %s42, %s43
      %p45 = scmp.eq.s32.totalorder %s44, 0
      %s47 = sadd.s32 %s46, 1
      %s48 = scalar_select %p45, %s46, %s47
      %p51 = pneg %p45
      %p52 = scmp.eq.s32.totalorder %s22, 3
      %p53 = por %p51, %p52
      %p54 = scmp.ne.s32.totalorder %s46, %s49
      %p55 = scmp.eq.s32.totalorder %s22, 0
      %p56 = por %p54, %p55
      %p57 = scmp.ne.s32.totalorder %s46, %s49
      %p58 = scmp.eq.s32.totalorder %s27, 3
      %p59 = por %p57, %p58
      %p60 = scmp.ne.s32.totalorder %s49, %s50
      %p61 = scmp.eq.s32.totalorder %s27, 0
      %p62 = por %p60, %p61
      %p63 = scmp.ne.s32.totalorder %s49, %s50
      %p64 = scmp.eq.s32.totalorder %s28, 3
      %p65 = por %p63, %p64
      %p67 = scmp.ne.s32.totalorder %s50, %s66
      %p68 = scmp.eq.s32.totalorder %s28, 0
      %p69 = por %p67, %p68
      %s71 = sadd.s32 %s70, 1
      %p74 = scmp.eq.s32.totalorder %s22, 3
      %p75 = scmp.ne.s32.totalorder %s70, %s72
      %p76 = scmp.eq.s32.totalorder %s22, 0
      %p77 = por %p75, %p76
      %p78 = scmp.ne.s32.totalorder %s70, %s72
      %p79 = scmp.eq.s32.totalorder %s27, 3
      %p80 = por %p78, %p79
      %p81 = scmp.ne.s32.totalorder %s72, %s73
      %p82 = scmp.eq.s32.totalorder %s27, 0
      %p83 = por %p81, %p82
      %p84 = scmp.ne.s32.totalorder %s72, %s73
      %p85 = scmp.eq.s32.totalorder %s28, 3
      %p86 = por %p84, %p85
      %p88 = scmp.ne.s32.totalorder %s73, %s87
      %p89 = scmp.eq.s32.totalorder %s28, 0
      %p90 = por %p88, %p89
      %s92 = sadd.s32 %s91, 1
      %p95 = scmp.eq.s32.totalorder %s22, 3
      %p96 = scmp.ne.s32.totalorder %s91, %s93
      %p97 = scmp.eq.s32.totalorder %s22, 0
      %p98 = por %p96, %p97
      %p99 = scmp.ne.s32.totalorder %s91, %s93
      %p100 = scmp.eq.s32.totalorder %s27, 3
      %p101 = por %p99, %p100
      %p102 = scmp.ne.s32.totalorder %s93, %s94
      %p103 = scmp.eq.s32.totalorder %s27, 0
      %p104 = por %p102, %p103
      %p105 = scmp.ne.s32.totalorder %s93, %s94
      %p106 = scmp.eq.s32.totalorder %s28, 3
      %p107 = por %p105, %p106
      %p109 = scmp.ne.s32.totalorder %s94, %s108
      %p110 = scmp.eq.s32.totalorder %s28, 0
      %p111 = por %p109, %p110
      %s113 = sadd.s32 %s112, 1
      %p116 = scmp.eq.s32.totalorder %s22, 3
      %p117 = scmp.ne.s32.totalorder %s112, %s114
      %p118 = scmp.eq.s32.totalorder %s22, 0
      %p119 = por %p117, %p118
      %p120 = scmp.ne.s32.totalorder %s112, %s114
      %p121 = scmp.eq.s32.totalorder %s27, 3
      %p122 = por %p120, %p121
      %p123 = scmp.ne.s32.totalorder %s114, %s115
      %p124 = scmp.eq.s32.totalorder %s27, 0
      %p125 = por %p123, %p124
      %p126 = scmp.ne.s32.totalorder %s114, %s115
      %p127 = scmp.eq.s32.totalorder %s28, 3
      %p128 = por %p126, %p127
      %p130 = scmp.ne.s32.totalorder %s115, %s129
      %p131 = scmp.eq.s32.totalorder %s28, 0
      %p132 = por %p130, %p131
      %s134 = sadd.s32 %s133, 1
      %p137 = scmp.eq.s32.totalorder %s22, 3
      %p138 = scmp.ne.s32.totalorder %s133, %s135
      %p139 = scmp.eq.s32.totalorder %s22, 0
      %p140 = por %p138, %p139
      %p141 = scmp.ne.s32.totalorder %s133, %s135
      %p142 = scmp.eq.s32.totalorder %s27, 3
      %p143 = por %p141, %p142
      %p144 = scmp.ne.s32.totalorder %s135, %s136
      %p145 = scmp.eq.s32.totalorder %s27, 0
      %p146 = por %p144, %p145
      %p147 = scmp.ne.s32.totalorder %s135, %s136
      %p148 = scmp.eq.s32.totalorder %s28, 3
      %p149 = por %p147, %p148
      %p151 = scmp.ne.s32.totalorder %s136, %s150
      %p152 = scmp.eq.s32.totalorder %s28, 0
      %p153 = por %p151, %p152
      %s155 = sadd.s32 %s154, 1
      %p158 = scmp.eq.s32.totalorder %s22, 3
      %p159 = scmp.ne.s32.totalorder %s154, %s156
      %p160 = scmp.eq.s32.totalorder %s22, 0
      %p161 = por %p159, %p160
      %p162 = scmp.ne.s32.totalorder %s154, %s156
      %p163 = scmp.eq.s32.totalorder %s27, 3
      %p164 = por %p162, %p163
      %p165 = scmp.ne.s32.totalorder %s156, %s157
      %p166 = scmp.eq.s32.totalorder %s27, 0
      %p167 = por %p165, %p166
      %p168 = scmp.ne.s32.totalorder %s156, %s157
      %p169 = scmp.eq.s32.totalorder %s28, 3
      %p170 = por %p168, %p169
      %p172 = scmp.ne.s32.totalorder %s157, %s171
      %p173 = scmp.eq.s32.totalorder %s28, 0
      %p174 = por %p172, %p173
      %s176 = sadd.s32 %s175, 1
      %p179 = scmp.eq.s32.totalorder %s22, 3
      %p180 = scmp.ne.s32.totalorder %s175, %s177
      %p181 = scmp.eq.s32.totalorder %s22, 0
      %p182 = por %p180, %p181
      %p183 = scmp.ne.s32.totalorder %s175, %s177
      %p184 = scmp.eq.s32.totalorder %s27, 3
      %p185 = por %p183, %p184
      %p186 = scmp.ne.s32.totalorder %s177, %s178
      %p187 = scmp.eq.s32.totalorder %s27, 0
      %p188 = por %p186, %p187
      %p189 = scmp.ne.s32.totalorder %s177, %s178
      %p190 = scmp.eq.s32.totalorder %s28, 3
      %p191 = por %p189, %p190
      %p193 = scmp.ne.s32.totalorder %s178, %s192
      %p194 = scmp.eq.s32.totalorder %s28, 0
      %p195 = por %p193, %p194
      %s197 = sadd.s32 %s196, 1
      %p200 = scmp.eq.s32.totalorder %s22, 3
      %p201 = scmp.ne.s32.totalorder %s196, %s198
      %p202 = scmp.eq.s32.totalorder %s22, 0
      %p203 = por %p201, %p202
      %p204 = scmp.ne.s32.totalorder %s196, %s198
      %p205 = scmp.eq.s32.totalorder %s27, 3
      %p206 = por %p204, %p205
      %p207 = scmp.ne.s32.totalorder %s198, %s199
      %p208 = scmp.eq.s32.totalorder %s27, 0
      %p209 = por %p207, %p208
      %p210 = scmp.ne.s32.totalorder %s198, %s199
      %p211 = scmp.eq.s32.totalorder %s28, 3
      %p212 = por %p210, %p211
      %p214 = scmp.ne.s32.totalorder %s199, %s213
      %p215 = scmp.eq.s32.totalorder %s28, 0
      %p216 = por %p214, %p215
      %s218 = sadd.s32 %s217, 1
      %p221 = scmp.eq.s32.totalorder %s22, 3
      %p222 = scmp.ne.s32.totalorder %s217, %s219
      %p223 = scmp.eq.s32.totalorder %s22, 0
      %p224 = por %p222, %p223
      %p225 = scmp.ne.s32.totalorder %s217, %s219
      %p226 = scmp.eq.s32.totalorder %s27, 3
      %p227 = por %p225, %p226
      %p228 = scmp.ne.s32.totalorder %s219, %s220
      %p229 = scmp.eq.s32.totalorder %s27, 0
      %p230 = por %p228, %p229
      %p231 = scmp.ne.s32.totalorder %s219, %s220
      %p232 = scmp.eq.s32.totalorder %s28, 3
      %p233 = por %p231, %p232
      %p235 = scmp.ne.s32.totalorder %s220, %s234
      %p236 = scmp.eq.s32.totalorder %s28, 0
      %p237 = por %p235, %p236
      %s239 = sadd.s32 %s238, 1
      %p242 = scmp.eq.s32.totalorder %s22, 3
      %p243 = scmp.ne.s32.totalorder %s238, %s240
      %p244 = scmp.eq.s32.totalorder %s22, 0
      %p245 = por %p243, %p244
      %p246 = scmp.ne.s32.totalorder %s238, %s240
      %p247 = scmp.eq.s32.totalorder %s27, 3
      %p248 = por %p246, %p247
      %p249 = scmp.ne.s32.totalorder %s240, %s241
      %p250 = scmp.eq.s32.totalorder %s27, 0
      %p251 = por %p249, %p250
      %p252 = scmp.ne.s32.totalorder %s240, %s241
      %p253 = scmp.eq.s32.totalorder %s28, 3
      %p254 = por %p252, %p253
      %p256 = scmp.ne.s32.totalorder %s241, %s255
      %p257 = scmp.eq.s32.totalorder %s28, 0
      %p258 = por %p256, %p257
      %s259 = ssub.s32 %s29, %s41
      %s260 = ssub.s32 %s30, %s37
      %s261 = sor.u32 %s259, %s260
      %p262 = scmp.eq.s32.totalorder %s261, 0
      %s264 = sadd.s32 %s263, 1
      %s265 = scalar_select %p262, %s263, %s264
      %p268 = pneg %p262
      %p269 = scmp.eq.s32.totalorder %s22, 3
      %p270 = por %p268, %p269
      %p271 = scmp.ne.s32.totalorder %s263, %s266
      %p272 = scmp.eq.s32.totalorder %s22, 0
      %p273 = por %p271, %p272
      %p274 = scmp.ne.s32.totalorder %s263, %s266
      %p275 = scmp.eq.s32.totalorder %s27, 3
      %p276 = por %p274, %p275
      %p277 = scmp.ne.s32.totalorder %s266, %s267
      %p278 = scmp.eq.s32.totalorder %s27, 0
      %p279 = por %p277, %p278
      %p280 = scmp.ne.s32.totalorder %s266, %s267
      %p281 = scmp.eq.s32.totalorder %s28, 3
      %p282 = por %p280, %p281
      %p284 = scmp.ne.s32.totalorder %s267, %s283
      %p285 = scmp.eq.s32.totalorder %s28, 0
      %p286 = por %p284, %p285
      %p287 = scmp.le.s32.totalorder 1, %s22
      %p288 = scmp.lt.s32.totalorder %s22, 5
      %p289 = pnand %p287, %p288
      %p290 = pneg %p289
      // Predicated region
      $region9: #{_tsa_impl.1} parent=5 // pred_check
        _
      $region10: #{_tsa_impl.1} parent=5 // pred_check_branch
        %292 = sbr.rel (%p289) target = $region12
      $region11: #{_tsa_impl.1} parent=5 // pred_region
        %s293 = ssub.s32 %s22, 1
        // Predicated region
        $region13: #{_tsa_impl.1} parent=11 // pred_check
          %p294 = pneg %p83
        $region14: #{_tsa_impl.1} parent=11 // pred_check_branch
          %296 = sbr.rel (%p294) target = $region16
        $region15: #{_tsa_impl.1} parent=11 // pred_region
          _
        $region16: #{_tsa_impl.1} parent=11 // pred_fallthru
          _
        // Predicated region
        $region17: #{_tsa_impl.1} parent=11 // pred_check
          %p297 = pneg %p104
        $region18: #{_tsa_impl.1} parent=11 // pred_check_branch
          %299 = sbr.rel (%p297) target = $region20
        $region19: #{_tsa_impl.1} parent=11 // pred_region
          _
        $region20: #{_tsa_impl.1} parent=11 // pred_fallthru
          _
        // Predicated region
        $region21: #{_tsa_impl.1} parent=11 // pred_check
          %p300 = pneg %p125
        $region22: #{_tsa_impl.1} parent=11 // pred_check_branch
          %302 = sbr.rel (%p300) target = $region24
        $region23: #{_tsa_impl.1} parent=11 // pred_region
          _
        $region24: #{_tsa_impl.1} parent=11 // pred_fallthru
          _
        // Predicated region
        $region25: #{_tsa_impl.1} parent=11 // pred_check
          %p303 = pneg %p146
        $region26: #{_tsa_impl.1} parent=11 // pred_check_branch
          %305 = sbr.rel (%p303) target = $region28
        $region27: #{_tsa_impl.1} parent=11 // pred_region
          _
        $region28: #{_tsa_impl.1} parent=11 // pred_fallthru
          _
        // Predicated region
        $region29: #{_tsa_impl.1} parent=11 // pred_check
          %p306 = pneg %p167
        $region30: #{_tsa_impl.1} parent=11 // pred_check_branch
          %308 = sbr.rel (%p306) target = $region32
        $region31: #{_tsa_impl.1} parent=11 // pred_region
          _
        $region32: #{_tsa_impl.1} parent=11 // pred_fallthru
          _
        // Predicated region
        $region33: #{_tsa_impl.1} parent=11 // pred_check
          %p309 = pneg %p188
        $region34: #{_tsa_impl.1} parent=11 // pred_check_branch
          %311 = sbr.rel (%p309) target = $region36
        $region35: #{_tsa_impl.1} parent=11 // pred_region
          _
        $region36: #{_tsa_impl.1} parent=11 // pred_fallthru
          _
        // Predicated region
        $region37: #{_tsa_impl.1} parent=11 // pred_check
          %p312 = pneg %p209
        $region38: #{_tsa_impl.1} parent=11 // pred_check_branch
          %314 = sbr.rel (%p312) target = $region40
        $region39: #{_tsa_impl.1} parent=11 // pred_region
          _
        $region40: #{_tsa_impl.1} parent=11 // pred_fallthru
          _
        // Predicated region
        $region41: #{_tsa_impl.1} parent=11 // pred_check
          %p315 = pneg %p230
        $region42: #{_tsa_impl.1} parent=11 // pred_check_branch
          %317 = sbr.rel (%p315) target = $region44
        $region43: #{_tsa_impl.1} parent=11 // pred_region
          _
        $region44: #{_tsa_impl.1} parent=11 // pred_fallthru
          _
        // Predicated region
        $region45: #{_tsa_impl.1} parent=11 // pred_check
          %p318 = pneg %p251
        $region46: #{_tsa_impl.1} parent=11 // pred_check_branch
          %320 = sbr.rel (%p318) target = $region48
        $region47: #{_tsa_impl.1} parent=11 // pred_region
          _
        $region48: #{_tsa_impl.1} parent=11 // pred_fallthru
          _
      $region12: #{_tsa_impl.1} parent=5 // pred_fallthru
        _
      %p321 = scmp.lt.s32.totalorder %s22, 4
      // Predicated region
      $region49: #{_tsa_impl.1} parent=5 // pred_check
        %p322 = pneg %p321
      $region50: #{_tsa_impl.1} parent=5 // pred_check_branch
        %324 = sbr.rel (%p322) target = $region52
      $region51: #{_tsa_impl.1} parent=5 // pred_region
        // Predicated region
        $region53: #{_tsa_impl.1} parent=51 // pred_check
          %p325 = pneg %p56
        $region54: #{_tsa_impl.1} parent=51 // pred_check_branch
          %327 = sbr.rel (%p325) target = $region56
        $region55: #{_tsa_impl.1} parent=51 // pred_region
          %s328 = sand.u32 %s46, 1
          %s329 = scalar_lea.sflag [#allocation3], %s328
          %s330 = sand.u32 %s46, 1
          %s331 = smul.addr %s330, 64
          %s332 = scalar_lea.vmem [#allocation2], %s331
          %s334 = ssub.s32 1024, 1024
          %335 = vsyncadd %s329, %s334
          %s336 = smul.addr %s29, 16
          %s337 = sadd.s32 %s30, %s336
          %s338 = smul.addr %s337, 128
          %s339 = scalar_lea.hbm %s0, %s338
          %s340 = sshll.u32 %s332, 4
          %s341 = int_to_ptr.vmem [resolvable:$true] %s340
          %346 = dma.hbm_to_vmem [thread:$0]  %s339, 1024, %s341, %s329, 256, 128, 8
        $region56: #{_tsa_impl.1} parent=51 // pred_fallthru
          _
      $region52: #{_tsa_impl.1} parent=5 // pred_fallthru
        _
      %p347 = scmp.le.s32.totalorder 1, %s22
      %p348 = scmp.lt.s32.totalorder %s22, 5
      %p349 = pnand %p347, %p348
      %p350 = pneg %p349
      // Predicated region
      $region57: #{_tsa_impl.1} parent=5 // pred_check
        _
      $region58: #{_tsa_impl.1} parent=5 // pred_check_branch
        %352 = sbr.rel (%p349) target = $region60
      $region59: #{_tsa_impl.1} parent=5 // pred_region
        %s353 = ssub.s32 %s22, 1
        %s354 = sand.u32 %s49, 1
        %s355 = scalar_lea.sflag [#allocation3], %s354
        %s356 = sand.u32 %s49, 1
        %s357 = smul.addr %s356, 64
        %s358 = scalar_lea.vmem [#allocation2], %s357
        // Predicated region
        $region61: #{_tsa_impl.1} parent=59 // pred_check
          %p359 = pneg %p62
        $region62: #{_tsa_impl.1} parent=59 // pred_check_branch
          %361 = sbr.rel (%p359) target = $region64
        $region63: #{_tsa_impl.1} parent=59 // pred_region
          %362 = dma.done %s355, 1024
        $region64: #{_tsa_impl.1} parent=59 // pred_fallthru
          _
        %s363 = sand.u32 %s49, 1
        %s364 = scalar_lea.sflag [#allocation3], %s363
        %s365 = sand.u32 %s49, 1
        %s366 = smul.addr %s365, 64
        %s367 = scalar_lea.vmem [#allocation2], %s366
        %p368 = pneg %p62
        %p369 = pneg %p59
        %p370 = pneg %p83
        %p371 = pneg %p80
        %p372 = pneg %p104
        %p373 = pneg %p101
        %p374 = pneg %p125
        %p375 = pneg %p122
        %p376 = pneg %p146
        %p377 = pneg %p143
        %p378 = pneg %p167
        %p379 = pneg %p164
        %p380 = pneg %p188
        %p381 = pneg %p185
        %p382 = pneg %p209
        %p383 = pneg %p206
        %p384 = pneg %p230
        %p385 = pneg %p227
        %p386 = pneg %p251
        %p387 = pneg %p248
        %p388 = pneg %p279
        %p389 = pneg %p276
        %s390 = sand.u32 %s266, 1
        %s391 = scalar_lea.sflag [#allocation4], %s390
        %s392 = sand.u32 %s266, 1
        %s393 = smul.addr %s392, 64
        %s394 = scalar_lea.vmem [#allocation5], %s393
        %v395 = vld [vmem:[%s358] sm:$0xff]
        %v396 = vld [vmem:[%s358 + $0x8] sm:$0xff]
        %v397 = vld [vmem:[%s358 + $0x10] sm:$0xff]
        %v398 = vld [vmem:[%s358 + $0x18] sm:$0xff]
        %v399 = vld [vmem:[%s358 + $0x20] sm:$0xff]
        %v400 = vld [vmem:[%s358 + $0x28] sm:$0xff]
        %v401 = vld [vmem:[%s358 + $0x30] sm:$0xff]
        %v402 = vld [vmem:[%s358 + $0x38] sm:$0xff]
        %v403 = vcombine.low %v395, %v397
        %v404 = vcombine.high %v395, %v397
        %v406 = vunpack.c.l.s4 1983009808
        %v407 = vunpack.c.0.s8 %v406
        %v408 = vlaneseq
        %v409 = vshrl.u32 %v408, 7
        %v410 = vsub.s32 %v407, %v409
        %v411 = vrot.slane %v403, %v410
        %v413 = vunpack.c.l.s4 1983009808
        %v414 = vunpack.c.0.s8 %v413
        %v415 = vlaneseq
        %v416 = vshrl.u32 %v415, 7
        %v417 = vsub.s32 %v414, %v416
        %v418 = vrot.slane %v404, %v417
        %v419 = vcombine.low %v396, %v398
        %v420 = vcombine.high %v396, %v398
        %v422 = vunpack.c.l.s4 1983009808
        %v423 = vunpack.c.0.s8 %v422
        %v424 = vlaneseq
        %v425 = vshrl.u32 %v424, 7
        %v426 = vsub.s32 %v423, %v425
        %v427 = vrot.slane %v419, %v426
        %v429 = vunpack.c.l.s4 1983009808
        %v430 = vunpack.c.0.s8 %v429
        %v431 = vlaneseq
        %v432 = vshrl.u32 %v431, 7
        %v433 = vsub.s32 %v430, %v432
        %v434 = vrot.slane %v420, %v433
        %v435 = vcombine.low %v399, %v401
        %v436 = vcombine.high %v399, %v401
        %v438 = vunpack.c.l.s4 1983009808
        %v439 = vunpack.c.0.s8 %v438
        %v440 = vlaneseq
        %v441 = vshrl.u32 %v440, 7
        %v442 = vsub.s32 %v439, %v441
        %v443 = vrot.slane %v435, %v442
        %v445 = vunpack.c.l.s4 1983009808
        %v446 = vunpack.c.0.s8 %v445
        %v447 = vlaneseq
        %v448 = vshrl.u32 %v447, 7
        %v449 = vsub.s32 %v446, %v448
        %v450 = vrot.slane %v436, %v449
        %v451 = vcombine.low %v400, %v402
        %v452 = vcombine.high %v400, %v402
        %v454 = vunpack.c.l.s4 1983009808
        %v455 = vunpack.c.0.s8 %v454
        %v456 = vlaneseq
        %v457 = vshrl.u32 %v456, 7
        %v458 = vsub.s32 %v455, %v457
        %v459 = vrot.slane %v451, %v458
        %v461 = vunpack.c.l.s4 1983009808
        %v462 = vunpack.c.0.s8 %v461
        %v463 = vlaneseq
        %v464 = vshrl.u32 %v463, 7
        %v465 = vsub.s32 %v462, %v464
        %v466 = vrot.slane %v452, %v465
        %v467 = vcombine.low %v411, %v427
        %v468 = vcombine.high %v411, %v427
        %v470 = vunpack.c.l.s4 1934713408
        %v471 = vunpack.c.0.s8 %v470
        %v472 = vlaneseq
        %v473 = vshrl.u32 %v472, 7
        %v474 = vsub.s32 %v471, %v473
        %v475 = vrot.slane %v467, %v474
        %v477 = vunpack.c.l.s4 1934713408
        %v478 = vunpack.c.0.s8 %v477
        %v479 = vlaneseq
        %v480 = vshrl.u32 %v479, 7
        %v481 = vsub.s32 %v478, %v480
        %v482 = vrot.slane %v468, %v481
        %v483 = vcombine.low %v418, %v434
        %v484 = vcombine.high %v418, %v434
        %v486 = vunpack.c.l.s4 1934713408
        %v487 = vunpack.c.0.s8 %v486
        %v488 = vlaneseq
        %v489 = vshrl.u32 %v488, 7
        %v490 = vsub.s32 %v487, %v489
        %v491 = vrot.slane %v483, %v490
        %v493 = vunpack.c.l.s4 1934713408
        %v494 = vunpack.c.0.s8 %v493
        %v495 = vlaneseq
        %v496 = vshrl.u32 %v495, 7
        %v497 = vsub.s32 %v494, %v496
        %v498 = vrot.slane %v484, %v497
        %v499 = vcombine.low %v443, %v459
        %v500 = vcombine.high %v443, %v459
        %v502 = vunpack.c.l.s4 1934713408
        %v503 = vunpack.c.0.s8 %v502
        %v504 = vlaneseq
        %v505 = vshrl.u32 %v504, 7
        %v506 = vsub.s32 %v503, %v505
        %v507 = vrot.slane %v499, %v506
        %v509 = vunpack.c.l.s4 1934713408
        %v510 = vunpack.c.0.s8 %v509
        %v511 = vlaneseq
        %v512 = vshrl.u32 %v511, 7
        %v513 = vsub.s32 %v510, %v512
        %v514 = vrot.slane %v500, %v513
        %v515 = vcombine.low %v450, %v466
        %v516 = vcombine.high %v450, %v466
        %v518 = vunpack.c.l.s4 1934713408
        %v519 = vunpack.c.0.s8 %v518
        %v520 = vlaneseq
        %v521 = vshrl.u32 %v520, 7
        %v522 = vsub.s32 %v519, %v521
        %v523 = vrot.slane %v515, %v522
        %v525 = vunpack.c.l.s4 1934713408
        %v526 = vunpack.c.0.s8 %v525
        %v527 = vlaneseq
        %v528 = vshrl.u32 %v527, 7
        %v529 = vsub.s32 %v526, %v528
        %v530 = vrot.slane %v516, %v529
        %v531 = vcombine.low %v475, %v507
        %v532 = vcombine.high %v475, %v507
        %v533 = vcombine.low %v482, %v514
        %v534 = vcombine.high %v482, %v514
        %v535 = vcombine.low %v491, %v523
        %v536 = vcombine.high %v491, %v523
        %v537 = vcombine.low %v498, %v530
        %v538 = vcombine.high %v498, %v530
        %v539 = vld [vmem:[%s1] sm:$0xff]
        %v540 = vld [vmem:[%s1 + $0x8] sm:$0xff]
        %v541 = vld [vmem:[%s1 + $0x10] sm:$0xff]
        %v542 = vld [vmem:[%s1 + $0x18] sm:$0xff]
        %vm543 = vcmask 261120
        %v545 = vsel %vm543, %v531, 0
        %v548 = vsel %vm543, %v532, 0
        %v551 = vsel %vm543, %v533, 0
        %v554 = vsel %vm543, %v534, 0
        %v557 = vsel %vm543, %v535, 0
        %v560 = vsel %vm543, %v536, 0
        %v563 = vsel %vm543, %v537, 0
        %v566 = vsel %vm543, %v538, 0
        %568 = vmatprep.subr.mxu0 0.0
        %569 = vmatpush1.msra.mxu0 0.0
        %570 = vmatprep.subr.mxu0 0.0
        %571 = vmatpush1.msra.mxu0 0.0
        %572 = vmatprep.subr.mxu0 0.0
        %573 = vmatpush1.msra.mxu0 0.0
        %574 = vmatprep.subr.mxu0 0.0
        %575 = vmatpush1.msra.mxu0 0.0
        %576 = vmatprep.subr.mxu0 0.0
        %577 = vmatpush1.msra.mxu0 0.0
        %578 = vmatprep.subr.mxu0 0.0
        %579 = vmatpush1.msra.mxu0 0.0
        %580 = vmatprep.subr.mxu0 0.0
        %581 = vmatpush1.msra.mxu0 0.0
        %582 = vmatprep.subr.mxu0 0.0
        %583 = vmatpush1.msra.mxu0 0.0
        %584 = vmatprep.subr.mxu0 0.0
        %585 = vmatpush1.msra.mxu0 0.0
        %586 = vmatprep.subr.mxu0 0.0
        %587 = vmatpush1.msra.mxu0 0.0
        %588 = vmatprep.subr.mxu0 0.0
        %589 = vmatpush1.msra.mxu0 0.0
        %590 = vmatprep.subr.mxu0 0.0
        %591 = vmatpush1.msra.mxu0 0.0
        %592 = vmatprep.subr.mxu0 0.0
        %593 = vmatpush1.msra.mxu0 %v542
        %594 = vmatprep.subr.mxu0 0.0
        %595 = vmatpush1.msra.mxu0 %v541
        %596 = vmatprep.subr.mxu0 0.0
        %597 = vmatpush1.msra.mxu0 %v540
        %598 = vmatprep.subr.mxu0 0.0
        %599 = vmatpush1.msra.mxu0 %v539
        %600 = vmatprep.subr.mxu0 0.0
        %601 = vmatpush2.msra.mxu0 0.0
        %602 = vmatprep.subr.mxu0 0.0
        %603 = vmatpush2.msra.mxu0 0.0
        %604 = vmatprep.subr.mxu0 0.0
        %605 = vmatpush2.msra.mxu0 0.0
        %606 = vmatprep.subr.mxu0 0.0
        %607 = vmatpush2.msra.mxu0 0.0
        %608 = vmatprep.subr.mxu0 0.0
        %609 = vmatpush2.msra.mxu0 0.0
        %610 = vmatprep.subr.mxu0 0.0
        %611 = vmatpush2.msra.mxu0 0.0
        %612 = vmatprep.subr.mxu0 0.0
        %613 = vmatpush2.msra.mxu0 0.0
        %614 = vmatprep.subr.mxu0 0.0
        %615 = vmatpush2.msra.mxu0 0.0
        %616 = vmatprep.subr.mxu0 0.0
        %617 = vmatpush2.msra.mxu0 0.0
        %618 = vmatprep.subr.mxu0 0.0
        %619 = vmatpush2.msra.mxu0 0.0
        %620 = vmatprep.subr.mxu0 0.0
        %621 = vmatpush2.msra.mxu0 0.0
        %622 = vmatprep.subr.mxu0 0.0
        %623 = vmatpush2.msra.mxu0 0.0
        %624 = vmatprep.subr.mxu0 0.0
        %625 = vmatpush2.msra.mxu0 0.0
        %626 = vmatprep.subr.mxu0 0.0
        %627 = vmatpush2.msra.mxu0 0.0
        %628 = vmatprep.subr.mxu0 0.0
        %629 = vmatpush2.msra.mxu0 0.0
        %630 = vmatprep.subr.mxu0 0.0
        %631 = vmatpush2.msra.mxu0 0.0
        %632 = vmatprep.mubr.f32.mxu0 0.0
        %633 = vmatmul.mubr.f32.gmra.mxu0 %v545
        %v634 = vpop.f32.mrf.mxu0
        %v635 = vadd.f32 0.0, %v634
        %v636 = vpop.f32.mrf.mxu0
        %637 = vmatprep.mubr.f32.mxu0 0.0
        %638 = vmatmul.mubr.f32.gmra.mxu0 %v548
        %v639 = vpop.f32.mrf.mxu0
        %v640 = vadd.f32 0.0, %v639
        %v641 = vpop.f32.mrf.mxu0
        %642 = vmatprep.mubr.f32.mxu0 0.0
        %643 = vmatmul.mubr.f32.gmra.mxu0 %v551
        %v644 = vpop.f32.mrf.mxu0
        %v645 = vadd.f32 0.0, %v644
        %v646 = vpop.f32.mrf.mxu0
        %647 = vmatprep.mubr.f32.mxu0 0.0
        %648 = vmatmul.mubr.f32.gmra.mxu0 %v554
        %v649 = vpop.f32.mrf.mxu0
        %v650 = vadd.f32 0.0, %v649
        %v651 = vpop.f32.mrf.mxu0
        %652 = vmatprep.mubr.f32.mxu0 0.0
        %653 = vmatmul.mubr.f32.gmra.mxu0 %v557
        %v654 = vpop.f32.mrf.mxu0
        %v655 = vadd.f32 0.0, %v654
        %v656 = vpop.f32.mrf.mxu0
        %657 = vmatprep.mubr.f32.mxu0 0.0
        %658 = vmatmul.mubr.f32.gmra.mxu0 %v560
        %v659 = vpop.f32.mrf.mxu0
        %v660 = vadd.f32 0.0, %v659
        %v661 = vpop.f32.mrf.mxu0
        %662 = vmatprep.mubr.f32.mxu0 0.0
        %663 = vmatmul.mubr.f32.gmra.mxu0 %v563
        %v664 = vpop.f32.mrf.mxu0
        %v665 = vadd.f32 0.0, %v664
        %v666 = vpop.f32.mrf.mxu0
        %667 = vmatprep.mubr.f32.mxu0 0.0
        %668 = vmatmul.mubr.f32.gmra.mxu0 %v566
        %v669 = vpop.f32.mrf.mxu0
        %v670 = vadd.f32 0.0, %v669
        %v671 = vpop.f32.mrf.mxu0
        %672 = vdwg.mxu0
        %v673 = vlaneseq
        %v674 = vshrl.u32 %v673, 7
        %v675 = vlaneseq
        %v676 = vand.u32 %v675, 127
        %vm677 = vcmp.gt.s32.totalorder %v676, %v674
        %v678 = vsel %vm677, -inf, 0.0
        %680 = vrot.lane.b32.xlu0 %v635, 96
        %v681 = vpop.permute.xlu0 %680
        %vm682 = vcmask 64512
        %v683 = vsel %vm682, %v635, 0
        %v685 = vsel %vm682, %v681, 0
        %687 = vmatprep.subr.mxu0 0.0
        %688 = vmatpush1.xpose.msra.mxu0 0.0
        %689 = vmatprep.subr.mxu0 0.0
        %690 = vmatpush1.xpose.msra.mxu0 0.0
        %691 = vmatprep.subr.mxu0 0.0
        %692 = vmatpush1.xpose.msra.mxu0 0.0
        %693 = vmatprep.subr.mxu0 0.0
        %694 = vmatpush1.xpose.msra.mxu0 0.0
        %695 = vmatprep.subr.mxu0 0.0
        %696 = vmatpush1.xpose.msra.mxu0 0.0
        %697 = vmatprep.subr.mxu0 0.0
        %698 = vmatpush1.xpose.msra.mxu0 0.0
        %699 = vmatprep.subr.mxu0 0.0
        %700 = vmatpush1.xpose.msra.mxu0 0.0
        %701 = vmatprep.subr.mxu0 0.0
        %702 = vmatpush1.xpose.msra.mxu0 0.0
        %703 = vmatprep.subr.mxu0 0.0
        %704 = vmatpush1.xpose.msra.mxu0 0.0
        %705 = vmatprep.subr.mxu0 0.0
        %706 = vmatpush1.xpose.msra.mxu0 0.0
        %707 = vmatprep.subr.mxu0 0.0
        %708 = vmatpush1.xpose.msra.mxu0 0.0
        %709 = vmatprep.subr.mxu0 0.0
        %710 = vmatpush1.xpose.msra.mxu0 0.0
        %711 = vmatprep.subr.mxu0 0.0
        %712 = vmatpush1.xpose.msra.mxu0 0.0
        %713 = vmatprep.subr.mxu0 0.0
        %714 = vmatpush1.xpose.msra.mxu0 0.0
        %715 = vmatprep.subr.mxu0 0.0
        %716 = vmatpush1.xpose.msra.mxu0 0.0
        %717 = vmatprep.subr.mxu0 0.0
        %718 = vmatpush1.xpose.msra.mxu0 %v685
        %719 = vmatprep.subr.mxu0 0.0
        %720 = vmatpush2.xpose.msra.mxu0 0.0
        %721 = vmatprep.subr.mxu0 0.0
        %722 = vmatpush2.xpose.msra.mxu0 0.0
        %723 = vmatprep.subr.mxu0 0.0
        %724 = vmatpush2.xpose.msra.mxu0 0.0
        %725 = vmatprep.subr.mxu0 0.0
        %726 = vmatpush2.xpose.msra.mxu0 0.0
        %727 = vmatprep.subr.mxu0 0.0
        %728 = vmatpush2.xpose.msra.mxu0 0.0
        %729 = vmatprep.subr.mxu0 0.0
        %730 = vmatpush2.xpose.msra.mxu0 0.0
        %731 = vmatprep.subr.mxu0 0.0
        %732 = vmatpush2.xpose.msra.mxu0 0.0
        %733 = vmatprep.subr.mxu0 0.0
        %734 = vmatpush2.xpose.msra.mxu0 0.0
        %735 = vmatprep.subr.mxu0 0.0
        %736 = vmatpush2.xpose.msra.mxu0 0.0
        %737 = vmatprep.subr.mxu0 0.0
        %738 = vmatpush2.xpose.msra.mxu0 0.0
        %739 = vmatprep.subr.mxu0 0.0
        %740 = vmatpush2.xpose.msra.mxu0 0.0
        %741 = vmatprep.subr.mxu0 0.0
        %742 = vmatpush2.xpose.msra.mxu0 0.0
        %743 = vmatprep.subr.mxu0 0.0
        %744 = vmatpush2.xpose.msra.mxu0 0.0
        %745 = vmatprep.subr.mxu0 0.0
        %746 = vmatpush2.xpose.msra.mxu0 0.0
        %747 = vmatprep.subr.mxu0 0.0
        %748 = vmatpush2.xpose.msra.mxu0 0.0
        %749 = vmatprep.subr.mxu0 0.0
        %750 = vmatpush2.xpose.msra.mxu0 0.0
        %751 = vmatprep.mubr.f32.mxu0 0.0
        %752 = vmatmul.mubr.f32.gmra.mxu0 %v683
        %v753 = vpop.f32.mrf.mxu0
        %v754 = vadd.f32 0.0, %v753
        %v755 = vpop.f32.mrf.mxu0
        %756 = vdwg.mxu0
        %758 = vrot.lane.b32.xlu0 %v640, 96
        %v759 = vpop.permute.xlu0 %758
        %v760 = vsel %vm682, %v640, 0
        %v762 = vsel %vm682, %v759, 0
        %764 = vmatprep.subr.mxu0 0.0
        %765 = vmatpush1.xpose.msra.mxu0 0.0
        %766 = vmatprep.subr.mxu0 0.0
        %767 = vmatpush1.xpose.msra.mxu0 0.0
        %768 = vmatprep.subr.mxu0 0.0
        %769 = vmatpush1.xpose.msra.mxu0 0.0
        %770 = vmatprep.subr.mxu0 0.0
        %771 = vmatpush1.xpose.msra.mxu0 0.0
        %772 = vmatprep.subr.mxu0 0.0
        %773 = vmatpush1.xpose.msra.mxu0 0.0
        %774 = vmatprep.subr.mxu0 0.0
        %775 = vmatpush1.xpose.msra.mxu0 0.0
        %776 = vmatprep.subr.mxu0 0.0
        %777 = vmatpush1.xpose.msra.mxu0 0.0
        %778 = vmatprep.subr.mxu0 0.0
        %779 = vmatpush1.xpose.msra.mxu0 0.0
        %780 = vmatprep.subr.mxu0 0.0
        %781 = vmatpush1.xpose.msra.mxu0 0.0
        %782 = vmatprep.subr.mxu0 0.0
        %783 = vmatpush1.xpose.msra.mxu0 0.0
        %784 = vmatprep.subr.mxu0 0.0
        %785 = vmatpush1.xpose.msra.mxu0 0.0
        %786 = vmatprep.subr.mxu0 0.0
        %787 = vmatpush1.xpose.msra.mxu0 0.0
        %788 = vmatprep.subr.mxu0 0.0
        %789 = vmatpush1.xpose.msra.mxu0 0.0
        %790 = vmatprep.subr.mxu0 0.0
        %791 = vmatpush1.xpose.msra.mxu0 0.0
        %792 = vmatprep.subr.mxu0 0.0
        %793 = vmatpush1.xpose.msra.mxu0 0.0
        %794 = vmatprep.subr.mxu0 0.0
        %795 = vmatpush1.xpose.msra.mxu0 %v762
        %796 = vmatprep.subr.mxu0 0.0
        %797 = vmatpush2.xpose.msra.mxu0 0.0
        %798 = vmatprep.subr.mxu0 0.0
        %799 = vmatpush2.xpose.msra.mxu0 0.0
        %800 = vmatprep.subr.mxu0 0.0
        %801 = vmatpush2.xpose.msra.mxu0 0.0
        %802 = vmatprep.subr.mxu0 0.0
        %803 = vmatpush2.xpose.msra.mxu0 0.0
        %804 = vmatprep.subr.mxu0 0.0
        %805 = vmatpush2.xpose.msra.mxu0 0.0
        %806 = vmatprep.subr.mxu0 0.0
        %807 = vmatpush2.xpose.msra.mxu0 0.0
        %808 = vmatprep.subr.mxu0 0.0
        %809 = vmatpush2.xpose.msra.mxu0 0.0
        %810 = vmatprep.subr.mxu0 0.0
        %811 = vmatpush2.xpose.msra.mxu0 0.0
        %812 = vmatprep.subr.mxu0 0.0
        %813 = vmatpush2.xpose.msra.mxu0 0.0
        %814 = vmatprep.subr.mxu0 0.0
        %815 = vmatpush2.xpose.msra.mxu0 0.0
        %816 = vmatprep.subr.mxu0 0.0
        %817 = vmatpush2.xpose.msra.mxu0 0.0
        %818 = vmatprep.subr.mxu0 0.0
        %819 = vmatpush2.xpose.msra.mxu0 0.0
        %820 = vmatprep.subr.mxu0 0.0
        %821 = vmatpush2.xpose.msra.mxu0 0.0
        %822 = vmatprep.subr.mxu0 0.0
        %823 = vmatpush2.xpose.msra.mxu0 0.0
        %824 = vmatprep.subr.mxu0 0.0
        %825 = vmatpush2.xpose.msra.mxu0 0.0
        %826 = vmatprep.subr.mxu0 0.0
        %827 = vmatpush2.xpose.msra.mxu0 0.0
        %828 = vmatprep.mubr.f32.mxu0 0.0
        %829 = vmatmul.mubr.f32.gmra.mxu0 %v760
        %v830 = vpop.f32.mrf.mxu0
        %v831 = vadd.f32 0.0, %v830
        %v832 = vpop.f32.mrf.mxu0
        %833 = vdwg.mxu0
        %835 = vrot.lane.b32.xlu0 %v645, 96
        %v836 = vpop.permute.xlu0 %835
        %v837 = vsel %vm682, %v645, 0
        %v839 = vsel %vm682, %v836, 0
        %841 = vmatprep.subr.mxu0 0.0
        %842 = vmatpush1.xpose.msra.mxu0 0.0
        %843 = vmatprep.subr.mxu0 0.0
        %844 = vmatpush1.xpose.msra.mxu0 0.0
        %845 = vmatprep.subr.mxu0 0.0
        %846 = vmatpush1.xpose.msra.mxu0 0.0
        %847 = vmatprep.subr.mxu0 0.0
        %848 = vmatpush1.xpose.msra.mxu0 0.0
        %849 = vmatprep.subr.mxu0 0.0
        %850 = vmatpush1.xpose.msra.mxu0 0.0
        %851 = vmatprep.subr.mxu0 0.0
        %852 = vmatpush1.xpose.msra.mxu0 0.0
        %853 = vmatprep.subr.mxu0 0.0
        %854 = vmatpush1.xpose.msra.mxu0 0.0
        %855 = vmatprep.subr.mxu0 0.0
        %856 = vmatpush1.xpose.msra.mxu0 0.0
        %857 = vmatprep.subr.mxu0 0.0
        %858 = vmatpush1.xpose.msra.mxu0 0.0
        %859 = vmatprep.subr.mxu0 0.0
        %860 = vmatpush1.xpose.msra.mxu0 0.0
        %861 = vmatprep.subr.mxu0 0.0
        %862 = vmatpush1.xpose.msra.mxu0 0.0
        %863 = vmatprep.subr.mxu0 0.0
        %864 = vmatpush1.xpose.msra.mxu0 0.0
        %865 = vmatprep.subr.mxu0 0.0
        %866 = vmatpush1.xpose.msra.mxu0 0.0
        %867 = vmatprep.subr.mxu0 0.0
        %868 = vmatpush1.xpose.msra.mxu0 0.0
        %869 = vmatprep.subr.mxu0 0.0
        %870 = vmatpush1.xpose.msra.mxu0 0.0
        %871 = vmatprep.subr.mxu0 0.0
        %872 = vmatpush1.xpose.msra.mxu0 %v839
        %873 = vmatprep.subr.mxu0 0.0
        %874 = vmatpush2.xpose.msra.mxu0 0.0
        %875 = vmatprep.subr.mxu0 0.0
        %876 = vmatpush2.xpose.msra.mxu0 0.0
        %877 = vmatprep.subr.mxu0 0.0
        %878 = vmatpush2.xpose.msra.mxu0 0.0
        %879 = vmatprep.subr.mxu0 0.0
        %880 = vmatpush2.xpose.msra.mxu0 0.0
        %881 = vmatprep.subr.mxu0 0.0
        %882 = vmatpush2.xpose.msra.mxu0 0.0
        %883 = vmatprep.subr.mxu0 0.0
        %884 = vmatpush2.xpose.msra.mxu0 0.0
        %885 = vmatprep.subr.mxu0 0.0
        %886 = vmatpush2.xpose.msra.mxu0 0.0
        %887 = vmatprep.subr.mxu0 0.0
        %888 = vmatpush2.xpose.msra.mxu0 0.0
        %889 = vmatprep.subr.mxu0 0.0
        %890 = vmatpush2.xpose.msra.mxu0 0.0
        %891 = vmatprep.subr.mxu0 0.0
        %892 = vmatpush2.xpose.msra.mxu0 0.0
        %893 = vmatprep.subr.mxu0 0.0
        %894 = vmatpush2.xpose.msra.mxu0 0.0
        %895 = vmatprep.subr.mxu0 0.0
        %896 = vmatpush2.xpose.msra.mxu0 0.0
        %897 = vmatprep.subr.mxu0 0.0
        %898 = vmatpush2.xpose.msra.mxu0 0.0
        %899 = vmatprep.subr.mxu0 0.0
        %900 = vmatpush2.xpose.msra.mxu0 0.0
        %901 = vmatprep.subr.mxu0 0.0
        %902 = vmatpush2.xpose.msra.mxu0 0.0
        %903 = vmatprep.subr.mxu0 0.0
        %904 = vmatpush2.xpose.msra.mxu0 0.0
        %905 = vmatprep.mubr.f32.mxu0 0.0
        %906 = vmatmul.mubr.f32.gmra.mxu0 %v837
        %v907 = vpop.f32.mrf.mxu0
        %v908 = vadd.f32 0.0, %v907
        %v909 = vpop.f32.mrf.mxu0
        %910 = vdwg.mxu0
        %912 = vrot.lane.b32.xlu0 %v650, 96
        %v913 = vpop.permute.xlu0 %912
        %v914 = vsel %vm682, %v650, 0
        %v916 = vsel %vm682, %v913, 0
        %918 = vmatprep.subr.mxu0 0.0
        %919 = vmatpush1.xpose.msra.mxu0 0.0
        %920 = vmatprep.subr.mxu0 0.0
        %921 = vmatpush1.xpose.msra.mxu0 0.0
        %922 = vmatprep.subr.mxu0 0.0
        %923 = vmatpush1.xpose.msra.mxu0 0.0
        %924 = vmatprep.subr.mxu0 0.0
        %925 = vmatpush1.xpose.msra.mxu0 0.0
        %926 = vmatprep.subr.mxu0 0.0
        %927 = vmatpush1.xpose.msra.mxu0 0.0
        %928 = vmatprep.subr.mxu0 0.0
        %929 = vmatpush1.xpose.msra.mxu0 0.0
        %930 = vmatprep.subr.mxu0 0.0
        %931 = vmatpush1.xpose.msra.mxu0 0.0
        %932 = vmatprep.subr.mxu0 0.0
        %933 = vmatpush1.xpose.msra.mxu0 0.0
        %934 = vmatprep.subr.mxu0 0.0
        %935 = vmatpush1.xpose.msra.mxu0 0.0
        %936 = vmatprep.subr.mxu0 0.0
        %937 = vmatpush1.xpose.msra.mxu0 0.0
        %938 = vmatprep.subr.mxu0 0.0
        %939 = vmatpush1.xpose.msra.mxu0 0.0
        %940 = vmatprep.subr.mxu0 0.0
        %941 = vmatpush1.xpose.msra.mxu0 0.0
        %942 = vmatprep.subr.mxu0 0.0
        %943 = vmatpush1.xpose.msra.mxu0 0.0
        %944 = vmatprep.subr.mxu0 0.0
        %945 = vmatpush1.xpose.msra.mxu0 0.0
        %946 = vmatprep.subr.mxu0 0.0
        %947 = vmatpush1.xpose.msra.mxu0 0.0
        %948 = vmatprep.subr.mxu0 0.0
        %949 = vmatpush1.xpose.msra.mxu0 %v916
        %950 = vmatprep.subr.mxu0 0.0
        %951 = vmatpush2.xpose.msra.mxu0 0.0
        %952 = vmatprep.subr.mxu0 0.0
        %953 = vmatpush2.xpose.msra.mxu0 0.0
        %954 = vmatprep.subr.mxu0 0.0
        %955 = vmatpush2.xpose.msra.mxu0 0.0
        %956 = vmatprep.subr.mxu0 0.0
        %957 = vmatpush2.xpose.msra.mxu0 0.0
        %958 = vmatprep.subr.mxu0 0.0
        %959 = vmatpush2.xpose.msra.mxu0 0.0
        %960 = vmatprep.subr.mxu0 0.0
        %961 = vmatpush2.xpose.msra.mxu0 0.0
        %962 = vmatprep.subr.mxu0 0.0
        %963 = vmatpush2.xpose.msra.mxu0 0.0
        %964 = vmatprep.subr.mxu0 0.0
        %965 = vmatpush2.xpose.msra.mxu0 0.0
        %966 = vmatprep.subr.mxu0 0.0
        %967 = vmatpush2.xpose.msra.mxu0 0.0
        %968 = vmatprep.subr.mxu0 0.0
        %969 = vmatpush2.xpose.msra.mxu0 0.0
        %970 = vmatprep.subr.mxu0 0.0
        %971 = vmatpush2.xpose.msra.mxu0 0.0
        %972 = vmatprep.subr.mxu0 0.0
        %973 = vmatpush2.xpose.msra.mxu0 0.0
        %974 = vmatprep.subr.mxu0 0.0
        %975 = vmatpush2.xpose.msra.mxu0 0.0
        %976 = vmatprep.subr.mxu0 0.0
        %977 = vmatpush2.xpose.msra.mxu0 0.0
        %978 = vmatprep.subr.mxu0 0.0
        %979 = vmatpush2.xpose.msra.mxu0 0.0
        %980 = vmatprep.subr.mxu0 0.0
        %981 = vmatpush2.xpose.msra.mxu0 0.0
        %982 = vmatprep.mubr.f32.mxu0 0.0
        %983 = vmatmul.mubr.f32.gmra.mxu0 %v914
        %v984 = vpop.f32.mrf.mxu0
        %v985 = vadd.f32 0.0, %v984
        %v986 = vpop.f32.mrf.mxu0
        %987 = vdwg.mxu0
        %989 = vrot.lane.b32.xlu0 %v655, 96
        %v990 = vpop.permute.xlu0 %989
        %v991 = vsel %vm682, %v655, 0
        %v993 = vsel %vm682, %v990, 0
        %995 = vmatprep.subr.mxu0 0.0
        %996 = vmatpush1.xpose.msra.mxu0 0.0
        %997 = vmatprep.subr.mxu0 0.0
        %998 = vmatpush1.xpose.msra.mxu0 0.0
        %999 = vmatprep.subr.mxu0 0.0
        %1000 = vmatpush1.xpose.msra.mxu0 0.0
        %1001 = vmatprep.subr.mxu0 0.0
        %1002 = vmatpush1.xpose.msra.mxu0 0.0
        %1003 = vmatprep.subr.mxu0 0.0
        %1004 = vmatpush1.xpose.msra.mxu0 0.0
        %1005 = vmatprep.subr.mxu0 0.0
        %1006 = vmatpush1.xpose.msra.mxu0 0.0
        %1007 = vmatprep.subr.mxu0 0.0
        %1008 = vmatpush1.xpose.msra.mxu0 0.0
        %1009 = vmatprep.subr.mxu0 0.0
        %1010 = vmatpush1.xpose.msra.mxu0 0.0
        %1011 = vmatprep.subr.mxu0 0.0
        %1012 = vmatpush1.xpose.msra.mxu0 0.0
        %1013 = vmatprep.subr.mxu0 0.0
        %1014 = vmatpush1.xpose.msra.mxu0 0.0
        %1015 = vmatprep.subr.mxu0 0.0
        %1016 = vmatpush1.xpose.msra.mxu0 0.0
        %1017 = vmatprep.subr.mxu0 0.0
        %1018 = vmatpush1.xpose.msra.mxu0 0.0
        %1019 = vmatprep.subr.mxu0 0.0
        %1020 = vmatpush1.xpose.msra.mxu0 0.0
        %1021 = vmatprep.subr.mxu0 0.0
        %1022 = vmatpush1.xpose.msra.mxu0 0.0
        %1023 = vmatprep.subr.mxu0 0.0
        %1024 = vmatpush1.xpose.msra.mxu0 0.0
        %1025 = vmatprep.subr.mxu0 0.0
        %1026 = vmatpush1.xpose.msra.mxu0 %v993
        %1027 = vmatprep.subr.mxu0 0.0
        %1028 = vmatpush2.xpose.msra.mxu0 0.0
        %1029 = vmatprep.subr.mxu0 0.0
        %1030 = vmatpush2.xpose.msra.mxu0 0.0
        %1031 = vmatprep.subr.mxu0 0.0
        %1032 = vmatpush2.xpose.msra.mxu0 0.0
        %1033 = vmatprep.subr.mxu0 0.0
        %1034 = vmatpush2.xpose.msra.mxu0 0.0
        %1035 = vmatprep.subr.mxu0 0.0
        %1036 = vmatpush2.xpose.msra.mxu0 0.0
        %1037 = vmatprep.subr.mxu0 0.0
        %1038 = vmatpush2.xpose.msra.mxu0 0.0
        %1039 = vmatprep.subr.mxu0 0.0
        %1040 = vmatpush2.xpose.msra.mxu0 0.0
        %1041 = vmatprep.subr.mxu0 0.0
        %1042 = vmatpush2.xpose.msra.mxu0 0.0
        %1043 = vmatprep.subr.mxu0 0.0
        %1044 = vmatpush2.xpose.msra.mxu0 0.0
        %1045 = vmatprep.subr.mxu0 0.0
        %1046 = vmatpush2.xpose.msra.mxu0 0.0
        %1047 = vmatprep.subr.mxu0 0.0
        %1048 = vmatpush2.xpose.msra.mxu0 0.0
        %1049 = vmatprep.subr.mxu0 0.0
        %1050 = vmatpush2.xpose.msra.mxu0 0.0
        %1051 = vmatprep.subr.mxu0 0.0
        %1052 = vmatpush2.xpose.msra.mxu0 0.0
        %1053 = vmatprep.subr.mxu0 0.0
        %1054 = vmatpush2.xpose.msra.mxu0 0.0
        %1055 = vmatprep.subr.mxu0 0.0
        %1056 = vmatpush2.xpose.msra.mxu0 0.0
        %1057 = vmatprep.subr.mxu0 0.0
        %1058 = vmatpush2.xpose.msra.mxu0 0.0
        %1059 = vmatprep.mubr.f32.mxu0 0.0
        %1060 = vmatmul.mubr.f32.gmra.mxu0 %v991
        %v1061 = vpop.f32.mrf.mxu0
        %v1062 = vadd.f32 0.0, %v1061
        %v1063 = vpop.f32.mrf.mxu0
        %1064 = vdwg.mxu0
        %1066 = vrot.lane.b32.xlu0 %v660, 96
        %v1067 = vpop.permute.xlu0 %1066
        %v1068 = vsel %vm682, %v660, 0
        %v1070 = vsel %vm682, %v1067, 0
        %1072 = vmatprep.subr.mxu0 0.0
        %1073 = vmatpush1.xpose.msra.mxu0 0.0
        %1074 = vmatprep.subr.mxu0 0.0
        %1075 = vmatpush1.xpose.msra.mxu0 0.0
        %1076 = vmatprep.subr.mxu0 0.0
        %1077 = vmatpush1.xpose.msra.mxu0 0.0
        %1078 = vmatprep.subr.mxu0 0.0
        %1079 = vmatpush1.xpose.msra.mxu0 0.0
        %1080 = vmatprep.subr.mxu0 0.0
        %1081 = vmatpush1.xpose.msra.mxu0 0.0
        %1082 = vmatprep.subr.mxu0 0.0
        %1083 = vmatpush1.xpose.msra.mxu0 0.0
        %1084 = vmatprep.subr.mxu0 0.0
        %1085 = vmatpush1.xpose.msra.mxu0 0.0
        %1086 = vmatprep.subr.mxu0 0.0
        %1087 = vmatpush1.xpose.msra.mxu0 0.0
        %1088 = vmatprep.subr.mxu0 0.0
        %1089 = vmatpush1.xpose.msra.mxu0 0.0
        %1090 = vmatprep.subr.mxu0 0.0
        %1091 = vmatpush1.xpose.msra.mxu0 0.0
        %1092 = vmatprep.subr.mxu0 0.0
        %1093 = vmatpush1.xpose.msra.mxu0 0.0
        %1094 = vmatprep.subr.mxu0 0.0
        %1095 = vmatpush1.xpose.msra.mxu0 0.0
        %1096 = vmatprep.subr.mxu0 0.0
        %1097 = vmatpush1.xpose.msra.mxu0 0.0
        %1098 = vmatprep.subr.mxu0 0.0
        %1099 = vmatpush1.xpose.msra.mxu0 0.0
        %1100 = vmatprep.subr.mxu0 0.0
        %1101 = vmatpush1.xpose.msra.mxu0 0.0
        %1102 = vmatprep.subr.mxu0 0.0
        %1103 = vmatpush1.xpose.msra.mxu0 %v1070
        %1104 = vmatprep.subr.mxu0 0.0
        %1105 = vmatpush2.xpose.msra.mxu0 0.0
        %1106 = vmatprep.subr.mxu0 0.0
        %1107 = vmatpush2.xpose.msra.mxu0 0.0
        %1108 = vmatprep.subr.mxu0 0.0
        %1109 = vmatpush2.xpose.msra.mxu0 0.0
        %1110 = vmatprep.subr.mxu0 0.0
        %1111 = vmatpush2.xpose.msra.mxu0 0.0
        %1112 = vmatprep.subr.mxu0 0.0
        %1113 = vmatpush2.xpose.msra.mxu0 0.0
        %1114 = vmatprep.subr.mxu0 0.0
        %1115 = vmatpush2.xpose.msra.mxu0 0.0
        %1116 = vmatprep.subr.mxu0 0.0
        %1117 = vmatpush2.xpose.msra.mxu0 0.0
        %1118 = vmatprep.subr.mxu0 0.0
        %1119 = vmatpush2.xpose.msra.mxu0 0.0
        %1120 = vmatprep.subr.mxu0 0.0
        %1121 = vmatpush2.xpose.msra.mxu0 0.0
        %1122 = vmatprep.subr.mxu0 0.0
        %1123 = vmatpush2.xpose.msra.mxu0 0.0
        %1124 = vmatprep.subr.mxu0 0.0
        %1125 = vmatpush2.xpose.msra.mxu0 0.0
        %1126 = vmatprep.subr.mxu0 0.0
        %1127 = vmatpush2.xpose.msra.mxu0 0.0
        %1128 = vmatprep.subr.mxu0 0.0
        %1129 = vmatpush2.xpose.msra.mxu0 0.0
        %1130 = vmatprep.subr.mxu0 0.0
        %1131 = vmatpush2.xpose.msra.mxu0 0.0
        %1132 = vmatprep.subr.mxu0 0.0
        %1133 = vmatpush2.xpose.msra.mxu0 0.0
        %1134 = vmatprep.subr.mxu0 0.0
        %1135 = vmatpush2.xpose.msra.mxu0 0.0
        %1136 = vmatprep.mubr.f32.mxu0 0.0
        %1137 = vmatmul.mubr.f32.gmra.mxu0 %v1068
        %v1138 = vpop.f32.mrf.mxu0
        %v1139 = vadd.f32 0.0, %v1138
        %v1140 = vpop.f32.mrf.mxu0
        %1141 = vdwg.mxu0
        %1143 = vrot.lane.b32.xlu0 %v665, 96
        %v1144 = vpop.permute.xlu0 %1143
        %v1145 = vsel %vm682, %v665, 0
        %v1147 = vsel %vm682, %v1144, 0
        %1149 = vmatprep.subr.mxu0 0.0
        %1150 = vmatpush1.xpose.msra.mxu0 0.0
        %1151 = vmatprep.subr.mxu0 0.0
        %1152 = vmatpush1.xpose.msra.mxu0 0.0
        %1153 = vmatprep.subr.mxu0 0.0
        %1154 = vmatpush1.xpose.msra.mxu0 0.0
        %1155 = vmatprep.subr.mxu0 0.0
        %1156 = vmatpush1.xpose.msra.mxu0 0.0
        %1157 = vmatprep.subr.mxu0 0.0
        %1158 = vmatpush1.xpose.msra.mxu0 0.0
        %1159 = vmatprep.subr.mxu0 0.0
        %1160 = vmatpush1.xpose.msra.mxu0 0.0
        %1161 = vmatprep.subr.mxu0 0.0
        %1162 = vmatpush1.xpose.msra.mxu0 0.0
        %1163 = vmatprep.subr.mxu0 0.0
        %1164 = vmatpush1.xpose.msra.mxu0 0.0
        %1165 = vmatprep.subr.mxu0 0.0
        %1166 = vmatpush1.xpose.msra.mxu0 0.0
        %1167 = vmatprep.subr.mxu0 0.0
        %1168 = vmatpush1.xpose.msra.mxu0 0.0
        %1169 = vmatprep.subr.mxu0 0.0
        %1170 = vmatpush1.xpose.msra.mxu0 0.0
        %1171 = vmatprep.subr.mxu0 0.0
        %1172 = vmatpush1.xpose.msra.mxu0 0.0
        %1173 = vmatprep.subr.mxu0 0.0
        %1174 = vmatpush1.xpose.msra.mxu0 0.0
        %1175 = vmatprep.subr.mxu0 0.0
        %1176 = vmatpush1.xpose.msra.mxu0 0.0
        %1177 = vmatprep.subr.mxu0 0.0
        %1178 = vmatpush1.xpose.msra.mxu0 0.0
        %1179 = vmatprep.subr.mxu0 0.0
        %1180 = vmatpush1.xpose.msra.mxu0 %v1147
        %1181 = vmatprep.subr.mxu0 0.0
        %1182 = vmatpush2.xpose.msra.mxu0 0.0
        %1183 = vmatprep.subr.mxu0 0.0
        %1184 = vmatpush2.xpose.msra.mxu0 0.0
        %1185 = vmatprep.subr.mxu0 0.0
        %1186 = vmatpush2.xpose.msra.mxu0 0.0
        %1187 = vmatprep.subr.mxu0 0.0
        %1188 = vmatpush2.xpose.msra.mxu0 0.0
        %1189 = vmatprep.subr.mxu0 0.0
        %1190 = vmatpush2.xpose.msra.mxu0 0.0
        %1191 = vmatprep.subr.mxu0 0.0
        %1192 = vmatpush2.xpose.msra.mxu0 0.0
        %1193 = vmatprep.subr.mxu0 0.0
        %1194 = vmatpush2.xpose.msra.mxu0 0.0
        %1195 = vmatprep.subr.mxu0 0.0
        %1196 = vmatpush2.xpose.msra.mxu0 0.0
        %1197 = vmatprep.subr.mxu0 0.0
        %1198 = vmatpush2.xpose.msra.mxu0 0.0
        %1199 = vmatprep.subr.mxu0 0.0
        %1200 = vmatpush2.xpose.msra.mxu0 0.0
        %1201 = vmatprep.subr.mxu0 0.0
        %1202 = vmatpush2.xpose.msra.mxu0 0.0
        %1203 = vmatprep.subr.mxu0 0.0
        %1204 = vmatpush2.xpose.msra.mxu0 0.0
        %1205 = vmatprep.subr.mxu0 0.0
        %1206 = vmatpush2.xpose.msra.mxu0 0.0
        %1207 = vmatprep.subr.mxu0 0.0
        %1208 = vmatpush2.xpose.msra.mxu0 0.0
        %1209 = vmatprep.subr.mxu0 0.0
        %1210 = vmatpush2.xpose.msra.mxu0 0.0
        %1211 = vmatprep.subr.mxu0 0.0
        %1212 = vmatpush2.xpose.msra.mxu0 0.0
        %1213 = vmatprep.mubr.f32.mxu0 0.0
        %1214 = vmatmul.mubr.f32.gmra.mxu0 %v1145
        %v1215 = vpop.f32.mrf.mxu0
        %v1216 = vadd.f32 0.0, %v1215
        %v1217 = vpop.f32.mrf.mxu0
        %1218 = vdwg.mxu0
        %1220 = vrot.lane.b32.xlu0 %v670, 96
        %v1221 = vpop.permute.xlu0 %1220
        %v1222 = vsel %vm682, %v670, 0
        %v1224 = vsel %vm682, %v1221, 0
        %1226 = vmatprep.subr.mxu0 0.0
        %1227 = vmatpush1.xpose.msra.mxu0 0.0
        %1228 = vmatprep.subr.mxu0 0.0
        %1229 = vmatpush1.xpose.msra.mxu0 0.0
        %1230 = vmatprep.subr.mxu0 0.0
        %1231 = vmatpush1.xpose.msra.mxu0 0.0
        %1232 = vmatprep.subr.mxu0 0.0
        %1233 = vmatpush1.xpose.msra.mxu0 0.0
        %1234 = vmatprep.subr.mxu0 0.0
        %1235 = vmatpush1.xpose.msra.mxu0 0.0
        %1236 = vmatprep.subr.mxu0 0.0
        %1237 = vmatpush1.xpose.msra.mxu0 0.0
        %1238 = vmatprep.subr.mxu0 0.0
        %1239 = vmatpush1.xpose.msra.mxu0 0.0
        %1240 = vmatprep.subr.mxu0 0.0
        %1241 = vmatpush1.xpose.msra.mxu0 0.0
        %1242 = vmatprep.subr.mxu0 0.0
        %1243 = vmatpush1.xpose.msra.mxu0 0.0
        %1244 = vmatprep.subr.mxu0 0.0
        %1245 = vmatpush1.xpose.msra.mxu0 0.0
        %1246 = vmatprep.subr.mxu0 0.0
        %1247 = vmatpush1.xpose.msra.mxu0 0.0
        %1248 = vmatprep.subr.mxu0 0.0
        %1249 = vmatpush1.xpose.msra.mxu0 0.0
        %1250 = vmatprep.subr.mxu0 0.0
        %1251 = vmatpush1.xpose.msra.mxu0 0.0
        %1252 = vmatprep.subr.mxu0 0.0
        %1253 = vmatpush1.xpose.msra.mxu0 0.0
        %1254 = vmatprep.subr.mxu0 0.0
        %1255 = vmatpush1.xpose.msra.mxu0 0.0
        %1256 = vmatprep.subr.mxu0 0.0
        %1257 = vmatpush1.xpose.msra.mxu0 %v1224
        %1258 = vmatprep.subr.mxu0 0.0
        %1259 = vmatpush2.xpose.msra.mxu0 0.0
        %1260 = vmatprep.subr.mxu0 0.0
        %1261 = vmatpush2.xpose.msra.mxu0 0.0
        %1262 = vmatprep.subr.mxu0 0.0
        %1263 = vmatpush2.xpose.msra.mxu0 0.0
        %1264 = vmatprep.subr.mxu0 0.0
        %1265 = vmatpush2.xpose.msra.mxu0 0.0
        %1266 = vmatprep.subr.mxu0 0.0
        %1267 = vmatpush2.xpose.msra.mxu0 0.0
        %1268 = vmatprep.subr.mxu0 0.0
        %1269 = vmatpush2.xpose.msra.mxu0 0.0
        %1270 = vmatprep.subr.mxu0 0.0
        %1271 = vmatpush2.xpose.msra.mxu0 0.0
        %1272 = vmatprep.subr.mxu0 0.0
        %1273 = vmatpush2.xpose.msra.mxu0 0.0
        %1274 = vmatprep.subr.mxu0 0.0
        %1275 = vmatpush2.xpose.msra.mxu0 0.0
        %1276 = vmatprep.subr.mxu0 0.0
        %1277 = vmatpush2.xpose.msra.mxu0 0.0
        %1278 = vmatprep.subr.mxu0 0.0
        %1279 = vmatpush2.xpose.msra.mxu0 0.0
        %1280 = vmatprep.subr.mxu0 0.0
        %1281 = vmatpush2.xpose.msra.mxu0 0.0
        %1282 = vmatprep.subr.mxu0 0.0
        %1283 = vmatpush2.xpose.msra.mxu0 0.0
        %1284 = vmatprep.subr.mxu0 0.0
        %1285 = vmatpush2.xpose.msra.mxu0 0.0
        %1286 = vmatprep.subr.mxu0 0.0
        %1287 = vmatpush2.xpose.msra.mxu0 0.0
        %1288 = vmatprep.subr.mxu0 0.0
        %1289 = vmatpush2.xpose.msra.mxu0 0.0
        %1290 = vmatprep.mubr.f32.mxu0 0.0
        %1291 = vmatmul.mubr.f32.gmra.mxu0 %v1222
        %v1292 = vpop.f32.mrf.mxu0
        %v1293 = vadd.f32 0.0, %v1292
        %v1294 = vpop.f32.mrf.mxu0
        %1295 = vdwg.mxu0
        %v1296 = vmul.f32 %v754, 0.35355338
        %v1297 = vmul.f32 %v831, 0.35355338
        %v1298 = vmul.f32 %v908, 0.35355338
        %v1299 = vmul.f32 %v985, 0.35355338
        %v1300 = vmul.f32 %v1062, 0.35355338
        %v1301 = vmul.f32 %v1139, 0.35355338
        %v1302 = vmul.f32 %v1216, 0.35355338
        %v1303 = vmul.f32 %v1293, 0.35355338
        %v1304 = vadd.f32 %v1296, %v678
        %v1305 = vadd.f32 %v1297, %v678
        %v1306 = vadd.f32 %v1298, %v678
        %v1307 = vadd.f32 %v1299, %v678
        %v1308 = vadd.f32 %v1300, %v678
        %v1309 = vadd.f32 %v1301, %v678
        %v1310 = vadd.f32 %v1302, %v678
        %v1311 = vadd.f32 %v1303, %v678
        %v1312 = vsel %vm682, %v1304, -inf
        %1313 = vmax.xlane.f32.xlu0 %v1312
        %v1314 = vpop.xlane.xlu0 %1313
        %v1315 = vsel %vm682, %v1305, -inf
        %1316 = vmax.xlane.f32.xlu0 %v1315
        %v1317 = vpop.xlane.xlu0 %1316
        %v1318 = vsel %vm682, %v1306, -inf
        %1319 = vmax.xlane.f32.xlu0 %v1318
        %v1320 = vpop.xlane.xlu0 %1319
        %v1321 = vsel %vm682, %v1307, -inf
        %1322 = vmax.xlane.f32.xlu0 %v1321
        %v1323 = vpop.xlane.xlu0 %1322
        %v1324 = vsel %vm682, %v1308, -inf
        %1325 = vmax.xlane.f32.xlu0 %v1324
        %v1326 = vpop.xlane.xlu0 %1325
        %v1327 = vsel %vm682, %v1309, -inf
        %1328 = vmax.xlane.f32.xlu0 %v1327
        %v1329 = vpop.xlane.xlu0 %1328
        %v1330 = vsel %vm682, %v1310, -inf
        %1331 = vmax.xlane.f32.xlu0 %v1330
        %v1332 = vpop.xlane.xlu0 %1331
        %v1333 = vsel %vm682, %v1311, -inf
        %1334 = vmax.xlane.f32.xlu0 %v1333
        %v1335 = vpop.xlane.xlu0 %1334
        %v1336 = vsub.f32 %v1304, %v1314
        %v1337 = vsub.f32 %v1305, %v1317
        %v1338 = vsub.f32 %v1306, %v1320
        %v1339 = vsub.f32 %v1307, %v1323
        %v1340 = vsub.f32 %v1308, %v1326
        %v1341 = vsub.f32 %v1309, %v1329
        %v1342 = vsub.f32 %v1310, %v1332
        %v1343 = vsub.f32 %v1311, %v1335
        %v1344 = vmul.f32 %v1336, 1.442695
        %v1345 = vpow.pop %v1344
        %v1346 = vmul.f32 %v1337, 1.442695
        %v1347 = vpow.pop %v1346
        %v1348 = vmul.f32 %v1338, 1.442695
        %v1349 = vpow.pop %v1348
        %v1350 = vmul.f32 %v1339, 1.442695
        %v1351 = vpow.pop %v1350
        %v1352 = vmul.f32 %v1340, 1.442695
        %v1353 = vpow.pop %v1352
        %v1354 = vmul.f32 %v1341, 1.442695
        %v1355 = vpow.pop %v1354
        %v1356 = vmul.f32 %v1342, 1.442695
        %v1357 = vpow.pop %v1356
        %v1358 = vmul.f32 %v1343, 1.442695
        %v1359 = vpow.pop %v1358
        %v1360 = vsel %vm682, %v1345, 0.0
        %1361 = vadd.xlane.f32.xlu0 %v1360
        %v1362 = vpop.xlane.xlu0 %1361
        %v1363 = vsel %vm682, %v1347, 0.0
        %1364 = vadd.xlane.f32.xlu0 %v1363
        %v1365 = vpop.xlane.xlu0 %1364
        %v1366 = vsel %vm682, %v1349, 0.0
        %1367 = vadd.xlane.f32.xlu0 %v1366
        %v1368 = vpop.xlane.xlu0 %1367
        %v1369 = vsel %vm682, %v1351, 0.0
        %1370 = vadd.xlane.f32.xlu0 %v1369
        %v1371 = vpop.xlane.xlu0 %1370
        %v1372 = vsel %vm682, %v1353, 0.0
        %1373 = vadd.xlane.f32.xlu0 %v1372
        %v1374 = vpop.xlane.xlu0 %1373
        %v1375 = vsel %vm682, %v1355, 0.0
        %1376 = vadd.xlane.f32.xlu0 %v1375
        %v1377 = vpop.xlane.xlu0 %1376
        %v1378 = vsel %vm682, %v1357, 0.0
        %1379 = vadd.xlane.f32.xlu0 %v1378
        %v1380 = vpop.xlane.xlu0 %1379
        %v1381 = vsel %vm682, %v1359, 0.0
        %1382 = vadd.xlane.f32.xlu0 %v1381
        %v1383 = vpop.xlane.xlu0 %1382
        %v1384 = vrcp.pop %v1362
        %v1385 = vrcp.pop %v1365
        %v1386 = vrcp.pop %v1368
        %v1387 = vrcp.pop %v1371
        %v1388 = vrcp.pop %v1374
        %v1389 = vrcp.pop %v1377
        %v1390 = vrcp.pop %v1380
        %v1391 = vrcp.pop %v1383
        %v1392 = vmul.f32 %v1345, %v1384
        %v1393 = vmul.f32 %v1347, %v1385
        %v1394 = vmul.f32 %v1349, %v1386
        %v1395 = vmul.f32 %v1351, %v1387
        %v1396 = vmul.f32 %v1353, %v1388
        %v1397 = vmul.f32 %v1355, %v1389
        %v1398 = vmul.f32 %v1357, %v1390
        %v1399 = vmul.f32 %v1359, %v1391
        %1400 = vrot.lane.b32.xlu0 %v635, 64
        %v1401 = vpop.permute.xlu0 %1400
        %v1404 = vsel %vm682, %v1392, 0
        %1406 = vmatprep.subr.mxu0 0.0
        %1407 = vmatpush1.msra.mxu0 0.0
        %1408 = vmatprep.subr.mxu0 0.0
        %1409 = vmatpush1.msra.mxu0 0.0
        %1410 = vmatprep.subr.mxu0 0.0
        %1411 = vmatpush1.msra.mxu0 0.0
        %1412 = vmatprep.subr.mxu0 0.0
        %1413 = vmatpush1.msra.mxu0 0.0
        %1414 = vmatprep.subr.mxu0 0.0
        %1415 = vmatpush1.msra.mxu0 0.0
        %1416 = vmatprep.subr.mxu0 0.0
        %1417 = vmatpush1.msra.mxu0 0.0
        %1418 = vmatprep.subr.mxu0 0.0
        %1419 = vmatpush1.msra.mxu0 0.0
        %1420 = vmatprep.subr.mxu0 0.0
        %1421 = vmatpush1.msra.mxu0 0.0
        %1422 = vmatprep.subr.mxu0 0.0
        %1423 = vmatpush1.msra.mxu0 0.0
        %1424 = vmatprep.subr.mxu0 0.0
        %1425 = vmatpush1.msra.mxu0 0.0
        %1426 = vmatprep.subr.mxu0 0.0
        %1427 = vmatpush1.msra.mxu0 0.0
        %1428 = vmatprep.subr.mxu0 0.0
        %1429 = vmatpush1.msra.mxu0 0.0
        %1430 = vmatprep.subr.mxu0 0.0
        %1431 = vmatpush1.msra.mxu0 0.0
        %1432 = vmatprep.subr.mxu0 0.0
        %1433 = vmatpush1.msra.mxu0 0.0
        %1434 = vmatprep.subr.mxu0 0.0
        %1435 = vmatpush1.msra.mxu0 0.0
        %1436 = vmatprep.subr.mxu0 0.0
        %1437 = vmatpush1.msra.mxu0 %v1401
        %1438 = vmatprep.subr.mxu0 0.0
        %1439 = vmatpush2.msra.mxu0 0.0
        %1440 = vmatprep.subr.mxu0 0.0
        %1441 = vmatpush2.msra.mxu0 0.0
        %1442 = vmatprep.subr.mxu0 0.0
        %1443 = vmatpush2.msra.mxu0 0.0
        %1444 = vmatprep.subr.mxu0 0.0
        %1445 = vmatpush2.msra.mxu0 0.0
        %1446 = vmatprep.subr.mxu0 0.0
        %1447 = vmatpush2.msra.mxu0 0.0
        %1448 = vmatprep.subr.mxu0 0.0
        %1449 = vmatpush2.msra.mxu0 0.0
        %1450 = vmatprep.subr.mxu0 0.0
        %1451 = vmatpush2.msra.mxu0 0.0
        %1452 = vmatprep.subr.mxu0 0.0
        %1453 = vmatpush2.msra.mxu0 0.0
        %1454 = vmatprep.subr.mxu0 0.0
        %1455 = vmatpush2.msra.mxu0 0.0
        %1456 = vmatprep.subr.mxu0 0.0
        %1457 = vmatpush2.msra.mxu0 0.0
        %1458 = vmatprep.subr.mxu0 0.0
        %1459 = vmatpush2.msra.mxu0 0.0
        %1460 = vmatprep.subr.mxu0 0.0
        %1461 = vmatpush2.msra.mxu0 0.0
        %1462 = vmatprep.subr.mxu0 0.0
        %1463 = vmatpush2.msra.mxu0 0.0
        %1464 = vmatprep.subr.mxu0 0.0
        %1465 = vmatpush2.msra.mxu0 0.0
        %1466 = vmatprep.subr.mxu0 0.0
        %1467 = vmatpush2.msra.mxu0 0.0
        %1468 = vmatprep.subr.mxu0 0.0
        %1469 = vmatpush2.msra.mxu0 0.0
        %1470 = vmatprep.mubr.f32.mxu0 0.0
        %1471 = vmatmul.mubr.f32.gmra.mxu0 %v1404
        %v1472 = vpop.f32.mrf.mxu0
        %v1473 = vadd.f32 0.0, %v1472
        %v1474 = vpop.f32.mrf.mxu0
        %1475 = vdwg.mxu0
        %1476 = vrot.lane.b32.xlu0 %v640, 64
        %v1477 = vpop.permute.xlu0 %1476
        %v1480 = vsel %vm682, %v1393, 0
        %1482 = vmatprep.subr.mxu0 0.0
        %1483 = vmatpush1.msra.mxu0 0.0
        %1484 = vmatprep.subr.mxu0 0.0
        %1485 = vmatpush1.msra.mxu0 0.0
        %1486 = vmatprep.subr.mxu0 0.0
        %1487 = vmatpush1.msra.mxu0 0.0
        %1488 = vmatprep.subr.mxu0 0.0
        %1489 = vmatpush1.msra.mxu0 0.0
        %1490 = vmatprep.subr.mxu0 0.0
        %1491 = vmatpush1.msra.mxu0 0.0
        %1492 = vmatprep.subr.mxu0 0.0
        %1493 = vmatpush1.msra.mxu0 0.0
        %1494 = vmatprep.subr.mxu0 0.0
        %1495 = vmatpush1.msra.mxu0 0.0
        %1496 = vmatprep.subr.mxu0 0.0
        %1497 = vmatpush1.msra.mxu0 0.0
        %1498 = vmatprep.subr.mxu0 0.0
        %1499 = vmatpush1.msra.mxu0 0.0
        %1500 = vmatprep.subr.mxu0 0.0
        %1501 = vmatpush1.msra.mxu0 0.0
        %1502 = vmatprep.subr.mxu0 0.0
        %1503 = vmatpush1.msra.mxu0 0.0
        %1504 = vmatprep.subr.mxu0 0.0
        %1505 = vmatpush1.msra.mxu0 0.0
        %1506 = vmatprep.subr.mxu0 0.0
        %1507 = vmatpush1.msra.mxu0 0.0
        %1508 = vmatprep.subr.mxu0 0.0
        %1509 = vmatpush1.msra.mxu0 0.0
        %1510 = vmatprep.subr.mxu0 0.0
        %1511 = vmatpush1.msra.mxu0 0.0
        %1512 = vmatprep.subr.mxu0 0.0
        %1513 = vmatpush1.msra.mxu0 %v1477
        %1514 = vmatprep.subr.mxu0 0.0
        %1515 = vmatpush2.msra.mxu0 0.0
        %1516 = vmatprep.subr.mxu0 0.0
        %1517 = vmatpush2.msra.mxu0 0.0
        %1518 = vmatprep.subr.mxu0 0.0
        %1519 = vmatpush2.msra.mxu0 0.0
        %1520 = vmatprep.subr.mxu0 0.0
        %1521 = vmatpush2.msra.mxu0 0.0
        %1522 = vmatprep.subr.mxu0 0.0
        %1523 = vmatpush2.msra.mxu0 0.0
        %1524 = vmatprep.subr.mxu0 0.0
        %1525 = vmatpush2.msra.mxu0 0.0
        %1526 = vmatprep.subr.mxu0 0.0
        %1527 = vmatpush2.msra.mxu0 0.0
        %1528 = vmatprep.subr.mxu0 0.0
        %1529 = vmatpush2.msra.mxu0 0.0
        %1530 = vmatprep.subr.mxu0 0.0
        %1531 = vmatpush2.msra.mxu0 0.0
        %1532 = vmatprep.subr.mxu0 0.0
        %1533 = vmatpush2.msra.mxu0 0.0
        %1534 = vmatprep.subr.mxu0 0.0
        %1535 = vmatpush2.msra.mxu0 0.0
        %1536 = vmatprep.subr.mxu0 0.0
        %1537 = vmatpush2.msra.mxu0 0.0
        %1538 = vmatprep.subr.mxu0 0.0
        %1539 = vmatpush2.msra.mxu0 0.0
        %1540 = vmatprep.subr.mxu0 0.0
        %1541 = vmatpush2.msra.mxu0 0.0
        %1542 = vmatprep.subr.mxu0 0.0
        %1543 = vmatpush2.msra.mxu0 0.0
        %1544 = vmatprep.subr.mxu0 0.0
        %1545 = vmatpush2.msra.mxu0 0.0
        %1546 = vmatprep.mubr.f32.mxu0 0.0
        %1547 = vmatmul.mubr.f32.gmra.mxu0 %v1480
        %v1548 = vpop.f32.mrf.mxu0
        %v1549 = vadd.f32 0.0, %v1548
        %v1550 = vpop.f32.mrf.mxu0
        %1551 = vdwg.mxu0
        %1552 = vrot.lane.b32.xlu0 %v645, 64
        %v1553 = vpop.permute.xlu0 %1552
        %v1556 = vsel %vm682, %v1394, 0
        %1558 = vmatprep.subr.mxu0 0.0
        %1559 = vmatpush1.msra.mxu0 0.0
        %1560 = vmatprep.subr.mxu0 0.0
        %1561 = vmatpush1.msra.mxu0 0.0
        %1562 = vmatprep.subr.mxu0 0.0
        %1563 = vmatpush1.msra.mxu0 0.0
        %1564 = vmatprep.subr.mxu0 0.0
        %1565 = vmatpush1.msra.mxu0 0.0
        %1566 = vmatprep.subr.mxu0 0.0
        %1567 = vmatpush1.msra.mxu0 0.0
        %1568 = vmatprep.subr.mxu0 0.0
        %1569 = vmatpush1.msra.mxu0 0.0
        %1570 = vmatprep.subr.mxu0 0.0
        %1571 = vmatpush1.msra.mxu0 0.0
        %1572 = vmatprep.subr.mxu0 0.0
        %1573 = vmatpush1.msra.mxu0 0.0
        %1574 = vmatprep.subr.mxu0 0.0
        %1575 = vmatpush1.msra.mxu0 0.0
        %1576 = vmatprep.subr.mxu0 0.0
        %1577 = vmatpush1.msra.mxu0 0.0
        %1578 = vmatprep.subr.mxu0 0.0
        %1579 = vmatpush1.msra.mxu0 0.0
        %1580 = vmatprep.subr.mxu0 0.0
        %1581 = vmatpush1.msra.mxu0 0.0
        %1582 = vmatprep.subr.mxu0 0.0
        %1583 = vmatpush1.msra.mxu0 0.0
        %1584 = vmatprep.subr.mxu0 0.0
        %1585 = vmatpush1.msra.mxu0 0.0
        %1586 = vmatprep.subr.mxu0 0.0
        %1587 = vmatpush1.msra.mxu0 0.0
        %1588 = vmatprep.subr.mxu0 0.0
        %1589 = vmatpush1.msra.mxu0 %v1553
        %1590 = vmatprep.subr.mxu0 0.0
        %1591 = vmatpush2.msra.mxu0 0.0
        %1592 = vmatprep.subr.mxu0 0.0
        %1593 = vmatpush2.msra.mxu0 0.0
        %1594 = vmatprep.subr.mxu0 0.0
        %1595 = vmatpush2.msra.mxu0 0.0
        %1596 = vmatprep.subr.mxu0 0.0
        %1597 = vmatpush2.msra.mxu0 0.0
        %1598 = vmatprep.subr.mxu0 0.0
        %1599 = vmatpush2.msra.mxu0 0.0
        %1600 = vmatprep.subr.mxu0 0.0
        %1601 = vmatpush2.msra.mxu0 0.0
        %1602 = vmatprep.subr.mxu0 0.0
        %1603 = vmatpush2.msra.mxu0 0.0
        %1604 = vmatprep.subr.mxu0 0.0
        %1605 = vmatpush2.msra.mxu0 0.0
        %1606 = vmatprep.subr.mxu0 0.0
        %1607 = vmatpush2.msra.mxu0 0.0
        %1608 = vmatprep.subr.mxu0 0.0
        %1609 = vmatpush2.msra.mxu0 0.0
        %1610 = vmatprep.subr.mxu0 0.0
        %1611 = vmatpush2.msra.mxu0 0.0
        %1612 = vmatprep.subr.mxu0 0.0
        %1613 = vmatpush2.msra.mxu0 0.0
        %1614 = vmatprep.subr.mxu0 0.0
        %1615 = vmatpush2.msra.mxu0 0.0
        %1616 = vmatprep.subr.mxu0 0.0
        %1617 = vmatpush2.msra.mxu0 0.0
        %1618 = vmatprep.subr.mxu0 0.0
        %1619 = vmatpush2.msra.mxu0 0.0
        %1620 = vmatprep.subr.mxu0 0.0
        %1621 = vmatpush2.msra.mxu0 0.0
        %1622 = vmatprep.mubr.f32.mxu0 0.0
        %1623 = vmatmul.mubr.f32.gmra.mxu0 %v1556
        %v1624 = vpop.f32.mrf.mxu0
        %v1625 = vadd.f32 0.0, %v1624
        %v1626 = vpop.f32.mrf.mxu0
        %1627 = vdwg.mxu0
        %1628 = vrot.lane.b32.xlu0 %v650, 64
        %v1629 = vpop.permute.xlu0 %1628
        %v1632 = vsel %vm682, %v1395, 0
        %1634 = vmatprep.subr.mxu0 0.0
        %1635 = vmatpush1.msra.mxu0 0.0
        %1636 = vmatprep.subr.mxu0 0.0
        %1637 = vmatpush1.msra.mxu0 0.0
        %1638 = vmatprep.subr.mxu0 0.0
        %1639 = vmatpush1.msra.mxu0 0.0
        %1640 = vmatprep.subr.mxu0 0.0
        %1641 = vmatpush1.msra.mxu0 0.0
        %1642 = vmatprep.subr.mxu0 0.0
        %1643 = vmatpush1.msra.mxu0 0.0
        %1644 = vmatprep.subr.mxu0 0.0
        %1645 = vmatpush1.msra.mxu0 0.0
        %1646 = vmatprep.subr.mxu0 0.0
        %1647 = vmatpush1.msra.mxu0 0.0
        %1648 = vmatprep.subr.mxu0 0.0
        %1649 = vmatpush1.msra.mxu0 0.0
        %1650 = vmatprep.subr.mxu0 0.0
        %1651 = vmatpush1.msra.mxu0 0.0
        %1652 = vmatprep.subr.mxu0 0.0
        %1653 = vmatpush1.msra.mxu0 0.0
        %1654 = vmatprep.subr.mxu0 0.0
        %1655 = vmatpush1.msra.mxu0 0.0
        %1656 = vmatprep.subr.mxu0 0.0
        %1657 = vmatpush1.msra.mxu0 0.0
        %1658 = vmatprep.subr.mxu0 0.0
        %1659 = vmatpush1.msra.mxu0 0.0
        %1660 = vmatprep.subr.mxu0 0.0
        %1661 = vmatpush1.msra.mxu0 0.0
        %1662 = vmatprep.subr.mxu0 0.0
        %1663 = vmatpush1.msra.mxu0 0.0
        %1664 = vmatprep.subr.mxu0 0.0
        %1665 = vmatpush1.msra.mxu0 %v1629
        %1666 = vmatprep.subr.mxu0 0.0
        %1667 = vmatpush2.msra.mxu0 0.0
        %1668 = vmatprep.subr.mxu0 0.0
        %1669 = vmatpush2.msra.mxu0 0.0
        %1670 = vmatprep.subr.mxu0 0.0
        %1671 = vmatpush2.msra.mxu0 0.0
        %1672 = vmatprep.subr.mxu0 0.0
        %1673 = vmatpush2.msra.mxu0 0.0
        %1674 = vmatprep.subr.mxu0 0.0
        %1675 = vmatpush2.msra.mxu0 0.0
        %1676 = vmatprep.subr.mxu0 0.0
        %1677 = vmatpush2.msra.mxu0 0.0
        %1678 = vmatprep.subr.mxu0 0.0
        %1679 = vmatpush2.msra.mxu0 0.0
        %1680 = vmatprep.subr.mxu0 0.0
        %1681 = vmatpush2.msra.mxu0 0.0
        %1682 = vmatprep.subr.mxu0 0.0
        %1683 = vmatpush2.msra.mxu0 0.0
        %1684 = vmatprep.subr.mxu0 0.0
        %1685 = vmatpush2.msra.mxu0 0.0
        %1686 = vmatprep.subr.mxu0 0.0
        %1687 = vmatpush2.msra.mxu0 0.0
        %1688 = vmatprep.subr.mxu0 0.0
        %1689 = vmatpush2.msra.mxu0 0.0
        %1690 = vmatprep.subr.mxu0 0.0
        %1691 = vmatpush2.msra.mxu0 0.0
        %1692 = vmatprep.subr.mxu0 0.0
        %1693 = vmatpush2.msra.mxu0 0.0
        %1694 = vmatprep.subr.mxu0 0.0
        %1695 = vmatpush2.msra.mxu0 0.0
        %1696 = vmatprep.subr.mxu0 0.0
        %1697 = vmatpush2.msra.mxu0 0.0
        %1698 = vmatprep.mubr.f32.mxu0 0.0
        %1699 = vmatmul.mubr.f32.gmra.mxu0 %v1632
        %v1700 = vpop.f32.mrf.mxu0
        %v1701 = vadd.f32 0.0, %v1700
        %v1702 = vpop.f32.mrf.mxu0
        %1703 = vdwg.mxu0
        %1704 = vrot.lane.b32.xlu0 %v655, 64
        %v1705 = vpop.permute.xlu0 %1704
        %v1708 = vsel %vm682, %v1396, 0
        %1710 = vmatprep.subr.mxu0 0.0
        %1711 = vmatpush1.msra.mxu0 0.0
        %1712 = vmatprep.subr.mxu0 0.0
        %1713 = vmatpush1.msra.mxu0 0.0
        %1714 = vmatprep.subr.mxu0 0.0
        %1715 = vmatpush1.msra.mxu0 0.0
        %1716 = vmatprep.subr.mxu0 0.0
        %1717 = vmatpush1.msra.mxu0 0.0
        %1718 = vmatprep.subr.mxu0 0.0
        %1719 = vmatpush1.msra.mxu0 0.0
        %1720 = vmatprep.subr.mxu0 0.0
        %1721 = vmatpush1.msra.mxu0 0.0
        %1722 = vmatprep.subr.mxu0 0.0
        %1723 = vmatpush1.msra.mxu0 0.0
        %1724 = vmatprep.subr.mxu0 0.0
        %1725 = vmatpush1.msra.mxu0 0.0
        %1726 = vmatprep.subr.mxu0 0.0
        %1727 = vmatpush1.msra.mxu0 0.0
        %1728 = vmatprep.subr.mxu0 0.0
        %1729 = vmatpush1.msra.mxu0 0.0
        %1730 = vmatprep.subr.mxu0 0.0
        %1731 = vmatpush1.msra.mxu0 0.0
        %1732 = vmatprep.subr.mxu0 0.0
        %1733 = vmatpush1.msra.mxu0 0.0
        %1734 = vmatprep.subr.mxu0 0.0
        %1735 = vmatpush1.msra.mxu0 0.0
        %1736 = vmatprep.subr.mxu0 0.0
        %1737 = vmatpush1.msra.mxu0 0.0
        %1738 = vmatprep.subr.mxu0 0.0
        %1739 = vmatpush1.msra.mxu0 0.0
        %1740 = vmatprep.subr.mxu0 0.0
        %1741 = vmatpush1.msra.mxu0 %v1705
        %1742 = vmatprep.subr.mxu0 0.0
        %1743 = vmatpush2.msra.mxu0 0.0
        %1744 = vmatprep.subr.mxu0 0.0
        %1745 = vmatpush2.msra.mxu0 0.0
        %1746 = vmatprep.subr.mxu0 0.0
        %1747 = vmatpush2.msra.mxu0 0.0
        %1748 = vmatprep.subr.mxu0 0.0
        %1749 = vmatpush2.msra.mxu0 0.0
        %1750 = vmatprep.subr.mxu0 0.0
        %1751 = vmatpush2.msra.mxu0 0.0
        %1752 = vmatprep.subr.mxu0 0.0
        %1753 = vmatpush2.msra.mxu0 0.0
        %1754 = vmatprep.subr.mxu0 0.0
        %1755 = vmatpush2.msra.mxu0 0.0
        %1756 = vmatprep.subr.mxu0 0.0
        %1757 = vmatpush2.msra.mxu0 0.0
        %1758 = vmatprep.subr.mxu0 0.0
        %1759 = vmatpush2.msra.mxu0 0.0
        %1760 = vmatprep.subr.mxu0 0.0
        %1761 = vmatpush2.msra.mxu0 0.0
        %1762 = vmatprep.subr.mxu0 0.0
        %1763 = vmatpush2.msra.mxu0 0.0
        %1764 = vmatprep.subr.mxu0 0.0
        %1765 = vmatpush2.msra.mxu0 0.0
        %1766 = vmatprep.subr.mxu0 0.0
        %1767 = vmatpush2.msra.mxu0 0.0
        %1768 = vmatprep.subr.mxu0 0.0
        %1769 = vmatpush2.msra.mxu0 0.0
        %1770 = vmatprep.subr.mxu0 0.0
        %1771 = vmatpush2.msra.mxu0 0.0
        %1772 = vmatprep.subr.mxu0 0.0
        %1773 = vmatpush2.msra.mxu0 0.0
        %1774 = vmatprep.mubr.f32.mxu0 0.0
        %1775 = vmatmul.mubr.f32.gmra.mxu0 %v1708
        %v1776 = vpop.f32.mrf.mxu0
        %v1777 = vadd.f32 0.0, %v1776
        %v1778 = vpop.f32.mrf.mxu0
        %1779 = vdwg.mxu0
        %1780 = vrot.lane.b32.xlu0 %v660, 64
        %v1781 = vpop.permute.xlu0 %1780
        %v1784 = vsel %vm682, %v1397, 0
        %1786 = vmatprep.subr.mxu0 0.0
        %1787 = vmatpush1.msra.mxu0 0.0
        %1788 = vmatprep.subr.mxu0 0.0
        %1789 = vmatpush1.msra.mxu0 0.0
        %1790 = vmatprep.subr.mxu0 0.0
        %1791 = vmatpush1.msra.mxu0 0.0
        %1792 = vmatprep.subr.mxu0 0.0
        %1793 = vmatpush1.msra.mxu0 0.0
        %1794 = vmatprep.subr.mxu0 0.0
        %1795 = vmatpush1.msra.mxu0 0.0
        %1796 = vmatprep.subr.mxu0 0.0
        %1797 = vmatpush1.msra.mxu0 0.0
        %1798 = vmatprep.subr.mxu0 0.0
        %1799 = vmatpush1.msra.mxu0 0.0
        %1800 = vmatprep.subr.mxu0 0.0
        %1801 = vmatpush1.msra.mxu0 0.0
        %1802 = vmatprep.subr.mxu0 0.0
        %1803 = vmatpush1.msra.mxu0 0.0
        %1804 = vmatprep.subr.mxu0 0.0
        %1805 = vmatpush1.msra.mxu0 0.0
        %1806 = vmatprep.subr.mxu0 0.0
        %1807 = vmatpush1.msra.mxu0 0.0
        %1808 = vmatprep.subr.mxu0 0.0
        %1809 = vmatpush1.msra.mxu0 0.0
        %1810 = vmatprep.subr.mxu0 0.0
        %1811 = vmatpush1.msra.mxu0 0.0
        %1812 = vmatprep.subr.mxu0 0.0
        %1813 = vmatpush1.msra.mxu0 0.0
        %1814 = vmatprep.subr.mxu0 0.0
        %1815 = vmatpush1.msra.mxu0 0.0
        %1816 = vmatprep.subr.mxu0 0.0
        %1817 = vmatpush1.msra.mxu0 %v1781
        %1818 = vmatprep.subr.mxu0 0.0
        %1819 = vmatpush2.msra.mxu0 0.0
        %1820 = vmatprep.subr.mxu0 0.0
        %1821 = vmatpush2.msra.mxu0 0.0
        %1822 = vmatprep.subr.mxu0 0.0
        %1823 = vmatpush2.msra.mxu0 0.0
        %1824 = vmatprep.subr.mxu0 0.0
        %1825 = vmatpush2.msra.mxu0 0.0
        %1826 = vmatprep.subr.mxu0 0.0
        %1827 = vmatpush2.msra.mxu0 0.0
        %1828 = vmatprep.subr.mxu0 0.0
        %1829 = vmatpush2.msra.mxu0 0.0
        %1830 = vmatprep.subr.mxu0 0.0
        %1831 = vmatpush2.msra.mxu0 0.0
        %1832 = vmatprep.subr.mxu0 0.0
        %1833 = vmatpush2.msra.mxu0 0.0
        %1834 = vmatprep.subr.mxu0 0.0
        %1835 = vmatpush2.msra.mxu0 0.0
        %1836 = vmatprep.subr.mxu0 0.0
        %1837 = vmatpush2.msra.mxu0 0.0
        %1838 = vmatprep.subr.mxu0 0.0
        %1839 = vmatpush2.msra.mxu0 0.0
        %1840 = vmatprep.subr.mxu0 0.0
        %1841 = vmatpush2.msra.mxu0 0.0
        %1842 = vmatprep.subr.mxu0 0.0
        %1843 = vmatpush2.msra.mxu0 0.0
        %1844 = vmatprep.subr.mxu0 0.0
        %1845 = vmatpush2.msra.mxu0 0.0
        %1846 = vmatprep.subr.mxu0 0.0
        %1847 = vmatpush2.msra.mxu0 0.0
        %1848 = vmatprep.subr.mxu0 0.0
        %1849 = vmatpush2.msra.mxu0 0.0
        %1850 = vmatprep.mubr.f32.mxu0 0.0
        %1851 = vmatmul.mubr.f32.gmra.mxu0 %v1784
        %v1852 = vpop.f32.mrf.mxu0
        %v1853 = vadd.f32 0.0, %v1852
        %v1854 = vpop.f32.mrf.mxu0
        %1855 = vdwg.mxu0
        %1856 = vrot.lane.b32.xlu0 %v665, 64
        %v1857 = vpop.permute.xlu0 %1856
        %v1860 = vsel %vm682, %v1398, 0
        %1862 = vmatprep.subr.mxu0 0.0
        %1863 = vmatpush1.msra.mxu0 0.0
        %1864 = vmatprep.subr.mxu0 0.0
        %1865 = vmatpush1.msra.mxu0 0.0
        %1866 = vmatprep.subr.mxu0 0.0
        %1867 = vmatpush1.msra.mxu0 0.0
        %1868 = vmatprep.subr.mxu0 0.0
        %1869 = vmatpush1.msra.mxu0 0.0
        %1870 = vmatprep.subr.mxu0 0.0
        %1871 = vmatpush1.msra.mxu0 0.0
        %1872 = vmatprep.subr.mxu0 0.0
        %1873 = vmatpush1.msra.mxu0 0.0
        %1874 = vmatprep.subr.mxu0 0.0
        %1875 = vmatpush1.msra.mxu0 0.0
        %1876 = vmatprep.subr.mxu0 0.0
        %1877 = vmatpush1.msra.mxu0 0.0
        %1878 = vmatprep.subr.mxu0 0.0
        %1879 = vmatpush1.msra.mxu0 0.0
        %1880 = vmatprep.subr.mxu0 0.0
        %1881 = vmatpush1.msra.mxu0 0.0
        %1882 = vmatprep.subr.mxu0 0.0
        %1883 = vmatpush1.msra.mxu0 0.0
        %1884 = vmatprep.subr.mxu0 0.0
        %1885 = vmatpush1.msra.mxu0 0.0
        %1886 = vmatprep.subr.mxu0 0.0
        %1887 = vmatpush1.msra.mxu0 0.0
        %1888 = vmatprep.subr.mxu0 0.0
        %1889 = vmatpush1.msra.mxu0 0.0
        %1890 = vmatprep.subr.mxu0 0.0
        %1891 = vmatpush1.msra.mxu0 0.0
        %1892 = vmatprep.subr.mxu0 0.0
        %1893 = vmatpush1.msra.mxu0 %v1857
        %1894 = vmatprep.subr.mxu0 0.0
        %1895 = vmatpush2.msra.mxu0 0.0
        %1896 = vmatprep.subr.mxu0 0.0
        %1897 = vmatpush2.msra.mxu0 0.0
        %1898 = vmatprep.subr.mxu0 0.0
        %1899 = vmatpush2.msra.mxu0 0.0
        %1900 = vmatprep.subr.mxu0 0.0
        %1901 = vmatpush2.msra.mxu0 0.0
        %1902 = vmatprep.subr.mxu0 0.0
        %1903 = vmatpush2.msra.mxu0 0.0
        %1904 = vmatprep.subr.mxu0 0.0
        %1905 = vmatpush2.msra.mxu0 0.0
        %1906 = vmatprep.subr.mxu0 0.0
        %1907 = vmatpush2.msra.mxu0 0.0
        %1908 = vmatprep.subr.mxu0 0.0
        %1909 = vmatpush2.msra.mxu0 0.0
        %1910 = vmatprep.subr.mxu0 0.0
        %1911 = vmatpush2.msra.mxu0 0.0
        %1912 = vmatprep.subr.mxu0 0.0
        %1913 = vmatpush2.msra.mxu0 0.0
        %1914 = vmatprep.subr.mxu0 0.0
        %1915 = vmatpush2.msra.mxu0 0.0
        %1916 = vmatprep.subr.mxu0 0.0
        %1917 = vmatpush2.msra.mxu0 0.0
        %1918 = vmatprep.subr.mxu0 0.0
        %1919 = vmatpush2.msra.mxu0 0.0
        %1920 = vmatprep.subr.mxu0 0.0
        %1921 = vmatpush2.msra.mxu0 0.0
        %1922 = vmatprep.subr.mxu0 0.0
        %1923 = vmatpush2.msra.mxu0 0.0
        %1924 = vmatprep.subr.mxu0 0.0
        %1925 = vmatpush2.msra.mxu0 0.0
        %1926 = vmatprep.mubr.f32.mxu0 0.0
        %1927 = vmatmul.mubr.f32.gmra.mxu0 %v1860
        %v1928 = vpop.f32.mrf.mxu0
        %v1929 = vadd.f32 0.0, %v1928
        %v1930 = vpop.f32.mrf.mxu0
        %1931 = vdwg.mxu0
        %1932 = vrot.lane.b32.xlu0 %v670, 64
        %v1933 = vpop.permute.xlu0 %1932
        %v1936 = vsel %vm682, %v1399, 0
        %1938 = vmatprep.subr.mxu0 0.0
        %1939 = vmatpush1.msra.mxu0 0.0
        %1940 = vmatprep.subr.mxu0 0.0
        %1941 = vmatpush1.msra.mxu0 0.0
        %1942 = vmatprep.subr.mxu0 0.0
        %1943 = vmatpush1.msra.mxu0 0.0
        %1944 = vmatprep.subr.mxu0 0.0
        %1945 = vmatpush1.msra.mxu0 0.0
        %1946 = vmatprep.subr.mxu0 0.0
        %1947 = vmatpush1.msra.mxu0 0.0
        %1948 = vmatprep.subr.mxu0 0.0
        %1949 = vmatpush1.msra.mxu0 0.0
        %1950 = vmatprep.subr.mxu0 0.0
        %1951 = vmatpush1.msra.mxu0 0.0
        %1952 = vmatprep.subr.mxu0 0.0
        %1953 = vmatpush1.msra.mxu0 0.0
        %1954 = vmatprep.subr.mxu0 0.0
        %1955 = vmatpush1.msra.mxu0 0.0
        %1956 = vmatprep.subr.mxu0 0.0
        %1957 = vmatpush1.msra.mxu0 0.0
        %1958 = vmatprep.subr.mxu0 0.0
        %1959 = vmatpush1.msra.mxu0 0.0
        %1960 = vmatprep.subr.mxu0 0.0
        %1961 = vmatpush1.msra.mxu0 0.0
        %1962 = vmatprep.subr.mxu0 0.0
        %1963 = vmatpush1.msra.mxu0 0.0
        %1964 = vmatprep.subr.mxu0 0.0
        %1965 = vmatpush1.msra.mxu0 0.0
        %1966 = vmatprep.subr.mxu0 0.0
        %1967 = vmatpush1.msra.mxu0 0.0
        %1968 = vmatprep.subr.mxu0 0.0
        %1969 = vmatpush1.msra.mxu0 %v1933
        %1970 = vmatprep.subr.mxu0 0.0
        %1971 = vmatpush2.msra.mxu0 0.0
        %1972 = vmatprep.subr.mxu0 0.0
        %1973 = vmatpush2.msra.mxu0 0.0
        %1974 = vmatprep.subr.mxu0 0.0
        %1975 = vmatpush2.msra.mxu0 0.0
        %1976 = vmatprep.subr.mxu0 0.0
        %1977 = vmatpush2.msra.mxu0 0.0
        %1978 = vmatprep.subr.mxu0 0.0
        %1979 = vmatpush2.msra.mxu0 0.0
        %1980 = vmatprep.subr.mxu0 0.0
        %1981 = vmatpush2.msra.mxu0 0.0
        %1982 = vmatprep.subr.mxu0 0.0
        %1983 = vmatpush2.msra.mxu0 0.0
        %1984 = vmatprep.subr.mxu0 0.0
        %1985 = vmatpush2.msra.mxu0 0.0
        %1986 = vmatprep.subr.mxu0 0.0
        %1987 = vmatpush2.msra.mxu0 0.0
        %1988 = vmatprep.subr.mxu0 0.0
        %1989 = vmatpush2.msra.mxu0 0.0
        %1990 = vmatprep.subr.mxu0 0.0
        %1991 = vmatpush2.msra.mxu0 0.0
        %1992 = vmatprep.subr.mxu0 0.0
        %1993 = vmatpush2.msra.mxu0 0.0
        %1994 = vmatprep.subr.mxu0 0.0
        %1995 = vmatpush2.msra.mxu0 0.0
        %1996 = vmatprep.subr.mxu0 0.0
        %1997 = vmatpush2.msra.mxu0 0.0
        %1998 = vmatprep.subr.mxu0 0.0
        %1999 = vmatpush2.msra.mxu0 0.0
        %2000 = vmatprep.subr.mxu0 0.0
        %2001 = vmatpush2.msra.mxu0 0.0
        %2002 = vmatprep.mubr.f32.mxu0 0.0
        %2003 = vmatmul.mubr.f32.gmra.mxu0 %v1936
        %v2004 = vpop.f32.mrf.mxu0
        %v2005 = vadd.f32 0.0, %v2004
        %v2006 = vpop.f32.mrf.mxu0
        %2007 = vdwg.mxu0
        %v2008 = vld [vmem:[%s2] sm:$0xff]
        %v2010 = vsel %vm682, %v1473, 0
        %v2013 = vsel %vm682, %v1549, 0
        %v2016 = vsel %vm682, %v1625, 0
        %v2019 = vsel %vm682, %v1701, 0
        %v2022 = vsel %vm682, %v1777, 0
        %v2025 = vsel %vm682, %v1853, 0
        %v2028 = vsel %vm682, %v1929, 0
        %v2031 = vsel %vm682, %v2005, 0
        %2033 = vmatprep.subr.mxu0 0.0
        %2034 = vmatpush1.msra.mxu0 0.0
        %2035 = vmatprep.subr.mxu0 0.0
        %2036 = vmatpush1.msra.mxu0 0.0
        %2037 = vmatprep.subr.mxu0 0.0
        %2038 = vmatpush1.msra.mxu0 0.0
        %2039 = vmatprep.subr.mxu0 0.0
        %2040 = vmatpush1.msra.mxu0 0.0
        %2041 = vmatprep.subr.mxu0 0.0
        %2042 = vmatpush1.msra.mxu0 0.0
        %2043 = vmatprep.subr.mxu0 0.0
        %2044 = vmatpush1.msra.mxu0 0.0
        %2045 = vmatprep.subr.mxu0 0.0
        %2046 = vmatpush1.msra.mxu0 0.0
        %2047 = vmatprep.subr.mxu0 0.0
        %2048 = vmatpush1.msra.mxu0 0.0
        %2049 = vmatprep.subr.mxu0 0.0
        %2050 = vmatpush1.msra.mxu0 0.0
        %2051 = vmatprep.subr.mxu0 0.0
        %2052 = vmatpush1.msra.mxu0 0.0
        %2053 = vmatprep.subr.mxu0 0.0
        %2054 = vmatpush1.msra.mxu0 0.0
        %2055 = vmatprep.subr.mxu0 0.0
        %2056 = vmatpush1.msra.mxu0 0.0
        %2057 = vmatprep.subr.mxu0 0.0
        %2058 = vmatpush1.msra.mxu0 0.0
        %2059 = vmatprep.subr.mxu0 0.0
        %2060 = vmatpush1.msra.mxu0 0.0
        %2061 = vmatprep.subr.mxu0 0.0
        %2062 = vmatpush1.msra.mxu0 0.0
        %2063 = vmatprep.subr.mxu0 0.0
        %2064 = vmatpush1.msra.mxu0 %v2008
        %2065 = vmatprep.subr.mxu0 0.0
        %2066 = vmatpush2.msra.mxu0 0.0
        %2067 = vmatprep.subr.mxu0 0.0
        %2068 = vmatpush2.msra.mxu0 0.0
        %2069 = vmatprep.subr.mxu0 0.0
        %2070 = vmatpush2.msra.mxu0 0.0
        %2071 = vmatprep.subr.mxu0 0.0
        %2072 = vmatpush2.msra.mxu0 0.0
        %2073 = vmatprep.subr.mxu0 0.0
        %2074 = vmatpush2.msra.mxu0 0.0
        %2075 = vmatprep.subr.mxu0 0.0
        %2076 = vmatpush2.msra.mxu0 0.0
        %2077 = vmatprep.subr.mxu0 0.0
        %2078 = vmatpush2.msra.mxu0 0.0
        %2079 = vmatprep.subr.mxu0 0.0
        %2080 = vmatpush2.msra.mxu0 0.0
        %2081 = vmatprep.subr.mxu0 0.0
        %2082 = vmatpush2.msra.mxu0 0.0
        %2083 = vmatprep.subr.mxu0 0.0
        %2084 = vmatpush2.msra.mxu0 0.0
        %2085 = vmatprep.subr.mxu0 0.0
        %2086 = vmatpush2.msra.mxu0 0.0
        %2087 = vmatprep.subr.mxu0 0.0
        %2088 = vmatpush2.msra.mxu0 0.0
        %2089 = vmatprep.subr.mxu0 0.0
        %2090 = vmatpush2.msra.mxu0 0.0
        %2091 = vmatprep.subr.mxu0 0.0
        %2092 = vmatpush2.msra.mxu0 0.0
        %2093 = vmatprep.subr.mxu0 0.0
        %2094 = vmatpush2.msra.mxu0 0.0
        %2095 = vmatprep.subr.mxu0 0.0
        %2096 = vmatpush2.msra.mxu0 0.0
        %2097 = vmatprep.mubr.f32.mxu0 0.0
        %2098 = vmatmul.mubr.f32.gmra.mxu0 %v2010
        %v2099 = vpop.f32.mrf.mxu0
        %v2100 = vadd.f32 0.0, %v2099
        %v2101 = vpop.f32.mrf.mxu0
        %2102 = vmatprep.mubr.f32.mxu0 0.0
        %2103 = vmatmul.mubr.f32.gmra.mxu0 %v2013
        %v2104 = vpop.f32.mrf.mxu0
        %v2105 = vadd.f32 0.0, %v2104
        %v2106 = vpop.f32.mrf.mxu0
        %2107 = vmatprep.mubr.f32.mxu0 0.0
        %2108 = vmatmul.mubr.f32.gmra.mxu0 %v2016
        %v2109 = vpop.f32.mrf.mxu0
        %v2110 = vadd.f32 0.0, %v2109
        %v2111 = vpop.f32.mrf.mxu0
        %2112 = vmatprep.mubr.f32.mxu0 0.0
        %2113 = vmatmul.mubr.f32.gmra.mxu0 %v2019
        %v2114 = vpop.f32.mrf.mxu0
        %v2115 = vadd.f32 0.0, %v2114
        %v2116 = vpop.f32.mrf.mxu0
        %2117 = vmatprep.mubr.f32.mxu0 0.0
        %2118 = vmatmul.mubr.f32.gmra.mxu0 %v2022
        %v2119 = vpop.f32.mrf.mxu0
        %v2120 = vadd.f32 0.0, %v2119
        %v2121 = vpop.f32.mrf.mxu0
        %2122 = vmatprep.mubr.f32.mxu0 0.0
        %2123 = vmatmul.mubr.f32.gmra.mxu0 %v2025
        %v2124 = vpop.f32.mrf.mxu0
        %v2125 = vadd.f32 0.0, %v2124
        %v2126 = vpop.f32.mrf.mxu0
        %2127 = vmatprep.mubr.f32.mxu0 0.0
        %2128 = vmatmul.mubr.f32.gmra.mxu0 %v2028
        %v2129 = vpop.f32.mrf.mxu0
        %v2130 = vadd.f32 0.0, %v2129
        %v2131 = vpop.f32.mrf.mxu0
        %2132 = vmatprep.mubr.f32.mxu0 0.0
        %2133 = vmatmul.mubr.f32.gmra.mxu0 %v2031
        %v2134 = vpop.f32.mrf.mxu0
        %v2135 = vadd.f32 0.0, %v2134
        %v2136 = vpop.f32.mrf.mxu0
        %2137 = vdwg.mxu0
        %v2138 = vld [vmem:[%s3] sm:$0xff]
        %2139 = vmatprep.subr.mxu0 0.0
        %2140 = vmatpush1.msra.mxu0 0.0
        %2141 = vmatprep.subr.mxu0 0.0
        %2142 = vmatpush1.msra.mxu0 0.0
        %2143 = vmatprep.subr.mxu0 0.0
        %2144 = vmatpush1.msra.mxu0 0.0
        %2145 = vmatprep.subr.mxu0 0.0
        %2146 = vmatpush1.msra.mxu0 0.0
        %2147 = vmatprep.subr.mxu0 0.0
        %2148 = vmatpush1.msra.mxu0 0.0
        %2149 = vmatprep.subr.mxu0 0.0
        %2150 = vmatpush1.msra.mxu0 0.0
        %2151 = vmatprep.subr.mxu0 0.0
        %2152 = vmatpush1.msra.mxu0 0.0
        %2153 = vmatprep.subr.mxu0 0.0
        %2154 = vmatpush1.msra.mxu0 0.0
        %2155 = vmatprep.subr.mxu0 0.0
        %2156 = vmatpush1.msra.mxu0 0.0
        %2157 = vmatprep.subr.mxu0 0.0
        %2158 = vmatpush1.msra.mxu0 0.0
        %2159 = vmatprep.subr.mxu0 0.0
        %2160 = vmatpush1.msra.mxu0 0.0
        %2161 = vmatprep.subr.mxu0 0.0
        %2162 = vmatpush1.msra.mxu0 0.0
        %2163 = vmatprep.subr.mxu0 0.0
        %2164 = vmatpush1.msra.mxu0 0.0
        %2165 = vmatprep.subr.mxu0 0.0
        %2166 = vmatpush1.msra.mxu0 0.0
        %2167 = vmatprep.subr.mxu0 0.0
        %2168 = vmatpush1.msra.mxu0 0.0
        %2169 = vmatprep.subr.mxu0 0.0
        %2170 = vmatpush1.msra.mxu0 %v2138
        %2171 = vmatprep.subr.mxu0 0.0
        %2172 = vmatpush2.msra.mxu0 0.0
        %2173 = vmatprep.subr.mxu0 0.0
        %2174 = vmatpush2.msra.mxu0 0.0
        %2175 = vmatprep.subr.mxu0 0.0
        %2176 = vmatpush2.msra.mxu0 0.0
        %2177 = vmatprep.subr.mxu0 0.0
        %2178 = vmatpush2.msra.mxu0 0.0
        %2179 = vmatprep.subr.mxu0 0.0
        %2180 = vmatpush2.msra.mxu0 0.0
        %2181 = vmatprep.subr.mxu0 0.0
        %2182 = vmatpush2.msra.mxu0 0.0
        %2183 = vmatprep.subr.mxu0 0.0
        %2184 = vmatpush2.msra.mxu0 0.0
        %2185 = vmatprep.subr.mxu0 0.0
        %2186 = vmatpush2.msra.mxu0 0.0
        %2187 = vmatprep.subr.mxu0 0.0
        %2188 = vmatpush2.msra.mxu0 0.0
        %2189 = vmatprep.subr.mxu0 0.0
        %2190 = vmatpush2.msra.mxu0 0.0
        %2191 = vmatprep.subr.mxu0 0.0
        %2192 = vmatpush2.msra.mxu0 0.0
        %2193 = vmatprep.subr.mxu0 0.0
        %2194 = vmatpush2.msra.mxu0 0.0
        %2195 = vmatprep.subr.mxu0 0.0
        %2196 = vmatpush2.msra.mxu0 0.0
        %2197 = vmatprep.subr.mxu0 0.0
        %2198 = vmatpush2.msra.mxu0 0.0
        %2199 = vmatprep.subr.mxu0 0.0
        %2200 = vmatpush2.msra.mxu0 0.0
        %2201 = vmatprep.subr.mxu0 0.0
        %2202 = vmatpush2.msra.mxu0 0.0
        %2203 = vmatprep.mubr.f32.mxu0 0.0
        %2204 = vmatmul.mubr.f32.gmra.mxu0 %v2010
        %v2205 = vpop.f32.mrf.mxu0
        %v2206 = vadd.f32 0.0, %v2205
        %v2207 = vpop.f32.mrf.mxu0
        %2208 = vmatprep.mubr.f32.mxu0 0.0
        %2209 = vmatmul.mubr.f32.gmra.mxu0 %v2013
        %v2210 = vpop.f32.mrf.mxu0
        %v2211 = vadd.f32 0.0, %v2210
        %v2212 = vpop.f32.mrf.mxu0
        %2213 = vmatprep.mubr.f32.mxu0 0.0
        %2214 = vmatmul.mubr.f32.gmra.mxu0 %v2016
        %v2215 = vpop.f32.mrf.mxu0
        %v2216 = vadd.f32 0.0, %v2215
        %v2217 = vpop.f32.mrf.mxu0
        %2218 = vmatprep.mubr.f32.mxu0 0.0
        %2219 = vmatmul.mubr.f32.gmra.mxu0 %v2019
        %v2220 = vpop.f32.mrf.mxu0
        %v2221 = vadd.f32 0.0, %v2220
        %v2222 = vpop.f32.mrf.mxu0
        %2223 = vmatprep.mubr.f32.mxu0 0.0
        %2224 = vmatmul.mubr.f32.gmra.mxu0 %v2022
        %v2225 = vpop.f32.mrf.mxu0
        %v2226 = vadd.f32 0.0, %v2225
        %v2227 = vpop.f32.mrf.mxu0
        %2228 = vmatprep.mubr.f32.mxu0 0.0
        %2229 = vmatmul.mubr.f32.gmra.mxu0 %v2025
        %v2230 = vpop.f32.mrf.mxu0
        %v2231 = vadd.f32 0.0, %v2230
        %v2232 = vpop.f32.mrf.mxu0
        %2233 = vmatprep.mubr.f32.mxu0 0.0
        %2234 = vmatmul.mubr.f32.gmra.mxu0 %v2028
        %v2235 = vpop.f32.mrf.mxu0
        %v2236 = vadd.f32 0.0, %v2235
        %v2237 = vpop.f32.mrf.mxu0
        %2238 = vmatprep.mubr.f32.mxu0 0.0
        %2239 = vmatmul.mubr.f32.gmra.mxu0 %v2031
        %v2240 = vpop.f32.mrf.mxu0
        %v2241 = vadd.f32 0.0, %v2240
        %v2242 = vpop.f32.mrf.mxu0
        %2243 = vdwg.mxu0
        %v2244 = vmax.f32 %v2206, 0.0
        %v2245 = vmax.f32 %v2211, 0.0
        %v2246 = vmax.f32 %v2216, 0.0
        %v2247 = vmax.f32 %v2221, 0.0
        %v2248 = vmax.f32 %v2226, 0.0
        %v2249 = vmax.f32 %v2231, 0.0
        %v2250 = vmax.f32 %v2236, 0.0
        %v2251 = vmax.f32 %v2241, 0.0
        %2252 = vrot.lane.b32.xlu0 %v635, 120
        %v2253 = vpop.permute.xlu0 %2252
        %2254 = vrot.lane.b32.xlu0 %v635, 88
        %v2255 = vpop.permute.xlu0 %2254
        %v2256 = vsel %vm682, %v2253, 0
        %v2258 = vsel %vm682, %v2255, 0
        %2260 = vmatprep.subr.mxu0 0.0
        %2261 = vmatpush1.xpose.msra.mxu0 0.0
        %2262 = vmatprep.subr.mxu0 0.0
        %2263 = vmatpush1.xpose.msra.mxu0 0.0
        %2264 = vmatprep.subr.mxu0 0.0
        %2265 = vmatpush1.xpose.msra.mxu0 0.0
        %2266 = vmatprep.subr.mxu0 0.0
        %2267 = vmatpush1.xpose.msra.mxu0 0.0
        %2268 = vmatprep.subr.mxu0 0.0
        %2269 = vmatpush1.xpose.msra.mxu0 0.0
        %2270 = vmatprep.subr.mxu0 0.0
        %2271 = vmatpush1.xpose.msra.mxu0 0.0
        %2272 = vmatprep.subr.mxu0 0.0
        %2273 = vmatpush1.xpose.msra.mxu0 0.0
        %2274 = vmatprep.subr.mxu0 0.0
        %2275 = vmatpush1.xpose.msra.mxu0 0.0
        %2276 = vmatprep.subr.mxu0 0.0
        %2277 = vmatpush1.xpose.msra.mxu0 0.0
        %2278 = vmatprep.subr.mxu0 0.0
        %2279 = vmatpush1.xpose.msra.mxu0 0.0
        %2280 = vmatprep.subr.mxu0 0.0
        %2281 = vmatpush1.xpose.msra.mxu0 0.0
        %2282 = vmatprep.subr.mxu0 0.0
        %2283 = vmatpush1.xpose.msra.mxu0 0.0
        %2284 = vmatprep.subr.mxu0 0.0
        %2285 = vmatpush1.xpose.msra.mxu0 0.0
        %2286 = vmatprep.subr.mxu0 0.0
        %2287 = vmatpush1.xpose.msra.mxu0 0.0
        %2288 = vmatprep.subr.mxu0 0.0
        %2289 = vmatpush1.xpose.msra.mxu0 0.0
        %2290 = vmatprep.subr.mxu0 0.0
        %2291 = vmatpush1.xpose.msra.mxu0 %v2258
        %2292 = vmatprep.subr.mxu0 0.0
        %2293 = vmatpush2.xpose.msra.mxu0 0.0
        %2294 = vmatprep.subr.mxu0 0.0
        %2295 = vmatpush2.xpose.msra.mxu0 0.0
        %2296 = vmatprep.subr.mxu0 0.0
        %2297 = vmatpush2.xpose.msra.mxu0 0.0
        %2298 = vmatprep.subr.mxu0 0.0
        %2299 = vmatpush2.xpose.msra.mxu0 0.0
        %2300 = vmatprep.subr.mxu0 0.0
        %2301 = vmatpush2.xpose.msra.mxu0 0.0
        %2302 = vmatprep.subr.mxu0 0.0
        %2303 = vmatpush2.xpose.msra.mxu0 0.0
        %2304 = vmatprep.subr.mxu0 0.0
        %2305 = vmatpush2.xpose.msra.mxu0 0.0
        %2306 = vmatprep.subr.mxu0 0.0
        %2307 = vmatpush2.xpose.msra.mxu0 0.0
        %2308 = vmatprep.subr.mxu0 0.0
        %2309 = vmatpush2.xpose.msra.mxu0 0.0
        %2310 = vmatprep.subr.mxu0 0.0
        %2311 = vmatpush2.xpose.msra.mxu0 0.0
        %2312 = vmatprep.subr.mxu0 0.0
        %2313 = vmatpush2.xpose.msra.mxu0 0.0
        %2314 = vmatprep.subr.mxu0 0.0
        %2315 = vmatpush2.xpose.msra.mxu0 0.0
        %2316 = vmatprep.subr.mxu0 0.0
        %2317 = vmatpush2.xpose.msra.mxu0 0.0
        %2318 = vmatprep.subr.mxu0 0.0
        %2319 = vmatpush2.xpose.msra.mxu0 0.0
        %2320 = vmatprep.subr.mxu0 0.0
        %2321 = vmatpush2.xpose.msra.mxu0 0.0
        %2322 = vmatprep.subr.mxu0 0.0
        %2323 = vmatpush2.xpose.msra.mxu0 0.0
        %2324 = vmatprep.mubr.f32.mxu0 0.0
        %2325 = vmatmul.mubr.f32.gmra.mxu0 %v2256
        %v2326 = vpop.f32.mrf.mxu0
        %v2327 = vadd.f32 0.0, %v2326
        %v2328 = vpop.f32.mrf.mxu0
        %2329 = vdwg.mxu0
        %2330 = vrot.lane.b32.xlu0 %v640, 120
        %v2331 = vpop.permute.xlu0 %2330
        %2332 = vrot.lane.b32.xlu0 %v640, 88
        %v2333 = vpop.permute.xlu0 %2332
        %v2334 = vsel %vm682, %v2331, 0
        %v2336 = vsel %vm682, %v2333, 0
        %2338 = vmatprep.subr.mxu0 0.0
        %2339 = vmatpush1.xpose.msra.mxu0 0.0
        %2340 = vmatprep.subr.mxu0 0.0
        %2341 = vmatpush1.xpose.msra.mxu0 0.0
        %2342 = vmatprep.subr.mxu0 0.0
        %2343 = vmatpush1.xpose.msra.mxu0 0.0
        %2344 = vmatprep.subr.mxu0 0.0
        %2345 = vmatpush1.xpose.msra.mxu0 0.0
        %2346 = vmatprep.subr.mxu0 0.0
        %2347 = vmatpush1.xpose.msra.mxu0 0.0
        %2348 = vmatprep.subr.mxu0 0.0
        %2349 = vmatpush1.xpose.msra.mxu0 0.0
        %2350 = vmatprep.subr.mxu0 0.0
        %2351 = vmatpush1.xpose.msra.mxu0 0.0
        %2352 = vmatprep.subr.mxu0 0.0
        %2353 = vmatpush1.xpose.msra.mxu0 0.0
        %2354 = vmatprep.subr.mxu0 0.0
        %2355 = vmatpush1.xpose.msra.mxu0 0.0
        %2356 = vmatprep.subr.mxu0 0.0
        %2357 = vmatpush1.xpose.msra.mxu0 0.0
        %2358 = vmatprep.subr.mxu0 0.0
        %2359 = vmatpush1.xpose.msra.mxu0 0.0
        %2360 = vmatprep.subr.mxu0 0.0
        %2361 = vmatpush1.xpose.msra.mxu0 0.0
        %2362 = vmatprep.subr.mxu0 0.0
        %2363 = vmatpush1.xpose.msra.mxu0 0.0
        %2364 = vmatprep.subr.mxu0 0.0
        %2365 = vmatpush1.xpose.msra.mxu0 0.0
        %2366 = vmatprep.subr.mxu0 0.0
        %2367 = vmatpush1.xpose.msra.mxu0 0.0
        %2368 = vmatprep.subr.mxu0 0.0
        %2369 = vmatpush1.xpose.msra.mxu0 %v2336
        %2370 = vmatprep.subr.mxu0 0.0
        %2371 = vmatpush2.xpose.msra.mxu0 0.0
        %2372 = vmatprep.subr.mxu0 0.0
        %2373 = vmatpush2.xpose.msra.mxu0 0.0
        %2374 = vmatprep.subr.mxu0 0.0
        %2375 = vmatpush2.xpose.msra.mxu0 0.0
        %2376 = vmatprep.subr.mxu0 0.0
        %2377 = vmatpush2.xpose.msra.mxu0 0.0
        %2378 = vmatprep.subr.mxu0 0.0
        %2379 = vmatpush2.xpose.msra.mxu0 0.0
        %2380 = vmatprep.subr.mxu0 0.0
        %2381 = vmatpush2.xpose.msra.mxu0 0.0
        %2382 = vmatprep.subr.mxu0 0.0
        %2383 = vmatpush2.xpose.msra.mxu0 0.0
        %2384 = vmatprep.subr.mxu0 0.0
        %2385 = vmatpush2.xpose.msra.mxu0 0.0
        %2386 = vmatprep.subr.mxu0 0.0
        %2387 = vmatpush2.xpose.msra.mxu0 0.0
        %2388 = vmatprep.subr.mxu0 0.0
        %2389 = vmatpush2.xpose.msra.mxu0 0.0
        %2390 = vmatprep.subr.mxu0 0.0
        %2391 = vmatpush2.xpose.msra.mxu0 0.0
        %2392 = vmatprep.subr.mxu0 0.0
        %2393 = vmatpush2.xpose.msra.mxu0 0.0
        %2394 = vmatprep.subr.mxu0 0.0
        %2395 = vmatpush2.xpose.msra.mxu0 0.0
        %2396 = vmatprep.subr.mxu0 0.0
        %2397 = vmatpush2.xpose.msra.mxu0 0.0
        %2398 = vmatprep.subr.mxu0 0.0
        %2399 = vmatpush2.xpose.msra.mxu0 0.0
        %2400 = vmatprep.subr.mxu0 0.0
        %2401 = vmatpush2.xpose.msra.mxu0 0.0
        %2402 = vmatprep.mubr.f32.mxu0 0.0
        %2403 = vmatmul.mubr.f32.gmra.mxu0 %v2334
        %v2404 = vpop.f32.mrf.mxu0
        %v2405 = vadd.f32 0.0, %v2404
        %v2406 = vpop.f32.mrf.mxu0
        %2407 = vdwg.mxu0
        %2408 = vrot.lane.b32.xlu0 %v645, 120
        %v2409 = vpop.permute.xlu0 %2408
        %2410 = vrot.lane.b32.xlu0 %v645, 88
        %v2411 = vpop.permute.xlu0 %2410
        %v2412 = vsel %vm682, %v2409, 0
        %v2414 = vsel %vm682, %v2411, 0
        %2416 = vmatprep.subr.mxu0 0.0
        %2417 = vmatpush1.xpose.msra.mxu0 0.0
        %2418 = vmatprep.subr.mxu0 0.0
        %2419 = vmatpush1.xpose.msra.mxu0 0.0
        %2420 = vmatprep.subr.mxu0 0.0
        %2421 = vmatpush1.xpose.msra.mxu0 0.0
        %2422 = vmatprep.subr.mxu0 0.0
        %2423 = vmatpush1.xpose.msra.mxu0 0.0
        %2424 = vmatprep.subr.mxu0 0.0
        %2425 = vmatpush1.xpose.msra.mxu0 0.0
        %2426 = vmatprep.subr.mxu0 0.0
        %2427 = vmatpush1.xpose.msra.mxu0 0.0
        %2428 = vmatprep.subr.mxu0 0.0
        %2429 = vmatpush1.xpose.msra.mxu0 0.0
        %2430 = vmatprep.subr.mxu0 0.0
        %2431 = vmatpush1.xpose.msra.mxu0 0.0
        %2432 = vmatprep.subr.mxu0 0.0
        %2433 = vmatpush1.xpose.msra.mxu0 0.0
        %2434 = vmatprep.subr.mxu0 0.0
        %2435 = vmatpush1.xpose.msra.mxu0 0.0
        %2436 = vmatprep.subr.mxu0 0.0
        %2437 = vmatpush1.xpose.msra.mxu0 0.0
        %2438 = vmatprep.subr.mxu0 0.0
        %2439 = vmatpush1.xpose.msra.mxu0 0.0
        %2440 = vmatprep.subr.mxu0 0.0
        %2441 = vmatpush1.xpose.msra.mxu0 0.0
        %2442 = vmatprep.subr.mxu0 0.0
        %2443 = vmatpush1.xpose.msra.mxu0 0.0
        %2444 = vmatprep.subr.mxu0 0.0
        %2445 = vmatpush1.xpose.msra.mxu0 0.0
        %2446 = vmatprep.subr.mxu0 0.0
        %2447 = vmatpush1.xpose.msra.mxu0 %v2414
        %2448 = vmatprep.subr.mxu0 0.0
        %2449 = vmatpush2.xpose.msra.mxu0 0.0
        %2450 = vmatprep.subr.mxu0 0.0
        %2451 = vmatpush2.xpose.msra.mxu0 0.0
        %2452 = vmatprep.subr.mxu0 0.0
        %2453 = vmatpush2.xpose.msra.mxu0 0.0
        %2454 = vmatprep.subr.mxu0 0.0
        %2455 = vmatpush2.xpose.msra.mxu0 0.0
        %2456 = vmatprep.subr.mxu0 0.0
        %2457 = vmatpush2.xpose.msra.mxu0 0.0
        %2458 = vmatprep.subr.mxu0 0.0
        %2459 = vmatpush2.xpose.msra.mxu0 0.0
        %2460 = vmatprep.subr.mxu0 0.0
        %2461 = vmatpush2.xpose.msra.mxu0 0.0
        %2462 = vmatprep.subr.mxu0 0.0
        %2463 = vmatpush2.xpose.msra.mxu0 0.0
        %2464 = vmatprep.subr.mxu0 0.0
        %2465 = vmatpush2.xpose.msra.mxu0 0.0
        %2466 = vmatprep.subr.mxu0 0.0
        %2467 = vmatpush2.xpose.msra.mxu0 0.0
        %2468 = vmatprep.subr.mxu0 0.0
        %2469 = vmatpush2.xpose.msra.mxu0 0.0
        %2470 = vmatprep.subr.mxu0 0.0
        %2471 = vmatpush2.xpose.msra.mxu0 0.0
        %2472 = vmatprep.subr.mxu0 0.0
        %2473 = vmatpush2.xpose.msra.mxu0 0.0
        %2474 = vmatprep.subr.mxu0 0.0
        %2475 = vmatpush2.xpose.msra.mxu0 0.0
        %2476 = vmatprep.subr.mxu0 0.0
        %2477 = vmatpush2.xpose.msra.mxu0 0.0
        %2478 = vmatprep.subr.mxu0 0.0
        %2479 = vmatpush2.xpose.msra.mxu0 0.0
        %2480 = vmatprep.mubr.f32.mxu0 0.0
        %2481 = vmatmul.mubr.f32.gmra.mxu0 %v2412
        %v2482 = vpop.f32.mrf.mxu0
        %v2483 = vadd.f32 0.0, %v2482
        %v2484 = vpop.f32.mrf.mxu0
        %2485 = vdwg.mxu0
        %2486 = vrot.lane.b32.xlu0 %v650, 120
        %v2487 = vpop.permute.xlu0 %2486
        %2488 = vrot.lane.b32.xlu0 %v650, 88
        %v2489 = vpop.permute.xlu0 %2488
        %v2490 = vsel %vm682, %v2487, 0
        %v2492 = vsel %vm682, %v2489, 0
        %2494 = vmatprep.subr.mxu0 0.0
        %2495 = vmatpush1.xpose.msra.mxu0 0.0
        %2496 = vmatprep.subr.mxu0 0.0
        %2497 = vmatpush1.xpose.msra.mxu0 0.0
        %2498 = vmatprep.subr.mxu0 0.0
        %2499 = vmatpush1.xpose.msra.mxu0 0.0
        %2500 = vmatprep.subr.mxu0 0.0
        %2501 = vmatpush1.xpose.msra.mxu0 0.0
        %2502 = vmatprep.subr.mxu0 0.0
        %2503 = vmatpush1.xpose.msra.mxu0 0.0
        %2504 = vmatprep.subr.mxu0 0.0
        %2505 = vmatpush1.xpose.msra.mxu0 0.0
        %2506 = vmatprep.subr.mxu0 0.0
        %2507 = vmatpush1.xpose.msra.mxu0 0.0
        %2508 = vmatprep.subr.mxu0 0.0
        %2509 = vmatpush1.xpose.msra.mxu0 0.0
        %2510 = vmatprep.subr.mxu0 0.0
        %2511 = vmatpush1.xpose.msra.mxu0 0.0
        %2512 = vmatprep.subr.mxu0 0.0
        %2513 = vmatpush1.xpose.msra.mxu0 0.0
        %2514 = vmatprep.subr.mxu0 0.0
        %2515 = vmatpush1.xpose.msra.mxu0 0.0
        %2516 = vmatprep.subr.mxu0 0.0
        %2517 = vmatpush1.xpose.msra.mxu0 0.0
        %2518 = vmatprep.subr.mxu0 0.0
        %2519 = vmatpush1.xpose.msra.mxu0 0.0
        %2520 = vmatprep.subr.mxu0 0.0
        %2521 = vmatpush1.xpose.msra.mxu0 0.0
        %2522 = vmatprep.subr.mxu0 0.0
        %2523 = vmatpush1.xpose.msra.mxu0 0.0
        %2524 = vmatprep.subr.mxu0 0.0
        %2525 = vmatpush1.xpose.msra.mxu0 %v2492
        %2526 = vmatprep.subr.mxu0 0.0
        %2527 = vmatpush2.xpose.msra.mxu0 0.0
        %2528 = vmatprep.subr.mxu0 0.0
        %2529 = vmatpush2.xpose.msra.mxu0 0.0
        %2530 = vmatprep.subr.mxu0 0.0
        %2531 = vmatpush2.xpose.msra.mxu0 0.0
        %2532 = vmatprep.subr.mxu0 0.0
        %2533 = vmatpush2.xpose.msra.mxu0 0.0
        %2534 = vmatprep.subr.mxu0 0.0
        %2535 = vmatpush2.xpose.msra.mxu0 0.0
        %2536 = vmatprep.subr.mxu0 0.0
        %2537 = vmatpush2.xpose.msra.mxu0 0.0
        %2538 = vmatprep.subr.mxu0 0.0
        %2539 = vmatpush2.xpose.msra.mxu0 0.0
        %2540 = vmatprep.subr.mxu0 0.0
        %2541 = vmatpush2.xpose.msra.mxu0 0.0
        %2542 = vmatprep.subr.mxu0 0.0
        %2543 = vmatpush2.xpose.msra.mxu0 0.0
        %2544 = vmatprep.subr.mxu0 0.0
        %2545 = vmatpush2.xpose.msra.mxu0 0.0
        %2546 = vmatprep.subr.mxu0 0.0
        %2547 = vmatpush2.xpose.msra.mxu0 0.0
        %2548 = vmatprep.subr.mxu0 0.0
        %2549 = vmatpush2.xpose.msra.mxu0 0.0
        %2550 = vmatprep.subr.mxu0 0.0
        %2551 = vmatpush2.xpose.msra.mxu0 0.0
        %2552 = vmatprep.subr.mxu0 0.0
        %2553 = vmatpush2.xpose.msra.mxu0 0.0
        %2554 = vmatprep.subr.mxu0 0.0
        %2555 = vmatpush2.xpose.msra.mxu0 0.0
        %2556 = vmatprep.subr.mxu0 0.0
        %2557 = vmatpush2.xpose.msra.mxu0 0.0
        %2558 = vmatprep.mubr.f32.mxu0 0.0
        %2559 = vmatmul.mubr.f32.gmra.mxu0 %v2490
        %v2560 = vpop.f32.mrf.mxu0
        %v2561 = vadd.f32 0.0, %v2560
        %v2562 = vpop.f32.mrf.mxu0
        %2563 = vdwg.mxu0
        %2564 = vrot.lane.b32.xlu0 %v655, 120
        %v2565 = vpop.permute.xlu0 %2564
        %2566 = vrot.lane.b32.xlu0 %v655, 88
        %v2567 = vpop.permute.xlu0 %2566
        %v2568 = vsel %vm682, %v2565, 0
        %v2570 = vsel %vm682, %v2567, 0
        %2572 = vmatprep.subr.mxu0 0.0
        %2573 = vmatpush1.xpose.msra.mxu0 0.0
        %2574 = vmatprep.subr.mxu0 0.0
        %2575 = vmatpush1.xpose.msra.mxu0 0.0
        %2576 = vmatprep.subr.mxu0 0.0
        %2577 = vmatpush1.xpose.msra.mxu0 0.0
        %2578 = vmatprep.subr.mxu0 0.0
        %2579 = vmatpush1.xpose.msra.mxu0 0.0
        %2580 = vmatprep.subr.mxu0 0.0
        %2581 = vmatpush1.xpose.msra.mxu0 0.0
        %2582 = vmatprep.subr.mxu0 0.0
        %2583 = vmatpush1.xpose.msra.mxu0 0.0
        %2584 = vmatprep.subr.mxu0 0.0
        %2585 = vmatpush1.xpose.msra.mxu0 0.0
        %2586 = vmatprep.subr.mxu0 0.0
        %2587 = vmatpush1.xpose.msra.mxu0 0.0
        %2588 = vmatprep.subr.mxu0 0.0
        %2589 = vmatpush1.xpose.msra.mxu0 0.0
        %2590 = vmatprep.subr.mxu0 0.0
        %2591 = vmatpush1.xpose.msra.mxu0 0.0
        %2592 = vmatprep.subr.mxu0 0.0
        %2593 = vmatpush1.xpose.msra.mxu0 0.0
        %2594 = vmatprep.subr.mxu0 0.0
        %2595 = vmatpush1.xpose.msra.mxu0 0.0
        %2596 = vmatprep.subr.mxu0 0.0
        %2597 = vmatpush1.xpose.msra.mxu0 0.0
        %2598 = vmatprep.subr.mxu0 0.0
        %2599 = vmatpush1.xpose.msra.mxu0 0.0
        %2600 = vmatprep.subr.mxu0 0.0
        %2601 = vmatpush1.xpose.msra.mxu0 0.0
        %2602 = vmatprep.subr.mxu0 0.0
        %2603 = vmatpush1.xpose.msra.mxu0 %v2570
        %2604 = vmatprep.subr.mxu0 0.0
        %2605 = vmatpush2.xpose.msra.mxu0 0.0
        %2606 = vmatprep.subr.mxu0 0.0
        %2607 = vmatpush2.xpose.msra.mxu0 0.0
        %2608 = vmatprep.subr.mxu0 0.0
        %2609 = vmatpush2.xpose.msra.mxu0 0.0
        %2610 = vmatprep.subr.mxu0 0.0
        %2611 = vmatpush2.xpose.msra.mxu0 0.0
        %2612 = vmatprep.subr.mxu0 0.0
        %2613 = vmatpush2.xpose.msra.mxu0 0.0
        %2614 = vmatprep.subr.mxu0 0.0
        %2615 = vmatpush2.xpose.msra.mxu0 0.0
        %2616 = vmatprep.subr.mxu0 0.0
        %2617 = vmatpush2.xpose.msra.mxu0 0.0
        %2618 = vmatprep.subr.mxu0 0.0
        %2619 = vmatpush2.xpose.msra.mxu0 0.0
        %2620 = vmatprep.subr.mxu0 0.0
        %2621 = vmatpush2.xpose.msra.mxu0 0.0
        %2622 = vmatprep.subr.mxu0 0.0
        %2623 = vmatpush2.xpose.msra.mxu0 0.0
        %2624 = vmatprep.subr.mxu0 0.0
        %2625 = vmatpush2.xpose.msra.mxu0 0.0
        %2626 = vmatprep.subr.mxu0 0.0
        %2627 = vmatpush2.xpose.msra.mxu0 0.0
        %2628 = vmatprep.subr.mxu0 0.0
        %2629 = vmatpush2.xpose.msra.mxu0 0.0
        %2630 = vmatprep.subr.mxu0 0.0
        %2631 = vmatpush2.xpose.msra.mxu0 0.0
        %2632 = vmatprep.subr.mxu0 0.0
        %2633 = vmatpush2.xpose.msra.mxu0 0.0
        %2634 = vmatprep.subr.mxu0 0.0
        %2635 = vmatpush2.xpose.msra.mxu0 0.0
        %2636 = vmatprep.mubr.f32.mxu0 0.0
        %2637 = vmatmul.mubr.f32.gmra.mxu0 %v2568
        %v2638 = vpop.f32.mrf.mxu0
        %v2639 = vadd.f32 0.0, %v2638
        %v2640 = vpop.f32.mrf.mxu0
        %2641 = vdwg.mxu0
        %2642 = vrot.lane.b32.xlu0 %v660, 120
        %v2643 = vpop.permute.xlu0 %2642
        %2644 = vrot.lane.b32.xlu0 %v660, 88
        %v2645 = vpop.permute.xlu0 %2644
        %v2646 = vsel %vm682, %v2643, 0
        %v2648 = vsel %vm682, %v2645, 0
        %2650 = vmatprep.subr.mxu0 0.0
        %2651 = vmatpush1.xpose.msra.mxu0 0.0
        %2652 = vmatprep.subr.mxu0 0.0
        %2653 = vmatpush1.xpose.msra.mxu0 0.0
        %2654 = vmatprep.subr.mxu0 0.0
        %2655 = vmatpush1.xpose.msra.mxu0 0.0
        %2656 = vmatprep.subr.mxu0 0.0
        %2657 = vmatpush1.xpose.msra.mxu0 0.0
        %2658 = vmatprep.subr.mxu0 0.0
        %2659 = vmatpush1.xpose.msra.mxu0 0.0
        %2660 = vmatprep.subr.mxu0 0.0
        %2661 = vmatpush1.xpose.msra.mxu0 0.0
        %2662 = vmatprep.subr.mxu0 0.0
        %2663 = vmatpush1.xpose.msra.mxu0 0.0
        %2664 = vmatprep.subr.mxu0 0.0
        %2665 = vmatpush1.xpose.msra.mxu0 0.0
        %2666 = vmatprep.subr.mxu0 0.0
        %2667 = vmatpush1.xpose.msra.mxu0 0.0
        %2668 = vmatprep.subr.mxu0 0.0
        %2669 = vmatpush1.xpose.msra.mxu0 0.0
        %2670 = vmatprep.subr.mxu0 0.0
        %2671 = vmatpush1.xpose.msra.mxu0 0.0
        %2672 = vmatprep.subr.mxu0 0.0
        %2673 = vmatpush1.xpose.msra.mxu0 0.0
        %2674 = vmatprep.subr.mxu0 0.0
        %2675 = vmatpush1.xpose.msra.mxu0 0.0
        %2676 = vmatprep.subr.mxu0 0.0
        %2677 = vmatpush1.xpose.msra.mxu0 0.0
        %2678 = vmatprep.subr.mxu0 0.0
        %2679 = vmatpush1.xpose.msra.mxu0 0.0
        %2680 = vmatprep.subr.mxu0 0.0
        %2681 = vmatpush1.xpose.msra.mxu0 %v2648
        %2682 = vmatprep.subr.mxu0 0.0
        %2683 = vmatpush2.xpose.msra.mxu0 0.0
        %2684 = vmatprep.subr.mxu0 0.0
        %2685 = vmatpush2.xpose.msra.mxu0 0.0
        %2686 = vmatprep.subr.mxu0 0.0
        %2687 = vmatpush2.xpose.msra.mxu0 0.0
        %2688 = vmatprep.subr.mxu0 0.0
        %2689 = vmatpush2.xpose.msra.mxu0 0.0
        %2690 = vmatprep.subr.mxu0 0.0
        %2691 = vmatpush2.xpose.msra.mxu0 0.0
        %2692 = vmatprep.subr.mxu0 0.0
        %2693 = vmatpush2.xpose.msra.mxu0 0.0
        %2694 = vmatprep.subr.mxu0 0.0
        %2695 = vmatpush2.xpose.msra.mxu0 0.0
        %2696 = vmatprep.subr.mxu0 0.0
        %2697 = vmatpush2.xpose.msra.mxu0 0.0
        %2698 = vmatprep.subr.mxu0 0.0
        %2699 = vmatpush2.xpose.msra.mxu0 0.0
        %2700 = vmatprep.subr.mxu0 0.0
        %2701 = vmatpush2.xpose.msra.mxu0 0.0
        %2702 = vmatprep.subr.mxu0 0.0
        %2703 = vmatpush2.xpose.msra.mxu0 0.0
        %2704 = vmatprep.subr.mxu0 0.0
        %2705 = vmatpush2.xpose.msra.mxu0 0.0
        %2706 = vmatprep.subr.mxu0 0.0
        %2707 = vmatpush2.xpose.msra.mxu0 0.0
        %2708 = vmatprep.subr.mxu0 0.0
        %2709 = vmatpush2.xpose.msra.mxu0 0.0
        %2710 = vmatprep.subr.mxu0 0.0
        %2711 = vmatpush2.xpose.msra.mxu0 0.0
        %2712 = vmatprep.subr.mxu0 0.0
        %2713 = vmatpush2.xpose.msra.mxu0 0.0
        %2714 = vmatprep.mubr.f32.mxu0 0.0
        %2715 = vmatmul.mubr.f32.gmra.mxu0 %v2646
        %v2716 = vpop.f32.mrf.mxu0
        %v2717 = vadd.f32 0.0, %v2716
        %v2718 = vpop.f32.mrf.mxu0
        %2719 = vdwg.mxu0
        %2720 = vrot.lane.b32.xlu0 %v665, 120
        %v2721 = vpop.permute.xlu0 %2720
        %2722 = vrot.lane.b32.xlu0 %v665, 88
        %v2723 = vpop.permute.xlu0 %2722
        %v2724 = vsel %vm682, %v2721, 0
        %v2726 = vsel %vm682, %v2723, 0
        %2728 = vmatprep.subr.mxu0 0.0
        %2729 = vmatpush1.xpose.msra.mxu0 0.0
        %2730 = vmatprep.subr.mxu0 0.0
        %2731 = vmatpush1.xpose.msra.mxu0 0.0
        %2732 = vmatprep.subr.mxu0 0.0
        %2733 = vmatpush1.xpose.msra.mxu0 0.0
        %2734 = vmatprep.subr.mxu0 0.0
        %2735 = vmatpush1.xpose.msra.mxu0 0.0
        %2736 = vmatprep.subr.mxu0 0.0
        %2737 = vmatpush1.xpose.msra.mxu0 0.0
        %2738 = vmatprep.subr.mxu0 0.0
        %2739 = vmatpush1.xpose.msra.mxu0 0.0
        %2740 = vmatprep.subr.mxu0 0.0
        %2741 = vmatpush1.xpose.msra.mxu0 0.0
        %2742 = vmatprep.subr.mxu0 0.0
        %2743 = vmatpush1.xpose.msra.mxu0 0.0
        %2744 = vmatprep.subr.mxu0 0.0
        %2745 = vmatpush1.xpose.msra.mxu0 0.0
        %2746 = vmatprep.subr.mxu0 0.0
        %2747 = vmatpush1.xpose.msra.mxu0 0.0
        %2748 = vmatprep.subr.mxu0 0.0
        %2749 = vmatpush1.xpose.msra.mxu0 0.0
        %2750 = vmatprep.subr.mxu0 0.0
        %2751 = vmatpush1.xpose.msra.mxu0 0.0
        %2752 = vmatprep.subr.mxu0 0.0
        %2753 = vmatpush1.xpose.msra.mxu0 0.0
        %2754 = vmatprep.subr.mxu0 0.0
        %2755 = vmatpush1.xpose.msra.mxu0 0.0
        %2756 = vmatprep.subr.mxu0 0.0
        %2757 = vmatpush1.xpose.msra.mxu0 0.0
        %2758 = vmatprep.subr.mxu0 0.0
        %2759 = vmatpush1.xpose.msra.mxu0 %v2726
        %2760 = vmatprep.subr.mxu0 0.0
        %2761 = vmatpush2.xpose.msra.mxu0 0.0
        %2762 = vmatprep.subr.mxu0 0.0
        %2763 = vmatpush2.xpose.msra.mxu0 0.0
        %2764 = vmatprep.subr.mxu0 0.0
        %2765 = vmatpush2.xpose.msra.mxu0 0.0
        %2766 = vmatprep.subr.mxu0 0.0
        %2767 = vmatpush2.xpose.msra.mxu0 0.0
        %2768 = vmatprep.subr.mxu0 0.0
        %2769 = vmatpush2.xpose.msra.mxu0 0.0
        %2770 = vmatprep.subr.mxu0 0.0
        %2771 = vmatpush2.xpose.msra.mxu0 0.0
        %2772 = vmatprep.subr.mxu0 0.0
        %2773 = vmatpush2.xpose.msra.mxu0 0.0
        %2774 = vmatprep.subr.mxu0 0.0
        %2775 = vmatpush2.xpose.msra.mxu0 0.0
        %2776 = vmatprep.subr.mxu0 0.0
        %2777 = vmatpush2.xpose.msra.mxu0 0.0
        %2778 = vmatprep.subr.mxu0 0.0
        %2779 = vmatpush2.xpose.msra.mxu0 0.0
        %2780 = vmatprep.subr.mxu0 0.0
        %2781 = vmatpush2.xpose.msra.mxu0 0.0
        %2782 = vmatprep.subr.mxu0 0.0
        %2783 = vmatpush2.xpose.msra.mxu0 0.0
        %2784 = vmatprep.subr.mxu0 0.0
        %2785 = vmatpush2.xpose.msra.mxu0 0.0
        %2786 = vmatprep.subr.mxu0 0.0
        %2787 = vmatpush2.xpose.msra.mxu0 0.0
        %2788 = vmatprep.subr.mxu0 0.0
        %2789 = vmatpush2.xpose.msra.mxu0 0.0
        %2790 = vmatprep.subr.mxu0 0.0
        %2791 = vmatpush2.xpose.msra.mxu0 0.0
        %2792 = vmatprep.mubr.f32.mxu0 0.0
        %2793 = vmatmul.mubr.f32.gmra.mxu0 %v2724
        %v2794 = vpop.f32.mrf.mxu0
        %v2795 = vadd.f32 0.0, %v2794
        %v2796 = vpop.f32.mrf.mxu0
        %2797 = vdwg.mxu0
        %2798 = vrot.lane.b32.xlu0 %v670, 120
        %v2799 = vpop.permute.xlu0 %2798
        %2800 = vrot.lane.b32.xlu0 %v670, 88
        %v2801 = vpop.permute.xlu0 %2800
        %v2802 = vsel %vm682, %v2799, 0
        %v2804 = vsel %vm682, %v2801, 0
        %2806 = vmatprep.subr.mxu0 0.0
        %2807 = vmatpush1.xpose.msra.mxu0 0.0
        %2808 = vmatprep.subr.mxu0 0.0
        %2809 = vmatpush1.xpose.msra.mxu0 0.0
        %2810 = vmatprep.subr.mxu0 0.0
        %2811 = vmatpush1.xpose.msra.mxu0 0.0
        %2812 = vmatprep.subr.mxu0 0.0
        %2813 = vmatpush1.xpose.msra.mxu0 0.0
        %2814 = vmatprep.subr.mxu0 0.0
        %2815 = vmatpush1.xpose.msra.mxu0 0.0
        %2816 = vmatprep.subr.mxu0 0.0
        %2817 = vmatpush1.xpose.msra.mxu0 0.0
        %2818 = vmatprep.subr.mxu0 0.0
        %2819 = vmatpush1.xpose.msra.mxu0 0.0
        %2820 = vmatprep.subr.mxu0 0.0
        %2821 = vmatpush1.xpose.msra.mxu0 0.0
        %2822 = vmatprep.subr.mxu0 0.0
        %2823 = vmatpush1.xpose.msra.mxu0 0.0
        %2824 = vmatprep.subr.mxu0 0.0
        %2825 = vmatpush1.xpose.msra.mxu0 0.0
        %2826 = vmatprep.subr.mxu0 0.0
        %2827 = vmatpush1.xpose.msra.mxu0 0.0
        %2828 = vmatprep.subr.mxu0 0.0
        %2829 = vmatpush1.xpose.msra.mxu0 0.0
        %2830 = vmatprep.subr.mxu0 0.0
        %2831 = vmatpush1.xpose.msra.mxu0 0.0
        %2832 = vmatprep.subr.mxu0 0.0
        %2833 = vmatpush1.xpose.msra.mxu0 0.0
        %2834 = vmatprep.subr.mxu0 0.0
        %2835 = vmatpush1.xpose.msra.mxu0 0.0
        %2836 = vmatprep.subr.mxu0 0.0
        %2837 = vmatpush1.xpose.msra.mxu0 %v2804
        %2838 = vmatprep.subr.mxu0 0.0
        %2839 = vmatpush2.xpose.msra.mxu0 0.0
        %2840 = vmatprep.subr.mxu0 0.0
        %2841 = vmatpush2.xpose.msra.mxu0 0.0
        %2842 = vmatprep.subr.mxu0 0.0
        %2843 = vmatpush2.xpose.msra.mxu0 0.0
        %2844 = vmatprep.subr.mxu0 0.0
        %2845 = vmatpush2.xpose.msra.mxu0 0.0
        %2846 = vmatprep.subr.mxu0 0.0
        %2847 = vmatpush2.xpose.msra.mxu0 0.0
        %2848 = vmatprep.subr.mxu0 0.0
        %2849 = vmatpush2.xpose.msra.mxu0 0.0
        %2850 = vmatprep.subr.mxu0 0.0
        %2851 = vmatpush2.xpose.msra.mxu0 0.0
        %2852 = vmatprep.subr.mxu0 0.0
        %2853 = vmatpush2.xpose.msra.mxu0 0.0
        %2854 = vmatprep.subr.mxu0 0.0
        %2855 = vmatpush2.xpose.msra.mxu0 0.0
        %2856 = vmatprep.subr.mxu0 0.0
        %2857 = vmatpush2.xpose.msra.mxu0 0.0
        %2858 = vmatprep.subr.mxu0 0.0
        %2859 = vmatpush2.xpose.msra.mxu0 0.0
        %2860 = vmatprep.subr.mxu0 0.0
        %2861 = vmatpush2.xpose.msra.mxu0 0.0
        %2862 = vmatprep.subr.mxu0 0.0
        %2863 = vmatpush2.xpose.msra.mxu0 0.0
        %2864 = vmatprep.subr.mxu0 0.0
        %2865 = vmatpush2.xpose.msra.mxu0 0.0
        %2866 = vmatprep.subr.mxu0 0.0
        %2867 = vmatpush2.xpose.msra.mxu0 0.0
        %2868 = vmatprep.subr.mxu0 0.0
        %2869 = vmatpush2.xpose.msra.mxu0 0.0
        %2870 = vmatprep.mubr.f32.mxu0 0.0
        %2871 = vmatmul.mubr.f32.gmra.mxu0 %v2802
        %v2872 = vpop.f32.mrf.mxu0
        %v2873 = vadd.f32 0.0, %v2872
        %v2874 = vpop.f32.mrf.mxu0
        %2875 = vdwg.mxu0
        %v2876 = vmul.f32 %v2327, 0.35355338
        %v2877 = vmul.f32 %v2405, 0.35355338
        %v2878 = vmul.f32 %v2483, 0.35355338
        %v2879 = vmul.f32 %v2561, 0.35355338
        %v2880 = vmul.f32 %v2639, 0.35355338
        %v2881 = vmul.f32 %v2717, 0.35355338
        %v2882 = vmul.f32 %v2795, 0.35355338
        %v2883 = vmul.f32 %v2873, 0.35355338
        %v2884 = vadd.f32 %v2876, %v678
        %v2885 = vadd.f32 %v2877, %v678
        %v2886 = vadd.f32 %v2878, %v678
        %v2887 = vadd.f32 %v2879, %v678
        %v2888 = vadd.f32 %v2880, %v678
        %v2889 = vadd.f32 %v2881, %v678
        %v2890 = vadd.f32 %v2882, %v678
        %v2891 = vadd.f32 %v2883, %v678
        %v2892 = vsel %vm682, %v2884, -inf
        %2893 = vmax.xlane.f32.xlu0 %v2892
        %v2894 = vpop.xlane.xlu0 %2893
        %v2895 = vsel %vm682, %v2885, -inf
        %2896 = vmax.xlane.f32.xlu0 %v2895
        %v2897 = vpop.xlane.xlu0 %2896
        %v2898 = vsel %vm682, %v2886, -inf
        %2899 = vmax.xlane.f32.xlu0 %v2898
        %v2900 = vpop.xlane.xlu0 %2899
        %v2901 = vsel %vm682, %v2887, -inf
        %2902 = vmax.xlane.f32.xlu0 %v2901
        %v2903 = vpop.xlane.xlu0 %2902
        %v2904 = vsel %vm682, %v2888, -inf
        %2905 = vmax.xlane.f32.xlu0 %v2904
        %v2906 = vpop.xlane.xlu0 %2905
        %v2907 = vsel %vm682, %v2889, -inf
        %2908 = vmax.xlane.f32.xlu0 %v2907
        %v2909 = vpop.xlane.xlu0 %2908
        %v2910 = vsel %vm682, %v2890, -inf
        %2911 = vmax.xlane.f32.xlu0 %v2910
        %v2912 = vpop.xlane.xlu0 %2911
        %v2913 = vsel %vm682, %v2891, -inf
        %2914 = vmax.xlane.f32.xlu0 %v2913
        %v2915 = vpop.xlane.xlu0 %2914
        %v2916 = vsub.f32 %v2884, %v2894
        %v2917 = vsub.f32 %v2885, %v2897
        %v2918 = vsub.f32 %v2886, %v2900
        %v2919 = vsub.f32 %v2887, %v2903
        %v2920 = vsub.f32 %v2888, %v2906
        %v2921 = vsub.f32 %v2889, %v2909
        %v2922 = vsub.f32 %v2890, %v2912
        %v2923 = vsub.f32 %v2891, %v2915
        %v2924 = vmul.f32 %v2916, 1.442695
        %v2925 = vpow.pop %v2924
        %v2926 = vmul.f32 %v2917, 1.442695
        %v2927 = vpow.pop %v2926
        %v2928 = vmul.f32 %v2918, 1.442695
        %v2929 = vpow.pop %v2928
        %v2930 = vmul.f32 %v2919, 1.442695
        %v2931 = vpow.pop %v2930
        %v2932 = vmul.f32 %v2920, 1.442695
        %v2933 = vpow.pop %v2932
        %v2934 = vmul.f32 %v2921, 1.442695
        %v2935 = vpow.pop %v2934
        %v2936 = vmul.f32 %v2922, 1.442695
        %v2937 = vpow.pop %v2936
        %v2938 = vmul.f32 %v2923, 1.442695
        %v2939 = vpow.pop %v2938
        %v2940 = vsel %vm682, %v2925, 0.0
        %2941 = vadd.xlane.f32.xlu0 %v2940
        %v2942 = vpop.xlane.xlu0 %2941
        %v2943 = vsel %vm682, %v2927, 0.0
        %2944 = vadd.xlane.f32.xlu0 %v2943
        %v2945 = vpop.xlane.xlu0 %2944
        %v2946 = vsel %vm682, %v2929, 0.0
        %2947 = vadd.xlane.f32.xlu0 %v2946
        %v2948 = vpop.xlane.xlu0 %2947
        %v2949 = vsel %vm682, %v2931, 0.0
        %2950 = vadd.xlane.f32.xlu0 %v2949
        %v2951 = vpop.xlane.xlu0 %2950
        %v2952 = vsel %vm682, %v2933, 0.0
        %2953 = vadd.xlane.f32.xlu0 %v2952
        %v2954 = vpop.xlane.xlu0 %2953
        %v2955 = vsel %vm682, %v2935, 0.0
        %2956 = vadd.xlane.f32.xlu0 %v2955
        %v2957 = vpop.xlane.xlu0 %2956
        %v2958 = vsel %vm682, %v2937, 0.0
        %2959 = vadd.xlane.f32.xlu0 %v2958
        %v2960 = vpop.xlane.xlu0 %2959
        %v2961 = vsel %vm682, %v2939, 0.0
        %2962 = vadd.xlane.f32.xlu0 %v2961
        %v2963 = vpop.xlane.xlu0 %2962
        %v2964 = vrcp.pop %v2942
        %v2965 = vrcp.pop %v2945
        %v2966 = vrcp.pop %v2948
        %v2967 = vrcp.pop %v2951
        %v2968 = vrcp.pop %v2954
        %v2969 = vrcp.pop %v2957
        %v2970 = vrcp.pop %v2960
        %v2971 = vrcp.pop %v2963
        %v2972 = vmul.f32 %v2925, %v2964
        %v2973 = vmul.f32 %v2927, %v2965
        %v2974 = vmul.f32 %v2929, %v2966
        %v2975 = vmul.f32 %v2931, %v2967
        %v2976 = vmul.f32 %v2933, %v2968
        %v2977 = vmul.f32 %v2935, %v2969
        %v2978 = vmul.f32 %v2937, %v2970
        %v2979 = vmul.f32 %v2939, %v2971
        %2980 = vrot.lane.b32.xlu0 %v635, 56
        %v2981 = vpop.permute.xlu0 %2980
        %v2984 = vsel %vm682, %v2972, 0
        %2986 = vmatprep.subr.mxu0 0.0
        %2987 = vmatpush1.msra.mxu0 0.0
        %2988 = vmatprep.subr.mxu0 0.0
        %2989 = vmatpush1.msra.mxu0 0.0
        %2990 = vmatprep.subr.mxu0 0.0
        %2991 = vmatpush1.msra.mxu0 0.0
        %2992 = vmatprep.subr.mxu0 0.0
        %2993 = vmatpush1.msra.mxu0 0.0
        %2994 = vmatprep.subr.mxu0 0.0
        %2995 = vmatpush1.msra.mxu0 0.0
        %2996 = vmatprep.subr.mxu0 0.0
        %2997 = vmatpush1.msra.mxu0 0.0
        %2998 = vmatprep.subr.mxu0 0.0
        %2999 = vmatpush1.msra.mxu0 0.0
        %3000 = vmatprep.subr.mxu0 0.0
        %3001 = vmatpush1.msra.mxu0 0.0
        %3002 = vmatprep.subr.mxu0 0.0
        %3003 = vmatpush1.msra.mxu0 0.0
        %3004 = vmatprep.subr.mxu0 0.0
        %3005 = vmatpush1.msra.mxu0 0.0
        %3006 = vmatprep.subr.mxu0 0.0
        %3007 = vmatpush1.msra.mxu0 0.0
        %3008 = vmatprep.subr.mxu0 0.0
        %3009 = vmatpush1.msra.mxu0 0.0
        %3010 = vmatprep.subr.mxu0 0.0
        %3011 = vmatpush1.msra.mxu0 0.0
        %3012 = vmatprep.subr.mxu0 0.0
        %3013 = vmatpush1.msra.mxu0 0.0
        %3014 = vmatprep.subr.mxu0 0.0
        %3015 = vmatpush1.msra.mxu0 0.0
        %3016 = vmatprep.subr.mxu0 0.0
        %3017 = vmatpush1.msra.mxu0 %v2981
        %3018 = vmatprep.subr.mxu0 0.0
        %3019 = vmatpush2.msra.mxu0 0.0
        %3020 = vmatprep.subr.mxu0 0.0
        %3021 = vmatpush2.msra.mxu0 0.0
        %3022 = vmatprep.subr.mxu0 0.0
        %3023 = vmatpush2.msra.mxu0 0.0
        %3024 = vmatprep.subr.mxu0 0.0
        %3025 = vmatpush2.msra.mxu0 0.0
        %3026 = vmatprep.subr.mxu0 0.0
        %3027 = vmatpush2.msra.mxu0 0.0
        %3028 = vmatprep.subr.mxu0 0.0
        %3029 = vmatpush2.msra.mxu0 0.0
        %3030 = vmatprep.subr.mxu0 0.0
        %3031 = vmatpush2.msra.mxu0 0.0
        %3032 = vmatprep.subr.mxu0 0.0
        %3033 = vmatpush2.msra.mxu0 0.0
        %3034 = vmatprep.subr.mxu0 0.0
        %3035 = vmatpush2.msra.mxu0 0.0
        %3036 = vmatprep.subr.mxu0 0.0
        %3037 = vmatpush2.msra.mxu0 0.0
        %3038 = vmatprep.subr.mxu0 0.0
        %3039 = vmatpush2.msra.mxu0 0.0
        %3040 = vmatprep.subr.mxu0 0.0
        %3041 = vmatpush2.msra.mxu0 0.0
        %3042 = vmatprep.subr.mxu0 0.0
        %3043 = vmatpush2.msra.mxu0 0.0
        %3044 = vmatprep.subr.mxu0 0.0
        %3045 = vmatpush2.msra.mxu0 0.0
        %3046 = vmatprep.subr.mxu0 0.0
        %3047 = vmatpush2.msra.mxu0 0.0
        %3048 = vmatprep.subr.mxu0 0.0
        %3049 = vmatpush2.msra.mxu0 0.0
        %3050 = vmatprep.mubr.f32.mxu0 0.0
        %3051 = vmatmul.mubr.f32.gmra.mxu0 %v2984
        %v3052 = vpop.f32.mrf.mxu0
        %v3053 = vadd.f32 0.0, %v3052
        %v3054 = vpop.f32.mrf.mxu0
        %3055 = vdwg.mxu0
        %3056 = vrot.lane.b32.xlu0 %v640, 56
        %v3057 = vpop.permute.xlu0 %3056
        %v3060 = vsel %vm682, %v2973, 0
        %3062 = vmatprep.subr.mxu0 0.0
        %3063 = vmatpush1.msra.mxu0 0.0
        %3064 = vmatprep.subr.mxu0 0.0
        %3065 = vmatpush1.msra.mxu0 0.0
        %3066 = vmatprep.subr.mxu0 0.0
        %3067 = vmatpush1.msra.mxu0 0.0
        %3068 = vmatprep.subr.mxu0 0.0
        %3069 = vmatpush1.msra.mxu0 0.0
        %3070 = vmatprep.subr.mxu0 0.0
        %3071 = vmatpush1.msra.mxu0 0.0
        %3072 = vmatprep.subr.mxu0 0.0
        %3073 = vmatpush1.msra.mxu0 0.0
        %3074 = vmatprep.subr.mxu0 0.0
        %3075 = vmatpush1.msra.mxu0 0.0
        %3076 = vmatprep.subr.mxu0 0.0
        %3077 = vmatpush1.msra.mxu0 0.0
        %3078 = vmatprep.subr.mxu0 0.0
        %3079 = vmatpush1.msra.mxu0 0.0
        %3080 = vmatprep.subr.mxu0 0.0
        %3081 = vmatpush1.msra.mxu0 0.0
        %3082 = vmatprep.subr.mxu0 0.0
        %3083 = vmatpush1.msra.mxu0 0.0
        %3084 = vmatprep.subr.mxu0 0.0
        %3085 = vmatpush1.msra.mxu0 0.0
        %3086 = vmatprep.subr.mxu0 0.0
        %3087 = vmatpush1.msra.mxu0 0.0
        %3088 = vmatprep.subr.mxu0 0.0
        %3089 = vmatpush1.msra.mxu0 0.0
        %3090 = vmatprep.subr.mxu0 0.0
        %3091 = vmatpush1.msra.mxu0 0.0
        %3092 = vmatprep.subr.mxu0 0.0
        %3093 = vmatpush1.msra.mxu0 %v3057
        %3094 = vmatprep.subr.mxu0 0.0
        %3095 = vmatpush2.msra.mxu0 0.0
        %3096 = vmatprep.subr.mxu0 0.0
        %3097 = vmatpush2.msra.mxu0 0.0
        %3098 = vmatprep.subr.mxu0 0.0
        %3099 = vmatpush2.msra.mxu0 0.0
        %3100 = vmatprep.subr.mxu0 0.0
        %3101 = vmatpush2.msra.mxu0 0.0
        %3102 = vmatprep.subr.mxu0 0.0
        %3103 = vmatpush2.msra.mxu0 0.0
        %3104 = vmatprep.subr.mxu0 0.0
        %3105 = vmatpush2.msra.mxu0 0.0
        %3106 = vmatprep.subr.mxu0 0.0
        %3107 = vmatpush2.msra.mxu0 0.0
        %3108 = vmatprep.subr.mxu0 0.0
        %3109 = vmatpush2.msra.mxu0 0.0
        %3110 = vmatprep.subr.mxu0 0.0
        %3111 = vmatpush2.msra.mxu0 0.0
        %3112 = vmatprep.subr.mxu0 0.0
        %3113 = vmatpush2.msra.mxu0 0.0
        %3114 = vmatprep.subr.mxu0 0.0
        %3115 = vmatpush2.msra.mxu0 0.0
        %3116 = vmatprep.subr.mxu0 0.0
        %3117 = vmatpush2.msra.mxu0 0.0
        %3118 = vmatprep.subr.mxu0 0.0
        %3119 = vmatpush2.msra.mxu0 0.0
        %3120 = vmatprep.subr.mxu0 0.0
        %3121 = vmatpush2.msra.mxu0 0.0
        %3122 = vmatprep.subr.mxu0 0.0
        %3123 = vmatpush2.msra.mxu0 0.0
        %3124 = vmatprep.subr.mxu0 0.0
        %3125 = vmatpush2.msra.mxu0 0.0
        %3126 = vmatprep.mubr.f32.mxu0 0.0
        %3127 = vmatmul.mubr.f32.gmra.mxu0 %v3060
        %v3128 = vpop.f32.mrf.mxu0
        %v3129 = vadd.f32 0.0, %v3128
        %v3130 = vpop.f32.mrf.mxu0
        %3131 = vdwg.mxu0
        %3132 = vrot.lane.b32.xlu0 %v645, 56
        %v3133 = vpop.permute.xlu0 %3132
        %v3136 = vsel %vm682, %v2974, 0
        %3138 = vmatprep.subr.mxu0 0.0
        %3139 = vmatpush1.msra.mxu0 0.0
        %3140 = vmatprep.subr.mxu0 0.0
        %3141 = vmatpush1.msra.mxu0 0.0
        %3142 = vmatprep.subr.mxu0 0.0
        %3143 = vmatpush1.msra.mxu0 0.0
        %3144 = vmatprep.subr.mxu0 0.0
        %3145 = vmatpush1.msra.mxu0 0.0
        %3146 = vmatprep.subr.mxu0 0.0
        %3147 = vmatpush1.msra.mxu0 0.0
        %3148 = vmatprep.subr.mxu0 0.0
        %3149 = vmatpush1.msra.mxu0 0.0
        %3150 = vmatprep.subr.mxu0 0.0
        %3151 = vmatpush1.msra.mxu0 0.0
        %3152 = vmatprep.subr.mxu0 0.0
        %3153 = vmatpush1.msra.mxu0 0.0
        %3154 = vmatprep.subr.mxu0 0.0
        %3155 = vmatpush1.msra.mxu0 0.0
        %3156 = vmatprep.subr.mxu0 0.0
        %3157 = vmatpush1.msra.mxu0 0.0
        %3158 = vmatprep.subr.mxu0 0.0
        %3159 = vmatpush1.msra.mxu0 0.0
        %3160 = vmatprep.subr.mxu0 0.0
        %3161 = vmatpush1.msra.mxu0 0.0
        %3162 = vmatprep.subr.mxu0 0.0
        %3163 = vmatpush1.msra.mxu0 0.0
        %3164 = vmatprep.subr.mxu0 0.0
        %3165 = vmatpush1.msra.mxu0 0.0
        %3166 = vmatprep.subr.mxu0 0.0
        %3167 = vmatpush1.msra.mxu0 0.0
        %3168 = vmatprep.subr.mxu0 0.0
        %3169 = vmatpush1.msra.mxu0 %v3133
        %3170 = vmatprep.subr.mxu0 0.0
        %3171 = vmatpush2.msra.mxu0 0.0
        %3172 = vmatprep.subr.mxu0 0.0
        %3173 = vmatpush2.msra.mxu0 0.0
        %3174 = vmatprep.subr.mxu0 0.0
        %3175 = vmatpush2.msra.mxu0 0.0
        %3176 = vmatprep.subr.mxu0 0.0
        %3177 = vmatpush2.msra.mxu0 0.0
        %3178 = vmatprep.subr.mxu0 0.0
        %3179 = vmatpush2.msra.mxu0 0.0
        %3180 = vmatprep.subr.mxu0 0.0
        %3181 = vmatpush2.msra.mxu0 0.0
        %3182 = vmatprep.subr.mxu0 0.0
        %3183 = vmatpush2.msra.mxu0 0.0
        %3184 = vmatprep.subr.mxu0 0.0
        %3185 = vmatpush2.msra.mxu0 0.0
        %3186 = vmatprep.subr.mxu0 0.0
        %3187 = vmatpush2.msra.mxu0 0.0
        %3188 = vmatprep.subr.mxu0 0.0
        %3189 = vmatpush2.msra.mxu0 0.0
        %3190 = vmatprep.subr.mxu0 0.0
        %3191 = vmatpush2.msra.mxu0 0.0
        %3192 = vmatprep.subr.mxu0 0.0
        %3193 = vmatpush2.msra.mxu0 0.0
        %3194 = vmatprep.subr.mxu0 0.0
        %3195 = vmatpush2.msra.mxu0 0.0
        %3196 = vmatprep.subr.mxu0 0.0
        %3197 = vmatpush2.msra.mxu0 0.0
        %3198 = vmatprep.subr.mxu0 0.0
        %3199 = vmatpush2.msra.mxu0 0.0
        %3200 = vmatprep.subr.mxu0 0.0
        %3201 = vmatpush2.msra.mxu0 0.0
        %3202 = vmatprep.mubr.f32.mxu0 0.0
        %3203 = vmatmul.mubr.f32.gmra.mxu0 %v3136
        %v3204 = vpop.f32.mrf.mxu0
        %v3205 = vadd.f32 0.0, %v3204
        %v3206 = vpop.f32.mrf.mxu0
        %3207 = vdwg.mxu0
        %3208 = vrot.lane.b32.xlu0 %v650, 56
        %v3209 = vpop.permute.xlu0 %3208
        %v3212 = vsel %vm682, %v2975, 0
        %3214 = vmatprep.subr.mxu0 0.0
        %3215 = vmatpush1.msra.mxu0 0.0
        %3216 = vmatprep.subr.mxu0 0.0
        %3217 = vmatpush1.msra.mxu0 0.0
        %3218 = vmatprep.subr.mxu0 0.0
        %3219 = vmatpush1.msra.mxu0 0.0
        %3220 = vmatprep.subr.mxu0 0.0
        %3221 = vmatpush1.msra.mxu0 0.0
        %3222 = vmatprep.subr.mxu0 0.0
        %3223 = vmatpush1.msra.mxu0 0.0
        %3224 = vmatprep.subr.mxu0 0.0
        %3225 = vmatpush1.msra.mxu0 0.0
        %3226 = vmatprep.subr.mxu0 0.0
        %3227 = vmatpush1.msra.mxu0 0.0
        %3228 = vmatprep.subr.mxu0 0.0
        %3229 = vmatpush1.msra.mxu0 0.0
        %3230 = vmatprep.subr.mxu0 0.0
        %3231 = vmatpush1.msra.mxu0 0.0
        %3232 = vmatprep.subr.mxu0 0.0
        %3233 = vmatpush1.msra.mxu0 0.0
        %3234 = vmatprep.subr.mxu0 0.0
        %3235 = vmatpush1.msra.mxu0 0.0
        %3236 = vmatprep.subr.mxu0 0.0
        %3237 = vmatpush1.msra.mxu0 0.0
        %3238 = vmatprep.subr.mxu0 0.0
        %3239 = vmatpush1.msra.mxu0 0.0
        %3240 = vmatprep.subr.mxu0 0.0
        %3241 = vmatpush1.msra.mxu0 0.0
        %3242 = vmatprep.subr.mxu0 0.0
        %3243 = vmatpush1.msra.mxu0 0.0
        %3244 = vmatprep.subr.mxu0 0.0
        %3245 = vmatpush1.msra.mxu0 %v3209
        %3246 = vmatprep.subr.mxu0 0.0
        %3247 = vmatpush2.msra.mxu0 0.0
        %3248 = vmatprep.subr.mxu0 0.0
        %3249 = vmatpush2.msra.mxu0 0.0
        %3250 = vmatprep.subr.mxu0 0.0
        %3251 = vmatpush2.msra.mxu0 0.0
        %3252 = vmatprep.subr.mxu0 0.0
        %3253 = vmatpush2.msra.mxu0 0.0
        %3254 = vmatprep.subr.mxu0 0.0
        %3255 = vmatpush2.msra.mxu0 0.0
        %3256 = vmatprep.subr.mxu0 0.0
        %3257 = vmatpush2.msra.mxu0 0.0
        %3258 = vmatprep.subr.mxu0 0.0
        %3259 = vmatpush2.msra.mxu0 0.0
        %3260 = vmatprep.subr.mxu0 0.0
        %3261 = vmatpush2.msra.mxu0 0.0
        %3262 = vmatprep.subr.mxu0 0.0
        %3263 = vmatpush2.msra.mxu0 0.0
        %3264 = vmatprep.subr.mxu0 0.0
        %3265 = vmatpush2.msra.mxu0 0.0
        %3266 = vmatprep.subr.mxu0 0.0
        %3267 = vmatpush2.msra.mxu0 0.0
        %3268 = vmatprep.subr.mxu0 0.0
        %3269 = vmatpush2.msra.mxu0 0.0
        %3270 = vmatprep.subr.mxu0 0.0
        %3271 = vmatpush2.msra.mxu0 0.0
        %3272 = vmatprep.subr.mxu0 0.0
        %3273 = vmatpush2.msra.mxu0 0.0
        %3274 = vmatprep.subr.mxu0 0.0
        %3275 = vmatpush2.msra.mxu0 0.0
        %3276 = vmatprep.subr.mxu0 0.0
        %3277 = vmatpush2.msra.mxu0 0.0
        %3278 = vmatprep.mubr.f32.mxu0 0.0
        %3279 = vmatmul.mubr.f32.gmra.mxu0 %v3212
        %v3280 = vpop.f32.mrf.mxu0
        %v3281 = vadd.f32 0.0, %v3280
        %v3282 = vpop.f32.mrf.mxu0
        %3283 = vdwg.mxu0
        %3284 = vrot.lane.b32.xlu0 %v655, 56
        %v3285 = vpop.permute.xlu0 %3284
        %v3288 = vsel %vm682, %v2976, 0
        %3290 = vmatprep.subr.mxu0 0.0
        %3291 = vmatpush1.msra.mxu0 0.0
        %3292 = vmatprep.subr.mxu0 0.0
        %3293 = vmatpush1.msra.mxu0 0.0
        %3294 = vmatprep.subr.mxu0 0.0
        %3295 = vmatpush1.msra.mxu0 0.0
        %3296 = vmatprep.subr.mxu0 0.0
        %3297 = vmatpush1.msra.mxu0 0.0
        %3298 = vmatprep.subr.mxu0 0.0
        %3299 = vmatpush1.msra.mxu0 0.0
        %3300 = vmatprep.subr.mxu0 0.0
        %3301 = vmatpush1.msra.mxu0 0.0
        %3302 = vmatprep.subr.mxu0 0.0
        %3303 = vmatpush1.msra.mxu0 0.0
        %3304 = vmatprep.subr.mxu0 0.0
        %3305 = vmatpush1.msra.mxu0 0.0
        %3306 = vmatprep.subr.mxu0 0.0
        %3307 = vmatpush1.msra.mxu0 0.0
        %3308 = vmatprep.subr.mxu0 0.0
        %3309 = vmatpush1.msra.mxu0 0.0
        %3310 = vmatprep.subr.mxu0 0.0
        %3311 = vmatpush1.msra.mxu0 0.0
        %3312 = vmatprep.subr.mxu0 0.0
        %3313 = vmatpush1.msra.mxu0 0.0
        %3314 = vmatprep.subr.mxu0 0.0
        %3315 = vmatpush1.msra.mxu0 0.0
        %3316 = vmatprep.subr.mxu0 0.0
        %3317 = vmatpush1.msra.mxu0 0.0
        %3318 = vmatprep.subr.mxu0 0.0
        %3319 = vmatpush1.msra.mxu0 0.0
        %3320 = vmatprep.subr.mxu0 0.0
        %3321 = vmatpush1.msra.mxu0 %v3285
        %3322 = vmatprep.subr.mxu0 0.0
        %3323 = vmatpush2.msra.mxu0 0.0
        %3324 = vmatprep.subr.mxu0 0.0
        %3325 = vmatpush2.msra.mxu0 0.0
        %3326 = vmatprep.subr.mxu0 0.0
        %3327 = vmatpush2.msra.mxu0 0.0
        %3328 = vmatprep.subr.mxu0 0.0
        %3329 = vmatpush2.msra.mxu0 0.0
        %3330 = vmatprep.subr.mxu0 0.0
        %3331 = vmatpush2.msra.mxu0 0.0
        %3332 = vmatprep.subr.mxu0 0.0
        %3333 = vmatpush2.msra.mxu0 0.0
        %3334 = vmatprep.subr.mxu0 0.0
        %3335 = vmatpush2.msra.mxu0 0.0
        %3336 = vmatprep.subr.mxu0 0.0
        %3337 = vmatpush2.msra.mxu0 0.0
        %3338 = vmatprep.subr.mxu0 0.0
        %3339 = vmatpush2.msra.mxu0 0.0
        %3340 = vmatprep.subr.mxu0 0.0
        %3341 = vmatpush2.msra.mxu0 0.0
        %3342 = vmatprep.subr.mxu0 0.0
        %3343 = vmatpush2.msra.mxu0 0.0
        %3344 = vmatprep.subr.mxu0 0.0
        %3345 = vmatpush2.msra.mxu0 0.0
        %3346 = vmatprep.subr.mxu0 0.0
        %3347 = vmatpush2.msra.mxu0 0.0
        %3348 = vmatprep.subr.mxu0 0.0
        %3349 = vmatpush2.msra.mxu0 0.0
        %3350 = vmatprep.subr.mxu0 0.0
        %3351 = vmatpush2.msra.mxu0 0.0
        %3352 = vmatprep.subr.mxu0 0.0
        %3353 = vmatpush2.msra.mxu0 0.0
        %3354 = vmatprep.mubr.f32.mxu0 0.0
        %3355 = vmatmul.mubr.f32.gmra.mxu0 %v3288
        %v3356 = vpop.f32.mrf.mxu0
        %v3357 = vadd.f32 0.0, %v3356
        %v3358 = vpop.f32.mrf.mxu0
        %3359 = vdwg.mxu0
        %3360 = vrot.lane.b32.xlu0 %v660, 56
        %v3361 = vpop.permute.xlu0 %3360
        %v3364 = vsel %vm682, %v2977, 0
        %3366 = vmatprep.subr.mxu0 0.0
        %3367 = vmatpush1.msra.mxu0 0.0
        %3368 = vmatprep.subr.mxu0 0.0
        %3369 = vmatpush1.msra.mxu0 0.0
        %3370 = vmatprep.subr.mxu0 0.0
        %3371 = vmatpush1.msra.mxu0 0.0
        %3372 = vmatprep.subr.mxu0 0.0
        %3373 = vmatpush1.msra.mxu0 0.0
        %3374 = vmatprep.subr.mxu0 0.0
        %3375 = vmatpush1.msra.mxu0 0.0
        %3376 = vmatprep.subr.mxu0 0.0
        %3377 = vmatpush1.msra.mxu0 0.0
        %3378 = vmatprep.subr.mxu0 0.0
        %3379 = vmatpush1.msra.mxu0 0.0
        %3380 = vmatprep.subr.mxu0 0.0
        %3381 = vmatpush1.msra.mxu0 0.0
        %3382 = vmatprep.subr.mxu0 0.0
        %3383 = vmatpush1.msra.mxu0 0.0
        %3384 = vmatprep.subr.mxu0 0.0
        %3385 = vmatpush1.msra.mxu0 0.0
        %3386 = vmatprep.subr.mxu0 0.0
        %3387 = vmatpush1.msra.mxu0 0.0
        %3388 = vmatprep.subr.mxu0 0.0
        %3389 = vmatpush1.msra.mxu0 0.0
        %3390 = vmatprep.subr.mxu0 0.0
        %3391 = vmatpush1.msra.mxu0 0.0
        %3392 = vmatprep.subr.mxu0 0.0
        %3393 = vmatpush1.msra.mxu0 0.0
        %3394 = vmatprep.subr.mxu0 0.0
        %3395 = vmatpush1.msra.mxu0 0.0
        %3396 = vmatprep.subr.mxu0 0.0
        %3397 = vmatpush1.msra.mxu0 %v3361
        %3398 = vmatprep.subr.mxu0 0.0
        %3399 = vmatpush2.msra.mxu0 0.0
        %3400 = vmatprep.subr.mxu0 0.0
        %3401 = vmatpush2.msra.mxu0 0.0
        %3402 = vmatprep.subr.mxu0 0.0
        %3403 = vmatpush2.msra.mxu0 0.0
        %3404 = vmatprep.subr.mxu0 0.0
        %3405 = vmatpush2.msra.mxu0 0.0
        %3406 = vmatprep.subr.mxu0 0.0
        %3407 = vmatpush2.msra.mxu0 0.0
        %3408 = vmatprep.subr.mxu0 0.0
        %3409 = vmatpush2.msra.mxu0 0.0
        %3410 = vmatprep.subr.mxu0 0.0
        %3411 = vmatpush2.msra.mxu0 0.0
        %3412 = vmatprep.subr.mxu0 0.0
        %3413 = vmatpush2.msra.mxu0 0.0
        %3414 = vmatprep.subr.mxu0 0.0
        %3415 = vmatpush2.msra.mxu0 0.0
        %3416 = vmatprep.subr.mxu0 0.0
        %3417 = vmatpush2.msra.mxu0 0.0
        %3418 = vmatprep.subr.mxu0 0.0
        %3419 = vmatpush2.msra.mxu0 0.0
        %3420 = vmatprep.subr.mxu0 0.0
        %3421 = vmatpush2.msra.mxu0 0.0
        %3422 = vmatprep.subr.mxu0 0.0
        %3423 = vmatpush2.msra.mxu0 0.0
        %3424 = vmatprep.subr.mxu0 0.0
        %3425 = vmatpush2.msra.mxu0 0.0
        %3426 = vmatprep.subr.mxu0 0.0
        %3427 = vmatpush2.msra.mxu0 0.0
        %3428 = vmatprep.subr.mxu0 0.0
        %3429 = vmatpush2.msra.mxu0 0.0
        %3430 = vmatprep.mubr.f32.mxu0 0.0
        %3431 = vmatmul.mubr.f32.gmra.mxu0 %v3364
        %v3432 = vpop.f32.mrf.mxu0
        %v3433 = vadd.f32 0.0, %v3432
        %v3434 = vpop.f32.mrf.mxu0
        %3435 = vdwg.mxu0
        %3436 = vrot.lane.b32.xlu0 %v665, 56
        %v3437 = vpop.permute.xlu0 %3436
        %v3440 = vsel %vm682, %v2978, 0
        %3442 = vmatprep.subr.mxu0 0.0
        %3443 = vmatpush1.msra.mxu0 0.0
        %3444 = vmatprep.subr.mxu0 0.0
        %3445 = vmatpush1.msra.mxu0 0.0
        %3446 = vmatprep.subr.mxu0 0.0
        %3447 = vmatpush1.msra.mxu0 0.0
        %3448 = vmatprep.subr.mxu0 0.0
        %3449 = vmatpush1.msra.mxu0 0.0
        %3450 = vmatprep.subr.mxu0 0.0
        %3451 = vmatpush1.msra.mxu0 0.0
        %3452 = vmatprep.subr.mxu0 0.0
        %3453 = vmatpush1.msra.mxu0 0.0
        %3454 = vmatprep.subr.mxu0 0.0
        %3455 = vmatpush1.msra.mxu0 0.0
        %3456 = vmatprep.subr.mxu0 0.0
        %3457 = vmatpush1.msra.mxu0 0.0
        %3458 = vmatprep.subr.mxu0 0.0
        %3459 = vmatpush1.msra.mxu0 0.0
        %3460 = vmatprep.subr.mxu0 0.0
        %3461 = vmatpush1.msra.mxu0 0.0
        %3462 = vmatprep.subr.mxu0 0.0
        %3463 = vmatpush1.msra.mxu0 0.0
        %3464 = vmatprep.subr.mxu0 0.0
        %3465 = vmatpush1.msra.mxu0 0.0
        %3466 = vmatprep.subr.mxu0 0.0
        %3467 = vmatpush1.msra.mxu0 0.0
        %3468 = vmatprep.subr.mxu0 0.0
        %3469 = vmatpush1.msra.mxu0 0.0
        %3470 = vmatprep.subr.mxu0 0.0
        %3471 = vmatpush1.msra.mxu0 0.0
        %3472 = vmatprep.subr.mxu0 0.0
        %3473 = vmatpush1.msra.mxu0 %v3437
        %3474 = vmatprep.subr.mxu0 0.0
        %3475 = vmatpush2.msra.mxu0 0.0
        %3476 = vmatprep.subr.mxu0 0.0
        %3477 = vmatpush2.msra.mxu0 0.0
        %3478 = vmatprep.subr.mxu0 0.0
        %3479 = vmatpush2.msra.mxu0 0.0
        %3480 = vmatprep.subr.mxu0 0.0
        %3481 = vmatpush2.msra.mxu0 0.0
        %3482 = vmatprep.subr.mxu0 0.0
        %3483 = vmatpush2.msra.mxu0 0.0
        %3484 = vmatprep.subr.mxu0 0.0
        %3485 = vmatpush2.msra.mxu0 0.0
        %3486 = vmatprep.subr.mxu0 0.0
        %3487 = vmatpush2.msra.mxu0 0.0
        %3488 = vmatprep.subr.mxu0 0.0
        %3489 = vmatpush2.msra.mxu0 0.0
        %3490 = vmatprep.subr.mxu0 0.0
        %3491 = vmatpush2.msra.mxu0 0.0
        %3492 = vmatprep.subr.mxu0 0.0
        %3493 = vmatpush2.msra.mxu0 0.0
        %3494 = vmatprep.subr.mxu0 0.0
        %3495 = vmatpush2.msra.mxu0 0.0
        %3496 = vmatprep.subr.mxu0 0.0
        %3497 = vmatpush2.msra.mxu0 0.0
        %3498 = vmatprep.subr.mxu0 0.0
        %3499 = vmatpush2.msra.mxu0 0.0
        %3500 = vmatprep.subr.mxu0 0.0
        %3501 = vmatpush2.msra.mxu0 0.0
        %3502 = vmatprep.subr.mxu0 0.0
        %3503 = vmatpush2.msra.mxu0 0.0
        %3504 = vmatprep.subr.mxu0 0.0
        %3505 = vmatpush2.msra.mxu0 0.0
        %3506 = vmatprep.mubr.f32.mxu0 0.0
        %3507 = vmatmul.mubr.f32.gmra.mxu0 %v3440
        %v3508 = vpop.f32.mrf.mxu0
        %v3509 = vadd.f32 0.0, %v3508
        %v3510 = vpop.f32.mrf.mxu0
        %3511 = vdwg.mxu0
        %3512 = vrot.lane.b32.xlu0 %v670, 56
        %v3513 = vpop.permute.xlu0 %3512
        %v3516 = vsel %vm682, %v2979, 0
        %3518 = vmatprep.subr.mxu0 0.0
        %3519 = vmatpush1.msra.mxu0 0.0
        %3520 = vmatprep.subr.mxu0 0.0
        %3521 = vmatpush1.msra.mxu0 0.0
        %3522 = vmatprep.subr.mxu0 0.0
        %3523 = vmatpush1.msra.mxu0 0.0
        %3524 = vmatprep.subr.mxu0 0.0
        %3525 = vmatpush1.msra.mxu0 0.0
        %3526 = vmatprep.subr.mxu0 0.0
        %3527 = vmatpush1.msra.mxu0 0.0
        %3528 = vmatprep.subr.mxu0 0.0
        %3529 = vmatpush1.msra.mxu0 0.0
        %3530 = vmatprep.subr.mxu0 0.0
        %3531 = vmatpush1.msra.mxu0 0.0
        %3532 = vmatprep.subr.mxu0 0.0
        %3533 = vmatpush1.msra.mxu0 0.0
        %3534 = vmatprep.subr.mxu0 0.0
        %3535 = vmatpush1.msra.mxu0 0.0
        %3536 = vmatprep.subr.mxu0 0.0
        %3537 = vmatpush1.msra.mxu0 0.0
        %3538 = vmatprep.subr.mxu0 0.0
        %3539 = vmatpush1.msra.mxu0 0.0
        %3540 = vmatprep.subr.mxu0 0.0
        %3541 = vmatpush1.msra.mxu0 0.0
        %3542 = vmatprep.subr.mxu0 0.0
        %3543 = vmatpush1.msra.mxu0 0.0
        %3544 = vmatprep.subr.mxu0 0.0
        %3545 = vmatpush1.msra.mxu0 0.0
        %3546 = vmatprep.subr.mxu0 0.0
        %3547 = vmatpush1.msra.mxu0 0.0
        %3548 = vmatprep.subr.mxu0 0.0
        %3549 = vmatpush1.msra.mxu0 %v3513
        %3550 = vmatprep.subr.mxu0 0.0
        %3551 = vmatpush2.msra.mxu0 0.0
        %3552 = vmatprep.subr.mxu0 0.0
        %3553 = vmatpush2.msra.mxu0 0.0
        %3554 = vmatprep.subr.mxu0 0.0
        %3555 = vmatpush2.msra.mxu0 0.0
        %3556 = vmatprep.subr.mxu0 0.0
        %3557 = vmatpush2.msra.mxu0 0.0
        %3558 = vmatprep.subr.mxu0 0.0
        %3559 = vmatpush2.msra.mxu0 0.0
        %3560 = vmatprep.subr.mxu0 0.0
        %3561 = vmatpush2.msra.mxu0 0.0
        %3562 = vmatprep.subr.mxu0 0.0
        %3563 = vmatpush2.msra.mxu0 0.0
        %3564 = vmatprep.subr.mxu0 0.0
        %3565 = vmatpush2.msra.mxu0 0.0
        %3566 = vmatprep.subr.mxu0 0.0
        %3567 = vmatpush2.msra.mxu0 0.0
        %3568 = vmatprep.subr.mxu0 0.0
        %3569 = vmatpush2.msra.mxu0 0.0
        %3570 = vmatprep.subr.mxu0 0.0
        %3571 = vmatpush2.msra.mxu0 0.0
        %3572 = vmatprep.subr.mxu0 0.0
        %3573 = vmatpush2.msra.mxu0 0.0
        %3574 = vmatprep.subr.mxu0 0.0
        %3575 = vmatpush2.msra.mxu0 0.0
        %3576 = vmatprep.subr.mxu0 0.0
        %3577 = vmatpush2.msra.mxu0 0.0
        %3578 = vmatprep.subr.mxu0 0.0
        %3579 = vmatpush2.msra.mxu0 0.0
        %3580 = vmatprep.subr.mxu0 0.0
        %3581 = vmatpush2.msra.mxu0 0.0
        %3582 = vmatprep.mubr.f32.mxu0 0.0
        %3583 = vmatmul.mubr.f32.gmra.mxu0 %v3516
        %v3584 = vpop.f32.mrf.mxu0
        %v3585 = vadd.f32 0.0, %v3584
        %v3586 = vpop.f32.mrf.mxu0
        %3587 = vdwg.mxu0
        %s3588 = scalar_lea.vmem %s2, 8
        %v3589 = vld [vmem:[%s3588] sm:$0xff]
        %v3591 = vsel %vm682, %v3053, 0
        %v3594 = vsel %vm682, %v3129, 0
        %v3597 = vsel %vm682, %v3205, 0
        %v3600 = vsel %vm682, %v3281, 0
        %v3603 = vsel %vm682, %v3357, 0
        %v3606 = vsel %vm682, %v3433, 0
        %v3609 = vsel %vm682, %v3509, 0
        %v3612 = vsel %vm682, %v3585, 0
        %3614 = vmatprep.subr.mxu0 0.0
        %3615 = vmatpush1.msra.mxu0 0.0
        %3616 = vmatprep.subr.mxu0 0.0
        %3617 = vmatpush1.msra.mxu0 0.0
        %3618 = vmatprep.subr.mxu0 0.0
        %3619 = vmatpush1.msra.mxu0 0.0
        %3620 = vmatprep.subr.mxu0 0.0
        %3621 = vmatpush1.msra.mxu0 0.0
        %3622 = vmatprep.subr.mxu0 0.0
        %3623 = vmatpush1.msra.mxu0 0.0
        %3624 = vmatprep.subr.mxu0 0.0
        %3625 = vmatpush1.msra.mxu0 0.0
        %3626 = vmatprep.subr.mxu0 0.0
        %3627 = vmatpush1.msra.mxu0 0.0
        %3628 = vmatprep.subr.mxu0 0.0
        %3629 = vmatpush1.msra.mxu0 0.0
        %3630 = vmatprep.subr.mxu0 0.0
        %3631 = vmatpush1.msra.mxu0 0.0
        %3632 = vmatprep.subr.mxu0 0.0
        %3633 = vmatpush1.msra.mxu0 0.0
        %3634 = vmatprep.subr.mxu0 0.0
        %3635 = vmatpush1.msra.mxu0 0.0
        %3636 = vmatprep.subr.mxu0 0.0
        %3637 = vmatpush1.msra.mxu0 0.0
        %3638 = vmatprep.subr.mxu0 0.0
        %3639 = vmatpush1.msra.mxu0 0.0
        %3640 = vmatprep.subr.mxu0 0.0
        %3641 = vmatpush1.msra.mxu0 0.0
        %3642 = vmatprep.subr.mxu0 0.0
        %3643 = vmatpush1.msra.mxu0 0.0
        %3644 = vmatprep.subr.mxu0 0.0
        %3645 = vmatpush1.msra.mxu0 %v3589
        %3646 = vmatprep.subr.mxu0 0.0
        %3647 = vmatpush2.msra.mxu0 0.0
        %3648 = vmatprep.subr.mxu0 0.0
        %3649 = vmatpush2.msra.mxu0 0.0
        %3650 = vmatprep.subr.mxu0 0.0
        %3651 = vmatpush2.msra.mxu0 0.0
        %3652 = vmatprep.subr.mxu0 0.0
        %3653 = vmatpush2.msra.mxu0 0.0
        %3654 = vmatprep.subr.mxu0 0.0
        %3655 = vmatpush2.msra.mxu0 0.0
        %3656 = vmatprep.subr.mxu0 0.0
        %3657 = vmatpush2.msra.mxu0 0.0
        %3658 = vmatprep.subr.mxu0 0.0
        %3659 = vmatpush2.msra.mxu0 0.0
        %3660 = vmatprep.subr.mxu0 0.0
        %3661 = vmatpush2.msra.mxu0 0.0
        %3662 = vmatprep.subr.mxu0 0.0
        %3663 = vmatpush2.msra.mxu0 0.0
        %3664 = vmatprep.subr.mxu0 0.0
        %3665 = vmatpush2.msra.mxu0 0.0
        %3666 = vmatprep.subr.mxu0 0.0
        %3667 = vmatpush2.msra.mxu0 0.0
        %3668 = vmatprep.subr.mxu0 0.0
        %3669 = vmatpush2.msra.mxu0 0.0
        %3670 = vmatprep.subr.mxu0 0.0
        %3671 = vmatpush2.msra.mxu0 0.0
        %3672 = vmatprep.subr.mxu0 0.0
        %3673 = vmatpush2.msra.mxu0 0.0
        %3674 = vmatprep.subr.mxu0 0.0
        %3675 = vmatpush2.msra.mxu0 0.0
        %3676 = vmatprep.subr.mxu0 0.0
        %3677 = vmatpush2.msra.mxu0 0.0
        %3678 = vmatprep.mubr.f32.mxu0 0.0
        %3679 = vmatmul.mubr.f32.gmra.mxu0 %v3591
        %v3680 = vpop.f32.mrf.mxu0
        %v3681 = vadd.f32 0.0, %v3680
        %v3682 = vpop.f32.mrf.mxu0
        %3683 = vmatprep.mubr.f32.mxu0 0.0
        %3684 = vmatmul.mubr.f32.gmra.mxu0 %v3594
        %v3685 = vpop.f32.mrf.mxu0
        %v3686 = vadd.f32 0.0, %v3685
        %v3687 = vpop.f32.mrf.mxu0
        %3688 = vmatprep.mubr.f32.mxu0 0.0
        %3689 = vmatmul.mubr.f32.gmra.mxu0 %v3597
        %v3690 = vpop.f32.mrf.mxu0
        %v3691 = vadd.f32 0.0, %v3690
        %v3692 = vpop.f32.mrf.mxu0
        %3693 = vmatprep.mubr.f32.mxu0 0.0
        %3694 = vmatmul.mubr.f32.gmra.mxu0 %v3600
        %v3695 = vpop.f32.mrf.mxu0
        %v3696 = vadd.f32 0.0, %v3695
        %v3697 = vpop.f32.mrf.mxu0
        %3698 = vmatprep.mubr.f32.mxu0 0.0
        %3699 = vmatmul.mubr.f32.gmra.mxu0 %v3603
        %v3700 = vpop.f32.mrf.mxu0
        %v3701 = vadd.f32 0.0, %v3700
        %v3702 = vpop.f32.mrf.mxu0
        %3703 = vmatprep.mubr.f32.mxu0 0.0
        %3704 = vmatmul.mubr.f32.gmra.mxu0 %v3606
        %v3705 = vpop.f32.mrf.mxu0
        %v3706 = vadd.f32 0.0, %v3705
        %v3707 = vpop.f32.mrf.mxu0
        %3708 = vmatprep.mubr.f32.mxu0 0.0
        %3709 = vmatmul.mubr.f32.gmra.mxu0 %v3609
        %v3710 = vpop.f32.mrf.mxu0
        %v3711 = vadd.f32 0.0, %v3710
        %v3712 = vpop.f32.mrf.mxu0
        %3713 = vmatprep.mubr.f32.mxu0 0.0
        %3714 = vmatmul.mubr.f32.gmra.mxu0 %v3612
        %v3715 = vpop.f32.mrf.mxu0
        %v3716 = vadd.f32 0.0, %v3715
        %v3717 = vpop.f32.mrf.mxu0
        %3718 = vdwg.mxu0
        %s3719 = scalar_lea.vmem %s3, 8
        %v3720 = vld [vmem:[%s3719] sm:$0xff]
        %3721 = vmatprep.subr.mxu0 0.0
        %3722 = vmatpush1.msra.mxu0 0.0
        %3723 = vmatprep.subr.mxu0 0.0
        %3724 = vmatpush1.msra.mxu0 0.0
        %3725 = vmatprep.subr.mxu0 0.0
        %3726 = vmatpush1.msra.mxu0 0.0
        %3727 = vmatprep.subr.mxu0 0.0
        %3728 = vmatpush1.msra.mxu0 0.0
        %3729 = vmatprep.subr.mxu0 0.0
        %3730 = vmatpush1.msra.mxu0 0.0
        %3731 = vmatprep.subr.mxu0 0.0
        %3732 = vmatpush1.msra.mxu0 0.0
        %3733 = vmatprep.subr.mxu0 0.0
        %3734 = vmatpush1.msra.mxu0 0.0
        %3735 = vmatprep.subr.mxu0 0.0
        %3736 = vmatpush1.msra.mxu0 0.0
        %3737 = vmatprep.subr.mxu0 0.0
        %3738 = vmatpush1.msra.mxu0 0.0
        %3739 = vmatprep.subr.mxu0 0.0
        %3740 = vmatpush1.msra.mxu0 0.0
        %3741 = vmatprep.subr.mxu0 0.0
        %3742 = vmatpush1.msra.mxu0 0.0
        %3743 = vmatprep.subr.mxu0 0.0
        %3744 = vmatpush1.msra.mxu0 0.0
        %3745 = vmatprep.subr.mxu0 0.0
        %3746 = vmatpush1.msra.mxu0 0.0
        %3747 = vmatprep.subr.mxu0 0.0
        %3748 = vmatpush1.msra.mxu0 0.0
        %3749 = vmatprep.subr.mxu0 0.0
        %3750 = vmatpush1.msra.mxu0 0.0
        %3751 = vmatprep.subr.mxu0 0.0
        %3752 = vmatpush1.msra.mxu0 %v3720
        %3753 = vmatprep.subr.mxu0 0.0
        %3754 = vmatpush2.msra.mxu0 0.0
        %3755 = vmatprep.subr.mxu0 0.0
        %3756 = vmatpush2.msra.mxu0 0.0
        %3757 = vmatprep.subr.mxu0 0.0
        %3758 = vmatpush2.msra.mxu0 0.0
        %3759 = vmatprep.subr.mxu0 0.0
        %3760 = vmatpush2.msra.mxu0 0.0
        %3761 = vmatprep.subr.mxu0 0.0
        %3762 = vmatpush2.msra.mxu0 0.0
        %3763 = vmatprep.subr.mxu0 0.0
        %3764 = vmatpush2.msra.mxu0 0.0
        %3765 = vmatprep.subr.mxu0 0.0
        %3766 = vmatpush2.msra.mxu0 0.0
        %3767 = vmatprep.subr.mxu0 0.0
        %3768 = vmatpush2.msra.mxu0 0.0
        %3769 = vmatprep.subr.mxu0 0.0
        %3770 = vmatpush2.msra.mxu0 0.0
        %3771 = vmatprep.subr.mxu0 0.0
        %3772 = vmatpush2.msra.mxu0 0.0
        %3773 = vmatprep.subr.mxu0 0.0
        %3774 = vmatpush2.msra.mxu0 0.0
        %3775 = vmatprep.subr.mxu0 0.0
        %3776 = vmatpush2.msra.mxu0 0.0
        %3777 = vmatprep.subr.mxu0 0.0
        %3778 = vmatpush2.msra.mxu0 0.0
        %3779 = vmatprep.subr.mxu0 0.0
        %3780 = vmatpush2.msra.mxu0 0.0
        %3781 = vmatprep.subr.mxu0 0.0
        %3782 = vmatpush2.msra.mxu0 0.0
        %3783 = vmatprep.subr.mxu0 0.0
        %3784 = vmatpush2.msra.mxu0 0.0
        %3785 = vmatprep.mubr.f32.mxu0 0.0
        %3786 = vmatmul.mubr.f32.gmra.mxu0 %v3591
        %v3787 = vpop.f32.mrf.mxu0
        %v3788 = vadd.f32 0.0, %v3787
        %v3789 = vpop.f32.mrf.mxu0
        %3790 = vmatprep.mubr.f32.mxu0 0.0
        %3791 = vmatmul.mubr.f32.gmra.mxu0 %v3594
        %v3792 = vpop.f32.mrf.mxu0
        %v3793 = vadd.f32 0.0, %v3792
        %v3794 = vpop.f32.mrf.mxu0
        %3795 = vmatprep.mubr.f32.mxu0 0.0
        %3796 = vmatmul.mubr.f32.gmra.mxu0 %v3597
        %v3797 = vpop.f32.mrf.mxu0
        %v3798 = vadd.f32 0.0, %v3797
        %v3799 = vpop.f32.mrf.mxu0
        %3800 = vmatprep.mubr.f32.mxu0 0.0
        %3801 = vmatmul.mubr.f32.gmra.mxu0 %v3600
        %v3802 = vpop.f32.mrf.mxu0
        %v3803 = vadd.f32 0.0, %v3802
        %v3804 = vpop.f32.mrf.mxu0
        %3805 = vmatprep.mubr.f32.mxu0 0.0
        %3806 = vmatmul.mubr.f32.gmra.mxu0 %v3603
        %v3807 = vpop.f32.mrf.mxu0
        %v3808 = vadd.f32 0.0, %v3807
        %v3809 = vpop.f32.mrf.mxu0
        %3810 = vmatprep.mubr.f32.mxu0 0.0
        %3811 = vmatmul.mubr.f32.gmra.mxu0 %v3606
        %v3812 = vpop.f32.mrf.mxu0
        %v3813 = vadd.f32 0.0, %v3812
        %v3814 = vpop.f32.mrf.mxu0
        %3815 = vmatprep.mubr.f32.mxu0 0.0
        %3816 = vmatmul.mubr.f32.gmra.mxu0 %v3609
        %v3817 = vpop.f32.mrf.mxu0
        %v3818 = vadd.f32 0.0, %v3817
        %v3819 = vpop.f32.mrf.mxu0
        %3820 = vmatprep.mubr.f32.mxu0 0.0
        %3821 = vmatmul.mubr.f32.gmra.mxu0 %v3612
        %v3822 = vpop.f32.mrf.mxu0
        %v3823 = vadd.f32 0.0, %v3822
        %v3824 = vpop.f32.mrf.mxu0
        %3825 = vdwg.mxu0
        %v3826 = vmax.f32 %v3788, 0.0
        %v3827 = vmax.f32 %v3793, 0.0
        %v3828 = vmax.f32 %v3798, 0.0
        %v3829 = vmax.f32 %v3803, 0.0
        %v3830 = vmax.f32 %v3808, 0.0
        %v3831 = vmax.f32 %v3813, 0.0
        %v3832 = vmax.f32 %v3818, 0.0
        %v3833 = vmax.f32 %v3823, 0.0
        %v3834 = vmax.f32 %v2244, %v3826
        %v3835 = vmax.f32 %v2245, %v3827
        %v3836 = vmax.f32 %v2246, %v3828
        %v3837 = vmax.f32 %v2247, %v3829
        %v3838 = vmax.f32 %v2248, %v3830
        %v3839 = vmax.f32 %v2249, %v3831
        %v3840 = vmax.f32 %v2250, %v3832
        %v3841 = vmax.f32 %v2251, %v3833
        %v3842 = vsub.f32 %v2244, %v3834
        %v3843 = vsub.f32 %v2245, %v3835
        %v3844 = vsub.f32 %v2246, %v3836
        %v3845 = vsub.f32 %v2247, %v3837
        %v3846 = vsub.f32 %v2248, %v3838
        %v3847 = vsub.f32 %v2249, %v3839
        %v3848 = vsub.f32 %v2250, %v3840
        %v3849 = vsub.f32 %v2251, %v3841
        %v3850 = vmul.f32 %v3842, 1.442695
        %v3851 = vpow.pop %v3850
        %v3852 = vmul.f32 %v3843, 1.442695
        %v3853 = vpow.pop %v3852
        %v3854 = vmul.f32 %v3844, 1.442695
        %v3855 = vpow.pop %v3854
        %v3856 = vmul.f32 %v3845, 1.442695
        %v3857 = vpow.pop %v3856
        %v3858 = vmul.f32 %v3846, 1.442695
        %v3859 = vpow.pop %v3858
        %v3860 = vmul.f32 %v3847, 1.442695
        %v3861 = vpow.pop %v3860
        %v3862 = vmul.f32 %v3848, 1.442695
        %v3863 = vpow.pop %v3862
        %v3864 = vmul.f32 %v3849, 1.442695
        %v3865 = vpow.pop %v3864
        %v3866 = vsub.f32 %v3826, %v3834
        %v3867 = vsub.f32 %v3827, %v3835
        %v3868 = vsub.f32 %v3828, %v3836
        %v3869 = vsub.f32 %v3829, %v3837
        %v3870 = vsub.f32 %v3830, %v3838
        %v3871 = vsub.f32 %v3831, %v3839
        %v3872 = vsub.f32 %v3832, %v3840
        %v3873 = vsub.f32 %v3833, %v3841
        %v3874 = vmul.f32 %v3866, 1.442695
        %v3875 = vpow.pop %v3874
        %v3876 = vmul.f32 %v3867, 1.442695
        %v3877 = vpow.pop %v3876
        %v3878 = vmul.f32 %v3868, 1.442695
        %v3879 = vpow.pop %v3878
        %v3880 = vmul.f32 %v3869, 1.442695
        %v3881 = vpow.pop %v3880
        %v3882 = vmul.f32 %v3870, 1.442695
        %v3883 = vpow.pop %v3882
        %v3884 = vmul.f32 %v3871, 1.442695
        %v3885 = vpow.pop %v3884
        %v3886 = vmul.f32 %v3872, 1.442695
        %v3887 = vpow.pop %v3886
        %v3888 = vmul.f32 %v3873, 1.442695
        %v3889 = vpow.pop %v3888
        %v3890 = vmul.f32 %v2100, %v3851
        %v3891 = vmul.f32 %v2105, %v3853
        %v3892 = vmul.f32 %v2110, %v3855
        %v3893 = vmul.f32 %v2115, %v3857
        %v3894 = vmul.f32 %v2120, %v3859
        %v3895 = vmul.f32 %v2125, %v3861
        %v3896 = vmul.f32 %v2130, %v3863
        %v3897 = vmul.f32 %v2135, %v3865
        %v3898 = vmul.f32 %v3681, %v3875
        %v3899 = vmul.f32 %v3686, %v3877
        %v3900 = vmul.f32 %v3691, %v3879
        %v3901 = vmul.f32 %v3696, %v3881
        %v3902 = vmul.f32 %v3701, %v3883
        %v3903 = vmul.f32 %v3706, %v3885
        %v3904 = vmul.f32 %v3711, %v3887
        %v3905 = vmul.f32 %v3716, %v3889
        %v3906 = vadd.f32 %v3890, %v3898
        %v3907 = vadd.f32 %v3891, %v3899
        %v3908 = vadd.f32 %v3892, %v3900
        %v3909 = vadd.f32 %v3893, %v3901
        %v3910 = vadd.f32 %v3894, %v3902
        %v3911 = vadd.f32 %v3895, %v3903
        %v3912 = vadd.f32 %v3896, %v3904
        %v3913 = vadd.f32 %v3897, %v3905
        %v3914 = vadd.f32 %v3851, %v3875
        %v3915 = vadd.f32 %v3853, %v3877
        %v3916 = vadd.f32 %v3855, %v3879
        %v3917 = vadd.f32 %v3857, %v3881
        %v3918 = vadd.f32 %v3859, %v3883
        %v3919 = vadd.f32 %v3861, %v3885
        %v3920 = vadd.f32 %v3863, %v3887
        %v3921 = vadd.f32 %v3865, %v3889
        %3922 = vrot.lane.b32.xlu0 %v635, 112
        %v3923 = vpop.permute.xlu0 %3922
        %3924 = vrot.lane.b32.xlu0 %v635, 80
        %v3925 = vpop.permute.xlu0 %3924
        %v3926 = vsel %vm682, %v3923, 0
        %v3928 = vsel %vm682, %v3925, 0
        %3930 = vmatprep.subr.mxu0 0.0
        %3931 = vmatpush1.xpose.msra.mxu0 0.0
        %3932 = vmatprep.subr.mxu0 0.0
        %3933 = vmatpush1.xpose.msra.mxu0 0.0
        %3934 = vmatprep.subr.mxu0 0.0
        %3935 = vmatpush1.xpose.msra.mxu0 0.0
        %3936 = vmatprep.subr.mxu0 0.0
        %3937 = vmatpush1.xpose.msra.mxu0 0.0
        %3938 = vmatprep.subr.mxu0 0.0
        %3939 = vmatpush1.xpose.msra.mxu0 0.0
        %3940 = vmatprep.subr.mxu0 0.0
        %3941 = vmatpush1.xpose.msra.mxu0 0.0
        %3942 = vmatprep.subr.mxu0 0.0
        %3943 = vmatpush1.xpose.msra.mxu0 0.0
        %3944 = vmatprep.subr.mxu0 0.0
        %3945 = vmatpush1.xpose.msra.mxu0 0.0
        %3946 = vmatprep.subr.mxu0 0.0
        %3947 = vmatpush1.xpose.msra.mxu0 0.0
        %3948 = vmatprep.subr.mxu0 0.0
        %3949 = vmatpush1.xpose.msra.mxu0 0.0
        %3950 = vmatprep.subr.mxu0 0.0
        %3951 = vmatpush1.xpose.msra.mxu0 0.0
        %3952 = vmatprep.subr.mxu0 0.0
        %3953 = vmatpush1.xpose.msra.mxu0 0.0
        %3954 = vmatprep.subr.mxu0 0.0
        %3955 = vmatpush1.xpose.msra.mxu0 0.0
        %3956 = vmatprep.subr.mxu0 0.0
        %3957 = vmatpush1.xpose.msra.mxu0 0.0
        %3958 = vmatprep.subr.mxu0 0.0
        %3959 = vmatpush1.xpose.msra.mxu0 0.0
        %3960 = vmatprep.subr.mxu0 0.0
        %3961 = vmatpush1.xpose.msra.mxu0 %v3928
        %3962 = vmatprep.subr.mxu0 0.0
        %3963 = vmatpush2.xpose.msra.mxu0 0.0
        %3964 = vmatprep.subr.mxu0 0.0
        %3965 = vmatpush2.xpose.msra.mxu0 0.0
        %3966 = vmatprep.subr.mxu0 0.0
        %3967 = vmatpush2.xpose.msra.mxu0 0.0
        %3968 = vmatprep.subr.mxu0 0.0
        %3969 = vmatpush2.xpose.msra.mxu0 0.0
        %3970 = vmatprep.subr.mxu0 0.0
        %3971 = vmatpush2.xpose.msra.mxu0 0.0
        %3972 = vmatprep.subr.mxu0 0.0
        %3973 = vmatpush2.xpose.msra.mxu0 0.0
        %3974 = vmatprep.subr.mxu0 0.0
        %3975 = vmatpush2.xpose.msra.mxu0 0.0
        %3976 = vmatprep.subr.mxu0 0.0
        %3977 = vmatpush2.xpose.msra.mxu0 0.0
        %3978 = vmatprep.subr.mxu0 0.0
        %3979 = vmatpush2.xpose.msra.mxu0 0.0
        %3980 = vmatprep.subr.mxu0 0.0
        %3981 = vmatpush2.xpose.msra.mxu0 0.0
        %3982 = vmatprep.subr.mxu0 0.0
        %3983 = vmatpush2.xpose.msra.mxu0 0.0
        %3984 = vmatprep.subr.mxu0 0.0
        %3985 = vmatpush2.xpose.msra.mxu0 0.0
        %3986 = vmatprep.subr.mxu0 0.0
        %3987 = vmatpush2.xpose.msra.mxu0 0.0
        %3988 = vmatprep.subr.mxu0 0.0
        %3989 = vmatpush2.xpose.msra.mxu0 0.0
        %3990 = vmatprep.subr.mxu0 0.0
        %3991 = vmatpush2.xpose.msra.mxu0 0.0
        %3992 = vmatprep.subr.mxu0 0.0
        %3993 = vmatpush2.xpose.msra.mxu0 0.0
        %3994 = vmatprep.mubr.f32.mxu0 0.0
        %3995 = vmatmul.mubr.f32.gmra.mxu0 %v3926
        %v3996 = vpop.f32.mrf.mxu0
        %v3997 = vadd.f32 0.0, %v3996
        %v3998 = vpop.f32.mrf.mxu0
        %3999 = vdwg.mxu0
        %4000 = vrot.lane.b32.xlu0 %v640, 112
        %v4001 = vpop.permute.xlu0 %4000
        %4002 = vrot.lane.b32.xlu0 %v640, 80
        %v4003 = vpop.permute.xlu0 %4002
        %v4004 = vsel %vm682, %v4001, 0
        %v4006 = vsel %vm682, %v4003, 0
        %4008 = vmatprep.subr.mxu0 0.0
        %4009 = vmatpush1.xpose.msra.mxu0 0.0
        %4010 = vmatprep.subr.mxu0 0.0
        %4011 = vmatpush1.xpose.msra.mxu0 0.0
        %4012 = vmatprep.subr.mxu0 0.0
        %4013 = vmatpush1.xpose.msra.mxu0 0.0
        %4014 = vmatprep.subr.mxu0 0.0
        %4015 = vmatpush1.xpose.msra.mxu0 0.0
        %4016 = vmatprep.subr.mxu0 0.0
        %4017 = vmatpush1.xpose.msra.mxu0 0.0
        %4018 = vmatprep.subr.mxu0 0.0
        %4019 = vmatpush1.xpose.msra.mxu0 0.0
        %4020 = vmatprep.subr.mxu0 0.0
        %4021 = vmatpush1.xpose.msra.mxu0 0.0
        %4022 = vmatprep.subr.mxu0 0.0
        %4023 = vmatpush1.xpose.msra.mxu0 0.0
        %4024 = vmatprep.subr.mxu0 0.0
        %4025 = vmatpush1.xpose.msra.mxu0 0.0
        %4026 = vmatprep.subr.mxu0 0.0
        %4027 = vmatpush1.xpose.msra.mxu0 0.0
        %4028 = vmatprep.subr.mxu0 0.0
        %4029 = vmatpush1.xpose.msra.mxu0 0.0
        %4030 = vmatprep.subr.mxu0 0.0
        %4031 = vmatpush1.xpose.msra.mxu0 0.0
        %4032 = vmatprep.subr.mxu0 0.0
        %4033 = vmatpush1.xpose.msra.mxu0 0.0
        %4034 = vmatprep.subr.mxu0 0.0
        %4035 = vmatpush1.xpose.msra.mxu0 0.0
        %4036 = vmatprep.subr.mxu0 0.0
        %4037 = vmatpush1.xpose.msra.mxu0 0.0
        %4038 = vmatprep.subr.mxu0 0.0
        %4039 = vmatpush1.xpose.msra.mxu0 %v4006
        %4040 = vmatprep.subr.mxu0 0.0
        %4041 = vmatpush2.xpose.msra.mxu0 0.0
        %4042 = vmatprep.subr.mxu0 0.0
        %4043 = vmatpush2.xpose.msra.mxu0 0.0
        %4044 = vmatprep.subr.mxu0 0.0
        %4045 = vmatpush2.xpose.msra.mxu0 0.0
        %4046 = vmatprep.subr.mxu0 0.0
        %4047 = vmatpush2.xpose.msra.mxu0 0.0
        %4048 = vmatprep.subr.mxu0 0.0
        %4049 = vmatpush2.xpose.msra.mxu0 0.0
        %4050 = vmatprep.subr.mxu0 0.0
        %4051 = vmatpush2.xpose.msra.mxu0 0.0
        %4052 = vmatprep.subr.mxu0 0.0
        %4053 = vmatpush2.xpose.msra.mxu0 0.0
        %4054 = vmatprep.subr.mxu0 0.0
        %4055 = vmatpush2.xpose.msra.mxu0 0.0
        %4056 = vmatprep.subr.mxu0 0.0
        %4057 = vmatpush2.xpose.msra.mxu0 0.0
        %4058 = vmatprep.subr.mxu0 0.0
        %4059 = vmatpush2.xpose.msra.mxu0 0.0
        %4060 = vmatprep.subr.mxu0 0.0
        %4061 = vmatpush2.xpose.msra.mxu0 0.0
        %4062 = vmatprep.subr.mxu0 0.0
        %4063 = vmatpush2.xpose.msra.mxu0 0.0
        %4064 = vmatprep.subr.mxu0 0.0
        %4065 = vmatpush2.xpose.msra.mxu0 0.0
        %4066 = vmatprep.subr.mxu0 0.0
        %4067 = vmatpush2.xpose.msra.mxu0 0.0
        %4068 = vmatprep.subr.mxu0 0.0
        %4069 = vmatpush2.xpose.msra.mxu0 0.0
        %4070 = vmatprep.subr.mxu0 0.0
        %4071 = vmatpush2.xpose.msra.mxu0 0.0
        %4072 = vmatprep.mubr.f32.mxu0 0.0
        %4073 = vmatmul.mubr.f32.gmra.mxu0 %v4004
        %v4074 = vpop.f32.mrf.mxu0
        %v4075 = vadd.f32 0.0, %v4074
        %v4076 = vpop.f32.mrf.mxu0
        %4077 = vdwg.mxu0
        %4078 = vrot.lane.b32.xlu0 %v645, 112
        %v4079 = vpop.permute.xlu0 %4078
        %4080 = vrot.lane.b32.xlu0 %v645, 80
        %v4081 = vpop.permute.xlu0 %4080
        %v4082 = vsel %vm682, %v4079, 0
        %v4084 = vsel %vm682, %v4081, 0
        %4086 = vmatprep.subr.mxu0 0.0
        %4087 = vmatpush1.xpose.msra.mxu0 0.0
        %4088 = vmatprep.subr.mxu0 0.0
        %4089 = vmatpush1.xpose.msra.mxu0 0.0
        %4090 = vmatprep.subr.mxu0 0.0
        %4091 = vmatpush1.xpose.msra.mxu0 0.0
        %4092 = vmatprep.subr.mxu0 0.0
        %4093 = vmatpush1.xpose.msra.mxu0 0.0
        %4094 = vmatprep.subr.mxu0 0.0
        %4095 = vmatpush1.xpose.msra.mxu0 0.0
        %4096 = vmatprep.subr.mxu0 0.0
        %4097 = vmatpush1.xpose.msra.mxu0 0.0
        %4098 = vmatprep.subr.mxu0 0.0
        %4099 = vmatpush1.xpose.msra.mxu0 0.0
        %4100 = vmatprep.subr.mxu0 0.0
        %4101 = vmatpush1.xpose.msra.mxu0 0.0
        %4102 = vmatprep.subr.mxu0 0.0
        %4103 = vmatpush1.xpose.msra.mxu0 0.0
        %4104 = vmatprep.subr.mxu0 0.0
        %4105 = vmatpush1.xpose.msra.mxu0 0.0
        %4106 = vmatprep.subr.mxu0 0.0
        %4107 = vmatpush1.xpose.msra.mxu0 0.0
        %4108 = vmatprep.subr.mxu0 0.0
        %4109 = vmatpush1.xpose.msra.mxu0 0.0
        %4110 = vmatprep.subr.mxu0 0.0
        %4111 = vmatpush1.xpose.msra.mxu0 0.0
        %4112 = vmatprep.subr.mxu0 0.0
        %4113 = vmatpush1.xpose.msra.mxu0 0.0
        %4114 = vmatprep.subr.mxu0 0.0
        %4115 = vmatpush1.xpose.msra.mxu0 0.0
        %4116 = vmatprep.subr.mxu0 0.0
        %4117 = vmatpush1.xpose.msra.mxu0 %v4084
        %4118 = vmatprep.subr.mxu0 0.0
        %4119 = vmatpush2.xpose.msra.mxu0 0.0
        %4120 = vmatprep.subr.mxu0 0.0
        %4121 = vmatpush2.xpose.msra.mxu0 0.0
        %4122 = vmatprep.subr.mxu0 0.0
        %4123 = vmatpush2.xpose.msra.mxu0 0.0
        %4124 = vmatprep.subr.mxu0 0.0
        %4125 = vmatpush2.xpose.msra.mxu0 0.0
        %4126 = vmatprep.subr.mxu0 0.0
        %4127 = vmatpush2.xpose.msra.mxu0 0.0
        %4128 = vmatprep.subr.mxu0 0.0
        %4129 = vmatpush2.xpose.msra.mxu0 0.0
        %4130 = vmatprep.subr.mxu0 0.0
        %4131 = vmatpush2.xpose.msra.mxu0 0.0
        %4132 = vmatprep.subr.mxu0 0.0
        %4133 = vmatpush2.xpose.msra.mxu0 0.0
        %4134 = vmatprep.subr.mxu0 0.0
        %4135 = vmatpush2.xpose.msra.mxu0 0.0
        %4136 = vmatprep.subr.mxu0 0.0
        %4137 = vmatpush2.xpose.msra.mxu0 0.0
        %4138 = vmatprep.subr.mxu0 0.0
        %4139 = vmatpush2.xpose.msra.mxu0 0.0
        %4140 = vmatprep.subr.mxu0 0.0
        %4141 = vmatpush2.xpose.msra.mxu0 0.0
        %4142 = vmatprep.subr.mxu0 0.0
        %4143 = vmatpush2.xpose.msra.mxu0 0.0
        %4144 = vmatprep.subr.mxu0 0.0
        %4145 = vmatpush2.xpose.msra.mxu0 0.0
        %4146 = vmatprep.subr.mxu0 0.0
        %4147 = vmatpush2.xpose.msra.mxu0 0.0
        %4148 = vmatprep.subr.mxu0 0.0
        %4149 = vmatpush2.xpose.msra.mxu0 0.0
        %4150 = vmatprep.mubr.f32.mxu0 0.0
        %4151 = vmatmul.mubr.f32.gmra.mxu0 %v4082
        %v4152 = vpop.f32.mrf.mxu0
        %v4153 = vadd.f32 0.0, %v4152
        %v4154 = vpop.f32.mrf.mxu0
        %4155 = vdwg.mxu0
        %4156 = vrot.lane.b32.xlu0 %v650, 112
        %v4157 = vpop.permute.xlu0 %4156
        %4158 = vrot.lane.b32.xlu0 %v650, 80
        %v4159 = vpop.permute.xlu0 %4158
        %v4160 = vsel %vm682, %v4157, 0
        %v4162 = vsel %vm682, %v4159, 0
        %4164 = vmatprep.subr.mxu0 0.0
        %4165 = vmatpush1.xpose.msra.mxu0 0.0
        %4166 = vmatprep.subr.mxu0 0.0
        %4167 = vmatpush1.xpose.msra.mxu0 0.0
        %4168 = vmatprep.subr.mxu0 0.0
        %4169 = vmatpush1.xpose.msra.mxu0 0.0
        %4170 = vmatprep.subr.mxu0 0.0
        %4171 = vmatpush1.xpose.msra.mxu0 0.0
        %4172 = vmatprep.subr.mxu0 0.0
        %4173 = vmatpush1.xpose.msra.mxu0 0.0
        %4174 = vmatprep.subr.mxu0 0.0
        %4175 = vmatpush1.xpose.msra.mxu0 0.0
        %4176 = vmatprep.subr.mxu0 0.0
        %4177 = vmatpush1.xpose.msra.mxu0 0.0
        %4178 = vmatprep.subr.mxu0 0.0
        %4179 = vmatpush1.xpose.msra.mxu0 0.0
        %4180 = vmatprep.subr.mxu0 0.0
        %4181 = vmatpush1.xpose.msra.mxu0 0.0
        %4182 = vmatprep.subr.mxu0 0.0
        %4183 = vmatpush1.xpose.msra.mxu0 0.0
        %4184 = vmatprep.subr.mxu0 0.0
        %4185 = vmatpush1.xpose.msra.mxu0 0.0
        %4186 = vmatprep.subr.mxu0 0.0
        %4187 = vmatpush1.xpose.msra.mxu0 0.0
        %4188 = vmatprep.subr.mxu0 0.0
        %4189 = vmatpush1.xpose.msra.mxu0 0.0
        %4190 = vmatprep.subr.mxu0 0.0
        %4191 = vmatpush1.xpose.msra.mxu0 0.0
        %4192 = vmatprep.subr.mxu0 0.0
        %4193 = vmatpush1.xpose.msra.mxu0 0.0
        %4194 = vmatprep.subr.mxu0 0.0
        %4195 = vmatpush1.xpose.msra.mxu0 %v4162
        %4196 = vmatprep.subr.mxu0 0.0
        %4197 = vmatpush2.xpose.msra.mxu0 0.0
        %4198 = vmatprep.subr.mxu0 0.0
        %4199 = vmatpush2.xpose.msra.mxu0 0.0
        %4200 = vmatprep.subr.mxu0 0.0
        %4201 = vmatpush2.xpose.msra.mxu0 0.0
        %4202 = vmatprep.subr.mxu0 0.0
        %4203 = vmatpush2.xpose.msra.mxu0 0.0
        %4204 = vmatprep.subr.mxu0 0.0
        %4205 = vmatpush2.xpose.msra.mxu0 0.0
        %4206 = vmatprep.subr.mxu0 0.0
        %4207 = vmatpush2.xpose.msra.mxu0 0.0
        %4208 = vmatprep.subr.mxu0 0.0
        %4209 = vmatpush2.xpose.msra.mxu0 0.0
        %4210 = vmatprep.subr.mxu0 0.0
        %4211 = vmatpush2.xpose.msra.mxu0 0.0
        %4212 = vmatprep.subr.mxu0 0.0
        %4213 = vmatpush2.xpose.msra.mxu0 0.0
        %4214 = vmatprep.subr.mxu0 0.0
        %4215 = vmatpush2.xpose.msra.mxu0 0.0
        %4216 = vmatprep.subr.mxu0 0.0
        %4217 = vmatpush2.xpose.msra.mxu0 0.0
        %4218 = vmatprep.subr.mxu0 0.0
        %4219 = vmatpush2.xpose.msra.mxu0 0.0
        %4220 = vmatprep.subr.mxu0 0.0
        %4221 = vmatpush2.xpose.msra.mxu0 0.0
        %4222 = vmatprep.subr.mxu0 0.0
        %4223 = vmatpush2.xpose.msra.mxu0 0.0
        %4224 = vmatprep.subr.mxu0 0.0
        %4225 = vmatpush2.xpose.msra.mxu0 0.0
        %4226 = vmatprep.subr.mxu0 0.0
        %4227 = vmatpush2.xpose.msra.mxu0 0.0
        %4228 = vmatprep.mubr.f32.mxu0 0.0
        %4229 = vmatmul.mubr.f32.gmra.mxu0 %v4160
        %v4230 = vpop.f32.mrf.mxu0
        %v4231 = vadd.f32 0.0, %v4230
        %v4232 = vpop.f32.mrf.mxu0
        %4233 = vdwg.mxu0
        %4234 = vrot.lane.b32.xlu0 %v655, 112
        %v4235 = vpop.permute.xlu0 %4234
        %4236 = vrot.lane.b32.xlu0 %v655, 80
        %v4237 = vpop.permute.xlu0 %4236
        %v4238 = vsel %vm682, %v4235, 0
        %v4240 = vsel %vm682, %v4237, 0
        %4242 = vmatprep.subr.mxu0 0.0
        %4243 = vmatpush1.xpose.msra.mxu0 0.0
        %4244 = vmatprep.subr.mxu0 0.0
        %4245 = vmatpush1.xpose.msra.mxu0 0.0
        %4246 = vmatprep.subr.mxu0 0.0
        %4247 = vmatpush1.xpose.msra.mxu0 0.0
        %4248 = vmatprep.subr.mxu0 0.0
        %4249 = vmatpush1.xpose.msra.mxu0 0.0
        %4250 = vmatprep.subr.mxu0 0.0
        %4251 = vmatpush1.xpose.msra.mxu0 0.0
        %4252 = vmatprep.subr.mxu0 0.0
        %4253 = vmatpush1.xpose.msra.mxu0 0.0
        %4254 = vmatprep.subr.mxu0 0.0
        %4255 = vmatpush1.xpose.msra.mxu0 0.0
        %4256 = vmatprep.subr.mxu0 0.0
        %4257 = vmatpush1.xpose.msra.mxu0 0.0
        %4258 = vmatprep.subr.mxu0 0.0
        %4259 = vmatpush1.xpose.msra.mxu0 0.0
        %4260 = vmatprep.subr.mxu0 0.0
        %4261 = vmatpush1.xpose.msra.mxu0 0.0
        %4262 = vmatprep.subr.mxu0 0.0
        %4263 = vmatpush1.xpose.msra.mxu0 0.0
        %4264 = vmatprep.subr.mxu0 0.0
        %4265 = vmatpush1.xpose.msra.mxu0 0.0
        %4266 = vmatprep.subr.mxu0 0.0
        %4267 = vmatpush1.xpose.msra.mxu0 0.0
        %4268 = vmatprep.subr.mxu0 0.0
        %4269 = vmatpush1.xpose.msra.mxu0 0.0
        %4270 = vmatprep.subr.mxu0 0.0
        %4271 = vmatpush1.xpose.msra.mxu0 0.0
        %4272 = vmatprep.subr.mxu0 0.0
        %4273 = vmatpush1.xpose.msra.mxu0 %v4240
        %4274 = vmatprep.subr.mxu0 0.0
        %4275 = vmatpush2.xpose.msra.mxu0 0.0
        %4276 = vmatprep.subr.mxu0 0.0
        %4277 = vmatpush2.xpose.msra.mxu0 0.0
        %4278 = vmatprep.subr.mxu0 0.0
        %4279 = vmatpush2.xpose.msra.mxu0 0.0
        %4280 = vmatprep.subr.mxu0 0.0
        %4281 = vmatpush2.xpose.msra.mxu0 0.0
        %4282 = vmatprep.subr.mxu0 0.0
        %4283 = vmatpush2.xpose.msra.mxu0 0.0
        %4284 = vmatprep.subr.mxu0 0.0
        %4285 = vmatpush2.xpose.msra.mxu0 0.0
        %4286 = vmatprep.subr.mxu0 0.0
        %4287 = vmatpush2.xpose.msra.mxu0 0.0
        %4288 = vmatprep.subr.mxu0 0.0
        %4289 = vmatpush2.xpose.msra.mxu0 0.0
        %4290 = vmatprep.subr.mxu0 0.0
        %4291 = vmatpush2.xpose.msra.mxu0 0.0
        %4292 = vmatprep.subr.mxu0 0.0
        %4293 = vmatpush2.xpose.msra.mxu0 0.0
        %4294 = vmatprep.subr.mxu0 0.0
        %4295 = vmatpush2.xpose.msra.mxu0 0.0
        %4296 = vmatprep.subr.mxu0 0.0
        %4297 = vmatpush2.xpose.msra.mxu0 0.0
        %4298 = vmatprep.subr.mxu0 0.0
        %4299 = vmatpush2.xpose.msra.mxu0 0.0
        %4300 = vmatprep.subr.mxu0 0.0
        %4301 = vmatpush2.xpose.msra.mxu0 0.0
        %4302 = vmatprep.subr.mxu0 0.0
        %4303 = vmatpush2.xpose.msra.mxu0 0.0
        %4304 = vmatprep.subr.mxu0 0.0
        %4305 = vmatpush2.xpose.msra.mxu0 0.0
        %4306 = vmatprep.mubr.f32.mxu0 0.0
        %4307 = vmatmul.mubr.f32.gmra.mxu0 %v4238
        %v4308 = vpop.f32.mrf.mxu0
        %v4309 = vadd.f32 0.0, %v4308
        %v4310 = vpop.f32.mrf.mxu0
        %4311 = vdwg.mxu0
        %4312 = vrot.lane.b32.xlu0 %v660, 112
        %v4313 = vpop.permute.xlu0 %4312
        %4314 = vrot.lane.b32.xlu0 %v660, 80
        %v4315 = vpop.permute.xlu0 %4314
        %v4316 = vsel %vm682, %v4313, 0
        %v4318 = vsel %vm682, %v4315, 0
        %4320 = vmatprep.subr.mxu0 0.0
        %4321 = vmatpush1.xpose.msra.mxu0 0.0
        %4322 = vmatprep.subr.mxu0 0.0
        %4323 = vmatpush1.xpose.msra.mxu0 0.0
        %4324 = vmatprep.subr.mxu0 0.0
        %4325 = vmatpush1.xpose.msra.mxu0 0.0
        %4326 = vmatprep.subr.mxu0 0.0
        %4327 = vmatpush1.xpose.msra.mxu0 0.0
        %4328 = vmatprep.subr.mxu0 0.0
        %4329 = vmatpush1.xpose.msra.mxu0 0.0
        %4330 = vmatprep.subr.mxu0 0.0
        %4331 = vmatpush1.xpose.msra.mxu0 0.0
        %4332 = vmatprep.subr.mxu0 0.0
        %4333 = vmatpush1.xpose.msra.mxu0 0.0
        %4334 = vmatprep.subr.mxu0 0.0
        %4335 = vmatpush1.xpose.msra.mxu0 0.0
        %4336 = vmatprep.subr.mxu0 0.0
        %4337 = vmatpush1.xpose.msra.mxu0 0.0
        %4338 = vmatprep.subr.mxu0 0.0
        %4339 = vmatpush1.xpose.msra.mxu0 0.0
        %4340 = vmatprep.subr.mxu0 0.0
        %4341 = vmatpush1.xpose.msra.mxu0 0.0
        %4342 = vmatprep.subr.mxu0 0.0
        %4343 = vmatpush1.xpose.msra.mxu0 0.0
        %4344 = vmatprep.subr.mxu0 0.0
        %4345 = vmatpush1.xpose.msra.mxu0 0.0
        %4346 = vmatprep.subr.mxu0 0.0
        %4347 = vmatpush1.xpose.msra.mxu0 0.0
        %4348 = vmatprep.subr.mxu0 0.0
        %4349 = vmatpush1.xpose.msra.mxu0 0.0
        %4350 = vmatprep.subr.mxu0 0.0
        %4351 = vmatpush1.xpose.msra.mxu0 %v4318
        %4352 = vmatprep.subr.mxu0 0.0
        %4353 = vmatpush2.xpose.msra.mxu0 0.0
        %4354 = vmatprep.subr.mxu0 0.0
        %4355 = vmatpush2.xpose.msra.mxu0 0.0
        %4356 = vmatprep.subr.mxu0 0.0
        %4357 = vmatpush2.xpose.msra.mxu0 0.0
        %4358 = vmatprep.subr.mxu0 0.0
        %4359 = vmatpush2.xpose.msra.mxu0 0.0
        %4360 = vmatprep.subr.mxu0 0.0
        %4361 = vmatpush2.xpose.msra.mxu0 0.0
        %4362 = vmatprep.subr.mxu0 0.0
        %4363 = vmatpush2.xpose.msra.mxu0 0.0
        %4364 = vmatprep.subr.mxu0 0.0
        %4365 = vmatpush2.xpose.msra.mxu0 0.0
        %4366 = vmatprep.subr.mxu0 0.0
        %4367 = vmatpush2.xpose.msra.mxu0 0.0
        %4368 = vmatprep.subr.mxu0 0.0
        %4369 = vmatpush2.xpose.msra.mxu0 0.0
        %4370 = vmatprep.subr.mxu0 0.0
        %4371 = vmatpush2.xpose.msra.mxu0 0.0
        %4372 = vmatprep.subr.mxu0 0.0
        %4373 = vmatpush2.xpose.msra.mxu0 0.0
        %4374 = vmatprep.subr.mxu0 0.0
        %4375 = vmatpush2.xpose.msra.mxu0 0.0
        %4376 = vmatprep.subr.mxu0 0.0
        %4377 = vmatpush2.xpose.msra.mxu0 0.0
        %4378 = vmatprep.subr.mxu0 0.0
        %4379 = vmatpush2.xpose.msra.mxu0 0.0
        %4380 = vmatprep.subr.mxu0 0.0
        %4381 = vmatpush2.xpose.msra.mxu0 0.0
        %4382 = vmatprep.subr.mxu0 0.0
        %4383 = vmatpush2.xpose.msra.mxu0 0.0
        %4384 = vmatprep.mubr.f32.mxu0 0.0
        %4385 = vmatmul.mubr.f32.gmra.mxu0 %v4316
        %v4386 = vpop.f32.mrf.mxu0
        %v4387 = vadd.f32 0.0, %v4386
        %v4388 = vpop.f32.mrf.mxu0
        %4389 = vdwg.mxu0
        %4390 = vrot.lane.b32.xlu0 %v665, 112
        %v4391 = vpop.permute.xlu0 %4390
        %4392 = vrot.lane.b32.xlu0 %v665, 80
        %v4393 = vpop.permute.xlu0 %4392
        %v4394 = vsel %vm682, %v4391, 0
        %v4396 = vsel %vm682, %v4393, 0
        %4398 = vmatprep.subr.mxu0 0.0
        %4399 = vmatpush1.xpose.msra.mxu0 0.0
        %4400 = vmatprep.subr.mxu0 0.0
        %4401 = vmatpush1.xpose.msra.mxu0 0.0
        %4402 = vmatprep.subr.mxu0 0.0
        %4403 = vmatpush1.xpose.msra.mxu0 0.0
        %4404 = vmatprep.subr.mxu0 0.0
        %4405 = vmatpush1.xpose.msra.mxu0 0.0
        %4406 = vmatprep.subr.mxu0 0.0
        %4407 = vmatpush1.xpose.msra.mxu0 0.0
        %4408 = vmatprep.subr.mxu0 0.0
        %4409 = vmatpush1.xpose.msra.mxu0 0.0
        %4410 = vmatprep.subr.mxu0 0.0
        %4411 = vmatpush1.xpose.msra.mxu0 0.0
        %4412 = vmatprep.subr.mxu0 0.0
        %4413 = vmatpush1.xpose.msra.mxu0 0.0
        %4414 = vmatprep.subr.mxu0 0.0
        %4415 = vmatpush1.xpose.msra.mxu0 0.0
        %4416 = vmatprep.subr.mxu0 0.0
        %4417 = vmatpush1.xpose.msra.mxu0 0.0
        %4418 = vmatprep.subr.mxu0 0.0
        %4419 = vmatpush1.xpose.msra.mxu0 0.0
        %4420 = vmatprep.subr.mxu0 0.0
        %4421 = vmatpush1.xpose.msra.mxu0 0.0
        %4422 = vmatprep.subr.mxu0 0.0
        %4423 = vmatpush1.xpose.msra.mxu0 0.0
        %4424 = vmatprep.subr.mxu0 0.0
        %4425 = vmatpush1.xpose.msra.mxu0 0.0
        %4426 = vmatprep.subr.mxu0 0.0
        %4427 = vmatpush1.xpose.msra.mxu0 0.0
        %4428 = vmatprep.subr.mxu0 0.0
        %4429 = vmatpush1.xpose.msra.mxu0 %v4396
        %4430 = vmatprep.subr.mxu0 0.0
        %4431 = vmatpush2.xpose.msra.mxu0 0.0
        %4432 = vmatprep.subr.mxu0 0.0
        %4433 = vmatpush2.xpose.msra.mxu0 0.0
        %4434 = vmatprep.subr.mxu0 0.0
        %4435 = vmatpush2.xpose.msra.mxu0 0.0
        %4436 = vmatprep.subr.mxu0 0.0
        %4437 = vmatpush2.xpose.msra.mxu0 0.0
        %4438 = vmatprep.subr.mxu0 0.0
        %4439 = vmatpush2.xpose.msra.mxu0 0.0
        %4440 = vmatprep.subr.mxu0 0.0
        %4441 = vmatpush2.xpose.msra.mxu0 0.0
        %4442 = vmatprep.subr.mxu0 0.0
        %4443 = vmatpush2.xpose.msra.mxu0 0.0
        %4444 = vmatprep.subr.mxu0 0.0
        %4445 = vmatpush2.xpose.msra.mxu0 0.0
        %4446 = vmatprep.subr.mxu0 0.0
        %4447 = vmatpush2.xpose.msra.mxu0 0.0
        %4448 = vmatprep.subr.mxu0 0.0
        %4449 = vmatpush2.xpose.msra.mxu0 0.0
        %4450 = vmatprep.subr.mxu0 0.0
        %4451 = vmatpush2.xpose.msra.mxu0 0.0
        %4452 = vmatprep.subr.mxu0 0.0
        %4453 = vmatpush2.xpose.msra.mxu0 0.0
        %4454 = vmatprep.subr.mxu0 0.0
        %4455 = vmatpush2.xpose.msra.mxu0 0.0
        %4456 = vmatprep.subr.mxu0 0.0
        %4457 = vmatpush2.xpose.msra.mxu0 0.0
        %4458 = vmatprep.subr.mxu0 0.0
        %4459 = vmatpush2.xpose.msra.mxu0 0.0
        %4460 = vmatprep.subr.mxu0 0.0
        %4461 = vmatpush2.xpose.msra.mxu0 0.0
        %4462 = vmatprep.mubr.f32.mxu0 0.0
        %4463 = vmatmul.mubr.f32.gmra.mxu0 %v4394
        %v4464 = vpop.f32.mrf.mxu0
        %v4465 = vadd.f32 0.0, %v4464
        %v4466 = vpop.f32.mrf.mxu0
        %4467 = vdwg.mxu0
        %4468 = vrot.lane.b32.xlu0 %v670, 112
        %v4469 = vpop.permute.xlu0 %4468
        %4470 = vrot.lane.b32.xlu0 %v670, 80
        %v4471 = vpop.permute.xlu0 %4470
        %v4472 = vsel %vm682, %v4469, 0
        %v4474 = vsel %vm682, %v4471, 0
        %4476 = vmatprep.subr.mxu0 0.0
        %4477 = vmatpush1.xpose.msra.mxu0 0.0
        %4478 = vmatprep.subr.mxu0 0.0
        %4479 = vmatpush1.xpose.msra.mxu0 0.0
        %4480 = vmatprep.subr.mxu0 0.0
        %4481 = vmatpush1.xpose.msra.mxu0 0.0
        %4482 = vmatprep.subr.mxu0 0.0
        %4483 = vmatpush1.xpose.msra.mxu0 0.0
        %4484 = vmatprep.subr.mxu0 0.0
        %4485 = vmatpush1.xpose.msra.mxu0 0.0
        %4486 = vmatprep.subr.mxu0 0.0
        %4487 = vmatpush1.xpose.msra.mxu0 0.0
        %4488 = vmatprep.subr.mxu0 0.0
        %4489 = vmatpush1.xpose.msra.mxu0 0.0
        %4490 = vmatprep.subr.mxu0 0.0
        %4491 = vmatpush1.xpose.msra.mxu0 0.0
        %4492 = vmatprep.subr.mxu0 0.0
        %4493 = vmatpush1.xpose.msra.mxu0 0.0
        %4494 = vmatprep.subr.mxu0 0.0
        %4495 = vmatpush1.xpose.msra.mxu0 0.0
        %4496 = vmatprep.subr.mxu0 0.0
        %4497 = vmatpush1.xpose.msra.mxu0 0.0
        %4498 = vmatprep.subr.mxu0 0.0
        %4499 = vmatpush1.xpose.msra.mxu0 0.0
        %4500 = vmatprep.subr.mxu0 0.0
        %4501 = vmatpush1.xpose.msra.mxu0 0.0
        %4502 = vmatprep.subr.mxu0 0.0
        %4503 = vmatpush1.xpose.msra.mxu0 0.0
        %4504 = vmatprep.subr.mxu0 0.0
        %4505 = vmatpush1.xpose.msra.mxu0 0.0
        %4506 = vmatprep.subr.mxu0 0.0
        %4507 = vmatpush1.xpose.msra.mxu0 %v4474
        %4508 = vmatprep.subr.mxu0 0.0
        %4509 = vmatpush2.xpose.msra.mxu0 0.0
        %4510 = vmatprep.subr.mxu0 0.0
        %4511 = vmatpush2.xpose.msra.mxu0 0.0
        %4512 = vmatprep.subr.mxu0 0.0
        %4513 = vmatpush2.xpose.msra.mxu0 0.0
        %4514 = vmatprep.subr.mxu0 0.0
        %4515 = vmatpush2.xpose.msra.mxu0 0.0
        %4516 = vmatprep.subr.mxu0 0.0
        %4517 = vmatpush2.xpose.msra.mxu0 0.0
        %4518 = vmatprep.subr.mxu0 0.0
        %4519 = vmatpush2.xpose.msra.mxu0 0.0
        %4520 = vmatprep.subr.mxu0 0.0
        %4521 = vmatpush2.xpose.msra.mxu0 0.0
        %4522 = vmatprep.subr.mxu0 0.0
        %4523 = vmatpush2.xpose.msra.mxu0 0.0
        %4524 = vmatprep.subr.mxu0 0.0
        %4525 = vmatpush2.xpose.msra.mxu0 0.0
        %4526 = vmatprep.subr.mxu0 0.0
        %4527 = vmatpush2.xpose.msra.mxu0 0.0
        %4528 = vmatprep.subr.mxu0 0.0
        %4529 = vmatpush2.xpose.msra.mxu0 0.0
        %4530 = vmatprep.subr.mxu0 0.0
        %4531 = vmatpush2.xpose.msra.mxu0 0.0
        %4532 = vmatprep.subr.mxu0 0.0
        %4533 = vmatpush2.xpose.msra.mxu0 0.0
        %4534 = vmatprep.subr.mxu0 0.0
        %4535 = vmatpush2.xpose.msra.mxu0 0.0
        %4536 = vmatprep.subr.mxu0 0.0
        %4537 = vmatpush2.xpose.msra.mxu0 0.0
        %4538 = vmatprep.subr.mxu0 0.0
        %4539 = vmatpush2.xpose.msra.mxu0 0.0
        %4540 = vmatprep.mubr.f32.mxu0 0.0
        %4541 = vmatmul.mubr.f32.gmra.mxu0 %v4472
        %v4542 = vpop.f32.mrf.mxu0
        %v4543 = vadd.f32 0.0, %v4542
        %v4544 = vpop.f32.mrf.mxu0
        %4545 = vdwg.mxu0
        %v4546 = vmul.f32 %v3997, 0.35355338
        %v4547 = vmul.f32 %v4075, 0.35355338
        %v4548 = vmul.f32 %v4153, 0.35355338
        %v4549 = vmul.f32 %v4231, 0.35355338
        %v4550 = vmul.f32 %v4309, 0.35355338
        %v4551 = vmul.f32 %v4387, 0.35355338
        %v4552 = vmul.f32 %v4465, 0.35355338
        %v4553 = vmul.f32 %v4543, 0.35355338
        %v4554 = vadd.f32 %v4546, %v678
        %v4555 = vadd.f32 %v4547, %v678
        %v4556 = vadd.f32 %v4548, %v678
        %v4557 = vadd.f32 %v4549, %v678
        %v4558 = vadd.f32 %v4550, %v678
        %v4559 = vadd.f32 %v4551, %v678
        %v4560 = vadd.f32 %v4552, %v678
        %v4561 = vadd.f32 %v4553, %v678
        %v4562 = vsel %vm682, %v4554, -inf
        %4563 = vmax.xlane.f32.xlu0 %v4562
        %v4564 = vpop.xlane.xlu0 %4563
        %v4565 = vsel %vm682, %v4555, -inf
        %4566 = vmax.xlane.f32.xlu0 %v4565
        %v4567 = vpop.xlane.xlu0 %4566
        %v4568 = vsel %vm682, %v4556, -inf
        %4569 = vmax.xlane.f32.xlu0 %v4568
        %v4570 = vpop.xlane.xlu0 %4569
        %v4571 = vsel %vm682, %v4557, -inf
        %4572 = vmax.xlane.f32.xlu0 %v4571
        %v4573 = vpop.xlane.xlu0 %4572
        %v4574 = vsel %vm682, %v4558, -inf
        %4575 = vmax.xlane.f32.xlu0 %v4574
        %v4576 = vpop.xlane.xlu0 %4575
        %v4577 = vsel %vm682, %v4559, -inf
        %4578 = vmax.xlane.f32.xlu0 %v4577
        %v4579 = vpop.xlane.xlu0 %4578
        %v4580 = vsel %vm682, %v4560, -inf
        %4581 = vmax.xlane.f32.xlu0 %v4580
        %v4582 = vpop.xlane.xlu0 %4581
        %v4583 = vsel %vm682, %v4561, -inf
        %4584 = vmax.xlane.f32.xlu0 %v4583
        %v4585 = vpop.xlane.xlu0 %4584
        %v4586 = vsub.f32 %v4554, %v4564
        %v4587 = vsub.f32 %v4555, %v4567
        %v4588 = vsub.f32 %v4556, %v4570
        %v4589 = vsub.f32 %v4557, %v4573
        %v4590 = vsub.f32 %v4558, %v4576
        %v4591 = vsub.f32 %v4559, %v4579
        %v4592 = vsub.f32 %v4560, %v4582
        %v4593 = vsub.f32 %v4561, %v4585
        %v4594 = vmul.f32 %v4586, 1.442695
        %v4595 = vpow.pop %v4594
        %v4596 = vmul.f32 %v4587, 1.442695
        %v4597 = vpow.pop %v4596
        %v4598 = vmul.f32 %v4588, 1.442695
        %v4599 = vpow.pop %v4598
        %v4600 = vmul.f32 %v4589, 1.442695
        %v4601 = vpow.pop %v4600
        %v4602 = vmul.f32 %v4590, 1.442695
        %v4603 = vpow.pop %v4602
        %v4604 = vmul.f32 %v4591, 1.442695
        %v4605 = vpow.pop %v4604
        %v4606 = vmul.f32 %v4592, 1.442695
        %v4607 = vpow.pop %v4606
        %v4608 = vmul.f32 %v4593, 1.442695
        %v4609 = vpow.pop %v4608
        %v4610 = vsel %vm682, %v4595, 0.0
        %4611 = vadd.xlane.f32.xlu0 %v4610
        %v4612 = vpop.xlane.xlu0 %4611
        %v4613 = vsel %vm682, %v4597, 0.0
        %4614 = vadd.xlane.f32.xlu0 %v4613
        %v4615 = vpop.xlane.xlu0 %4614
        %v4616 = vsel %vm682, %v4599, 0.0
        %4617 = vadd.xlane.f32.xlu0 %v4616
        %v4618 = vpop.xlane.xlu0 %4617
        %v4619 = vsel %vm682, %v4601, 0.0
        %4620 = vadd.xlane.f32.xlu0 %v4619
        %v4621 = vpop.xlane.xlu0 %4620
        %v4622 = vsel %vm682, %v4603, 0.0
        %4623 = vadd.xlane.f32.xlu0 %v4622
        %v4624 = vpop.xlane.xlu0 %4623
        %v4625 = vsel %vm682, %v4605, 0.0
        %4626 = vadd.xlane.f32.xlu0 %v4625
        %v4627 = vpop.xlane.xlu0 %4626
        %v4628 = vsel %vm682, %v4607, 0.0
        %4629 = vadd.xlane.f32.xlu0 %v4628
        %v4630 = vpop.xlane.xlu0 %4629
        %v4631 = vsel %vm682, %v4609, 0.0
        %4632 = vadd.xlane.f32.xlu0 %v4631
        %v4633 = vpop.xlane.xlu0 %4632
        %v4634 = vrcp.pop %v4612
        %v4635 = vrcp.pop %v4615
        %v4636 = vrcp.pop %v4618
        %v4637 = vrcp.pop %v4621
        %v4638 = vrcp.pop %v4624
        %v4639 = vrcp.pop %v4627
        %v4640 = vrcp.pop %v4630
        %v4641 = vrcp.pop %v4633
        %v4642 = vmul.f32 %v4595, %v4634
        %v4643 = vmul.f32 %v4597, %v4635
        %v4644 = vmul.f32 %v4599, %v4636
        %v4645 = vmul.f32 %v4601, %v4637
        %v4646 = vmul.f32 %v4603, %v4638
        %v4647 = vmul.f32 %v4605, %v4639
        %v4648 = vmul.f32 %v4607, %v4640
        %v4649 = vmul.f32 %v4609, %v4641
        %4650 = vrot.lane.b32.xlu0 %v635, 48
        %v4651 = vpop.permute.xlu0 %4650
        %v4654 = vsel %vm682, %v4642, 0
        %4656 = vmatprep.subr.mxu0 0.0
        %4657 = vmatpush1.msra.mxu0 0.0
        %4658 = vmatprep.subr.mxu0 0.0
        %4659 = vmatpush1.msra.mxu0 0.0
        %4660 = vmatprep.subr.mxu0 0.0
        %4661 = vmatpush1.msra.mxu0 0.0
        %4662 = vmatprep.subr.mxu0 0.0
        %4663 = vmatpush1.msra.mxu0 0.0
        %4664 = vmatprep.subr.mxu0 0.0
        %4665 = vmatpush1.msra.mxu0 0.0
        %4666 = vmatprep.subr.mxu0 0.0
        %4667 = vmatpush1.msra.mxu0 0.0
        %4668 = vmatprep.subr.mxu0 0.0
        %4669 = vmatpush1.msra.mxu0 0.0
        %4670 = vmatprep.subr.mxu0 0.0
        %4671 = vmatpush1.msra.mxu0 0.0
        %4672 = vmatprep.subr.mxu0 0.0
        %4673 = vmatpush1.msra.mxu0 0.0
        %4674 = vmatprep.subr.mxu0 0.0
        %4675 = vmatpush1.msra.mxu0 0.0
        %4676 = vmatprep.subr.mxu0 0.0
        %4677 = vmatpush1.msra.mxu0 0.0
        %4678 = vmatprep.subr.mxu0 0.0
        %4679 = vmatpush1.msra.mxu0 0.0
        %4680 = vmatprep.subr.mxu0 0.0
        %4681 = vmatpush1.msra.mxu0 0.0
        %4682 = vmatprep.subr.mxu0 0.0
        %4683 = vmatpush1.msra.mxu0 0.0
        %4684 = vmatprep.subr.mxu0 0.0
        %4685 = vmatpush1.msra.mxu0 0.0
        %4686 = vmatprep.subr.mxu0 0.0
        %4687 = vmatpush1.msra.mxu0 %v4651
        %4688 = vmatprep.subr.mxu0 0.0
        %4689 = vmatpush2.msra.mxu0 0.0
        %4690 = vmatprep.subr.mxu0 0.0
        %4691 = vmatpush2.msra.mxu0 0.0
        %4692 = vmatprep.subr.mxu0 0.0
        %4693 = vmatpush2.msra.mxu0 0.0
        %4694 = vmatprep.subr.mxu0 0.0
        %4695 = vmatpush2.msra.mxu0 0.0
        %4696 = vmatprep.subr.mxu0 0.0
        %4697 = vmatpush2.msra.mxu0 0.0
        %4698 = vmatprep.subr.mxu0 0.0
        %4699 = vmatpush2.msra.mxu0 0.0
        %4700 = vmatprep.subr.mxu0 0.0
        %4701 = vmatpush2.msra.mxu0 0.0
        %4702 = vmatprep.subr.mxu0 0.0
        %4703 = vmatpush2.msra.mxu0 0.0
        %4704 = vmatprep.subr.mxu0 0.0
        %4705 = vmatpush2.msra.mxu0 0.0
        %4706 = vmatprep.subr.mxu0 0.0
        %4707 = vmatpush2.msra.mxu0 0.0
        %4708 = vmatprep.subr.mxu0 0.0
        %4709 = vmatpush2.msra.mxu0 0.0
        %4710 = vmatprep.subr.mxu0 0.0
        %4711 = vmatpush2.msra.mxu0 0.0
        %4712 = vmatprep.subr.mxu0 0.0
        %4713 = vmatpush2.msra.mxu0 0.0
        %4714 = vmatprep.subr.mxu0 0.0
        %4715 = vmatpush2.msra.mxu0 0.0
        %4716 = vmatprep.subr.mxu0 0.0
        %4717 = vmatpush2.msra.mxu0 0.0
        %4718 = vmatprep.subr.mxu0 0.0
        %4719 = vmatpush2.msra.mxu0 0.0
        %4720 = vmatprep.mubr.f32.mxu0 0.0
        %4721 = vmatmul.mubr.f32.gmra.mxu0 %v4654
        %v4722 = vpop.f32.mrf.mxu0
        %v4723 = vadd.f32 0.0, %v4722
        %v4724 = vpop.f32.mrf.mxu0
        %4725 = vdwg.mxu0
        %4726 = vrot.lane.b32.xlu0 %v640, 48
        %v4727 = vpop.permute.xlu0 %4726
        %v4730 = vsel %vm682, %v4643, 0
        %4732 = vmatprep.subr.mxu0 0.0
        %4733 = vmatpush1.msra.mxu0 0.0
        %4734 = vmatprep.subr.mxu0 0.0
        %4735 = vmatpush1.msra.mxu0 0.0
        %4736 = vmatprep.subr.mxu0 0.0
        %4737 = vmatpush1.msra.mxu0 0.0
        %4738 = vmatprep.subr.mxu0 0.0
        %4739 = vmatpush1.msra.mxu0 0.0
        %4740 = vmatprep.subr.mxu0 0.0
        %4741 = vmatpush1.msra.mxu0 0.0
        %4742 = vmatprep.subr.mxu0 0.0
        %4743 = vmatpush1.msra.mxu0 0.0
        %4744 = vmatprep.subr.mxu0 0.0
        %4745 = vmatpush1.msra.mxu0 0.0
        %4746 = vmatprep.subr.mxu0 0.0
        %4747 = vmatpush1.msra.mxu0 0.0
        %4748 = vmatprep.subr.mxu0 0.0
        %4749 = vmatpush1.msra.mxu0 0.0
        %4750 = vmatprep.subr.mxu0 0.0
        %4751 = vmatpush1.msra.mxu0 0.0
        %4752 = vmatprep.subr.mxu0 0.0
        %4753 = vmatpush1.msra.mxu0 0.0
        %4754 = vmatprep.subr.mxu0 0.0
        %4755 = vmatpush1.msra.mxu0 0.0
        %4756 = vmatprep.subr.mxu0 0.0
        %4757 = vmatpush1.msra.mxu0 0.0
        %4758 = vmatprep.subr.mxu0 0.0
        %4759 = vmatpush1.msra.mxu0 0.0
        %4760 = vmatprep.subr.mxu0 0.0
        %4761 = vmatpush1.msra.mxu0 0.0
        %4762 = vmatprep.subr.mxu0 0.0
        %4763 = vmatpush1.msra.mxu0 %v4727
        %4764 = vmatprep.subr.mxu0 0.0
        %4765 = vmatpush2.msra.mxu0 0.0
        %4766 = vmatprep.subr.mxu0 0.0
        %4767 = vmatpush2.msra.mxu0 0.0
        %4768 = vmatprep.subr.mxu0 0.0
        %4769 = vmatpush2.msra.mxu0 0.0
        %4770 = vmatprep.subr.mxu0 0.0
        %4771 = vmatpush2.msra.mxu0 0.0
        %4772 = vmatprep.subr.mxu0 0.0
        %4773 = vmatpush2.msra.mxu0 0.0
        %4774 = vmatprep.subr.mxu0 0.0
        %4775 = vmatpush2.msra.mxu0 0.0
        %4776 = vmatprep.subr.mxu0 0.0
        %4777 = vmatpush2.msra.mxu0 0.0
        %4778 = vmatprep.subr.mxu0 0.0
        %4779 = vmatpush2.msra.mxu0 0.0
        %4780 = vmatprep.subr.mxu0 0.0
        %4781 = vmatpush2.msra.mxu0 0.0
        %4782 = vmatprep.subr.mxu0 0.0
        %4783 = vmatpush2.msra.mxu0 0.0
        %4784 = vmatprep.subr.mxu0 0.0
        %4785 = vmatpush2.msra.mxu0 0.0
        %4786 = vmatprep.subr.mxu0 0.0
        %4787 = vmatpush2.msra.mxu0 0.0
        %4788 = vmatprep.subr.mxu0 0.0
        %4789 = vmatpush2.msra.mxu0 0.0
        %4790 = vmatprep.subr.mxu0 0.0
        %4791 = vmatpush2.msra.mxu0 0.0
        %4792 = vmatprep.subr.mxu0 0.0
        %4793 = vmatpush2.msra.mxu0 0.0
        %4794 = vmatprep.subr.mxu0 0.0
        %4795 = vmatpush2.msra.mxu0 0.0
        %4796 = vmatprep.mubr.f32.mxu0 0.0
        %4797 = vmatmul.mubr.f32.gmra.mxu0 %v4730
        %v4798 = vpop.f32.mrf.mxu0
        %v4799 = vadd.f32 0.0, %v4798
        %v4800 = vpop.f32.mrf.mxu0
        %4801 = vdwg.mxu0
        %4802 = vrot.lane.b32.xlu0 %v645, 48
        %v4803 = vpop.permute.xlu0 %4802
        %v4806 = vsel %vm682, %v4644, 0
        %4808 = vmatprep.subr.mxu0 0.0
        %4809 = vmatpush1.msra.mxu0 0.0
        %4810 = vmatprep.subr.mxu0 0.0
        %4811 = vmatpush1.msra.mxu0 0.0
        %4812 = vmatprep.subr.mxu0 0.0
        %4813 = vmatpush1.msra.mxu0 0.0
        %4814 = vmatprep.subr.mxu0 0.0
        %4815 = vmatpush1.msra.mxu0 0.0
        %4816 = vmatprep.subr.mxu0 0.0
        %4817 = vmatpush1.msra.mxu0 0.0
        %4818 = vmatprep.subr.mxu0 0.0
        %4819 = vmatpush1.msra.mxu0 0.0
        %4820 = vmatprep.subr.mxu0 0.0
        %4821 = vmatpush1.msra.mxu0 0.0
        %4822 = vmatprep.subr.mxu0 0.0
        %4823 = vmatpush1.msra.mxu0 0.0
        %4824 = vmatprep.subr.mxu0 0.0
        %4825 = vmatpush1.msra.mxu0 0.0
        %4826 = vmatprep.subr.mxu0 0.0
        %4827 = vmatpush1.msra.mxu0 0.0
        %4828 = vmatprep.subr.mxu0 0.0
        %4829 = vmatpush1.msra.mxu0 0.0
        %4830 = vmatprep.subr.mxu0 0.0
        %4831 = vmatpush1.msra.mxu0 0.0
        %4832 = vmatprep.subr.mxu0 0.0
        %4833 = vmatpush1.msra.mxu0 0.0
        %4834 = vmatprep.subr.mxu0 0.0
        %4835 = vmatpush1.msra.mxu0 0.0
        %4836 = vmatprep.subr.mxu0 0.0
        %4837 = vmatpush1.msra.mxu0 0.0
        %4838 = vmatprep.subr.mxu0 0.0
        %4839 = vmatpush1.msra.mxu0 %v4803
        %4840 = vmatprep.subr.mxu0 0.0
        %4841 = vmatpush2.msra.mxu0 0.0
        %4842 = vmatprep.subr.mxu0 0.0
        %4843 = vmatpush2.msra.mxu0 0.0
        %4844 = vmatprep.subr.mxu0 0.0
        %4845 = vmatpush2.msra.mxu0 0.0
        %4846 = vmatprep.subr.mxu0 0.0
        %4847 = vmatpush2.msra.mxu0 0.0
        %4848 = vmatprep.subr.mxu0 0.0
        %4849 = vmatpush2.msra.mxu0 0.0
        %4850 = vmatprep.subr.mxu0 0.0
        %4851 = vmatpush2.msra.mxu0 0.0
        %4852 = vmatprep.subr.mxu0 0.0
        %4853 = vmatpush2.msra.mxu0 0.0
        %4854 = vmatprep.subr.mxu0 0.0
        %4855 = vmatpush2.msra.mxu0 0.0
        %4856 = vmatprep.subr.mxu0 0.0
        %4857 = vmatpush2.msra.mxu0 0.0
        %4858 = vmatprep.subr.mxu0 0.0
        %4859 = vmatpush2.msra.mxu0 0.0
        %4860 = vmatprep.subr.mxu0 0.0
        %4861 = vmatpush2.msra.mxu0 0.0
        %4862 = vmatprep.subr.mxu0 0.0
        %4863 = vmatpush2.msra.mxu0 0.0
        %4864 = vmatprep.subr.mxu0 0.0
        %4865 = vmatpush2.msra.mxu0 0.0
        %4866 = vmatprep.subr.mxu0 0.0
        %4867 = vmatpush2.msra.mxu0 0.0
        %4868 = vmatprep.subr.mxu0 0.0
        %4869 = vmatpush2.msra.mxu0 0.0
        %4870 = vmatprep.subr.mxu0 0.0
        %4871 = vmatpush2.msra.mxu0 0.0
        %4872 = vmatprep.mubr.f32.mxu0 0.0
        %4873 = vmatmul.mubr.f32.gmra.mxu0 %v4806
        %v4874 = vpop.f32.mrf.mxu0
        %v4875 = vadd.f32 0.0, %v4874
        %v4876 = vpop.f32.mrf.mxu0
        %4877 = vdwg.mxu0
        %4878 = vrot.lane.b32.xlu0 %v650, 48
        %v4879 = vpop.permute.xlu0 %4878
        %v4882 = vsel %vm682, %v4645, 0
        %4884 = vmatprep.subr.mxu0 0.0
        %4885 = vmatpush1.msra.mxu0 0.0
        %4886 = vmatprep.subr.mxu0 0.0
        %4887 = vmatpush1.msra.mxu0 0.0
        %4888 = vmatprep.subr.mxu0 0.0
        %4889 = vmatpush1.msra.mxu0 0.0
        %4890 = vmatprep.subr.mxu0 0.0
        %4891 = vmatpush1.msra.mxu0 0.0
        %4892 = vmatprep.subr.mxu0 0.0
        %4893 = vmatpush1.msra.mxu0 0.0
        %4894 = vmatprep.subr.mxu0 0.0
        %4895 = vmatpush1.msra.mxu0 0.0
        %4896 = vmatprep.subr.mxu0 0.0
        %4897 = vmatpush1.msra.mxu0 0.0
        %4898 = vmatprep.subr.mxu0 0.0
        %4899 = vmatpush1.msra.mxu0 0.0
        %4900 = vmatprep.subr.mxu0 0.0
        %4901 = vmatpush1.msra.mxu0 0.0
        %4902 = vmatprep.subr.mxu0 0.0
        %4903 = vmatpush1.msra.mxu0 0.0
        %4904 = vmatprep.subr.mxu0 0.0
        %4905 = vmatpush1.msra.mxu0 0.0
        %4906 = vmatprep.subr.mxu0 0.0
        %4907 = vmatpush1.msra.mxu0 0.0
        %4908 = vmatprep.subr.mxu0 0.0
        %4909 = vmatpush1.msra.mxu0 0.0
        %4910 = vmatprep.subr.mxu0 0.0
        %4911 = vmatpush1.msra.mxu0 0.0
        %4912 = vmatprep.subr.mxu0 0.0
        %4913 = vmatpush1.msra.mxu0 0.0
        %4914 = vmatprep.subr.mxu0 0.0
        %4915 = vmatpush1.msra.mxu0 %v4879
        %4916 = vmatprep.subr.mxu0 0.0
        %4917 = vmatpush2.msra.mxu0 0.0
        %4918 = vmatprep.subr.mxu0 0.0
        %4919 = vmatpush2.msra.mxu0 0.0
        %4920 = vmatprep.subr.mxu0 0.0
        %4921 = vmatpush2.msra.mxu0 0.0
        %4922 = vmatprep.subr.mxu0 0.0
        %4923 = vmatpush2.msra.mxu0 0.0
        %4924 = vmatprep.subr.mxu0 0.0
        %4925 = vmatpush2.msra.mxu0 0.0
        %4926 = vmatprep.subr.mxu0 0.0
        %4927 = vmatpush2.msra.mxu0 0.0
        %4928 = vmatprep.subr.mxu0 0.0
        %4929 = vmatpush2.msra.mxu0 0.0
        %4930 = vmatprep.subr.mxu0 0.0
        %4931 = vmatpush2.msra.mxu0 0.0
        %4932 = vmatprep.subr.mxu0 0.0
        %4933 = vmatpush2.msra.mxu0 0.0
        %4934 = vmatprep.subr.mxu0 0.0
        %4935 = vmatpush2.msra.mxu0 0.0
        %4936 = vmatprep.subr.mxu0 0.0
        %4937 = vmatpush2.msra.mxu0 0.0
        %4938 = vmatprep.subr.mxu0 0.0
        %4939 = vmatpush2.msra.mxu0 0.0
        %4940 = vmatprep.subr.mxu0 0.0
        %4941 = vmatpush2.msra.mxu0 0.0
        %4942 = vmatprep.subr.mxu0 0.0
        %4943 = vmatpush2.msra.mxu0 0.0
        %4944 = vmatprep.subr.mxu0 0.0
        %4945 = vmatpush2.msra.mxu0 0.0
        %4946 = vmatprep.subr.mxu0 0.0
        %4947 = vmatpush2.msra.mxu0 0.0
        %4948 = vmatprep.mubr.f32.mxu0 0.0
        %4949 = vmatmul.mubr.f32.gmra.mxu0 %v4882
        %v4950 = vpop.f32.mrf.mxu0
        %v4951 = vadd.f32 0.0, %v4950
        %v4952 = vpop.f32.mrf.mxu0
        %4953 = vdwg.mxu0
        %4954 = vrot.lane.b32.xlu0 %v655, 48
        %v4955 = vpop.permute.xlu0 %4954
        %v4958 = vsel %vm682, %v4646, 0
        %4960 = vmatprep.subr.mxu0 0.0
        %4961 = vmatpush1.msra.mxu0 0.0
        %4962 = vmatprep.subr.mxu0 0.0
        %4963 = vmatpush1.msra.mxu0 0.0
        %4964 = vmatprep.subr.mxu0 0.0
        %4965 = vmatpush1.msra.mxu0 0.0
        %4966 = vmatprep.subr.mxu0 0.0
        %4967 = vmatpush1.msra.mxu0 0.0
        %4968 = vmatprep.subr.mxu0 0.0
        %4969 = vmatpush1.msra.mxu0 0.0
        %4970 = vmatprep.subr.mxu0 0.0
        %4971 = vmatpush1.msra.mxu0 0.0
        %4972 = vmatprep.subr.mxu0 0.0
        %4973 = vmatpush1.msra.mxu0 0.0
        %4974 = vmatprep.subr.mxu0 0.0
        %4975 = vmatpush1.msra.mxu0 0.0
        %4976 = vmatprep.subr.mxu0 0.0
        %4977 = vmatpush1.msra.mxu0 0.0
        %4978 = vmatprep.subr.mxu0 0.0
        %4979 = vmatpush1.msra.mxu0 0.0
        %4980 = vmatprep.subr.mxu0 0.0
        %4981 = vmatpush1.msra.mxu0 0.0
        %4982 = vmatprep.subr.mxu0 0.0
        %4983 = vmatpush1.msra.mxu0 0.0
        %4984 = vmatprep.subr.mxu0 0.0
        %4985 = vmatpush1.msra.mxu0 0.0
        %4986 = vmatprep.subr.mxu0 0.0
        %4987 = vmatpush1.msra.mxu0 0.0
        %4988 = vmatprep.subr.mxu0 0.0
        %4989 = vmatpush1.msra.mxu0 0.0
        %4990 = vmatprep.subr.mxu0 0.0
        %4991 = vmatpush1.msra.mxu0 %v4955
        %4992 = vmatprep.subr.mxu0 0.0
        %4993 = vmatpush2.msra.mxu0 0.0
        %4994 = vmatprep.subr.mxu0 0.0
        %4995 = vmatpush2.msra.mxu0 0.0
        %4996 = vmatprep.subr.mxu0 0.0
        %4997 = vmatpush2.msra.mxu0 0.0
        %4998 = vmatprep.subr.mxu0 0.0
        %4999 = vmatpush2.msra.mxu0 0.0
        %5000 = vmatprep.subr.mxu0 0.0
        %5001 = vmatpush2.msra.mxu0 0.0
        %5002 = vmatprep.subr.mxu0 0.0
        %5003 = vmatpush2.msra.mxu0 0.0
        %5004 = vmatprep.subr.mxu0 0.0
        %5005 = vmatpush2.msra.mxu0 0.0
        %5006 = vmatprep.subr.mxu0 0.0
        %5007 = vmatpush2.msra.mxu0 0.0
        %5008 = vmatprep.subr.mxu0 0.0
        %5009 = vmatpush2.msra.mxu0 0.0
        %5010 = vmatprep.subr.mxu0 0.0
        %5011 = vmatpush2.msra.mxu0 0.0
        %5012 = vmatprep.subr.mxu0 0.0
        %5013 = vmatpush2.msra.mxu0 0.0
        %5014 = vmatprep.subr.mxu0 0.0
        %5015 = vmatpush2.msra.mxu0 0.0
        %5016 = vmatprep.subr.mxu0 0.0
        %5017 = vmatpush2.msra.mxu0 0.0
        %5018 = vmatprep.subr.mxu0 0.0
        %5019 = vmatpush2.msra.mxu0 0.0
        %5020 = vmatprep.subr.mxu0 0.0
        %5021 = vmatpush2.msra.mxu0 0.0
        %5022 = vmatprep.subr.mxu0 0.0
        %5023 = vmatpush2.msra.mxu0 0.0
        %5024 = vmatprep.mubr.f32.mxu0 0.0
        %5025 = vmatmul.mubr.f32.gmra.mxu0 %v4958
        %v5026 = vpop.f32.mrf.mxu0
        %v5027 = vadd.f32 0.0, %v5026
        %v5028 = vpop.f32.mrf.mxu0
        %5029 = vdwg.mxu0
        %5030 = vrot.lane.b32.xlu0 %v660, 48
        %v5031 = vpop.permute.xlu0 %5030
        %v5034 = vsel %vm682, %v4647, 0
        %5036 = vmatprep.subr.mxu0 0.0
        %5037 = vmatpush1.msra.mxu0 0.0
        %5038 = vmatprep.subr.mxu0 0.0
        %5039 = vmatpush1.msra.mxu0 0.0
        %5040 = vmatprep.subr.mxu0 0.0
        %5041 = vmatpush1.msra.mxu0 0.0
        %5042 = vmatprep.subr.mxu0 0.0
        %5043 = vmatpush1.msra.mxu0 0.0
        %5044 = vmatprep.subr.mxu0 0.0
        %5045 = vmatpush1.msra.mxu0 0.0
        %5046 = vmatprep.subr.mxu0 0.0
        %5047 = vmatpush1.msra.mxu0 0.0
        %5048 = vmatprep.subr.mxu0 0.0
        %5049 = vmatpush1.msra.mxu0 0.0
        %5050 = vmatprep.subr.mxu0 0.0
        %5051 = vmatpush1.msra.mxu0 0.0
        %5052 = vmatprep.subr.mxu0 0.0
        %5053 = vmatpush1.msra.mxu0 0.0
        %5054 = vmatprep.subr.mxu0 0.0
        %5055 = vmatpush1.msra.mxu0 0.0
        %5056 = vmatprep.subr.mxu0 0.0
        %5057 = vmatpush1.msra.mxu0 0.0
        %5058 = vmatprep.subr.mxu0 0.0
        %5059 = vmatpush1.msra.mxu0 0.0
        %5060 = vmatprep.subr.mxu0 0.0
        %5061 = vmatpush1.msra.mxu0 0.0
        %5062 = vmatprep.subr.mxu0 0.0
        %5063 = vmatpush1.msra.mxu0 0.0
        %5064 = vmatprep.subr.mxu0 0.0
        %5065 = vmatpush1.msra.mxu0 0.0
        %5066 = vmatprep.subr.mxu0 0.0
        %5067 = vmatpush1.msra.mxu0 %v5031
        %5068 = vmatprep.subr.mxu0 0.0
        %5069 = vmatpush2.msra.mxu0 0.0
        %5070 = vmatprep.subr.mxu0 0.0
        %5071 = vmatpush2.msra.mxu0 0.0
        %5072 = vmatprep.subr.mxu0 0.0
        %5073 = vmatpush2.msra.mxu0 0.0
        %5074 = vmatprep.subr.mxu0 0.0
        %5075 = vmatpush2.msra.mxu0 0.0
        %5076 = vmatprep.subr.mxu0 0.0
        %5077 = vmatpush2.msra.mxu0 0.0
        %5078 = vmatprep.subr.mxu0 0.0
        %5079 = vmatpush2.msra.mxu0 0.0
        %5080 = vmatprep.subr.mxu0 0.0
        %5081 = vmatpush2.msra.mxu0 0.0
        %5082 = vmatprep.subr.mxu0 0.0
        %5083 = vmatpush2.msra.mxu0 0.0
        %5084 = vmatprep.subr.mxu0 0.0
        %5085 = vmatpush2.msra.mxu0 0.0
        %5086 = vmatprep.subr.mxu0 0.0
        %5087 = vmatpush2.msra.mxu0 0.0
        %5088 = vmatprep.subr.mxu0 0.0
        %5089 = vmatpush2.msra.mxu0 0.0
        %5090 = vmatprep.subr.mxu0 0.0
        %5091 = vmatpush2.msra.mxu0 0.0
        %5092 = vmatprep.subr.mxu0 0.0
        %5093 = vmatpush2.msra.mxu0 0.0
        %5094 = vmatprep.subr.mxu0 0.0
        %5095 = vmatpush2.msra.mxu0 0.0
        %5096 = vmatprep.subr.mxu0 0.0
        %5097 = vmatpush2.msra.mxu0 0.0
        %5098 = vmatprep.subr.mxu0 0.0
        %5099 = vmatpush2.msra.mxu0 0.0
        %5100 = vmatprep.mubr.f32.mxu0 0.0
        %5101 = vmatmul.mubr.f32.gmra.mxu0 %v5034
        %v5102 = vpop.f32.mrf.mxu0
        %v5103 = vadd.f32 0.0, %v5102
        %v5104 = vpop.f32.mrf.mxu0
        %5105 = vdwg.mxu0
        %5106 = vrot.lane.b32.xlu0 %v665, 48
        %v5107 = vpop.permute.xlu0 %5106
        %v5110 = vsel %vm682, %v4648, 0
        %5112 = vmatprep.subr.mxu0 0.0
        %5113 = vmatpush1.msra.mxu0 0.0
        %5114 = vmatprep.subr.mxu0 0.0
        %5115 = vmatpush1.msra.mxu0 0.0
        %5116 = vmatprep.subr.mxu0 0.0
        %5117 = vmatpush1.msra.mxu0 0.0
        %5118 = vmatprep.subr.mxu0 0.0
        %5119 = vmatpush1.msra.mxu0 0.0
        %5120 = vmatprep.subr.mxu0 0.0
        %5121 = vmatpush1.msra.mxu0 0.0
        %5122 = vmatprep.subr.mxu0 0.0
        %5123 = vmatpush1.msra.mxu0 0.0
        %5124 = vmatprep.subr.mxu0 0.0
        %5125 = vmatpush1.msra.mxu0 0.0
        %5126 = vmatprep.subr.mxu0 0.0
        %5127 = vmatpush1.msra.mxu0 0.0
        %5128 = vmatprep.subr.mxu0 0.0
        %5129 = vmatpush1.msra.mxu0 0.0
        %5130 = vmatprep.subr.mxu0 0.0
        %5131 = vmatpush1.msra.mxu0 0.0
        %5132 = vmatprep.subr.mxu0 0.0
        %5133 = vmatpush1.msra.mxu0 0.0
        %5134 = vmatprep.subr.mxu0 0.0
        %5135 = vmatpush1.msra.mxu0 0.0
        %5136 = vmatprep.subr.mxu0 0.0
        %5137 = vmatpush1.msra.mxu0 0.0
        %5138 = vmatprep.subr.mxu0 0.0
        %5139 = vmatpush1.msra.mxu0 0.0
        %5140 = vmatprep.subr.mxu0 0.0
        %5141 = vmatpush1.msra.mxu0 0.0
        %5142 = vmatprep.subr.mxu0 0.0
        %5143 = vmatpush1.msra.mxu0 %v5107
        %5144 = vmatprep.subr.mxu0 0.0
        %5145 = vmatpush2.msra.mxu0 0.0
        %5146 = vmatprep.subr.mxu0 0.0
        %5147 = vmatpush2.msra.mxu0 0.0
        %5148 = vmatprep.subr.mxu0 0.0
        %5149 = vmatpush2.msra.mxu0 0.0
        %5150 = vmatprep.subr.mxu0 0.0
        %5151 = vmatpush2.msra.mxu0 0.0
        %5152 = vmatprep.subr.mxu0 0.0
        %5153 = vmatpush2.msra.mxu0 0.0
        %5154 = vmatprep.subr.mxu0 0.0
        %5155 = vmatpush2.msra.mxu0 0.0
        %5156 = vmatprep.subr.mxu0 0.0
        %5157 = vmatpush2.msra.mxu0 0.0
        %5158 = vmatprep.subr.mxu0 0.0
        %5159 = vmatpush2.msra.mxu0 0.0
        %5160 = vmatprep.subr.mxu0 0.0
        %5161 = vmatpush2.msra.mxu0 0.0
        %5162 = vmatprep.subr.mxu0 0.0
        %5163 = vmatpush2.msra.mxu0 0.0
        %5164 = vmatprep.subr.mxu0 0.0
        %5165 = vmatpush2.msra.mxu0 0.0
        %5166 = vmatprep.subr.mxu0 0.0
        %5167 = vmatpush2.msra.mxu0 0.0
        %5168 = vmatprep.subr.mxu0 0.0
        %5169 = vmatpush2.msra.mxu0 0.0
        %5170 = vmatprep.subr.mxu0 0.0
        %5171 = vmatpush2.msra.mxu0 0.0
        %5172 = vmatprep.subr.mxu0 0.0
        %5173 = vmatpush2.msra.mxu0 0.0
        %5174 = vmatprep.subr.mxu0 0.0
        %5175 = vmatpush2.msra.mxu0 0.0
        %5176 = vmatprep.mubr.f32.mxu0 0.0
        %5177 = vmatmul.mubr.f32.gmra.mxu0 %v5110
        %v5178 = vpop.f32.mrf.mxu0
        %v5179 = vadd.f32 0.0, %v5178
        %v5180 = vpop.f32.mrf.mxu0
        %5181 = vdwg.mxu0
        %5182 = vrot.lane.b32.xlu0 %v670, 48
        %v5183 = vpop.permute.xlu0 %5182
        %v5186 = vsel %vm682, %v4649, 0
        %5188 = vmatprep.subr.mxu0 0.0
        %5189 = vmatpush1.msra.mxu0 0.0
        %5190 = vmatprep.subr.mxu0 0.0
        %5191 = vmatpush1.msra.mxu0 0.0
        %5192 = vmatprep.subr.mxu0 0.0
        %5193 = vmatpush1.msra.mxu0 0.0
        %5194 = vmatprep.subr.mxu0 0.0
        %5195 = vmatpush1.msra.mxu0 0.0
        %5196 = vmatprep.subr.mxu0 0.0
        %5197 = vmatpush1.msra.mxu0 0.0
        %5198 = vmatprep.subr.mxu0 0.0
        %5199 = vmatpush1.msra.mxu0 0.0
        %5200 = vmatprep.subr.mxu0 0.0
        %5201 = vmatpush1.msra.mxu0 0.0
        %5202 = vmatprep.subr.mxu0 0.0
        %5203 = vmatpush1.msra.mxu0 0.0
        %5204 = vmatprep.subr.mxu0 0.0
        %5205 = vmatpush1.msra.mxu0 0.0
        %5206 = vmatprep.subr.mxu0 0.0
        %5207 = vmatpush1.msra.mxu0 0.0
        %5208 = vmatprep.subr.mxu0 0.0
        %5209 = vmatpush1.msra.mxu0 0.0
        %5210 = vmatprep.subr.mxu0 0.0
        %5211 = vmatpush1.msra.mxu0 0.0
        %5212 = vmatprep.subr.mxu0 0.0
        %5213 = vmatpush1.msra.mxu0 0.0
        %5214 = vmatprep.subr.mxu0 0.0
        %5215 = vmatpush1.msra.mxu0 0.0
        %5216 = vmatprep.subr.mxu0 0.0
        %5217 = vmatpush1.msra.mxu0 0.0
        %5218 = vmatprep.subr.mxu0 0.0
        %5219 = vmatpush1.msra.mxu0 %v5183
        %5220 = vmatprep.subr.mxu0 0.0
        %5221 = vmatpush2.msra.mxu0 0.0
        %5222 = vmatprep.subr.mxu0 0.0
        %5223 = vmatpush2.msra.mxu0 0.0
        %5224 = vmatprep.subr.mxu0 0.0
        %5225 = vmatpush2.msra.mxu0 0.0
        %5226 = vmatprep.subr.mxu0 0.0
        %5227 = vmatpush2.msra.mxu0 0.0
        %5228 = vmatprep.subr.mxu0 0.0
        %5229 = vmatpush2.msra.mxu0 0.0
        %5230 = vmatprep.subr.mxu0 0.0
        %5231 = vmatpush2.msra.mxu0 0.0
        %5232 = vmatprep.subr.mxu0 0.0
        %5233 = vmatpush2.msra.mxu0 0.0
        %5234 = vmatprep.subr.mxu0 0.0
        %5235 = vmatpush2.msra.mxu0 0.0
        %5236 = vmatprep.subr.mxu0 0.0
        %5237 = vmatpush2.msra.mxu0 0.0
        %5238 = vmatprep.subr.mxu0 0.0
        %5239 = vmatpush2.msra.mxu0 0.0
        %5240 = vmatprep.subr.mxu0 0.0
        %5241 = vmatpush2.msra.mxu0 0.0
        %5242 = vmatprep.subr.mxu0 0.0
        %5243 = vmatpush2.msra.mxu0 0.0
        %5244 = vmatprep.subr.mxu0 0.0
        %5245 = vmatpush2.msra.mxu0 0.0
        %5246 = vmatprep.subr.mxu0 0.0
        %5247 = vmatpush2.msra.mxu0 0.0
        %5248 = vmatprep.subr.mxu0 0.0
        %5249 = vmatpush2.msra.mxu0 0.0
        %5250 = vmatprep.subr.mxu0 0.0
        %5251 = vmatpush2.msra.mxu0 0.0
        %5252 = vmatprep.mubr.f32.mxu0 0.0
        %5253 = vmatmul.mubr.f32.gmra.mxu0 %v5186
        %v5254 = vpop.f32.mrf.mxu0
        %v5255 = vadd.f32 0.0, %v5254
        %v5256 = vpop.f32.mrf.mxu0
        %5257 = vdwg.mxu0
        %s5258 = scalar_lea.vmem %s2, 16
        %v5259 = vld [vmem:[%s5258] sm:$0xff]
        %v5261 = vsel %vm682, %v4723, 0
        %v5264 = vsel %vm682, %v4799, 0
        %v5267 = vsel %vm682, %v4875, 0
        %v5270 = vsel %vm682, %v4951, 0
        %v5273 = vsel %vm682, %v5027, 0
        %v5276 = vsel %vm682, %v5103, 0
        %v5279 = vsel %vm682, %v5179, 0
        %v5282 = vsel %vm682, %v5255, 0
        %5284 = vmatprep.subr.mxu0 0.0
        %5285 = vmatpush1.msra.mxu0 0.0
        %5286 = vmatprep.subr.mxu0 0.0
        %5287 = vmatpush1.msra.mxu0 0.0
        %5288 = vmatprep.subr.mxu0 0.0
        %5289 = vmatpush1.msra.mxu0 0.0
        %5290 = vmatprep.subr.mxu0 0.0
        %5291 = vmatpush1.msra.mxu0 0.0
        %5292 = vmatprep.subr.mxu0 0.0
        %5293 = vmatpush1.msra.mxu0 0.0
        %5294 = vmatprep.subr.mxu0 0.0
        %5295 = vmatpush1.msra.mxu0 0.0
        %5296 = vmatprep.subr.mxu0 0.0
        %5297 = vmatpush1.msra.mxu0 0.0
        %5298 = vmatprep.subr.mxu0 0.0
        %5299 = vmatpush1.msra.mxu0 0.0
        %5300 = vmatprep.subr.mxu0 0.0
        %5301 = vmatpush1.msra.mxu0 0.0
        %5302 = vmatprep.subr.mxu0 0.0
        %5303 = vmatpush1.msra.mxu0 0.0
        %5304 = vmatprep.subr.mxu0 0.0
        %5305 = vmatpush1.msra.mxu0 0.0
        %5306 = vmatprep.subr.mxu0 0.0
        %5307 = vmatpush1.msra.mxu0 0.0
        %5308 = vmatprep.subr.mxu0 0.0
        %5309 = vmatpush1.msra.mxu0 0.0
        %5310 = vmatprep.subr.mxu0 0.0
        %5311 = vmatpush1.msra.mxu0 0.0
        %5312 = vmatprep.subr.mxu0 0.0
        %5313 = vmatpush1.msra.mxu0 0.0
        %5314 = vmatprep.subr.mxu0 0.0
        %5315 = vmatpush1.msra.mxu0 %v5259
        %5316 = vmatprep.subr.mxu0 0.0
        %5317 = vmatpush2.msra.mxu0 0.0
        %5318 = vmatprep.subr.mxu0 0.0
        %5319 = vmatpush2.msra.mxu0 0.0
        %5320 = vmatprep.subr.mxu0 0.0
        %5321 = vmatpush2.msra.mxu0 0.0
        %5322 = vmatprep.subr.mxu0 0.0
        %5323 = vmatpush2.msra.mxu0 0.0
        %5324 = vmatprep.subr.mxu0 0.0
        %5325 = vmatpush2.msra.mxu0 0.0
        %5326 = vmatprep.subr.mxu0 0.0
        %5327 = vmatpush2.msra.mxu0 0.0
        %5328 = vmatprep.subr.mxu0 0.0
        %5329 = vmatpush2.msra.mxu0 0.0
        %5330 = vmatprep.subr.mxu0 0.0
        %5331 = vmatpush2.msra.mxu0 0.0
        %5332 = vmatprep.subr.mxu0 0.0
        %5333 = vmatpush2.msra.mxu0 0.0
        %5334 = vmatprep.subr.mxu0 0.0
        %5335 = vmatpush2.msra.mxu0 0.0
        %5336 = vmatprep.subr.mxu0 0.0
        %5337 = vmatpush2.msra.mxu0 0.0
        %5338 = vmatprep.subr.mxu0 0.0
        %5339 = vmatpush2.msra.mxu0 0.0
        %5340 = vmatprep.subr.mxu0 0.0
        %5341 = vmatpush2.msra.mxu0 0.0
        %5342 = vmatprep.subr.mxu0 0.0
        %5343 = vmatpush2.msra.mxu0 0.0
        %5344 = vmatprep.subr.mxu0 0.0
        %5345 = vmatpush2.msra.mxu0 0.0
        %5346 = vmatprep.subr.mxu0 0.0
        %5347 = vmatpush2.msra.mxu0 0.0
        %5348 = vmatprep.mubr.f32.mxu0 0.0
        %5349 = vmatmul.mubr.f32.gmra.mxu0 %v5261
        %v5350 = vpop.f32.mrf.mxu0
        %v5351 = vadd.f32 0.0, %v5350
        %v5352 = vpop.f32.mrf.mxu0
        %5353 = vmatprep.mubr.f32.mxu0 0.0
        %5354 = vmatmul.mubr.f32.gmra.mxu0 %v5264
        %v5355 = vpop.f32.mrf.mxu0
        %v5356 = vadd.f32 0.0, %v5355
        %v5357 = vpop.f32.mrf.mxu0
        %5358 = vmatprep.mubr.f32.mxu0 0.0
        %5359 = vmatmul.mubr.f32.gmra.mxu0 %v5267
        %v5360 = vpop.f32.mrf.mxu0
        %v5361 = vadd.f32 0.0, %v5360
        %v5362 = vpop.f32.mrf.mxu0
        %5363 = vmatprep.mubr.f32.mxu0 0.0
        %5364 = vmatmul.mubr.f32.gmra.mxu0 %v5270
        %v5365 = vpop.f32.mrf.mxu0
        %v5366 = vadd.f32 0.0, %v5365
        %v5367 = vpop.f32.mrf.mxu0
        %5368 = vmatprep.mubr.f32.mxu0 0.0
        %5369 = vmatmul.mubr.f32.gmra.mxu0 %v5273
        %v5370 = vpop.f32.mrf.mxu0
        %v5371 = vadd.f32 0.0, %v5370
        %v5372 = vpop.f32.mrf.mxu0
        %5373 = vmatprep.mubr.f32.mxu0 0.0
        %5374 = vmatmul.mubr.f32.gmra.mxu0 %v5276
        %v5375 = vpop.f32.mrf.mxu0
        %v5376 = vadd.f32 0.0, %v5375
        %v5377 = vpop.f32.mrf.mxu0
        %5378 = vmatprep.mubr.f32.mxu0 0.0
        %5379 = vmatmul.mubr.f32.gmra.mxu0 %v5279
        %v5380 = vpop.f32.mrf.mxu0
        %v5381 = vadd.f32 0.0, %v5380
        %v5382 = vpop.f32.mrf.mxu0
        %5383 = vmatprep.mubr.f32.mxu0 0.0
        %5384 = vmatmul.mubr.f32.gmra.mxu0 %v5282
        %v5385 = vpop.f32.mrf.mxu0
        %v5386 = vadd.f32 0.0, %v5385
        %v5387 = vpop.f32.mrf.mxu0
        %5388 = vdwg.mxu0
        %s5389 = scalar_lea.vmem %s3, 16
        %v5390 = vld [vmem:[%s5389] sm:$0xff]
        %5391 = vmatprep.subr.mxu0 0.0
        %5392 = vmatpush1.msra.mxu0 0.0
        %5393 = vmatprep.subr.mxu0 0.0
        %5394 = vmatpush1.msra.mxu0 0.0
        %5395 = vmatprep.subr.mxu0 0.0
        %5396 = vmatpush1.msra.mxu0 0.0
        %5397 = vmatprep.subr.mxu0 0.0
        %5398 = vmatpush1.msra.mxu0 0.0
        %5399 = vmatprep.subr.mxu0 0.0
        %5400 = vmatpush1.msra.mxu0 0.0
        %5401 = vmatprep.subr.mxu0 0.0
        %5402 = vmatpush1.msra.mxu0 0.0
        %5403 = vmatprep.subr.mxu0 0.0
        %5404 = vmatpush1.msra.mxu0 0.0
        %5405 = vmatprep.subr.mxu0 0.0
        %5406 = vmatpush1.msra.mxu0 0.0
        %5407 = vmatprep.subr.mxu0 0.0
        %5408 = vmatpush1.msra.mxu0 0.0
        %5409 = vmatprep.subr.mxu0 0.0
        %5410 = vmatpush1.msra.mxu0 0.0
        %5411 = vmatprep.subr.mxu0 0.0
        %5412 = vmatpush1.msra.mxu0 0.0
        %5413 = vmatprep.subr.mxu0 0.0
        %5414 = vmatpush1.msra.mxu0 0.0
        %5415 = vmatprep.subr.mxu0 0.0
        %5416 = vmatpush1.msra.mxu0 0.0
        %5417 = vmatprep.subr.mxu0 0.0
        %5418 = vmatpush1.msra.mxu0 0.0
        %5419 = vmatprep.subr.mxu0 0.0
        %5420 = vmatpush1.msra.mxu0 0.0
        %5421 = vmatprep.subr.mxu0 0.0
        %5422 = vmatpush1.msra.mxu0 %v5390
        %5423 = vmatprep.subr.mxu0 0.0
        %5424 = vmatpush2.msra.mxu0 0.0
        %5425 = vmatprep.subr.mxu0 0.0
        %5426 = vmatpush2.msra.mxu0 0.0
        %5427 = vmatprep.subr.mxu0 0.0
        %5428 = vmatpush2.msra.mxu0 0.0
        %5429 = vmatprep.subr.mxu0 0.0
        %5430 = vmatpush2.msra.mxu0 0.0
        %5431 = vmatprep.subr.mxu0 0.0
        %5432 = vmatpush2.msra.mxu0 0.0
        %5433 = vmatprep.subr.mxu0 0.0
        %5434 = vmatpush2.msra.mxu0 0.0
        %5435 = vmatprep.subr.mxu0 0.0
        %5436 = vmatpush2.msra.mxu0 0.0
        %5437 = vmatprep.subr.mxu0 0.0
        %5438 = vmatpush2.msra.mxu0 0.0
        %5439 = vmatprep.subr.mxu0 0.0
        %5440 = vmatpush2.msra.mxu0 0.0
        %5441 = vmatprep.subr.mxu0 0.0
        %5442 = vmatpush2.msra.mxu0 0.0
        %5443 = vmatprep.subr.mxu0 0.0
        %5444 = vmatpush2.msra.mxu0 0.0
        %5445 = vmatprep.subr.mxu0 0.0
        %5446 = vmatpush2.msra.mxu0 0.0
        %5447 = vmatprep.subr.mxu0 0.0
        %5448 = vmatpush2.msra.mxu0 0.0
        %5449 = vmatprep.subr.mxu0 0.0
        %5450 = vmatpush2.msra.mxu0 0.0
        %5451 = vmatprep.subr.mxu0 0.0
        %5452 = vmatpush2.msra.mxu0 0.0
        %5453 = vmatprep.subr.mxu0 0.0
        %5454 = vmatpush2.msra.mxu0 0.0
        %5455 = vmatprep.mubr.f32.mxu0 0.0
        %5456 = vmatmul.mubr.f32.gmra.mxu0 %v5261
        %v5457 = vpop.f32.mrf.mxu0
        %v5458 = vadd.f32 0.0, %v5457
        %v5459 = vpop.f32.mrf.mxu0
        %5460 = vmatprep.mubr.f32.mxu0 0.0
        %5461 = vmatmul.mubr.f32.gmra.mxu0 %v5264
        %v5462 = vpop.f32.mrf.mxu0
        %v5463 = vadd.f32 0.0, %v5462
        %v5464 = vpop.f32.mrf.mxu0
        %5465 = vmatprep.mubr.f32.mxu0 0.0
        %5466 = vmatmul.mubr.f32.gmra.mxu0 %v5267
        %v5467 = vpop.f32.mrf.mxu0
        %v5468 = vadd.f32 0.0, %v5467
        %v5469 = vpop.f32.mrf.mxu0
        %5470 = vmatprep.mubr.f32.mxu0 0.0
        %5471 = vmatmul.mubr.f32.gmra.mxu0 %v5270
        %v5472 = vpop.f32.mrf.mxu0
        %v5473 = vadd.f32 0.0, %v5472
        %v5474 = vpop.f32.mrf.mxu0
        %5475 = vmatprep.mubr.f32.mxu0 0.0
        %5476 = vmatmul.mubr.f32.gmra.mxu0 %v5273
        %v5477 = vpop.f32.mrf.mxu0
        %v5478 = vadd.f32 0.0, %v5477
        %v5479 = vpop.f32.mrf.mxu0
        %5480 = vmatprep.mubr.f32.mxu0 0.0
        %5481 = vmatmul.mubr.f32.gmra.mxu0 %v5276
        %v5482 = vpop.f32.mrf.mxu0
        %v5483 = vadd.f32 0.0, %v5482
        %v5484 = vpop.f32.mrf.mxu0
        %5485 = vmatprep.mubr.f32.mxu0 0.0
        %5486 = vmatmul.mubr.f32.gmra.mxu0 %v5279
        %v5487 = vpop.f32.mrf.mxu0
        %v5488 = vadd.f32 0.0, %v5487
        %v5489 = vpop.f32.mrf.mxu0
        %5490 = vmatprep.mubr.f32.mxu0 0.0
        %5491 = vmatmul.mubr.f32.gmra.mxu0 %v5282
        %v5492 = vpop.f32.mrf.mxu0
        %v5493 = vadd.f32 0.0, %v5492
        %v5494 = vpop.f32.mrf.mxu0
        %5495 = vdwg.mxu0
        %v5496 = vmax.f32 %v5458, 0.0
        %v5497 = vmax.f32 %v5463, 0.0
        %v5498 = vmax.f32 %v5468, 0.0
        %v5499 = vmax.f32 %v5473, 0.0
        %v5500 = vmax.f32 %v5478, 0.0
        %v5501 = vmax.f32 %v5483, 0.0
        %v5502 = vmax.f32 %v5488, 0.0
        %v5503 = vmax.f32 %v5493, 0.0
        %v5504 = vmax.f32 %v3834, %v5496
        %v5505 = vmax.f32 %v3835, %v5497
        %v5506 = vmax.f32 %v3836, %v5498
        %v5507 = vmax.f32 %v3837, %v5499
        %v5508 = vmax.f32 %v3838, %v5500
        %v5509 = vmax.f32 %v3839, %v5501
        %v5510 = vmax.f32 %v3840, %v5502
        %v5511 = vmax.f32 %v3841, %v5503
        %v5512 = vsub.f32 %v3834, %v5504
        %v5513 = vsub.f32 %v3835, %v5505
        %v5514 = vsub.f32 %v3836, %v5506
        %v5515 = vsub.f32 %v3837, %v5507
        %v5516 = vsub.f32 %v3838, %v5508
        %v5517 = vsub.f32 %v3839, %v5509
        %v5518 = vsub.f32 %v3840, %v5510
        %v5519 = vsub.f32 %v3841, %v5511
        %v5520 = vmul.f32 %v5512, 1.442695
        %v5521 = vpow.pop %v5520
        %v5522 = vmul.f32 %v5513, 1.442695
        %v5523 = vpow.pop %v5522
        %v5524 = vmul.f32 %v5514, 1.442695
        %v5525 = vpow.pop %v5524
        %v5526 = vmul.f32 %v5515, 1.442695
        %v5527 = vpow.pop %v5526
        %v5528 = vmul.f32 %v5516, 1.442695
        %v5529 = vpow.pop %v5528
        %v5530 = vmul.f32 %v5517, 1.442695
        %v5531 = vpow.pop %v5530
        %v5532 = vmul.f32 %v5518, 1.442695
        %v5533 = vpow.pop %v5532
        %v5534 = vmul.f32 %v5519, 1.442695
        %v5535 = vpow.pop %v5534
        %v5536 = vsub.f32 %v5496, %v5504
        %v5537 = vsub.f32 %v5497, %v5505
        %v5538 = vsub.f32 %v5498, %v5506
        %v5539 = vsub.f32 %v5499, %v5507
        %v5540 = vsub.f32 %v5500, %v5508
        %v5541 = vsub.f32 %v5501, %v5509
        %v5542 = vsub.f32 %v5502, %v5510
        %v5543 = vsub.f32 %v5503, %v5511
        %v5544 = vmul.f32 %v5536, 1.442695
        %v5545 = vpow.pop %v5544
        %v5546 = vmul.f32 %v5537, 1.442695
        %v5547 = vpow.pop %v5546
        %v5548 = vmul.f32 %v5538, 1.442695
        %v5549 = vpow.pop %v5548
        %v5550 = vmul.f32 %v5539, 1.442695
        %v5551 = vpow.pop %v5550
        %v5552 = vmul.f32 %v5540, 1.442695
        %v5553 = vpow.pop %v5552
        %v5554 = vmul.f32 %v5541, 1.442695
        %v5555 = vpow.pop %v5554
        %v5556 = vmul.f32 %v5542, 1.442695
        %v5557 = vpow.pop %v5556
        %v5558 = vmul.f32 %v5543, 1.442695
        %v5559 = vpow.pop %v5558
        %v5560 = vmul.f32 %v3906, %v5521
        %v5561 = vmul.f32 %v3907, %v5523
        %v5562 = vmul.f32 %v3908, %v5525
        %v5563 = vmul.f32 %v3909, %v5527
        %v5564 = vmul.f32 %v3910, %v5529
        %v5565 = vmul.f32 %v3911, %v5531
        %v5566 = vmul.f32 %v3912, %v5533
        %v5567 = vmul.f32 %v3913, %v5535
        %v5568 = vmul.f32 %v5351, %v5545
        %v5569 = vmul.f32 %v5356, %v5547
        %v5570 = vmul.f32 %v5361, %v5549
        %v5571 = vmul.f32 %v5366, %v5551
        %v5572 = vmul.f32 %v5371, %v5553
        %v5573 = vmul.f32 %v5376, %v5555
        %v5574 = vmul.f32 %v5381, %v5557
        %v5575 = vmul.f32 %v5386, %v5559
        %v5576 = vadd.f32 %v5560, %v5568
        %v5577 = vadd.f32 %v5561, %v5569
        %v5578 = vadd.f32 %v5562, %v5570
        %v5579 = vadd.f32 %v5563, %v5571
        %v5580 = vadd.f32 %v5564, %v5572
        %v5581 = vadd.f32 %v5565, %v5573
        %v5582 = vadd.f32 %v5566, %v5574
        %v5583 = vadd.f32 %v5567, %v5575
        %v5584 = vmul.f32 %v3914, %v5521
        %v5585 = vmul.f32 %v3915, %v5523
        %v5586 = vmul.f32 %v3916, %v5525
        %v5587 = vmul.f32 %v3917, %v5527
        %v5588 = vmul.f32 %v3918, %v5529
        %v5589 = vmul.f32 %v3919, %v5531
        %v5590 = vmul.f32 %v3920, %v5533
        %v5591 = vmul.f32 %v3921, %v5535
        %v5592 = vadd.f32 %v5584, %v5545
        %v5593 = vadd.f32 %v5585, %v5547
        %v5594 = vadd.f32 %v5586, %v5549
        %v5595 = vadd.f32 %v5587, %v5551
        %v5596 = vadd.f32 %v5588, %v5553
        %v5597 = vadd.f32 %v5589, %v5555
        %v5598 = vadd.f32 %v5590, %v5557
        %v5599 = vadd.f32 %v5591, %v5559
        %5600 = vrot.lane.b32.xlu0 %v635, 104
        %v5601 = vpop.permute.xlu0 %5600
        %5602 = vrot.lane.b32.xlu0 %v635, 72
        %v5603 = vpop.permute.xlu0 %5602
        %v5604 = vsel %vm682, %v5601, 0
        %v5606 = vsel %vm682, %v5603, 0
        %5608 = vmatprep.subr.mxu0 0.0
        %5609 = vmatpush1.xpose.msra.mxu0 0.0
        %5610 = vmatprep.subr.mxu0 0.0
        %5611 = vmatpush1.xpose.msra.mxu0 0.0
        %5612 = vmatprep.subr.mxu0 0.0
        %5613 = vmatpush1.xpose.msra.mxu0 0.0
        %5614 = vmatprep.subr.mxu0 0.0
        %5615 = vmatpush1.xpose.msra.mxu0 0.0
        %5616 = vmatprep.subr.mxu0 0.0
        %5617 = vmatpush1.xpose.msra.mxu0 0.0
        %5618 = vmatprep.subr.mxu0 0.0
        %5619 = vmatpush1.xpose.msra.mxu0 0.0
        %5620 = vmatprep.subr.mxu0 0.0
        %5621 = vmatpush1.xpose.msra.mxu0 0.0
        %5622 = vmatprep.subr.mxu0 0.0
        %5623 = vmatpush1.xpose.msra.mxu0 0.0
        %5624 = vmatprep.subr.mxu0 0.0
        %5625 = vmatpush1.xpose.msra.mxu0 0.0
        %5626 = vmatprep.subr.mxu0 0.0
        %5627 = vmatpush1.xpose.msra.mxu0 0.0
        %5628 = vmatprep.subr.mxu0 0.0
        %5629 = vmatpush1.xpose.msra.mxu0 0.0
        %5630 = vmatprep.subr.mxu0 0.0
        %5631 = vmatpush1.xpose.msra.mxu0 0.0
        %5632 = vmatprep.subr.mxu0 0.0
        %5633 = vmatpush1.xpose.msra.mxu0 0.0
        %5634 = vmatprep.subr.mxu0 0.0
        %5635 = vmatpush1.xpose.msra.mxu0 0.0
        %5636 = vmatprep.subr.mxu0 0.0
        %5637 = vmatpush1.xpose.msra.mxu0 0.0
        %5638 = vmatprep.subr.mxu0 0.0
        %5639 = vmatpush1.xpose.msra.mxu0 %v5606
        %5640 = vmatprep.subr.mxu0 0.0
        %5641 = vmatpush2.xpose.msra.mxu0 0.0
        %5642 = vmatprep.subr.mxu0 0.0
        %5643 = vmatpush2.xpose.msra.mxu0 0.0
        %5644 = vmatprep.subr.mxu0 0.0
        %5645 = vmatpush2.xpose.msra.mxu0 0.0
        %5646 = vmatprep.subr.mxu0 0.0
        %5647 = vmatpush2.xpose.msra.mxu0 0.0
        %5648 = vmatprep.subr.mxu0 0.0
        %5649 = vmatpush2.xpose.msra.mxu0 0.0
        %5650 = vmatprep.subr.mxu0 0.0
        %5651 = vmatpush2.xpose.msra.mxu0 0.0
        %5652 = vmatprep.subr.mxu0 0.0
        %5653 = vmatpush2.xpose.msra.mxu0 0.0
        %5654 = vmatprep.subr.mxu0 0.0
        %5655 = vmatpush2.xpose.msra.mxu0 0.0
        %5656 = vmatprep.subr.mxu0 0.0
        %5657 = vmatpush2.xpose.msra.mxu0 0.0
        %5658 = vmatprep.subr.mxu0 0.0
        %5659 = vmatpush2.xpose.msra.mxu0 0.0
        %5660 = vmatprep.subr.mxu0 0.0
        %5661 = vmatpush2.xpose.msra.mxu0 0.0
        %5662 = vmatprep.subr.mxu0 0.0
        %5663 = vmatpush2.xpose.msra.mxu0 0.0
        %5664 = vmatprep.subr.mxu0 0.0
        %5665 = vmatpush2.xpose.msra.mxu0 0.0
        %5666 = vmatprep.subr.mxu0 0.0
        %5667 = vmatpush2.xpose.msra.mxu0 0.0
        %5668 = vmatprep.subr.mxu0 0.0
        %5669 = vmatpush2.xpose.msra.mxu0 0.0
        %5670 = vmatprep.subr.mxu0 0.0
        %5671 = vmatpush2.xpose.msra.mxu0 0.0
        %5672 = vmatprep.mubr.f32.mxu0 0.0
        %5673 = vmatmul.mubr.f32.gmra.mxu0 %v5604
        %v5674 = vpop.f32.mrf.mxu0
        %v5675 = vadd.f32 0.0, %v5674
        %v5676 = vpop.f32.mrf.mxu0
        %5677 = vdwg.mxu0
        %5678 = vrot.lane.b32.xlu0 %v640, 104
        %v5679 = vpop.permute.xlu0 %5678
        %5680 = vrot.lane.b32.xlu0 %v640, 72
        %v5681 = vpop.permute.xlu0 %5680
        %v5682 = vsel %vm682, %v5679, 0
        %v5684 = vsel %vm682, %v5681, 0
        %5686 = vmatprep.subr.mxu0 0.0
        %5687 = vmatpush1.xpose.msra.mxu0 0.0
        %5688 = vmatprep.subr.mxu0 0.0
        %5689 = vmatpush1.xpose.msra.mxu0 0.0
        %5690 = vmatprep.subr.mxu0 0.0
        %5691 = vmatpush1.xpose.msra.mxu0 0.0
        %5692 = vmatprep.subr.mxu0 0.0
        %5693 = vmatpush1.xpose.msra.mxu0 0.0
        %5694 = vmatprep.subr.mxu0 0.0
        %5695 = vmatpush1.xpose.msra.mxu0 0.0
        %5696 = vmatprep.subr.mxu0 0.0
        %5697 = vmatpush1.xpose.msra.mxu0 0.0
        %5698 = vmatprep.subr.mxu0 0.0
        %5699 = vmatpush1.xpose.msra.mxu0 0.0
        %5700 = vmatprep.subr.mxu0 0.0
        %5701 = vmatpush1.xpose.msra.mxu0 0.0
        %5702 = vmatprep.subr.mxu0 0.0
        %5703 = vmatpush1.xpose.msra.mxu0 0.0
        %5704 = vmatprep.subr.mxu0 0.0
        %5705 = vmatpush1.xpose.msra.mxu0 0.0
        %5706 = vmatprep.subr.mxu0 0.0
        %5707 = vmatpush1.xpose.msra.mxu0 0.0
        %5708 = vmatprep.subr.mxu0 0.0
        %5709 = vmatpush1.xpose.msra.mxu0 0.0
        %5710 = vmatprep.subr.mxu0 0.0
        %5711 = vmatpush1.xpose.msra.mxu0 0.0
        %5712 = vmatprep.subr.mxu0 0.0
        %5713 = vmatpush1.xpose.msra.mxu0 0.0
        %5714 = vmatprep.subr.mxu0 0.0
        %5715 = vmatpush1.xpose.msra.mxu0 0.0
        %5716 = vmatprep.subr.mxu0 0.0
        %5717 = vmatpush1.xpose.msra.mxu0 %v5684
        %5718 = vmatprep.subr.mxu0 0.0
        %5719 = vmatpush2.xpose.msra.mxu0 0.0
        %5720 = vmatprep.subr.mxu0 0.0
        %5721 = vmatpush2.xpose.msra.mxu0 0.0
        %5722 = vmatprep.subr.mxu0 0.0
        %5723 = vmatpush2.xpose.msra.mxu0 0.0
        %5724 = vmatprep.subr.mxu0 0.0
        %5725 = vmatpush2.xpose.msra.mxu0 0.0
        %5726 = vmatprep.subr.mxu0 0.0
        %5727 = vmatpush2.xpose.msra.mxu0 0.0
        %5728 = vmatprep.subr.mxu0 0.0
        %5729 = vmatpush2.xpose.msra.mxu0 0.0
        %5730 = vmatprep.subr.mxu0 0.0
        %5731 = vmatpush2.xpose.msra.mxu0 0.0
        %5732 = vmatprep.subr.mxu0 0.0
        %5733 = vmatpush2.xpose.msra.mxu0 0.0
        %5734 = vmatprep.subr.mxu0 0.0
        %5735 = vmatpush2.xpose.msra.mxu0 0.0
        %5736 = vmatprep.subr.mxu0 0.0
        %5737 = vmatpush2.xpose.msra.mxu0 0.0
        %5738 = vmatprep.subr.mxu0 0.0
        %5739 = vmatpush2.xpose.msra.mxu0 0.0
        %5740 = vmatprep.subr.mxu0 0.0
        %5741 = vmatpush2.xpose.msra.mxu0 0.0
        %5742 = vmatprep.subr.mxu0 0.0
        %5743 = vmatpush2.xpose.msra.mxu0 0.0
        %5744 = vmatprep.subr.mxu0 0.0
        %5745 = vmatpush2.xpose.msra.mxu0 0.0
        %5746 = vmatprep.subr.mxu0 0.0
        %5747 = vmatpush2.xpose.msra.mxu0 0.0
        %5748 = vmatprep.subr.mxu0 0.0
        %5749 = vmatpush2.xpose.msra.mxu0 0.0
        %5750 = vmatprep.mubr.f32.mxu0 0.0
        %5751 = vmatmul.mubr.f32.gmra.mxu0 %v5682
        %v5752 = vpop.f32.mrf.mxu0
        %v5753 = vadd.f32 0.0, %v5752
        %v5754 = vpop.f32.mrf.mxu0
        %5755 = vdwg.mxu0
        %5756 = vrot.lane.b32.xlu0 %v645, 104
        %v5757 = vpop.permute.xlu0 %5756
        %5758 = vrot.lane.b32.xlu0 %v645, 72
        %v5759 = vpop.permute.xlu0 %5758
        %v5760 = vsel %vm682, %v5757, 0
        %v5762 = vsel %vm682, %v5759, 0
        %5764 = vmatprep.subr.mxu0 0.0
        %5765 = vmatpush1.xpose.msra.mxu0 0.0
        %5766 = vmatprep.subr.mxu0 0.0
        %5767 = vmatpush1.xpose.msra.mxu0 0.0
        %5768 = vmatprep.subr.mxu0 0.0
        %5769 = vmatpush1.xpose.msra.mxu0 0.0
        %5770 = vmatprep.subr.mxu0 0.0
        %5771 = vmatpush1.xpose.msra.mxu0 0.0
        %5772 = vmatprep.subr.mxu0 0.0
        %5773 = vmatpush1.xpose.msra.mxu0 0.0
        %5774 = vmatprep.subr.mxu0 0.0
        %5775 = vmatpush1.xpose.msra.mxu0 0.0
        %5776 = vmatprep.subr.mxu0 0.0
        %5777 = vmatpush1.xpose.msra.mxu0 0.0
        %5778 = vmatprep.subr.mxu0 0.0
        %5779 = vmatpush1.xpose.msra.mxu0 0.0
        %5780 = vmatprep.subr.mxu0 0.0
        %5781 = vmatpush1.xpose.msra.mxu0 0.0
        %5782 = vmatprep.subr.mxu0 0.0
        %5783 = vmatpush1.xpose.msra.mxu0 0.0
        %5784 = vmatprep.subr.mxu0 0.0
        %5785 = vmatpush1.xpose.msra.mxu0 0.0
        %5786 = vmatprep.subr.mxu0 0.0
        %5787 = vmatpush1.xpose.msra.mxu0 0.0
        %5788 = vmatprep.subr.mxu0 0.0
        %5789 = vmatpush1.xpose.msra.mxu0 0.0
        %5790 = vmatprep.subr.mxu0 0.0
        %5791 = vmatpush1.xpose.msra.mxu0 0.0
        %5792 = vmatprep.subr.mxu0 0.0
        %5793 = vmatpush1.xpose.msra.mxu0 0.0
        %5794 = vmatprep.subr.mxu0 0.0
        %5795 = vmatpush1.xpose.msra.mxu0 %v5762
        %5796 = vmatprep.subr.mxu0 0.0
        %5797 = vmatpush2.xpose.msra.mxu0 0.0
        %5798 = vmatprep.subr.mxu0 0.0
        %5799 = vmatpush2.xpose.msra.mxu0 0.0
        %5800 = vmatprep.subr.mxu0 0.0
        %5801 = vmatpush2.xpose.msra.mxu0 0.0
        %5802 = vmatprep.subr.mxu0 0.0
        %5803 = vmatpush2.xpose.msra.mxu0 0.0
        %5804 = vmatprep.subr.mxu0 0.0
        %5805 = vmatpush2.xpose.msra.mxu0 0.0
        %5806 = vmatprep.subr.mxu0 0.0
        %5807 = vmatpush2.xpose.msra.mxu0 0.0
        %5808 = vmatprep.subr.mxu0 0.0
        %5809 = vmatpush2.xpose.msra.mxu0 0.0
        %5810 = vmatprep.subr.mxu0 0.0
        %5811 = vmatpush2.xpose.msra.mxu0 0.0
        %5812 = vmatprep.subr.mxu0 0.0
        %5813 = vmatpush2.xpose.msra.mxu0 0.0
        %5814 = vmatprep.subr.mxu0 0.0
        %5815 = vmatpush2.xpose.msra.mxu0 0.0
        %5816 = vmatprep.subr.mxu0 0.0
        %5817 = vmatpush2.xpose.msra.mxu0 0.0
        %5818 = vmatprep.subr.mxu0 0.0
        %5819 = vmatpush2.xpose.msra.mxu0 0.0
        %5820 = vmatprep.subr.mxu0 0.0
        %5821 = vmatpush2.xpose.msra.mxu0 0.0
        %5822 = vmatprep.subr.mxu0 0.0
        %5823 = vmatpush2.xpose.msra.mxu0 0.0
        %5824 = vmatprep.subr.mxu0 0.0
        %5825 = vmatpush2.xpose.msra.mxu0 0.0
        %5826 = vmatprep.subr.mxu0 0.0
        %5827 = vmatpush2.xpose.msra.mxu0 0.0
        %5828 = vmatprep.mubr.f32.mxu0 0.0
        %5829 = vmatmul.mubr.f32.gmra.mxu0 %v5760
        %v5830 = vpop.f32.mrf.mxu0
        %v5831 = vadd.f32 0.0, %v5830
        %v5832 = vpop.f32.mrf.mxu0
        %5833 = vdwg.mxu0
        %5834 = vrot.lane.b32.xlu0 %v650, 104
        %v5835 = vpop.permute.xlu0 %5834
        %5836 = vrot.lane.b32.xlu0 %v650, 72
        %v5837 = vpop.permute.xlu0 %5836
        %v5838 = vsel %vm682, %v5835, 0
        %v5840 = vsel %vm682, %v5837, 0
        %5842 = vmatprep.subr.mxu0 0.0
        %5843 = vmatpush1.xpose.msra.mxu0 0.0
        %5844 = vmatprep.subr.mxu0 0.0
        %5845 = vmatpush1.xpose.msra.mxu0 0.0
        %5846 = vmatprep.subr.mxu0 0.0
        %5847 = vmatpush1.xpose.msra.mxu0 0.0
        %5848 = vmatprep.subr.mxu0 0.0
        %5849 = vmatpush1.xpose.msra.mxu0 0.0
        %5850 = vmatprep.subr.mxu0 0.0
        %5851 = vmatpush1.xpose.msra.mxu0 0.0
        %5852 = vmatprep.subr.mxu0 0.0
        %5853 = vmatpush1.xpose.msra.mxu0 0.0
        %5854 = vmatprep.subr.mxu0 0.0
        %5855 = vmatpush1.xpose.msra.mxu0 0.0
        %5856 = vmatprep.subr.mxu0 0.0
        %5857 = vmatpush1.xpose.msra.mxu0 0.0
        %5858 = vmatprep.subr.mxu0 0.0
        %5859 = vmatpush1.xpose.msra.mxu0 0.0
        %5860 = vmatprep.subr.mxu0 0.0
        %5861 = vmatpush1.xpose.msra.mxu0 0.0
        %5862 = vmatprep.subr.mxu0 0.0
        %5863 = vmatpush1.xpose.msra.mxu0 0.0
        %5864 = vmatprep.subr.mxu0 0.0
        %5865 = vmatpush1.xpose.msra.mxu0 0.0
        %5866 = vmatprep.subr.mxu0 0.0
        %5867 = vmatpush1.xpose.msra.mxu0 0.0
        %5868 = vmatprep.subr.mxu0 0.0
        %5869 = vmatpush1.xpose.msra.mxu0 0.0
        %5870 = vmatprep.subr.mxu0 0.0
        %5871 = vmatpush1.xpose.msra.mxu0 0.0
        %5872 = vmatprep.subr.mxu0 0.0
        %5873 = vmatpush1.xpose.msra.mxu0 %v5840
        %5874 = vmatprep.subr.mxu0 0.0
        %5875 = vmatpush2.xpose.msra.mxu0 0.0
        %5876 = vmatprep.subr.mxu0 0.0
        %5877 = vmatpush2.xpose.msra.mxu0 0.0
        %5878 = vmatprep.subr.mxu0 0.0
        %5879 = vmatpush2.xpose.msra.mxu0 0.0
        %5880 = vmatprep.subr.mxu0 0.0
        %5881 = vmatpush2.xpose.msra.mxu0 0.0
        %5882 = vmatprep.subr.mxu0 0.0
        %5883 = vmatpush2.xpose.msra.mxu0 0.0
        %5884 = vmatprep.subr.mxu0 0.0
        %5885 = vmatpush2.xpose.msra.mxu0 0.0
        %5886 = vmatprep.subr.mxu0 0.0
        %5887 = vmatpush2.xpose.msra.mxu0 0.0
        %5888 = vmatprep.subr.mxu0 0.0
        %5889 = vmatpush2.xpose.msra.mxu0 0.0
        %5890 = vmatprep.subr.mxu0 0.0
        %5891 = vmatpush2.xpose.msra.mxu0 0.0
        %5892 = vmatprep.subr.mxu0 0.0
        %5893 = vmatpush2.xpose.msra.mxu0 0.0
        %5894 = vmatprep.subr.mxu0 0.0
        %5895 = vmatpush2.xpose.msra.mxu0 0.0
        %5896 = vmatprep.subr.mxu0 0.0
        %5897 = vmatpush2.xpose.msra.mxu0 0.0
        %5898 = vmatprep.subr.mxu0 0.0
        %5899 = vmatpush2.xpose.msra.mxu0 0.0
        %5900 = vmatprep.subr.mxu0 0.0
        %5901 = vmatpush2.xpose.msra.mxu0 0.0
        %5902 = vmatprep.subr.mxu0 0.0
        %5903 = vmatpush2.xpose.msra.mxu0 0.0
        %5904 = vmatprep.subr.mxu0 0.0
        %5905 = vmatpush2.xpose.msra.mxu0 0.0
        %5906 = vmatprep.mubr.f32.mxu0 0.0
        %5907 = vmatmul.mubr.f32.gmra.mxu0 %v5838
        %v5908 = vpop.f32.mrf.mxu0
        %v5909 = vadd.f32 0.0, %v5908
        %v5910 = vpop.f32.mrf.mxu0
        %5911 = vdwg.mxu0
        %5912 = vrot.lane.b32.xlu0 %v655, 104
        %v5913 = vpop.permute.xlu0 %5912
        %5914 = vrot.lane.b32.xlu0 %v655, 72
        %v5915 = vpop.permute.xlu0 %5914
        %v5916 = vsel %vm682, %v5913, 0
        %v5918 = vsel %vm682, %v5915, 0
        %5920 = vmatprep.subr.mxu0 0.0
        %5921 = vmatpush1.xpose.msra.mxu0 0.0
        %5922 = vmatprep.subr.mxu0 0.0
        %5923 = vmatpush1.xpose.msra.mxu0 0.0
        %5924 = vmatprep.subr.mxu0 0.0
        %5925 = vmatpush1.xpose.msra.mxu0 0.0
        %5926 = vmatprep.subr.mxu0 0.0
        %5927 = vmatpush1.xpose.msra.mxu0 0.0
        %5928 = vmatprep.subr.mxu0 0.0
        %5929 = vmatpush1.xpose.msra.mxu0 0.0
        %5930 = vmatprep.subr.mxu0 0.0
        %5931 = vmatpush1.xpose.msra.mxu0 0.0
        %5932 = vmatprep.subr.mxu0 0.0
        %5933 = vmatpush1.xpose.msra.mxu0 0.0
        %5934 = vmatprep.subr.mxu0 0.0
        %5935 = vmatpush1.xpose.msra.mxu0 0.0
        %5936 = vmatprep.subr.mxu0 0.0
        %5937 = vmatpush1.xpose.msra.mxu0 0.0
        %5938 = vmatprep.subr.mxu0 0.0
        %5939 = vmatpush1.xpose.msra.mxu0 0.0
        %5940 = vmatprep.subr.mxu0 0.0
        %5941 = vmatpush1.xpose.msra.mxu0 0.0
        %5942 = vmatprep.subr.mxu0 0.0
        %5943 = vmatpush1.xpose.msra.mxu0 0.0
        %5944 = vmatprep.subr.mxu0 0.0
        %5945 = vmatpush1.xpose.msra.mxu0 0.0
        %5946 = vmatprep.subr.mxu0 0.0
        %5947 = vmatpush1.xpose.msra.mxu0 0.0
        %5948 = vmatprep.subr.mxu0 0.0
        %5949 = vmatpush1.xpose.msra.mxu0 0.0
        %5950 = vmatprep.subr.mxu0 0.0
        %5951 = vmatpush1.xpose.msra.mxu0 %v5918
        %5952 = vmatprep.subr.mxu0 0.0
        %5953 = vmatpush2.xpose.msra.mxu0 0.0
        %5954 = vmatprep.subr.mxu0 0.0
        %5955 = vmatpush2.xpose.msra.mxu0 0.0
        %5956 = vmatprep.subr.mxu0 0.0
        %5957 = vmatpush2.xpose.msra.mxu0 0.0
        %5958 = vmatprep.subr.mxu0 0.0
        %5959 = vmatpush2.xpose.msra.mxu0 0.0
        %5960 = vmatprep.subr.mxu0 0.0
        %5961 = vmatpush2.xpose.msra.mxu0 0.0
        %5962 = vmatprep.subr.mxu0 0.0
        %5963 = vmatpush2.xpose.msra.mxu0 0.0
        %5964 = vmatprep.subr.mxu0 0.0
        %5965 = vmatpush2.xpose.msra.mxu0 0.0
        %5966 = vmatprep.subr.mxu0 0.0
        %5967 = vmatpush2.xpose.msra.mxu0 0.0
        %5968 = vmatprep.subr.mxu0 0.0
        %5969 = vmatpush2.xpose.msra.mxu0 0.0
        %5970 = vmatprep.subr.mxu0 0.0
        %5971 = vmatpush2.xpose.msra.mxu0 0.0
        %5972 = vmatprep.subr.mxu0 0.0
        %5973 = vmatpush2.xpose.msra.mxu0 0.0
        %5974 = vmatprep.subr.mxu0 0.0
        %5975 = vmatpush2.xpose.msra.mxu0 0.0
        %5976 = vmatprep.subr.mxu0 0.0
        %5977 = vmatpush2.xpose.msra.mxu0 0.0
        %5978 = vmatprep.subr.mxu0 0.0
        %5979 = vmatpush2.xpose.msra.mxu0 0.0
        %5980 = vmatprep.subr.mxu0 0.0
        %5981 = vmatpush2.xpose.msra.mxu0 0.0
        %5982 = vmatprep.subr.mxu0 0.0
        %5983 = vmatpush2.xpose.msra.mxu0 0.0
        %5984 = vmatprep.mubr.f32.mxu0 0.0
        %5985 = vmatmul.mubr.f32.gmra.mxu0 %v5916
        %v5986 = vpop.f32.mrf.mxu0
        %v5987 = vadd.f32 0.0, %v5986
        %v5988 = vpop.f32.mrf.mxu0
        %5989 = vdwg.mxu0
        %5990 = vrot.lane.b32.xlu0 %v660, 104
        %v5991 = vpop.permute.xlu0 %5990
        %5992 = vrot.lane.b32.xlu0 %v660, 72
        %v5993 = vpop.permute.xlu0 %5992
        %v5994 = vsel %vm682, %v5991, 0
        %v5996 = vsel %vm682, %v5993, 0
        %5998 = vmatprep.subr.mxu0 0.0
        %5999 = vmatpush1.xpose.msra.mxu0 0.0
        %6000 = vmatprep.subr.mxu0 0.0
        %6001 = vmatpush1.xpose.msra.mxu0 0.0
        %6002 = vmatprep.subr.mxu0 0.0
        %6003 = vmatpush1.xpose.msra.mxu0 0.0
        %6004 = vmatprep.subr.mxu0 0.0
        %6005 = vmatpush1.xpose.msra.mxu0 0.0
        %6006 = vmatprep.subr.mxu0 0.0
        %6007 = vmatpush1.xpose.msra.mxu0 0.0
        %6008 = vmatprep.subr.mxu0 0.0
        %6009 = vmatpush1.xpose.msra.mxu0 0.0
        %6010 = vmatprep.subr.mxu0 0.0
        %6011 = vmatpush1.xpose.msra.mxu0 0.0
        %6012 = vmatprep.subr.mxu0 0.0
        %6013 = vmatpush1.xpose.msra.mxu0 0.0
        %6014 = vmatprep.subr.mxu0 0.0
        %6015 = vmatpush1.xpose.msra.mxu0 0.0
        %6016 = vmatprep.subr.mxu0 0.0
        %6017 = vmatpush1.xpose.msra.mxu0 0.0
        %6018 = vmatprep.subr.mxu0 0.0
        %6019 = vmatpush1.xpose.msra.mxu0 0.0
        %6020 = vmatprep.subr.mxu0 0.0
        %6021 = vmatpush1.xpose.msra.mxu0 0.0
        %6022 = vmatprep.subr.mxu0 0.0
        %6023 = vmatpush1.xpose.msra.mxu0 0.0
        %6024 = vmatprep.subr.mxu0 0.0
        %6025 = vmatpush1.xpose.msra.mxu0 0.0
        %6026 = vmatprep.subr.mxu0 0.0
        %6027 = vmatpush1.xpose.msra.mxu0 0.0
        %6028 = vmatprep.subr.mxu0 0.0
        %6029 = vmatpush1.xpose.msra.mxu0 %v5996
        %6030 = vmatprep.subr.mxu0 0.0
        %6031 = vmatpush2.xpose.msra.mxu0 0.0
        %6032 = vmatprep.subr.mxu0 0.0
        %6033 = vmatpush2.xpose.msra.mxu0 0.0
        %6034 = vmatprep.subr.mxu0 0.0
        %6035 = vmatpush2.xpose.msra.mxu0 0.0
        %6036 = vmatprep.subr.mxu0 0.0
        %6037 = vmatpush2.xpose.msra.mxu0 0.0
        %6038 = vmatprep.subr.mxu0 0.0
        %6039 = vmatpush2.xpose.msra.mxu0 0.0
        %6040 = vmatprep.subr.mxu0 0.0
        %6041 = vmatpush2.xpose.msra.mxu0 0.0
        %6042 = vmatprep.subr.mxu0 0.0
        %6043 = vmatpush2.xpose.msra.mxu0 0.0
        %6044 = vmatprep.subr.mxu0 0.0
        %6045 = vmatpush2.xpose.msra.mxu0 0.0
        %6046 = vmatprep.subr.mxu0 0.0
        %6047 = vmatpush2.xpose.msra.mxu0 0.0
        %6048 = vmatprep.subr.mxu0 0.0
        %6049 = vmatpush2.xpose.msra.mxu0 0.0
        %6050 = vmatprep.subr.mxu0 0.0
        %6051 = vmatpush2.xpose.msra.mxu0 0.0
        %6052 = vmatprep.subr.mxu0 0.0
        %6053 = vmatpush2.xpose.msra.mxu0 0.0
        %6054 = vmatprep.subr.mxu0 0.0
        %6055 = vmatpush2.xpose.msra.mxu0 0.0
        %6056 = vmatprep.subr.mxu0 0.0
        %6057 = vmatpush2.xpose.msra.mxu0 0.0
        %6058 = vmatprep.subr.mxu0 0.0
        %6059 = vmatpush2.xpose.msra.mxu0 0.0
        %6060 = vmatprep.subr.mxu0 0.0
        %6061 = vmatpush2.xpose.msra.mxu0 0.0
        %6062 = vmatprep.mubr.f32.mxu0 0.0
        %6063 = vmatmul.mubr.f32.gmra.mxu0 %v5994
        %v6064 = vpop.f32.mrf.mxu0
        %v6065 = vadd.f32 0.0, %v6064
        %v6066 = vpop.f32.mrf.mxu0
        %6067 = vdwg.mxu0
        %6068 = vrot.lane.b32.xlu0 %v665, 104
        %v6069 = vpop.permute.xlu0 %6068
        %6070 = vrot.lane.b32.xlu0 %v665, 72
        %v6071 = vpop.permute.xlu0 %6070
        %v6072 = vsel %vm682, %v6069, 0
        %v6074 = vsel %vm682, %v6071, 0
        %6076 = vmatprep.subr.mxu0 0.0
        %6077 = vmatpush1.xpose.msra.mxu0 0.0
        %6078 = vmatprep.subr.mxu0 0.0
        %6079 = vmatpush1.xpose.msra.mxu0 0.0
        %6080 = vmatprep.subr.mxu0 0.0
        %6081 = vmatpush1.xpose.msra.mxu0 0.0
        %6082 = vmatprep.subr.mxu0 0.0
        %6083 = vmatpush1.xpose.msra.mxu0 0.0
        %6084 = vmatprep.subr.mxu0 0.0
        %6085 = vmatpush1.xpose.msra.mxu0 0.0
        %6086 = vmatprep.subr.mxu0 0.0
        %6087 = vmatpush1.xpose.msra.mxu0 0.0
        %6088 = vmatprep.subr.mxu0 0.0
        %6089 = vmatpush1.xpose.msra.mxu0 0.0
        %6090 = vmatprep.subr.mxu0 0.0
        %6091 = vmatpush1.xpose.msra.mxu0 0.0
        %6092 = vmatprep.subr.mxu0 0.0
        %6093 = vmatpush1.xpose.msra.mxu0 0.0
        %6094 = vmatprep.subr.mxu0 0.0
        %6095 = vmatpush1.xpose.msra.mxu0 0.0
        %6096 = vmatprep.subr.mxu0 0.0
        %6097 = vmatpush1.xpose.msra.mxu0 0.0
        %6098 = vmatprep.subr.mxu0 0.0
        %6099 = vmatpush1.xpose.msra.mxu0 0.0
        %6100 = vmatprep.subr.mxu0 0.0
        %6101 = vmatpush1.xpose.msra.mxu0 0.0
        %6102 = vmatprep.subr.mxu0 0.0
        %6103 = vmatpush1.xpose.msra.mxu0 0.0
        %6104 = vmatprep.subr.mxu0 0.0
        %6105 = vmatpush1.xpose.msra.mxu0 0.0
        %6106 = vmatprep.subr.mxu0 0.0
        %6107 = vmatpush1.xpose.msra.mxu0 %v6074
        %6108 = vmatprep.subr.mxu0 0.0
        %6109 = vmatpush2.xpose.msra.mxu0 0.0
        %6110 = vmatprep.subr.mxu0 0.0
        %6111 = vmatpush2.xpose.msra.mxu0 0.0
        %6112 = vmatprep.subr.mxu0 0.0
        %6113 = vmatpush2.xpose.msra.mxu0 0.0
        %6114 = vmatprep.subr.mxu0 0.0
        %6115 = vmatpush2.xpose.msra.mxu0 0.0
        %6116 = vmatprep.subr.mxu0 0.0
        %6117 = vmatpush2.xpose.msra.mxu0 0.0
        %6118 = vmatprep.subr.mxu0 0.0
        %6119 = vmatpush2.xpose.msra.mxu0 0.0
        %6120 = vmatprep.subr.mxu0 0.0
        %6121 = vmatpush2.xpose.msra.mxu0 0.0
        %6122 = vmatprep.subr.mxu0 0.0
        %6123 = vmatpush2.xpose.msra.mxu0 0.0
        %6124 = vmatprep.subr.mxu0 0.0
        %6125 = vmatpush2.xpose.msra.mxu0 0.0
        %6126 = vmatprep.subr.mxu0 0.0
        %6127 = vmatpush2.xpose.msra.mxu0 0.0
        %6128 = vmatprep.subr.mxu0 0.0
        %6129 = vmatpush2.xpose.msra.mxu0 0.0
        %6130 = vmatprep.subr.mxu0 0.0
        %6131 = vmatpush2.xpose.msra.mxu0 0.0
        %6132 = vmatprep.subr.mxu0 0.0
        %6133 = vmatpush2.xpose.msra.mxu0 0.0
        %6134 = vmatprep.subr.mxu0 0.0
        %6135 = vmatpush2.xpose.msra.mxu0 0.0
        %6136 = vmatprep.subr.mxu0 0.0
        %6137 = vmatpush2.xpose.msra.mxu0 0.0
        %6138 = vmatprep.subr.mxu0 0.0
        %6139 = vmatpush2.xpose.msra.mxu0 0.0
        %6140 = vmatprep.mubr.f32.mxu0 0.0
        %6141 = vmatmul.mubr.f32.gmra.mxu0 %v6072
        %v6142 = vpop.f32.mrf.mxu0
        %v6143 = vadd.f32 0.0, %v6142
        %v6144 = vpop.f32.mrf.mxu0
        %6145 = vdwg.mxu0
        %6146 = vrot.lane.b32.xlu0 %v670, 104
        %v6147 = vpop.permute.xlu0 %6146
        %6148 = vrot.lane.b32.xlu0 %v670, 72
        %v6149 = vpop.permute.xlu0 %6148
        %v6150 = vsel %vm682, %v6147, 0
        %v6152 = vsel %vm682, %v6149, 0
        %6154 = vmatprep.subr.mxu0 0.0
        %6155 = vmatpush1.xpose.msra.mxu0 0.0
        %6156 = vmatprep.subr.mxu0 0.0
        %6157 = vmatpush1.xpose.msra.mxu0 0.0
        %6158 = vmatprep.subr.mxu0 0.0
        %6159 = vmatpush1.xpose.msra.mxu0 0.0
        %6160 = vmatprep.subr.mxu0 0.0
        %6161 = vmatpush1.xpose.msra.mxu0 0.0
        %6162 = vmatprep.subr.mxu0 0.0
        %6163 = vmatpush1.xpose.msra.mxu0 0.0
        %6164 = vmatprep.subr.mxu0 0.0
        %6165 = vmatpush1.xpose.msra.mxu0 0.0
        %6166 = vmatprep.subr.mxu0 0.0
        %6167 = vmatpush1.xpose.msra.mxu0 0.0
        %6168 = vmatprep.subr.mxu0 0.0
        %6169 = vmatpush1.xpose.msra.mxu0 0.0
        %6170 = vmatprep.subr.mxu0 0.0
        %6171 = vmatpush1.xpose.msra.mxu0 0.0
        %6172 = vmatprep.subr.mxu0 0.0
        %6173 = vmatpush1.xpose.msra.mxu0 0.0
        %6174 = vmatprep.subr.mxu0 0.0
        %6175 = vmatpush1.xpose.msra.mxu0 0.0
        %6176 = vmatprep.subr.mxu0 0.0
        %6177 = vmatpush1.xpose.msra.mxu0 0.0
        %6178 = vmatprep.subr.mxu0 0.0
        %6179 = vmatpush1.xpose.msra.mxu0 0.0
        %6180 = vmatprep.subr.mxu0 0.0
        %6181 = vmatpush1.xpose.msra.mxu0 0.0
        %6182 = vmatprep.subr.mxu0 0.0
        %6183 = vmatpush1.xpose.msra.mxu0 0.0
        %6184 = vmatprep.subr.mxu0 0.0
        %6185 = vmatpush1.xpose.msra.mxu0 %v6152
        %6186 = vmatprep.subr.mxu0 0.0
        %6187 = vmatpush2.xpose.msra.mxu0 0.0
        %6188 = vmatprep.subr.mxu0 0.0
        %6189 = vmatpush2.xpose.msra.mxu0 0.0
        %6190 = vmatprep.subr.mxu0 0.0
        %6191 = vmatpush2.xpose.msra.mxu0 0.0
        %6192 = vmatprep.subr.mxu0 0.0
        %6193 = vmatpush2.xpose.msra.mxu0 0.0
        %6194 = vmatprep.subr.mxu0 0.0
        %6195 = vmatpush2.xpose.msra.mxu0 0.0
        %6196 = vmatprep.subr.mxu0 0.0
        %6197 = vmatpush2.xpose.msra.mxu0 0.0
        %6198 = vmatprep.subr.mxu0 0.0
        %6199 = vmatpush2.xpose.msra.mxu0 0.0
        %6200 = vmatprep.subr.mxu0 0.0
        %6201 = vmatpush2.xpose.msra.mxu0 0.0
        %6202 = vmatprep.subr.mxu0 0.0
        %6203 = vmatpush2.xpose.msra.mxu0 0.0
        %6204 = vmatprep.subr.mxu0 0.0
        %6205 = vmatpush2.xpose.msra.mxu0 0.0
        %6206 = vmatprep.subr.mxu0 0.0
        %6207 = vmatpush2.xpose.msra.mxu0 0.0
        %6208 = vmatprep.subr.mxu0 0.0
        %6209 = vmatpush2.xpose.msra.mxu0 0.0
        %6210 = vmatprep.subr.mxu0 0.0
        %6211 = vmatpush2.xpose.msra.mxu0 0.0
        %6212 = vmatprep.subr.mxu0 0.0
        %6213 = vmatpush2.xpose.msra.mxu0 0.0
        %6214 = vmatprep.subr.mxu0 0.0
        %6215 = vmatpush2.xpose.msra.mxu0 0.0
        %6216 = vmatprep.subr.mxu0 0.0
        %6217 = vmatpush2.xpose.msra.mxu0 0.0
        %6218 = vmatprep.mubr.f32.mxu0 0.0
        %6219 = vmatmul.mubr.f32.gmra.mxu0 %v6150
        %v6220 = vpop.f32.mrf.mxu0
        %v6221 = vadd.f32 0.0, %v6220
        %v6222 = vpop.f32.mrf.mxu0
        %6223 = vdwg.mxu0
        %v6224 = vmul.f32 %v5675, 0.35355338
        %v6225 = vmul.f32 %v5753, 0.35355338
        %v6226 = vmul.f32 %v5831, 0.35355338
        %v6227 = vmul.f32 %v5909, 0.35355338
        %v6228 = vmul.f32 %v5987, 0.35355338
        %v6229 = vmul.f32 %v6065, 0.35355338
        %v6230 = vmul.f32 %v6143, 0.35355338
        %v6231 = vmul.f32 %v6221, 0.35355338
        %v6232 = vadd.f32 %v6224, %v678
        %v6233 = vadd.f32 %v6225, %v678
        %v6234 = vadd.f32 %v6226, %v678
        %v6235 = vadd.f32 %v6227, %v678
        %v6236 = vadd.f32 %v6228, %v678
        %v6237 = vadd.f32 %v6229, %v678
        %v6238 = vadd.f32 %v6230, %v678
        %v6239 = vadd.f32 %v6231, %v678
        %v6240 = vsel %vm682, %v6232, -inf
        %6241 = vmax.xlane.f32.xlu0 %v6240
        %v6242 = vpop.xlane.xlu0 %6241
        %v6243 = vsel %vm682, %v6233, -inf
        %6244 = vmax.xlane.f32.xlu0 %v6243
        %v6245 = vpop.xlane.xlu0 %6244
        %v6246 = vsel %vm682, %v6234, -inf
        %6247 = vmax.xlane.f32.xlu0 %v6246
        %v6248 = vpop.xlane.xlu0 %6247
        %v6249 = vsel %vm682, %v6235, -inf
        %6250 = vmax.xlane.f32.xlu0 %v6249
        %v6251 = vpop.xlane.xlu0 %6250
        %v6252 = vsel %vm682, %v6236, -inf
        %6253 = vmax.xlane.f32.xlu0 %v6252
        %v6254 = vpop.xlane.xlu0 %6253
        %v6255 = vsel %vm682, %v6237, -inf
        %6256 = vmax.xlane.f32.xlu0 %v6255
        %v6257 = vpop.xlane.xlu0 %6256
        %v6258 = vsel %vm682, %v6238, -inf
        %6259 = vmax.xlane.f32.xlu0 %v6258
        %v6260 = vpop.xlane.xlu0 %6259
        %v6261 = vsel %vm682, %v6239, -inf
        %6262 = vmax.xlane.f32.xlu0 %v6261
        %v6263 = vpop.xlane.xlu0 %6262
        %v6264 = vsub.f32 %v6232, %v6242
        %v6265 = vsub.f32 %v6233, %v6245
        %v6266 = vsub.f32 %v6234, %v6248
        %v6267 = vsub.f32 %v6235, %v6251
        %v6268 = vsub.f32 %v6236, %v6254
        %v6269 = vsub.f32 %v6237, %v6257
        %v6270 = vsub.f32 %v6238, %v6260
        %v6271 = vsub.f32 %v6239, %v6263
        %v6272 = vmul.f32 %v6264, 1.442695
        %v6273 = vpow.pop %v6272
        %v6274 = vmul.f32 %v6265, 1.442695
        %v6275 = vpow.pop %v6274
        %v6276 = vmul.f32 %v6266, 1.442695
        %v6277 = vpow.pop %v6276
        %v6278 = vmul.f32 %v6267, 1.442695
        %v6279 = vpow.pop %v6278
        %v6280 = vmul.f32 %v6268, 1.442695
        %v6281 = vpow.pop %v6280
        %v6282 = vmul.f32 %v6269, 1.442695
        %v6283 = vpow.pop %v6282
        %v6284 = vmul.f32 %v6270, 1.442695
        %v6285 = vpow.pop %v6284
        %v6286 = vmul.f32 %v6271, 1.442695
        %v6287 = vpow.pop %v6286
        %v6288 = vsel %vm682, %v6273, 0.0
        %6289 = vadd.xlane.f32.xlu0 %v6288
        %v6290 = vpop.xlane.xlu0 %6289
        %v6291 = vsel %vm682, %v6275, 0.0
        %6292 = vadd.xlane.f32.xlu0 %v6291
        %v6293 = vpop.xlane.xlu0 %6292
        %v6294 = vsel %vm682, %v6277, 0.0
        %6295 = vadd.xlane.f32.xlu0 %v6294
        %v6296 = vpop.xlane.xlu0 %6295
        %v6297 = vsel %vm682, %v6279, 0.0
        %6298 = vadd.xlane.f32.xlu0 %v6297
        %v6299 = vpop.xlane.xlu0 %6298
        %v6300 = vsel %vm682, %v6281, 0.0
        %6301 = vadd.xlane.f32.xlu0 %v6300
        %v6302 = vpop.xlane.xlu0 %6301
        %v6303 = vsel %vm682, %v6283, 0.0
        %6304 = vadd.xlane.f32.xlu0 %v6303
        %v6305 = vpop.xlane.xlu0 %6304
        %v6306 = vsel %vm682, %v6285, 0.0
        %6307 = vadd.xlane.f32.xlu0 %v6306
        %v6308 = vpop.xlane.xlu0 %6307
        %v6309 = vsel %vm682, %v6287, 0.0
        %6310 = vadd.xlane.f32.xlu0 %v6309
        %v6311 = vpop.xlane.xlu0 %6310
        %v6312 = vrcp.pop %v6290
        %v6313 = vrcp.pop %v6293
        %v6314 = vrcp.pop %v6296
        %v6315 = vrcp.pop %v6299
        %v6316 = vrcp.pop %v6302
        %v6317 = vrcp.pop %v6305
        %v6318 = vrcp.pop %v6308
        %v6319 = vrcp.pop %v6311
        %v6320 = vmul.f32 %v6273, %v6312
        %v6321 = vmul.f32 %v6275, %v6313
        %v6322 = vmul.f32 %v6277, %v6314
        %v6323 = vmul.f32 %v6279, %v6315
        %v6324 = vmul.f32 %v6281, %v6316
        %v6325 = vmul.f32 %v6283, %v6317
        %v6326 = vmul.f32 %v6285, %v6318
        %v6327 = vmul.f32 %v6287, %v6319
        %6328 = vrot.lane.b32.xlu0 %v635, 40
        %v6329 = vpop.permute.xlu0 %6328
        %v6332 = vsel %vm682, %v6320, 0
        %6334 = vmatprep.subr.mxu0 0.0
        %6335 = vmatpush1.msra.mxu0 0.0
        %6336 = vmatprep.subr.mxu0 0.0
        %6337 = vmatpush1.msra.mxu0 0.0
        %6338 = vmatprep.subr.mxu0 0.0
        %6339 = vmatpush1.msra.mxu0 0.0
        %6340 = vmatprep.subr.mxu0 0.0
        %6341 = vmatpush1.msra.mxu0 0.0
        %6342 = vmatprep.subr.mxu0 0.0
        %6343 = vmatpush1.msra.mxu0 0.0
        %6344 = vmatprep.subr.mxu0 0.0
        %6345 = vmatpush1.msra.mxu0 0.0
        %6346 = vmatprep.subr.mxu0 0.0
        %6347 = vmatpush1.msra.mxu0 0.0
        %6348 = vmatprep.subr.mxu0 0.0
        %6349 = vmatpush1.msra.mxu0 0.0
        %6350 = vmatprep.subr.mxu0 0.0
        %6351 = vmatpush1.msra.mxu0 0.0
        %6352 = vmatprep.subr.mxu0 0.0
        %6353 = vmatpush1.msra.mxu0 0.0
        %6354 = vmatprep.subr.mxu0 0.0
        %6355 = vmatpush1.msra.mxu0 0.0
        %6356 = vmatprep.subr.mxu0 0.0
        %6357 = vmatpush1.msra.mxu0 0.0
        %6358 = vmatprep.subr.mxu0 0.0
        %6359 = vmatpush1.msra.mxu0 0.0
        %6360 = vmatprep.subr.mxu0 0.0
        %6361 = vmatpush1.msra.mxu0 0.0
        %6362 = vmatprep.subr.mxu0 0.0
        %6363 = vmatpush1.msra.mxu0 0.0
        %6364 = vmatprep.subr.mxu0 0.0
        %6365 = vmatpush1.msra.mxu0 %v6329
        %6366 = vmatprep.subr.mxu0 0.0
        %6367 = vmatpush2.msra.mxu0 0.0
        %6368 = vmatprep.subr.mxu0 0.0
        %6369 = vmatpush2.msra.mxu0 0.0
        %6370 = vmatprep.subr.mxu0 0.0
        %6371 = vmatpush2.msra.mxu0 0.0
        %6372 = vmatprep.subr.mxu0 0.0
        %6373 = vmatpush2.msra.mxu0 0.0
        %6374 = vmatprep.subr.mxu0 0.0
        %6375 = vmatpush2.msra.mxu0 0.0
        %6376 = vmatprep.subr.mxu0 0.0
        %6377 = vmatpush2.msra.mxu0 0.0
        %6378 = vmatprep.subr.mxu0 0.0
        %6379 = vmatpush2.msra.mxu0 0.0
        %6380 = vmatprep.subr.mxu0 0.0
        %6381 = vmatpush2.msra.mxu0 0.0
        %6382 = vmatprep.subr.mxu0 0.0
        %6383 = vmatpush2.msra.mxu0 0.0
        %6384 = vmatprep.subr.mxu0 0.0
        %6385 = vmatpush2.msra.mxu0 0.0
        %6386 = vmatprep.subr.mxu0 0.0
        %6387 = vmatpush2.msra.mxu0 0.0
        %6388 = vmatprep.subr.mxu0 0.0
        %6389 = vmatpush2.msra.mxu0 0.0
        %6390 = vmatprep.subr.mxu0 0.0
        %6391 = vmatpush2.msra.mxu0 0.0
        %6392 = vmatprep.subr.mxu0 0.0
        %6393 = vmatpush2.msra.mxu0 0.0
        %6394 = vmatprep.subr.mxu0 0.0
        %6395 = vmatpush2.msra.mxu0 0.0
        %6396 = vmatprep.subr.mxu0 0.0
        %6397 = vmatpush2.msra.mxu0 0.0
        %6398 = vmatprep.mubr.f32.mxu0 0.0
        %6399 = vmatmul.mubr.f32.gmra.mxu0 %v6332
        %v6400 = vpop.f32.mrf.mxu0
        %v6401 = vadd.f32 0.0, %v6400
        %v6402 = vpop.f32.mrf.mxu0
        %6403 = vdwg.mxu0
        %6404 = vrot.lane.b32.xlu0 %v640, 40
        %v6405 = vpop.permute.xlu0 %6404
        %v6408 = vsel %vm682, %v6321, 0
        %6410 = vmatprep.subr.mxu0 0.0
        %6411 = vmatpush1.msra.mxu0 0.0
        %6412 = vmatprep.subr.mxu0 0.0
        %6413 = vmatpush1.msra.mxu0 0.0
        %6414 = vmatprep.subr.mxu0 0.0
        %6415 = vmatpush1.msra.mxu0 0.0
        %6416 = vmatprep.subr.mxu0 0.0
        %6417 = vmatpush1.msra.mxu0 0.0
        %6418 = vmatprep.subr.mxu0 0.0
        %6419 = vmatpush1.msra.mxu0 0.0
        %6420 = vmatprep.subr.mxu0 0.0
        %6421 = vmatpush1.msra.mxu0 0.0
        %6422 = vmatprep.subr.mxu0 0.0
        %6423 = vmatpush1.msra.mxu0 0.0
        %6424 = vmatprep.subr.mxu0 0.0
        %6425 = vmatpush1.msra.mxu0 0.0
        %6426 = vmatprep.subr.mxu0 0.0
        %6427 = vmatpush1.msra.mxu0 0.0
        %6428 = vmatprep.subr.mxu0 0.0
        %6429 = vmatpush1.msra.mxu0 0.0
        %6430 = vmatprep.subr.mxu0 0.0
        %6431 = vmatpush1.msra.mxu0 0.0
        %6432 = vmatprep.subr.mxu0 0.0
        %6433 = vmatpush1.msra.mxu0 0.0
        %6434 = vmatprep.subr.mxu0 0.0
        %6435 = vmatpush1.msra.mxu0 0.0
        %6436 = vmatprep.subr.mxu0 0.0
        %6437 = vmatpush1.msra.mxu0 0.0
        %6438 = vmatprep.subr.mxu0 0.0
        %6439 = vmatpush1.msra.mxu0 0.0
        %6440 = vmatprep.subr.mxu0 0.0
        %6441 = vmatpush1.msra.mxu0 %v6405
        %6442 = vmatprep.subr.mxu0 0.0
        %6443 = vmatpush2.msra.mxu0 0.0
        %6444 = vmatprep.subr.mxu0 0.0
        %6445 = vmatpush2.msra.mxu0 0.0
        %6446 = vmatprep.subr.mxu0 0.0
        %6447 = vmatpush2.msra.mxu0 0.0
        %6448 = vmatprep.subr.mxu0 0.0
        %6449 = vmatpush2.msra.mxu0 0.0
        %6450 = vmatprep.subr.mxu0 0.0
        %6451 = vmatpush2.msra.mxu0 0.0
        %6452 = vmatprep.subr.mxu0 0.0
        %6453 = vmatpush2.msra.mxu0 0.0
        %6454 = vmatprep.subr.mxu0 0.0
        %6455 = vmatpush2.msra.mxu0 0.0
        %6456 = vmatprep.subr.mxu0 0.0
        %6457 = vmatpush2.msra.mxu0 0.0
        %6458 = vmatprep.subr.mxu0 0.0
        %6459 = vmatpush2.msra.mxu0 0.0
        %6460 = vmatprep.subr.mxu0 0.0
        %6461 = vmatpush2.msra.mxu0 0.0
        %6462 = vmatprep.subr.mxu0 0.0
        %6463 = vmatpush2.msra.mxu0 0.0
        %6464 = vmatprep.subr.mxu0 0.0
        %6465 = vmatpush2.msra.mxu0 0.0
        %6466 = vmatprep.subr.mxu0 0.0
        %6467 = vmatpush2.msra.mxu0 0.0
        %6468 = vmatprep.subr.mxu0 0.0
        %6469 = vmatpush2.msra.mxu0 0.0
        %6470 = vmatprep.subr.mxu0 0.0
        %6471 = vmatpush2.msra.mxu0 0.0
        %6472 = vmatprep.subr.mxu0 0.0
        %6473 = vmatpush2.msra.mxu0 0.0
        %6474 = vmatprep.mubr.f32.mxu0 0.0
        %6475 = vmatmul.mubr.f32.gmra.mxu0 %v6408
        %v6476 = vpop.f32.mrf.mxu0
        %v6477 = vadd.f32 0.0, %v6476
        %v6478 = vpop.f32.mrf.mxu0
        %6479 = vdwg.mxu0
        %6480 = vrot.lane.b32.xlu0 %v645, 40
        %v6481 = vpop.permute.xlu0 %6480
        %v6484 = vsel %vm682, %v6322, 0
        %6486 = vmatprep.subr.mxu0 0.0
        %6487 = vmatpush1.msra.mxu0 0.0
        %6488 = vmatprep.subr.mxu0 0.0
        %6489 = vmatpush1.msra.mxu0 0.0
        %6490 = vmatprep.subr.mxu0 0.0
        %6491 = vmatpush1.msra.mxu0 0.0
        %6492 = vmatprep.subr.mxu0 0.0
        %6493 = vmatpush1.msra.mxu0 0.0
        %6494 = vmatprep.subr.mxu0 0.0
        %6495 = vmatpush1.msra.mxu0 0.0
        %6496 = vmatprep.subr.mxu0 0.0
        %6497 = vmatpush1.msra.mxu0 0.0
        %6498 = vmatprep.subr.mxu0 0.0
        %6499 = vmatpush1.msra.mxu0 0.0
        %6500 = vmatprep.subr.mxu0 0.0
        %6501 = vmatpush1.msra.mxu0 0.0
        %6502 = vmatprep.subr.mxu0 0.0
        %6503 = vmatpush1.msra.mxu0 0.0
        %6504 = vmatprep.subr.mxu0 0.0
        %6505 = vmatpush1.msra.mxu0 0.0
        %6506 = vmatprep.subr.mxu0 0.0
        %6507 = vmatpush1.msra.mxu0 0.0
        %6508 = vmatprep.subr.mxu0 0.0
        %6509 = vmatpush1.msra.mxu0 0.0
        %6510 = vmatprep.subr.mxu0 0.0
        %6511 = vmatpush1.msra.mxu0 0.0
        %6512 = vmatprep.subr.mxu0 0.0
        %6513 = vmatpush1.msra.mxu0 0.0
        %6514 = vmatprep.subr.mxu0 0.0
        %6515 = vmatpush1.msra.mxu0 0.0
        %6516 = vmatprep.subr.mxu0 0.0
        %6517 = vmatpush1.msra.mxu0 %v6481
        %6518 = vmatprep.subr.mxu0 0.0
        %6519 = vmatpush2.msra.mxu0 0.0
        %6520 = vmatprep.subr.mxu0 0.0
        %6521 = vmatpush2.msra.mxu0 0.0
        %6522 = vmatprep.subr.mxu0 0.0
        %6523 = vmatpush2.msra.mxu0 0.0
        %6524 = vmatprep.subr.mxu0 0.0
        %6525 = vmatpush2.msra.mxu0 0.0
        %6526 = vmatprep.subr.mxu0 0.0
        %6527 = vmatpush2.msra.mxu0 0.0
        %6528 = vmatprep.subr.mxu0 0.0
        %6529 = vmatpush2.msra.mxu0 0.0
        %6530 = vmatprep.subr.mxu0 0.0
        %6531 = vmatpush2.msra.mxu0 0.0
        %6532 = vmatprep.subr.mxu0 0.0
        %6533 = vmatpush2.msra.mxu0 0.0
        %6534 = vmatprep.subr.mxu0 0.0
        %6535 = vmatpush2.msra.mxu0 0.0
        %6536 = vmatprep.subr.mxu0 0.0
        %6537 = vmatpush2.msra.mxu0 0.0
        %6538 = vmatprep.subr.mxu0 0.0
        %6539 = vmatpush2.msra.mxu0 0.0
        %6540 = vmatprep.subr.mxu0 0.0
        %6541 = vmatpush2.msra.mxu0 0.0
        %6542 = vmatprep.subr.mxu0 0.0
        %6543 = vmatpush2.msra.mxu0 0.0
        %6544 = vmatprep.subr.mxu0 0.0
        %6545 = vmatpush2.msra.mxu0 0.0
        %6546 = vmatprep.subr.mxu0 0.0
        %6547 = vmatpush2.msra.mxu0 0.0
        %6548 = vmatprep.subr.mxu0 0.0
        %6549 = vmatpush2.msra.mxu0 0.0
        %6550 = vmatprep.mubr.f32.mxu0 0.0
        %6551 = vmatmul.mubr.f32.gmra.mxu0 %v6484
        %v6552 = vpop.f32.mrf.mxu0
        %v6553 = vadd.f32 0.0, %v6552
        %v6554 = vpop.f32.mrf.mxu0
        %6555 = vdwg.mxu0
        %6556 = vrot.lane.b32.xlu0 %v650, 40
        %v6557 = vpop.permute.xlu0 %6556
        %v6560 = vsel %vm682, %v6323, 0
        %6562 = vmatprep.subr.mxu0 0.0
        %6563 = vmatpush1.msra.mxu0 0.0
        %6564 = vmatprep.subr.mxu0 0.0
        %6565 = vmatpush1.msra.mxu0 0.0
        %6566 = vmatprep.subr.mxu0 0.0
        %6567 = vmatpush1.msra.mxu0 0.0
        %6568 = vmatprep.subr.mxu0 0.0
        %6569 = vmatpush1.msra.mxu0 0.0
        %6570 = vmatprep.subr.mxu0 0.0
        %6571 = vmatpush1.msra.mxu0 0.0
        %6572 = vmatprep.subr.mxu0 0.0
        %6573 = vmatpush1.msra.mxu0 0.0
        %6574 = vmatprep.subr.mxu0 0.0
        %6575 = vmatpush1.msra.mxu0 0.0
        %6576 = vmatprep.subr.mxu0 0.0
        %6577 = vmatpush1.msra.mxu0 0.0
        %6578 = vmatprep.subr.mxu0 0.0
        %6579 = vmatpush1.msra.mxu0 0.0
        %6580 = vmatprep.subr.mxu0 0.0
        %6581 = vmatpush1.msra.mxu0 0.0
        %6582 = vmatprep.subr.mxu0 0.0
        %6583 = vmatpush1.msra.mxu0 0.0
        %6584 = vmatprep.subr.mxu0 0.0
        %6585 = vmatpush1.msra.mxu0 0.0
        %6586 = vmatprep.subr.mxu0 0.0
        %6587 = vmatpush1.msra.mxu0 0.0
        %6588 = vmatprep.subr.mxu0 0.0
        %6589 = vmatpush1.msra.mxu0 0.0
        %6590 = vmatprep.subr.mxu0 0.0
        %6591 = vmatpush1.msra.mxu0 0.0
        %6592 = vmatprep.subr.mxu0 0.0
        %6593 = vmatpush1.msra.mxu0 %v6557
        %6594 = vmatprep.subr.mxu0 0.0
        %6595 = vmatpush2.msra.mxu0 0.0
        %6596 = vmatprep.subr.mxu0 0.0
        %6597 = vmatpush2.msra.mxu0 0.0
        %6598 = vmatprep.subr.mxu0 0.0
        %6599 = vmatpush2.msra.mxu0 0.0
        %6600 = vmatprep.subr.mxu0 0.0
        %6601 = vmatpush2.msra.mxu0 0.0
        %6602 = vmatprep.subr.mxu0 0.0
        %6603 = vmatpush2.msra.mxu0 0.0
        %6604 = vmatprep.subr.mxu0 0.0
        %6605 = vmatpush2.msra.mxu0 0.0
        %6606 = vmatprep.subr.mxu0 0.0
        %6607 = vmatpush2.msra.mxu0 0.0
        %6608 = vmatprep.subr.mxu0 0.0
        %6609 = vmatpush2.msra.mxu0 0.0
        %6610 = vmatprep.subr.mxu0 0.0
        %6611 = vmatpush2.msra.mxu0 0.0
        %6612 = vmatprep.subr.mxu0 0.0
        %6613 = vmatpush2.msra.mxu0 0.0
        %6614 = vmatprep.subr.mxu0 0.0
        %6615 = vmatpush2.msra.mxu0 0.0
        %6616 = vmatprep.subr.mxu0 0.0
        %6617 = vmatpush2.msra.mxu0 0.0
        %6618 = vmatprep.subr.mxu0 0.0
        %6619 = vmatpush2.msra.mxu0 0.0
        %6620 = vmatprep.subr.mxu0 0.0
        %6621 = vmatpush2.msra.mxu0 0.0
        %6622 = vmatprep.subr.mxu0 0.0
        %6623 = vmatpush2.msra.mxu0 0.0
        %6624 = vmatprep.subr.mxu0 0.0
        %6625 = vmatpush2.msra.mxu0 0.0
        %6626 = vmatprep.mubr.f32.mxu0 0.0
        %6627 = vmatmul.mubr.f32.gmra.mxu0 %v6560
        %v6628 = vpop.f32.mrf.mxu0
        %v6629 = vadd.f32 0.0, %v6628
        %v6630 = vpop.f32.mrf.mxu0
        %6631 = vdwg.mxu0
        %6632 = vrot.lane.b32.xlu0 %v655, 40
        %v6633 = vpop.permute.xlu0 %6632
        %v6636 = vsel %vm682, %v6324, 0
        %6638 = vmatprep.subr.mxu0 0.0
        %6639 = vmatpush1.msra.mxu0 0.0
        %6640 = vmatprep.subr.mxu0 0.0
        %6641 = vmatpush1.msra.mxu0 0.0
        %6642 = vmatprep.subr.mxu0 0.0
        %6643 = vmatpush1.msra.mxu0 0.0
        %6644 = vmatprep.subr.mxu0 0.0
        %6645 = vmatpush1.msra.mxu0 0.0
        %6646 = vmatprep.subr.mxu0 0.0
        %6647 = vmatpush1.msra.mxu0 0.0
        %6648 = vmatprep.subr.mxu0 0.0
        %6649 = vmatpush1.msra.mxu0 0.0
        %6650 = vmatprep.subr.mxu0 0.0
        %6651 = vmatpush1.msra.mxu0 0.0
        %6652 = vmatprep.subr.mxu0 0.0
        %6653 = vmatpush1.msra.mxu0 0.0
        %6654 = vmatprep.subr.mxu0 0.0
        %6655 = vmatpush1.msra.mxu0 0.0
        %6656 = vmatprep.subr.mxu0 0.0
        %6657 = vmatpush1.msra.mxu0 0.0
        %6658 = vmatprep.subr.mxu0 0.0
        %6659 = vmatpush1.msra.mxu0 0.0
        %6660 = vmatprep.subr.mxu0 0.0
        %6661 = vmatpush1.msra.mxu0 0.0
        %6662 = vmatprep.subr.mxu0 0.0
        %6663 = vmatpush1.msra.mxu0 0.0
        %6664 = vmatprep.subr.mxu0 0.0
        %6665 = vmatpush1.msra.mxu0 0.0
        %6666 = vmatprep.subr.mxu0 0.0
        %6667 = vmatpush1.msra.mxu0 0.0
        %6668 = vmatprep.subr.mxu0 0.0
        %6669 = vmatpush1.msra.mxu0 %v6633
        %6670 = vmatprep.subr.mxu0 0.0
        %6671 = vmatpush2.msra.mxu0 0.0
        %6672 = vmatprep.subr.mxu0 0.0
        %6673 = vmatpush2.msra.mxu0 0.0
        %6674 = vmatprep.subr.mxu0 0.0
        %6675 = vmatpush2.msra.mxu0 0.0
        %6676 = vmatprep.subr.mxu0 0.0
        %6677 = vmatpush2.msra.mxu0 0.0
        %6678 = vmatprep.subr.mxu0 0.0
        %6679 = vmatpush2.msra.mxu0 0.0
        %6680 = vmatprep.subr.mxu0 0.0
        %6681 = vmatpush2.msra.mxu0 0.0
        %6682 = vmatprep.subr.mxu0 0.0
        %6683 = vmatpush2.msra.mxu0 0.0
        %6684 = vmatprep.subr.mxu0 0.0
        %6685 = vmatpush2.msra.mxu0 0.0
        %6686 = vmatprep.subr.mxu0 0.0
        %6687 = vmatpush2.msra.mxu0 0.0
        %6688 = vmatprep.subr.mxu0 0.0
        %6689 = vmatpush2.msra.mxu0 0.0
        %6690 = vmatprep.subr.mxu0 0.0
        %6691 = vmatpush2.msra.mxu0 0.0
        %6692 = vmatprep.subr.mxu0 0.0
        %6693 = vmatpush2.msra.mxu0 0.0
        %6694 = vmatprep.subr.mxu0 0.0
        %6695 = vmatpush2.msra.mxu0 0.0
        %6696 = vmatprep.subr.mxu0 0.0
        %6697 = vmatpush2.msra.mxu0 0.0
        %6698 = vmatprep.subr.mxu0 0.0
        %6699 = vmatpush2.msra.mxu0 0.0
        %6700 = vmatprep.subr.mxu0 0.0
        %6701 = vmatpush2.msra.mxu0 0.0
        %6702 = vmatprep.mubr.f32.mxu0 0.0
        %6703 = vmatmul.mubr.f32.gmra.mxu0 %v6636
        %v6704 = vpop.f32.mrf.mxu0
        %v6705 = vadd.f32 0.0, %v6704
        %v6706 = vpop.f32.mrf.mxu0
        %6707 = vdwg.mxu0
        %6708 = vrot.lane.b32.xlu0 %v660, 40
        %v6709 = vpop.permute.xlu0 %6708
        %v6712 = vsel %vm682, %v6325, 0
        %6714 = vmatprep.subr.mxu0 0.0
        %6715 = vmatpush1.msra.mxu0 0.0
        %6716 = vmatprep.subr.mxu0 0.0
        %6717 = vmatpush1.msra.mxu0 0.0
        %6718 = vmatprep.subr.mxu0 0.0
        %6719 = vmatpush1.msra.mxu0 0.0
        %6720 = vmatprep.subr.mxu0 0.0
        %6721 = vmatpush1.msra.mxu0 0.0
        %6722 = vmatprep.subr.mxu0 0.0
        %6723 = vmatpush1.msra.mxu0 0.0
        %6724 = vmatprep.subr.mxu0 0.0
        %6725 = vmatpush1.msra.mxu0 0.0
        %6726 = vmatprep.subr.mxu0 0.0
        %6727 = vmatpush1.msra.mxu0 0.0
        %6728 = vmatprep.subr.mxu0 0.0
        %6729 = vmatpush1.msra.mxu0 0.0
        %6730 = vmatprep.subr.mxu0 0.0
        %6731 = vmatpush1.msra.mxu0 0.0
        %6732 = vmatprep.subr.mxu0 0.0
        %6733 = vmatpush1.msra.mxu0 0.0
        %6734 = vmatprep.subr.mxu0 0.0
        %6735 = vmatpush1.msra.mxu0 0.0
        %6736 = vmatprep.subr.mxu0 0.0
        %6737 = vmatpush1.msra.mxu0 0.0
        %6738 = vmatprep.subr.mxu0 0.0
        %6739 = vmatpush1.msra.mxu0 0.0
        %6740 = vmatprep.subr.mxu0 0.0
        %6741 = vmatpush1.msra.mxu0 0.0
        %6742 = vmatprep.subr.mxu0 0.0
        %6743 = vmatpush1.msra.mxu0 0.0
        %6744 = vmatprep.subr.mxu0 0.0
        %6745 = vmatpush1.msra.mxu0 %v6709
        %6746 = vmatprep.subr.mxu0 0.0
        %6747 = vmatpush2.msra.mxu0 0.0
        %6748 = vmatprep.subr.mxu0 0.0
        %6749 = vmatpush2.msra.mxu0 0.0
        %6750 = vmatprep.subr.mxu0 0.0
        %6751 = vmatpush2.msra.mxu0 0.0
        %6752 = vmatprep.subr.mxu0 0.0
        %6753 = vmatpush2.msra.mxu0 0.0
        %6754 = vmatprep.subr.mxu0 0.0
        %6755 = vmatpush2.msra.mxu0 0.0
        %6756 = vmatprep.subr.mxu0 0.0
        %6757 = vmatpush2.msra.mxu0 0.0
        %6758 = vmatprep.subr.mxu0 0.0
        %6759 = vmatpush2.msra.mxu0 0.0
        %6760 = vmatprep.subr.mxu0 0.0
        %6761 = vmatpush2.msra.mxu0 0.0
        %6762 = vmatprep.subr.mxu0 0.0
        %6763 = vmatpush2.msra.mxu0 0.0
        %6764 = vmatprep.subr.mxu0 0.0
        %6765 = vmatpush2.msra.mxu0 0.0
        %6766 = vmatprep.subr.mxu0 0.0
        %6767 = vmatpush2.msra.mxu0 0.0
        %6768 = vmatprep.subr.mxu0 0.0
        %6769 = vmatpush2.msra.mxu0 0.0
        %6770 = vmatprep.subr.mxu0 0.0
        %6771 = vmatpush2.msra.mxu0 0.0
        %6772 = vmatprep.subr.mxu0 0.0
        %6773 = vmatpush2.msra.mxu0 0.0
        %6774 = vmatprep.subr.mxu0 0.0
        %6775 = vmatpush2.msra.mxu0 0.0
        %6776 = vmatprep.subr.mxu0 0.0
        %6777 = vmatpush2.msra.mxu0 0.0
        %6778 = vmatprep.mubr.f32.mxu0 0.0
        %6779 = vmatmul.mubr.f32.gmra.mxu0 %v6712
        %v6780 = vpop.f32.mrf.mxu0
        %v6781 = vadd.f32 0.0, %v6780
        %v6782 = vpop.f32.mrf.mxu0
        %6783 = vdwg.mxu0
        %6784 = vrot.lane.b32.xlu0 %v665, 40
        %v6785 = vpop.permute.xlu0 %6784
        %v6788 = vsel %vm682, %v6326, 0
        %6790 = vmatprep.subr.mxu0 0.0
        %6791 = vmatpush1.msra.mxu0 0.0
        %6792 = vmatprep.subr.mxu0 0.0
        %6793 = vmatpush1.msra.mxu0 0.0
        %6794 = vmatprep.subr.mxu0 0.0
        %6795 = vmatpush1.msra.mxu0 0.0
        %6796 = vmatprep.subr.mxu0 0.0
        %6797 = vmatpush1.msra.mxu0 0.0
        %6798 = vmatprep.subr.mxu0 0.0
        %6799 = vmatpush1.msra.mxu0 0.0
        %6800 = vmatprep.subr.mxu0 0.0
        %6801 = vmatpush1.msra.mxu0 0.0
        %6802 = vmatprep.subr.mxu0 0.0
        %6803 = vmatpush1.msra.mxu0 0.0
        %6804 = vmatprep.subr.mxu0 0.0
        %6805 = vmatpush1.msra.mxu0 0.0
        %6806 = vmatprep.subr.mxu0 0.0
        %6807 = vmatpush1.msra.mxu0 0.0
        %6808 = vmatprep.subr.mxu0 0.0
        %6809 = vmatpush1.msra.mxu0 0.0
        %6810 = vmatprep.subr.mxu0 0.0
        %6811 = vmatpush1.msra.mxu0 0.0
        %6812 = vmatprep.subr.mxu0 0.0
        %6813 = vmatpush1.msra.mxu0 0.0
        %6814 = vmatprep.subr.mxu0 0.0
        %6815 = vmatpush1.msra.mxu0 0.0
        %6816 = vmatprep.subr.mxu0 0.0
        %6817 = vmatpush1.msra.mxu0 0.0
        %6818 = vmatprep.subr.mxu0 0.0
        %6819 = vmatpush1.msra.mxu0 0.0
        %6820 = vmatprep.subr.mxu0 0.0
        %6821 = vmatpush1.msra.mxu0 %v6785
        %6822 = vmatprep.subr.mxu0 0.0
        %6823 = vmatpush2.msra.mxu0 0.0
        %6824 = vmatprep.subr.mxu0 0.0
        %6825 = vmatpush2.msra.mxu0 0.0
        %6826 = vmatprep.subr.mxu0 0.0
        %6827 = vmatpush2.msra.mxu0 0.0
        %6828 = vmatprep.subr.mxu0 0.0
        %6829 = vmatpush2.msra.mxu0 0.0
        %6830 = vmatprep.subr.mxu0 0.0
        %6831 = vmatpush2.msra.mxu0 0.0
        %6832 = vmatprep.subr.mxu0 0.0
        %6833 = vmatpush2.msra.mxu0 0.0
        %6834 = vmatprep.subr.mxu0 0.0
        %6835 = vmatpush2.msra.mxu0 0.0
        %6836 = vmatprep.subr.mxu0 0.0
        %6837 = vmatpush2.msra.mxu0 0.0
        %6838 = vmatprep.subr.mxu0 0.0
        %6839 = vmatpush2.msra.mxu0 0.0
        %6840 = vmatprep.subr.mxu0 0.0
        %6841 = vmatpush2.msra.mxu0 0.0
        %6842 = vmatprep.subr.mxu0 0.0
        %6843 = vmatpush2.msra.mxu0 0.0
        %6844 = vmatprep.subr.mxu0 0.0
        %6845 = vmatpush2.msra.mxu0 0.0
        %6846 = vmatprep.subr.mxu0 0.0
        %6847 = vmatpush2.msra.mxu0 0.0
        %6848 = vmatprep.subr.mxu0 0.0
        %6849 = vmatpush2.msra.mxu0 0.0
        %6850 = vmatprep.subr.mxu0 0.0
        %6851 = vmatpush2.msra.mxu0 0.0
        %6852 = vmatprep.subr.mxu0 0.0
        %6853 = vmatpush2.msra.mxu0 0.0
        %6854 = vmatprep.mubr.f32.mxu0 0.0
        %6855 = vmatmul.mubr.f32.gmra.mxu0 %v6788
        %v6856 = vpop.f32.mrf.mxu0
        %v6857 = vadd.f32 0.0, %v6856
        %v6858 = vpop.f32.mrf.mxu0
        %6859 = vdwg.mxu0
        %6860 = vrot.lane.b32.xlu0 %v670, 40
        %v6861 = vpop.permute.xlu0 %6860
        %v6864 = vsel %vm682, %v6327, 0
        %6866 = vmatprep.subr.mxu0 0.0
        %6867 = vmatpush1.msra.mxu0 0.0
        %6868 = vmatprep.subr.mxu0 0.0
        %6869 = vmatpush1.msra.mxu0 0.0
        %6870 = vmatprep.subr.mxu0 0.0
        %6871 = vmatpush1.msra.mxu0 0.0
        %6872 = vmatprep.subr.mxu0 0.0
        %6873 = vmatpush1.msra.mxu0 0.0
        %6874 = vmatprep.subr.mxu0 0.0
        %6875 = vmatpush1.msra.mxu0 0.0
        %6876 = vmatprep.subr.mxu0 0.0
        %6877 = vmatpush1.msra.mxu0 0.0
        %6878 = vmatprep.subr.mxu0 0.0
        %6879 = vmatpush1.msra.mxu0 0.0
        %6880 = vmatprep.subr.mxu0 0.0
        %6881 = vmatpush1.msra.mxu0 0.0
        %6882 = vmatprep.subr.mxu0 0.0
        %6883 = vmatpush1.msra.mxu0 0.0
        %6884 = vmatprep.subr.mxu0 0.0
        %6885 = vmatpush1.msra.mxu0 0.0
        %6886 = vmatprep.subr.mxu0 0.0
        %6887 = vmatpush1.msra.mxu0 0.0
        %6888 = vmatprep.subr.mxu0 0.0
        %6889 = vmatpush1.msra.mxu0 0.0
        %6890 = vmatprep.subr.mxu0 0.0
        %6891 = vmatpush1.msra.mxu0 0.0
        %6892 = vmatprep.subr.mxu0 0.0
        %6893 = vmatpush1.msra.mxu0 0.0
        %6894 = vmatprep.subr.mxu0 0.0
        %6895 = vmatpush1.msra.mxu0 0.0
        %6896 = vmatprep.subr.mxu0 0.0
        %6897 = vmatpush1.msra.mxu0 %v6861
        %6898 = vmatprep.subr.mxu0 0.0
        %6899 = vmatpush2.msra.mxu0 0.0
        %6900 = vmatprep.subr.mxu0 0.0
        %6901 = vmatpush2.msra.mxu0 0.0
        %6902 = vmatprep.subr.mxu0 0.0
        %6903 = vmatpush2.msra.mxu0 0.0
        %6904 = vmatprep.subr.mxu0 0.0
        %6905 = vmatpush2.msra.mxu0 0.0
        %6906 = vmatprep.subr.mxu0 0.0
        %6907 = vmatpush2.msra.mxu0 0.0
        %6908 = vmatprep.subr.mxu0 0.0
        %6909 = vmatpush2.msra.mxu0 0.0
        %6910 = vmatprep.subr.mxu0 0.0
        %6911 = vmatpush2.msra.mxu0 0.0
        %6912 = vmatprep.subr.mxu0 0.0
        %6913 = vmatpush2.msra.mxu0 0.0
        %6914 = vmatprep.subr.mxu0 0.0
        %6915 = vmatpush2.msra.mxu0 0.0
        %6916 = vmatprep.subr.mxu0 0.0
        %6917 = vmatpush2.msra.mxu0 0.0
        %6918 = vmatprep.subr.mxu0 0.0
        %6919 = vmatpush2.msra.mxu0 0.0
        %6920 = vmatprep.subr.mxu0 0.0
        %6921 = vmatpush2.msra.mxu0 0.0
        %6922 = vmatprep.subr.mxu0 0.0
        %6923 = vmatpush2.msra.mxu0 0.0
        %6924 = vmatprep.subr.mxu0 0.0
        %6925 = vmatpush2.msra.mxu0 0.0
        %6926 = vmatprep.subr.mxu0 0.0
        %6927 = vmatpush2.msra.mxu0 0.0
        %6928 = vmatprep.subr.mxu0 0.0
        %6929 = vmatpush2.msra.mxu0 0.0
        %6930 = vmatprep.mubr.f32.mxu0 0.0
        %6931 = vmatmul.mubr.f32.gmra.mxu0 %v6864
        %v6932 = vpop.f32.mrf.mxu0
        %v6933 = vadd.f32 0.0, %v6932
        %v6934 = vpop.f32.mrf.mxu0
        %6935 = vdwg.mxu0
        %s6936 = scalar_lea.vmem %s2, 24
        %v6937 = vld [vmem:[%s6936] sm:$0xff]
        %v6939 = vsel %vm682, %v6401, 0
        %v6942 = vsel %vm682, %v6477, 0
        %v6945 = vsel %vm682, %v6553, 0
        %v6948 = vsel %vm682, %v6629, 0
        %v6951 = vsel %vm682, %v6705, 0
        %v6954 = vsel %vm682, %v6781, 0
        %v6957 = vsel %vm682, %v6857, 0
        %v6960 = vsel %vm682, %v6933, 0
        %6962 = vmatprep.subr.mxu0 0.0
        %6963 = vmatpush1.msra.mxu0 0.0
        %6964 = vmatprep.subr.mxu0 0.0
        %6965 = vmatpush1.msra.mxu0 0.0
        %6966 = vmatprep.subr.mxu0 0.0
        %6967 = vmatpush1.msra.mxu0 0.0
        %6968 = vmatprep.subr.mxu0 0.0
        %6969 = vmatpush1.msra.mxu0 0.0
        %6970 = vmatprep.subr.mxu0 0.0
        %6971 = vmatpush1.msra.mxu0 0.0
        %6972 = vmatprep.subr.mxu0 0.0
        %6973 = vmatpush1.msra.mxu0 0.0
        %6974 = vmatprep.subr.mxu0 0.0
        %6975 = vmatpush1.msra.mxu0 0.0
        %6976 = vmatprep.subr.mxu0 0.0
        %6977 = vmatpush1.msra.mxu0 0.0
        %6978 = vmatprep.subr.mxu0 0.0
        %6979 = vmatpush1.msra.mxu0 0.0
        %6980 = vmatprep.subr.mxu0 0.0
        %6981 = vmatpush1.msra.mxu0 0.0
        %6982 = vmatprep.subr.mxu0 0.0
        %6983 = vmatpush1.msra.mxu0 0.0
        %6984 = vmatprep.subr.mxu0 0.0
        %6985 = vmatpush1.msra.mxu0 0.0
        %6986 = vmatprep.subr.mxu0 0.0
        %6987 = vmatpush1.msra.mxu0 0.0
        %6988 = vmatprep.subr.mxu0 0.0
        %6989 = vmatpush1.msra.mxu0 0.0
        %6990 = vmatprep.subr.mxu0 0.0
        %6991 = vmatpush1.msra.mxu0 0.0
        %6992 = vmatprep.subr.mxu0 0.0
        %6993 = vmatpush1.msra.mxu0 %v6937
        %6994 = vmatprep.subr.mxu0 0.0
        %6995 = vmatpush2.msra.mxu0 0.0
        %6996 = vmatprep.subr.mxu0 0.0
        %6997 = vmatpush2.msra.mxu0 0.0
        %6998 = vmatprep.subr.mxu0 0.0
        %6999 = vmatpush2.msra.mxu0 0.0
        %7000 = vmatprep.subr.mxu0 0.0
        %7001 = vmatpush2.msra.mxu0 0.0
        %7002 = vmatprep.subr.mxu0 0.0
        %7003 = vmatpush2.msra.mxu0 0.0
        %7004 = vmatprep.subr.mxu0 0.0
        %7005 = vmatpush2.msra.mxu0 0.0
        %7006 = vmatprep.subr.mxu0 0.0
        %7007 = vmatpush2.msra.mxu0 0.0
        %7008 = vmatprep.subr.mxu0 0.0
        %7009 = vmatpush2.msra.mxu0 0.0
        %7010 = vmatprep.subr.mxu0 0.0
        %7011 = vmatpush2.msra.mxu0 0.0
        %7012 = vmatprep.subr.mxu0 0.0
        %7013 = vmatpush2.msra.mxu0 0.0
        %7014 = vmatprep.subr.mxu0 0.0
        %7015 = vmatpush2.msra.mxu0 0.0
        %7016 = vmatprep.subr.mxu0 0.0
        %7017 = vmatpush2.msra.mxu0 0.0
        %7018 = vmatprep.subr.mxu0 0.0
        %7019 = vmatpush2.msra.mxu0 0.0
        %7020 = vmatprep.subr.mxu0 0.0
        %7021 = vmatpush2.msra.mxu0 0.0
        %7022 = vmatprep.subr.mxu0 0.0
        %7023 = vmatpush2.msra.mxu0 0.0
        %7024 = vmatprep.subr.mxu0 0.0
        %7025 = vmatpush2.msra.mxu0 0.0
        %7026 = vmatprep.mubr.f32.mxu0 0.0
        %7027 = vmatmul.mubr.f32.gmra.mxu0 %v6939
        %v7028 = vpop.f32.mrf.mxu0
        %v7029 = vadd.f32 0.0, %v7028
        %v7030 = vpop.f32.mrf.mxu0
        %7031 = vmatprep.mubr.f32.mxu0 0.0
        %7032 = vmatmul.mubr.f32.gmra.mxu0 %v6942
        %v7033 = vpop.f32.mrf.mxu0
        %v7034 = vadd.f32 0.0, %v7033
        %v7035 = vpop.f32.mrf.mxu0
        %7036 = vmatprep.mubr.f32.mxu0 0.0
        %7037 = vmatmul.mubr.f32.gmra.mxu0 %v6945
        %v7038 = vpop.f32.mrf.mxu0
        %v7039 = vadd.f32 0.0, %v7038
        %v7040 = vpop.f32.mrf.mxu0
        %7041 = vmatprep.mubr.f32.mxu0 0.0
        %7042 = vmatmul.mubr.f32.gmra.mxu0 %v6948
        %v7043 = vpop.f32.mrf.mxu0
        %v7044 = vadd.f32 0.0, %v7043
        %v7045 = vpop.f32.mrf.mxu0
        %7046 = vmatprep.mubr.f32.mxu0 0.0
        %7047 = vmatmul.mubr.f32.gmra.mxu0 %v6951
        %v7048 = vpop.f32.mrf.mxu0
        %v7049 = vadd.f32 0.0, %v7048
        %v7050 = vpop.f32.mrf.mxu0
        %7051 = vmatprep.mubr.f32.mxu0 0.0
        %7052 = vmatmul.mubr.f32.gmra.mxu0 %v6954
        %v7053 = vpop.f32.mrf.mxu0
        %v7054 = vadd.f32 0.0, %v7053
        %v7055 = vpop.f32.mrf.mxu0
        %7056 = vmatprep.mubr.f32.mxu0 0.0
        %7057 = vmatmul.mubr.f32.gmra.mxu0 %v6957
        %v7058 = vpop.f32.mrf.mxu0
        %v7059 = vadd.f32 0.0, %v7058
        %v7060 = vpop.f32.mrf.mxu0
        %7061 = vmatprep.mubr.f32.mxu0 0.0
        %7062 = vmatmul.mubr.f32.gmra.mxu0 %v6960
        %v7063 = vpop.f32.mrf.mxu0
        %v7064 = vadd.f32 0.0, %v7063
        %v7065 = vpop.f32.mrf.mxu0
        %7066 = vdwg.mxu0
        %s7067 = scalar_lea.vmem %s3, 24
        %v7068 = vld [vmem:[%s7067] sm:$0xff]
        %7069 = vmatprep.subr.mxu0 0.0
        %7070 = vmatpush1.msra.mxu0 0.0
        %7071 = vmatprep.subr.mxu0 0.0
        %7072 = vmatpush1.msra.mxu0 0.0
        %7073 = vmatprep.subr.mxu0 0.0
        %7074 = vmatpush1.msra.mxu0 0.0
        %7075 = vmatprep.subr.mxu0 0.0
        %7076 = vmatpush1.msra.mxu0 0.0
        %7077 = vmatprep.subr.mxu0 0.0
        %7078 = vmatpush1.msra.mxu0 0.0
        %7079 = vmatprep.subr.mxu0 0.0
        %7080 = vmatpush1.msra.mxu0 0.0
        %7081 = vmatprep.subr.mxu0 0.0
        %7082 = vmatpush1.msra.mxu0 0.0
        %7083 = vmatprep.subr.mxu0 0.0
        %7084 = vmatpush1.msra.mxu0 0.0
        %7085 = vmatprep.subr.mxu0 0.0
        %7086 = vmatpush1.msra.mxu0 0.0
        %7087 = vmatprep.subr.mxu0 0.0
        %7088 = vmatpush1.msra.mxu0 0.0
        %7089 = vmatprep.subr.mxu0 0.0
        %7090 = vmatpush1.msra.mxu0 0.0
        %7091 = vmatprep.subr.mxu0 0.0
        %7092 = vmatpush1.msra.mxu0 0.0
        %7093 = vmatprep.subr.mxu0 0.0
        %7094 = vmatpush1.msra.mxu0 0.0
        %7095 = vmatprep.subr.mxu0 0.0
        %7096 = vmatpush1.msra.mxu0 0.0
        %7097 = vmatprep.subr.mxu0 0.0
        %7098 = vmatpush1.msra.mxu0 0.0
        %7099 = vmatprep.subr.mxu0 0.0
        %7100 = vmatpush1.msra.mxu0 %v7068
        %7101 = vmatprep.subr.mxu0 0.0
        %7102 = vmatpush2.msra.mxu0 0.0
        %7103 = vmatprep.subr.mxu0 0.0
        %7104 = vmatpush2.msra.mxu0 0.0
        %7105 = vmatprep.subr.mxu0 0.0
        %7106 = vmatpush2.msra.mxu0 0.0
        %7107 = vmatprep.subr.mxu0 0.0
        %7108 = vmatpush2.msra.mxu0 0.0
        %7109 = vmatprep.subr.mxu0 0.0
        %7110 = vmatpush2.msra.mxu0 0.0
        %7111 = vmatprep.subr.mxu0 0.0
        %7112 = vmatpush2.msra.mxu0 0.0
        %7113 = vmatprep.subr.mxu0 0.0
        %7114 = vmatpush2.msra.mxu0 0.0
        %7115 = vmatprep.subr.mxu0 0.0
        %7116 = vmatpush2.msra.mxu0 0.0
        %7117 = vmatprep.subr.mxu0 0.0
        %7118 = vmatpush2.msra.mxu0 0.0
        %7119 = vmatprep.subr.mxu0 0.0
        %7120 = vmatpush2.msra.mxu0 0.0
        %7121 = vmatprep.subr.mxu0 0.0
        %7122 = vmatpush2.msra.mxu0 0.0
        %7123 = vmatprep.subr.mxu0 0.0
        %7124 = vmatpush2.msra.mxu0 0.0
        %7125 = vmatprep.subr.mxu0 0.0
        %7126 = vmatpush2.msra.mxu0 0.0
        %7127 = vmatprep.subr.mxu0 0.0
        %7128 = vmatpush2.msra.mxu0 0.0
        %7129 = vmatprep.subr.mxu0 0.0
        %7130 = vmatpush2.msra.mxu0 0.0
        %7131 = vmatprep.subr.mxu0 0.0
        %7132 = vmatpush2.msra.mxu0 0.0
        %7133 = vmatprep.mubr.f32.mxu0 0.0
        %7134 = vmatmul.mubr.f32.gmra.mxu0 %v6939
        %v7135 = vpop.f32.mrf.mxu0
        %v7136 = vadd.f32 0.0, %v7135
        %v7137 = vpop.f32.mrf.mxu0
        %7138 = vmatprep.mubr.f32.mxu0 0.0
        %7139 = vmatmul.mubr.f32.gmra.mxu0 %v6942
        %v7140 = vpop.f32.mrf.mxu0
        %v7141 = vadd.f32 0.0, %v7140
        %v7142 = vpop.f32.mrf.mxu0
        %7143 = vmatprep.mubr.f32.mxu0 0.0
        %7144 = vmatmul.mubr.f32.gmra.mxu0 %v6945
        %v7145 = vpop.f32.mrf.mxu0
        %v7146 = vadd.f32 0.0, %v7145
        %v7147 = vpop.f32.mrf.mxu0
        %7148 = vmatprep.mubr.f32.mxu0 0.0
        %7149 = vmatmul.mubr.f32.gmra.mxu0 %v6948
        %v7150 = vpop.f32.mrf.mxu0
        %v7151 = vadd.f32 0.0, %v7150
        %v7152 = vpop.f32.mrf.mxu0
        %7153 = vmatprep.mubr.f32.mxu0 0.0
        %7154 = vmatmul.mubr.f32.gmra.mxu0 %v6951
        %v7155 = vpop.f32.mrf.mxu0
        %v7156 = vadd.f32 0.0, %v7155
        %v7157 = vpop.f32.mrf.mxu0
        %7158 = vmatprep.mubr.f32.mxu0 0.0
        %7159 = vmatmul.mubr.f32.gmra.mxu0 %v6954
        %v7160 = vpop.f32.mrf.mxu0
        %v7161 = vadd.f32 0.0, %v7160
        %v7162 = vpop.f32.mrf.mxu0
        %7163 = vmatprep.mubr.f32.mxu0 0.0
        %7164 = vmatmul.mubr.f32.gmra.mxu0 %v6957
        %v7165 = vpop.f32.mrf.mxu0
        %v7166 = vadd.f32 0.0, %v7165
        %v7167 = vpop.f32.mrf.mxu0
        %7168 = vmatprep.mubr.f32.mxu0 0.0
        %7169 = vmatmul.mubr.f32.gmra.mxu0 %v6960
        %v7170 = vpop.f32.mrf.mxu0
        %v7171 = vadd.f32 0.0, %v7170
        %v7172 = vpop.f32.mrf.mxu0
        %7173 = vdwg.mxu0
        %v7174 = vmax.f32 %v7136, 0.0
        %v7175 = vmax.f32 %v7141, 0.0
        %v7176 = vmax.f32 %v7146, 0.0
        %v7177 = vmax.f32 %v7151, 0.0
        %v7178 = vmax.f32 %v7156, 0.0
        %v7179 = vmax.f32 %v7161, 0.0
        %v7180 = vmax.f32 %v7166, 0.0
        %v7181 = vmax.f32 %v7171, 0.0
        %v7182 = vmax.f32 %v5504, %v7174
        %v7183 = vmax.f32 %v5505, %v7175
        %v7184 = vmax.f32 %v5506, %v7176
        %v7185 = vmax.f32 %v5507, %v7177
        %v7186 = vmax.f32 %v5508, %v7178
        %v7187 = vmax.f32 %v5509, %v7179
        %v7188 = vmax.f32 %v5510, %v7180
        %v7189 = vmax.f32 %v5511, %v7181
        %v7190 = vsub.f32 %v5504, %v7182
        %v7191 = vsub.f32 %v5505, %v7183
        %v7192 = vsub.f32 %v5506, %v7184
        %v7193 = vsub.f32 %v5507, %v7185
        %v7194 = vsub.f32 %v5508, %v7186
        %v7195 = vsub.f32 %v5509, %v7187
        %v7196 = vsub.f32 %v5510, %v7188
        %v7197 = vsub.f32 %v5511, %v7189
        %v7198 = vmul.f32 %v7190, 1.442695
        %v7199 = vpow.pop %v7198
        %v7200 = vmul.f32 %v7191, 1.442695
        %v7201 = vpow.pop %v7200
        %v7202 = vmul.f32 %v7192, 1.442695
        %v7203 = vpow.pop %v7202
        %v7204 = vmul.f32 %v7193, 1.442695
        %v7205 = vpow.pop %v7204
        %v7206 = vmul.f32 %v7194, 1.442695
        %v7207 = vpow.pop %v7206
        %v7208 = vmul.f32 %v7195, 1.442695
        %v7209 = vpow.pop %v7208
        %v7210 = vmul.f32 %v7196, 1.442695
        %v7211 = vpow.pop %v7210
        %v7212 = vmul.f32 %v7197, 1.442695
        %v7213 = vpow.pop %v7212
        %v7214 = vsub.f32 %v7174, %v7182
        %v7215 = vsub.f32 %v7175, %v7183
        %v7216 = vsub.f32 %v7176, %v7184
        %v7217 = vsub.f32 %v7177, %v7185
        %v7218 = vsub.f32 %v7178, %v7186
        %v7219 = vsub.f32 %v7179, %v7187
        %v7220 = vsub.f32 %v7180, %v7188
        %v7221 = vsub.f32 %v7181, %v7189
        %v7222 = vmul.f32 %v7214, 1.442695
        %v7223 = vpow.pop %v7222
        %v7224 = vmul.f32 %v7215, 1.442695
        %v7225 = vpow.pop %v7224
        %v7226 = vmul.f32 %v7216, 1.442695
        %v7227 = vpow.pop %v7226
        %v7228 = vmul.f32 %v7217, 1.442695
        %v7229 = vpow.pop %v7228
        %v7230 = vmul.f32 %v7218, 1.442695
        %v7231 = vpow.pop %v7230
        %v7232 = vmul.f32 %v7219, 1.442695
        %v7233 = vpow.pop %v7232
        %v7234 = vmul.f32 %v7220, 1.442695
        %v7235 = vpow.pop %v7234
        %v7236 = vmul.f32 %v7221, 1.442695
        %v7237 = vpow.pop %v7236
        %v7238 = vmul.f32 %v5576, %v7199
        %v7239 = vmul.f32 %v5577, %v7201
        %v7240 = vmul.f32 %v5578, %v7203
        %v7241 = vmul.f32 %v5579, %v7205
        %v7242 = vmul.f32 %v5580, %v7207
        %v7243 = vmul.f32 %v5581, %v7209
        %v7244 = vmul.f32 %v5582, %v7211
        %v7245 = vmul.f32 %v5583, %v7213
        %v7246 = vmul.f32 %v7029, %v7223
        %v7247 = vmul.f32 %v7034, %v7225
        %v7248 = vmul.f32 %v7039, %v7227
        %v7249 = vmul.f32 %v7044, %v7229
        %v7250 = vmul.f32 %v7049, %v7231
        %v7251 = vmul.f32 %v7054, %v7233
        %v7252 = vmul.f32 %v7059, %v7235
        %v7253 = vmul.f32 %v7064, %v7237
        %v7254 = vadd.f32 %v7238, %v7246
        %v7255 = vadd.f32 %v7239, %v7247
        %v7256 = vadd.f32 %v7240, %v7248
        %v7257 = vadd.f32 %v7241, %v7249
        %v7258 = vadd.f32 %v7242, %v7250
        %v7259 = vadd.f32 %v7243, %v7251
        %v7260 = vadd.f32 %v7244, %v7252
        %v7261 = vadd.f32 %v7245, %v7253
        %v7262 = vmul.f32 %v5592, %v7199
        %v7263 = vmul.f32 %v5593, %v7201
        %v7264 = vmul.f32 %v5594, %v7203
        %v7265 = vmul.f32 %v5595, %v7205
        %v7266 = vmul.f32 %v5596, %v7207
        %v7267 = vmul.f32 %v5597, %v7209
        %v7268 = vmul.f32 %v5598, %v7211
        %v7269 = vmul.f32 %v5599, %v7213
        %v7270 = vadd.f32 %v7262, %v7223
        %v7271 = vadd.f32 %v7263, %v7225
        %v7272 = vadd.f32 %v7264, %v7227
        %v7273 = vadd.f32 %v7265, %v7229
        %v7274 = vadd.f32 %v7266, %v7231
        %v7275 = vadd.f32 %v7267, %v7233
        %v7276 = vadd.f32 %v7268, %v7235
        %v7277 = vadd.f32 %v7269, %v7237
        %v7278 = vrcp.pop %v7270
        %v7279 = vrcp.pop %v7271
        %v7280 = vrcp.pop %v7272
        %v7281 = vrcp.pop %v7273
        %v7282 = vrcp.pop %v7274
        %v7283 = vrcp.pop %v7275
        %v7284 = vrcp.pop %v7276
        %v7285 = vrcp.pop %v7277
        %v7286 = vmul.f32 %v7254, %v7278
        %v7287 = vmul.f32 %v7255, %v7279
        %v7288 = vmul.f32 %v7256, %v7280
        %v7289 = vmul.f32 %v7257, %v7281
        %v7290 = vmul.f32 %v7258, %v7282
        %v7291 = vmul.f32 %v7259, %v7283
        %v7292 = vmul.f32 %v7260, %v7284
        %v7293 = vmul.f32 %v7261, %v7285
        %v7294 = vld [vmem:[%s4] sm:$0xff]
        %v7295 = vld [vmem:[%s4 + $0x8] sm:$0xff]
        %v7296 = vld [vmem:[%s4 + $0x10] sm:$0xff]
        %v7297 = vld [vmem:[%s4 + $0x18] sm:$0xff]
        %v7298 = vld [vmem:[%s5] sm:$0x1]
        %v7300 = vlaneseq
        %v7301 = vshrl.u32 %v7300, 7
        %v7302 = vsub.s32 0, %v7301
        %v7303 = vrot.slane %v7298, %v7302
        %7305 = vmatprep.subr.mxu0 0.0
        %7306 = vmatpush1.msra.mxu0 0.0
        %7307 = vmatprep.subr.mxu0 0.0
        %7308 = vmatpush1.msra.mxu0 0.0
        %7309 = vmatprep.subr.mxu0 0.0
        %7310 = vmatpush1.msra.mxu0 0.0
        %7311 = vmatprep.subr.mxu0 0.0
        %7312 = vmatpush1.msra.mxu0 0.0
        %7313 = vmatprep.subr.mxu0 0.0
        %7314 = vmatpush1.msra.mxu0 0.0
        %7315 = vmatprep.subr.mxu0 0.0
        %7316 = vmatpush1.msra.mxu0 0.0
        %7317 = vmatprep.subr.mxu0 0.0
        %7318 = vmatpush1.msra.mxu0 0.0
        %7319 = vmatprep.subr.mxu0 0.0
        %7320 = vmatpush1.msra.mxu0 0.0
        %7321 = vmatprep.subr.mxu0 0.0
        %7322 = vmatpush1.msra.mxu0 0.0
        %7323 = vmatprep.subr.mxu0 0.0
        %7324 = vmatpush1.msra.mxu0 0.0
        %7325 = vmatprep.subr.mxu0 0.0
        %7326 = vmatpush1.msra.mxu0 0.0
        %7327 = vmatprep.subr.mxu0 0.0
        %7328 = vmatpush1.msra.mxu0 0.0
        %7329 = vmatprep.subr.mxu0 0.0
        %7330 = vmatpush1.msra.mxu0 %v7297
        %7331 = vmatprep.subr.mxu0 0.0
        %7332 = vmatpush1.msra.mxu0 %v7296
        %7333 = vmatprep.subr.mxu0 0.0
        %7334 = vmatpush1.msra.mxu0 %v7295
        %7335 = vmatprep.subr.mxu0 0.0
        %7336 = vmatpush1.msra.mxu0 %v7294
        %7337 = vmatprep.subr.mxu0 0.0
        %7338 = vmatpush2.msra.mxu0 0.0
        %7339 = vmatprep.subr.mxu0 0.0
        %7340 = vmatpush2.msra.mxu0 0.0
        %7341 = vmatprep.subr.mxu0 0.0
        %7342 = vmatpush2.msra.mxu0 0.0
        %7343 = vmatprep.subr.mxu0 0.0
        %7344 = vmatpush2.msra.mxu0 0.0
        %7345 = vmatprep.subr.mxu0 0.0
        %7346 = vmatpush2.msra.mxu0 0.0
        %7347 = vmatprep.subr.mxu0 0.0
        %7348 = vmatpush2.msra.mxu0 0.0
        %7349 = vmatprep.subr.mxu0 0.0
        %7350 = vmatpush2.msra.mxu0 0.0
        %7351 = vmatprep.subr.mxu0 0.0
        %7352 = vmatpush2.msra.mxu0 0.0
        %7353 = vmatprep.subr.mxu0 0.0
        %7354 = vmatpush2.msra.mxu0 0.0
        %7355 = vmatprep.subr.mxu0 0.0
        %7356 = vmatpush2.msra.mxu0 0.0
        %7357 = vmatprep.subr.mxu0 0.0
        %7358 = vmatpush2.msra.mxu0 0.0
        %7359 = vmatprep.subr.mxu0 0.0
        %7360 = vmatpush2.msra.mxu0 0.0
        %7361 = vmatprep.subr.mxu0 0.0
        %7362 = vmatpush2.msra.mxu0 0.0
        %7363 = vmatprep.subr.mxu0 0.0
        %7364 = vmatpush2.msra.mxu0 0.0
        %7365 = vmatprep.subr.mxu0 0.0
        %7366 = vmatpush2.msra.mxu0 0.0
        %7367 = vmatprep.subr.mxu0 0.0
        %7368 = vmatpush2.msra.mxu0 0.0
        %7369 = vmatprep.mubr.f32.mxu0 0.0
        %7370 = vmatmul.mubr.f32.gmra.mxu0 %v545
        %v7371 = vpop.f32.mrf.mxu0
        %v7372 = vadd.f32 %v7303, %v7371
        %v7373 = vpop.f32.mrf.mxu0
        %7374 = vmatprep.mubr.f32.mxu0 0.0
        %7375 = vmatmul.mubr.f32.gmra.mxu0 %v548
        %v7376 = vpop.f32.mrf.mxu0
        %v7377 = vadd.f32 %v7303, %v7376
        %v7378 = vpop.f32.mrf.mxu0
        %7379 = vmatprep.mubr.f32.mxu0 0.0
        %7380 = vmatmul.mubr.f32.gmra.mxu0 %v551
        %v7381 = vpop.f32.mrf.mxu0
        %v7382 = vadd.f32 %v7303, %v7381
        %v7383 = vpop.f32.mrf.mxu0
        %7384 = vmatprep.mubr.f32.mxu0 0.0
        %7385 = vmatmul.mubr.f32.gmra.mxu0 %v554
        %v7386 = vpop.f32.mrf.mxu0
        %v7387 = vadd.f32 %v7303, %v7386
        %v7388 = vpop.f32.mrf.mxu0
        %7389 = vmatprep.mubr.f32.mxu0 0.0
        %7390 = vmatmul.mubr.f32.gmra.mxu0 %v557
        %v7391 = vpop.f32.mrf.mxu0
        %v7392 = vadd.f32 %v7303, %v7391
        %v7393 = vpop.f32.mrf.mxu0
        %7394 = vmatprep.mubr.f32.mxu0 0.0
        %7395 = vmatmul.mubr.f32.gmra.mxu0 %v560
        %v7396 = vpop.f32.mrf.mxu0
        %v7397 = vadd.f32 %v7303, %v7396
        %v7398 = vpop.f32.mrf.mxu0
        %7399 = vmatprep.mubr.f32.mxu0 0.0
        %7400 = vmatmul.mubr.f32.gmra.mxu0 %v563
        %v7401 = vpop.f32.mrf.mxu0
        %v7402 = vadd.f32 %v7303, %v7401
        %v7403 = vpop.f32.mrf.mxu0
        %7404 = vmatprep.mubr.f32.mxu0 0.0
        %7405 = vmatmul.mubr.f32.gmra.mxu0 %v566
        %v7406 = vpop.f32.mrf.mxu0
        %v7407 = vadd.f32 %v7303, %v7406
        %v7408 = vpop.f32.mrf.mxu0
        %7409 = vdwg.mxu0
        %v7410 = vmul.f32 %v7372, %v7286
        %v7411 = vmul.f32 %v7377, %v7287
        %v7412 = vmul.f32 %v7382, %v7288
        %v7413 = vmul.f32 %v7387, %v7289
        %v7414 = vmul.f32 %v7392, %v7290
        %v7415 = vmul.f32 %v7397, %v7291
        %v7416 = vmul.f32 %v7402, %v7292
        %v7417 = vmul.f32 %v7407, %v7293
        %v7418 = vsub.f32 0.0, %v7410
        %v7419 = vsub.f32 0.0, %v7411
        %v7420 = vsub.f32 0.0, %v7412
        %v7421 = vsub.f32 0.0, %v7413
        %v7422 = vsub.f32 0.0, %v7414
        %v7423 = vsub.f32 0.0, %v7415
        %v7424 = vsub.f32 0.0, %v7416
        %v7425 = vsub.f32 0.0, %v7417
        %v7426 = vmul.f32 %v7418, 1.442695
        %v7427 = vpow.pop %v7426
        %v7428 = vmul.f32 %v7419, 1.442695
        %v7429 = vpow.pop %v7428
        %v7430 = vmul.f32 %v7420, 1.442695
        %v7431 = vpow.pop %v7430
        %v7432 = vmul.f32 %v7421, 1.442695
        %v7433 = vpow.pop %v7432
        %v7434 = vmul.f32 %v7422, 1.442695
        %v7435 = vpow.pop %v7434
        %v7436 = vmul.f32 %v7423, 1.442695
        %v7437 = vpow.pop %v7436
        %v7438 = vmul.f32 %v7424, 1.442695
        %v7439 = vpow.pop %v7438
        %v7440 = vmul.f32 %v7425, 1.442695
        %v7441 = vpow.pop %v7440
        %v7442 = vadd.f32 %v7427, 1.0
        %v7443 = vadd.f32 %v7429, 1.0
        %v7444 = vadd.f32 %v7431, 1.0
        %v7445 = vadd.f32 %v7433, 1.0
        %v7446 = vadd.f32 %v7435, 1.0
        %v7447 = vadd.f32 %v7437, 1.0
        %v7448 = vadd.f32 %v7439, 1.0
        %v7449 = vadd.f32 %v7441, 1.0
        %v7450 = vrcp.pop %v7442
        %v7451 = vrcp.pop %v7443
        %v7452 = vrcp.pop %v7444
        %v7453 = vrcp.pop %v7445
        %v7454 = vrcp.pop %v7446
        %v7455 = vrcp.pop %v7447
        %v7456 = vrcp.pop %v7448
        %v7457 = vrcp.pop %v7449
        %v7458 = vmul.f32 %v7410, %v7450
        %v7459 = vmul.f32 %v7411, %v7451
        %v7460 = vmul.f32 %v7412, %v7452
        %v7461 = vmul.f32 %v7413, %v7453
        %v7462 = vmul.f32 %v7414, %v7454
        %v7463 = vmul.f32 %v7415, %v7455
        %v7464 = vmul.f32 %v7416, %v7456
        %v7465 = vmul.f32 %v7417, %v7457
        %v7466 = vld [vmem:[%s6] sm:$0xff]
        %v7467 = vld [vmem:[%s6 + $0x8] sm:$0xff]
        %v7468 = vld [vmem:[%s6 + $0x10] sm:$0xff]
        %v7469 = vld [vmem:[%s6 + $0x18] sm:$0xff]
        %v7470 = vld [vmem:[%s7] sm:$0x1]
        %v7472 = vlaneseq
        %v7473 = vshrl.u32 %v7472, 7
        %v7474 = vsub.s32 0, %v7473
        %v7475 = vrot.slane %v7470, %v7474
        %v7478 = vsel %vm543, %v7458, 0
        %v7481 = vsel %vm543, %v7459, 0
        %v7484 = vsel %vm543, %v7460, 0
        %v7487 = vsel %vm543, %v7461, 0
        %v7490 = vsel %vm543, %v7462, 0
        %v7493 = vsel %vm543, %v7463, 0
        %v7496 = vsel %vm543, %v7464, 0
        %v7499 = vsel %vm543, %v7465, 0
        %7501 = vmatprep.subr.mxu0 0.0
        %7502 = vmatpush1.msra.mxu0 0.0
        %7503 = vmatprep.subr.mxu0 0.0
        %7504 = vmatpush1.msra.mxu0 0.0
        %7505 = vmatprep.subr.mxu0 0.0
        %7506 = vmatpush1.msra.mxu0 0.0
        %7507 = vmatprep.subr.mxu0 0.0
        %7508 = vmatpush1.msra.mxu0 0.0
        %7509 = vmatprep.subr.mxu0 0.0
        %7510 = vmatpush1.msra.mxu0 0.0
        %7511 = vmatprep.subr.mxu0 0.0
        %7512 = vmatpush1.msra.mxu0 0.0
        %7513 = vmatprep.subr.mxu0 0.0
        %7514 = vmatpush1.msra.mxu0 0.0
        %7515 = vmatprep.subr.mxu0 0.0
        %7516 = vmatpush1.msra.mxu0 0.0
        %7517 = vmatprep.subr.mxu0 0.0
        %7518 = vmatpush1.msra.mxu0 0.0
        %7519 = vmatprep.subr.mxu0 0.0
        %7520 = vmatpush1.msra.mxu0 0.0
        %7521 = vmatprep.subr.mxu0 0.0
        %7522 = vmatpush1.msra.mxu0 0.0
        %7523 = vmatprep.subr.mxu0 0.0
        %7524 = vmatpush1.msra.mxu0 0.0
        %7525 = vmatprep.subr.mxu0 0.0
        %7526 = vmatpush1.msra.mxu0 %v7469
        %7527 = vmatprep.subr.mxu0 0.0
        %7528 = vmatpush1.msra.mxu0 %v7468
        %7529 = vmatprep.subr.mxu0 0.0
        %7530 = vmatpush1.msra.mxu0 %v7467
        %7531 = vmatprep.subr.mxu0 0.0
        %7532 = vmatpush1.msra.mxu0 %v7466
        %7533 = vmatprep.subr.mxu0 0.0
        %7534 = vmatpush2.msra.mxu0 0.0
        %7535 = vmatprep.subr.mxu0 0.0
        %7536 = vmatpush2.msra.mxu0 0.0
        %7537 = vmatprep.subr.mxu0 0.0
        %7538 = vmatpush2.msra.mxu0 0.0
        %7539 = vmatprep.subr.mxu0 0.0
        %7540 = vmatpush2.msra.mxu0 0.0
        %7541 = vmatprep.subr.mxu0 0.0
        %7542 = vmatpush2.msra.mxu0 0.0
        %7543 = vmatprep.subr.mxu0 0.0
        %7544 = vmatpush2.msra.mxu0 0.0
        %7545 = vmatprep.subr.mxu0 0.0
        %7546 = vmatpush2.msra.mxu0 0.0
        %7547 = vmatprep.subr.mxu0 0.0
        %7548 = vmatpush2.msra.mxu0 0.0
        %7549 = vmatprep.subr.mxu0 0.0
        %7550 = vmatpush2.msra.mxu0 0.0
        %7551 = vmatprep.subr.mxu0 0.0
        %7552 = vmatpush2.msra.mxu0 0.0
        %7553 = vmatprep.subr.mxu0 0.0
        %7554 = vmatpush2.msra.mxu0 0.0
        %7555 = vmatprep.subr.mxu0 0.0
        %7556 = vmatpush2.msra.mxu0 0.0
        %7557 = vmatprep.subr.mxu0 0.0
        %7558 = vmatpush2.msra.mxu0 0.0
        %7559 = vmatprep.subr.mxu0 0.0
        %7560 = vmatpush2.msra.mxu0 0.0
        %7561 = vmatprep.subr.mxu0 0.0
        %7562 = vmatpush2.msra.mxu0 0.0
        %7563 = vmatprep.subr.mxu0 0.0
        %7564 = vmatpush2.msra.mxu0 0.0
        %7565 = vmatprep.mubr.f32.mxu0 0.0
        %7566 = vmatmul.mubr.f32.gmra.mxu0 %v7478
        %v7567 = vpop.f32.mrf.mxu0
        %v7568 = vadd.f32 %v7475, %v7567
        %v7569 = vpop.f32.mrf.mxu0
        %7570 = vmatprep.mubr.f32.mxu0 0.0
        %7571 = vmatmul.mubr.f32.gmra.mxu0 %v7481
        %v7572 = vpop.f32.mrf.mxu0
        %v7573 = vadd.f32 %v7475, %v7572
        %v7574 = vpop.f32.mrf.mxu0
        %7575 = vmatprep.mubr.f32.mxu0 0.0
        %7576 = vmatmul.mubr.f32.gmra.mxu0 %v7484
        %v7577 = vpop.f32.mrf.mxu0
        %v7578 = vadd.f32 %v7475, %v7577
        %v7579 = vpop.f32.mrf.mxu0
        %7580 = vmatprep.mubr.f32.mxu0 0.0
        %7581 = vmatmul.mubr.f32.gmra.mxu0 %v7487
        %v7582 = vpop.f32.mrf.mxu0
        %v7583 = vadd.f32 %v7475, %v7582
        %v7584 = vpop.f32.mrf.mxu0
        %7585 = vmatprep.mubr.f32.mxu0 0.0
        %7586 = vmatmul.mubr.f32.gmra.mxu0 %v7490
        %v7587 = vpop.f32.mrf.mxu0
        %v7588 = vadd.f32 %v7475, %v7587
        %v7589 = vpop.f32.mrf.mxu0
        %7590 = vmatprep.mubr.f32.mxu0 0.0
        %7591 = vmatmul.mubr.f32.gmra.mxu0 %v7493
        %v7592 = vpop.f32.mrf.mxu0
        %v7593 = vadd.f32 %v7475, %v7592
        %v7594 = vpop.f32.mrf.mxu0
        %7595 = vmatprep.mubr.f32.mxu0 0.0
        %7596 = vmatmul.mubr.f32.gmra.mxu0 %v7496
        %v7597 = vpop.f32.mrf.mxu0
        %v7598 = vadd.f32 %v7475, %v7597
        %v7599 = vpop.f32.mrf.mxu0
        %7600 = vmatprep.mubr.f32.mxu0 0.0
        %7601 = vmatmul.mubr.f32.gmra.mxu0 %v7499
        %v7602 = vpop.f32.mrf.mxu0
        %v7603 = vadd.f32 %v7475, %v7602
        %v7604 = vpop.f32.mrf.mxu0
        %7605 = vdwg.mxu0
        %v7606 = vadd.f32 %v7568, %v531
        %v7607 = vadd.f32 %v7573, %v532
        %v7608 = vadd.f32 %v7578, %v533
        %v7609 = vadd.f32 %v7583, %v534
        %v7610 = vadd.f32 %v7588, %v535
        %v7611 = vadd.f32 %v7593, %v536
        %v7612 = vadd.f32 %v7598, %v537
        %v7613 = vadd.f32 %v7603, %v538
        %v7614 = vsel %vm543, %v7606, 0.0
        %7615 = vadd.xlane.f32.xlu0 %v7614
        %v7616 = vpop.xlane.xlu0 %7615
        %v7617 = vsel %vm543, %v7607, 0.0
        %7618 = vadd.xlane.f32.xlu0 %v7617
        %v7619 = vpop.xlane.xlu0 %7618
        %v7620 = vsel %vm543, %v7608, 0.0
        %7621 = vadd.xlane.f32.xlu0 %v7620
        %v7622 = vpop.xlane.xlu0 %7621
        %v7623 = vsel %vm543, %v7609, 0.0
        %7624 = vadd.xlane.f32.xlu0 %v7623
        %v7625 = vpop.xlane.xlu0 %7624
        %v7626 = vsel %vm543, %v7610, 0.0
        %7627 = vadd.xlane.f32.xlu0 %v7626
        %v7628 = vpop.xlane.xlu0 %7627
        %v7629 = vsel %vm543, %v7611, 0.0
        %7630 = vadd.xlane.f32.xlu0 %v7629
        %v7631 = vpop.xlane.xlu0 %7630
        %v7632 = vsel %vm543, %v7612, 0.0
        %7633 = vadd.xlane.f32.xlu0 %v7632
        %v7634 = vpop.xlane.xlu0 %7633
        %v7635 = vsel %vm543, %v7613, 0.0
        %7636 = vadd.xlane.f32.xlu0 %v7635
        %v7637 = vpop.xlane.xlu0 %7636
        %v7638 = vrcp.pop 32.0
        %v7639 = vmul.f32 %v7616, %v7638
        %v7640 = vmul.f32 %v7619, %v7638
        %v7641 = vmul.f32 %v7622, %v7638
        %v7642 = vmul.f32 %v7625, %v7638
        %v7643 = vmul.f32 %v7628, %v7638
        %v7644 = vmul.f32 %v7631, %v7638
        %v7645 = vmul.f32 %v7634, %v7638
        %v7646 = vmul.f32 %v7637, %v7638
        %v7647 = vsub.f32 %v7606, %v7639
        %v7648 = vsub.f32 %v7607, %v7640
        %v7649 = vsub.f32 %v7608, %v7641
        %v7650 = vsub.f32 %v7609, %v7642
        %v7651 = vsub.f32 %v7610, %v7643
        %v7652 = vsub.f32 %v7611, %v7644
        %v7653 = vsub.f32 %v7612, %v7645
        %v7654 = vsub.f32 %v7613, %v7646
        %v7655 = vmul.f32 %v7647, %v7647
        %v7656 = vmul.f32 %v7648, %v7648
        %v7657 = vmul.f32 %v7649, %v7649
        %v7658 = vmul.f32 %v7650, %v7650
        %v7659 = vmul.f32 %v7651, %v7651
        %v7660 = vmul.f32 %v7652, %v7652
        %v7661 = vmul.f32 %v7653, %v7653
        %v7662 = vmul.f32 %v7654, %v7654
        %v7663 = vsel %vm543, %v7655, 0.0
        %7664 = vadd.xlane.f32.xlu0 %v7663
        %v7665 = vpop.xlane.xlu0 %7664
        %v7666 = vsel %vm543, %v7656, 0.0
        %7667 = vadd.xlane.f32.xlu0 %v7666
        %v7668 = vpop.xlane.xlu0 %7667
        %v7669 = vsel %vm543, %v7657, 0.0
        %7670 = vadd.xlane.f32.xlu0 %v7669
        %v7671 = vpop.xlane.xlu0 %7670
        %v7672 = vsel %vm543, %v7658, 0.0
        %7673 = vadd.xlane.f32.xlu0 %v7672
        %v7674 = vpop.xlane.xlu0 %7673
        %v7675 = vsel %vm543, %v7659, 0.0
        %7676 = vadd.xlane.f32.xlu0 %v7675
        %v7677 = vpop.xlane.xlu0 %7676
        %v7678 = vsel %vm543, %v7660, 0.0
        %7679 = vadd.xlane.f32.xlu0 %v7678
        %v7680 = vpop.xlane.xlu0 %7679
        %v7681 = vsel %vm543, %v7661, 0.0
        %7682 = vadd.xlane.f32.xlu0 %v7681
        %v7683 = vpop.xlane.xlu0 %7682
        %v7684 = vsel %vm543, %v7662, 0.0
        %7685 = vadd.xlane.f32.xlu0 %v7684
        %v7686 = vpop.xlane.xlu0 %7685
        %v7687 = vmul.f32 %v7665, %v7638
        %v7688 = vmul.f32 %v7668, %v7638
        %v7689 = vmul.f32 %v7671, %v7638
        %v7690 = vmul.f32 %v7674, %v7638
        %v7691 = vmul.f32 %v7677, %v7638
        %v7692 = vmul.f32 %v7680, %v7638
        %v7693 = vmul.f32 %v7683, %v7638
        %v7694 = vmul.f32 %v7686, %v7638
        %v7695 = vadd.f32 %v7687, 1e-05
        %v7696 = vadd.f32 %v7688, 1e-05
        %v7697 = vadd.f32 %v7689, 1e-05
        %v7698 = vadd.f32 %v7690, 1e-05
        %v7699 = vadd.f32 %v7691, 1e-05
        %v7700 = vadd.f32 %v7692, 1e-05
        %v7701 = vadd.f32 %v7693, 1e-05
        %v7702 = vadd.f32 %v7694, 1e-05
        %v7703 = vrsqrt.pop %v7695
        %v7704 = vrsqrt.pop %v7696
        %v7705 = vrsqrt.pop %v7697
        %v7706 = vrsqrt.pop %v7698
        %v7707 = vrsqrt.pop %v7699
        %v7708 = vrsqrt.pop %v7700
        %v7709 = vrsqrt.pop %v7701
        %v7710 = vrsqrt.pop %v7702
        %v7711 = vmul.f32 %v7647, %v7703
        %v7712 = vmul.f32 %v7648, %v7704
        %v7713 = vmul.f32 %v7649, %v7705
        %v7714 = vmul.f32 %v7650, %v7706
        %v7715 = vmul.f32 %v7651, %v7707
        %v7716 = vmul.f32 %v7652, %v7708
        %v7717 = vmul.f32 %v7653, %v7709
        %v7718 = vmul.f32 %v7654, %v7710
        %v7719 = vld [vmem:[%s8] sm:$0x1]
        %v7721 = vlaneseq
        %v7722 = vshrl.u32 %v7721, 7
        %v7723 = vsub.s32 0, %v7722
        %v7724 = vrot.slane %v7719, %v7723
        %v7726 = vmul.f32 %v7711, %v7724
        %v7727 = vmul.f32 %v7712, %v7724
        %v7728 = vmul.f32 %v7713, %v7724
        %v7729 = vmul.f32 %v7714, %v7724
        %v7730 = vmul.f32 %v7715, %v7724
        %v7731 = vmul.f32 %v7716, %v7724
        %v7732 = vmul.f32 %v7717, %v7724
        %v7733 = vmul.f32 %v7718, %v7724
        %v7734 = vld [vmem:[%s9] sm:$0x1]
        %v7736 = vlaneseq
        %v7737 = vshrl.u32 %v7736, 7
        %v7738 = vsub.s32 0, %v7737
        %v7739 = vrot.slane %v7734, %v7738
        %v7741 = vadd.f32 %v7726, %v7739
        %v7742 = vadd.f32 %v7727, %v7739
        %v7743 = vadd.f32 %v7728, %v7739
        %v7744 = vadd.f32 %v7729, %v7739
        %v7745 = vadd.f32 %v7730, %v7739
        %v7746 = vadd.f32 %v7731, %v7739
        %v7747 = vadd.f32 %v7732, %v7739
        %v7748 = vadd.f32 %v7733, %v7739
        %v7749 = vcombine.low %v7741, %v7743
        %v7750 = vcombine.high %v7741, %v7743
        %v7752 = vunpack.c.l.s4 1983009808
        %v7753 = vunpack.c.0.s8 %v7752
        %v7754 = vlaneseq
        %v7755 = vshrl.u32 %v7754, 7
        %v7756 = vsub.s32 %v7753, %v7755
        %v7757 = vrot.slane %v7749, %v7756
        %v7759 = vunpack.c.l.s4 1983009808
        %v7760 = vunpack.c.0.s8 %v7759
        %v7761 = vlaneseq
        %v7762 = vshrl.u32 %v7761, 7
        %v7763 = vsub.s32 %v7760, %v7762
        %v7764 = vrot.slane %v7750, %v7763
        %v7765 = vcombine.low %v7742, %v7744
        %v7766 = vcombine.high %v7742, %v7744
        %v7768 = vunpack.c.l.s4 1983009808
        %v7769 = vunpack.c.0.s8 %v7768
        %v7770 = vlaneseq
        %v7771 = vshrl.u32 %v7770, 7
        %v7772 = vsub.s32 %v7769, %v7771
        %v7773 = vrot.slane %v7765, %v7772
        %v7775 = vunpack.c.l.s4 1983009808
        %v7776 = vunpack.c.0.s8 %v7775
        %v7777 = vlaneseq
        %v7778 = vshrl.u32 %v7777, 7
        %v7779 = vsub.s32 %v7776, %v7778
        %v7780 = vrot.slane %v7766, %v7779
        %v7781 = vcombine.low %v7745, %v7747
        %v7782 = vcombine.high %v7745, %v7747
        %v7784 = vunpack.c.l.s4 1983009808
        %v7785 = vunpack.c.0.s8 %v7784
        %v7786 = vlaneseq
        %v7787 = vshrl.u32 %v7786, 7
        %v7788 = vsub.s32 %v7785, %v7787
        %v7789 = vrot.slane %v7781, %v7788
        %v7791 = vunpack.c.l.s4 1983009808
        %v7792 = vunpack.c.0.s8 %v7791
        %v7793 = vlaneseq
        %v7794 = vshrl.u32 %v7793, 7
        %v7795 = vsub.s32 %v7792, %v7794
        %v7796 = vrot.slane %v7782, %v7795
        %v7797 = vcombine.low %v7746, %v7748
        %v7798 = vcombine.high %v7746, %v7748
        %v7800 = vunpack.c.l.s4 1983009808
        %v7801 = vunpack.c.0.s8 %v7800
        %v7802 = vlaneseq
        %v7803 = vshrl.u32 %v7802, 7
        %v7804 = vsub.s32 %v7801, %v7803
        %v7805 = vrot.slane %v7797, %v7804
        %v7807 = vunpack.c.l.s4 1983009808
        %v7808 = vunpack.c.0.s8 %v7807
        %v7809 = vlaneseq
        %v7810 = vshrl.u32 %v7809, 7
        %v7811 = vsub.s32 %v7808, %v7810
        %v7812 = vrot.slane %v7798, %v7811
        %v7813 = vcombine.low %v7757, %v7773
        %v7814 = vcombine.high %v7757, %v7773
        %v7816 = vunpack.c.l.s4 1934713408
        %v7817 = vunpack.c.0.s8 %v7816
        %v7818 = vlaneseq
        %v7819 = vshrl.u32 %v7818, 7
        %v7820 = vsub.s32 %v7817, %v7819
        %v7821 = vrot.slane %v7813, %v7820
        %v7823 = vunpack.c.l.s4 1934713408
        %v7824 = vunpack.c.0.s8 %v7823
        %v7825 = vlaneseq
        %v7826 = vshrl.u32 %v7825, 7
        %v7827 = vsub.s32 %v7824, %v7826
        %v7828 = vrot.slane %v7814, %v7827
        %v7829 = vcombine.low %v7764, %v7780
        %v7830 = vcombine.high %v7764, %v7780
        %v7832 = vunpack.c.l.s4 1934713408
        %v7833 = vunpack.c.0.s8 %v7832
        %v7834 = vlaneseq
        %v7835 = vshrl.u32 %v7834, 7
        %v7836 = vsub.s32 %v7833, %v7835
        %v7837 = vrot.slane %v7829, %v7836
        %v7839 = vunpack.c.l.s4 1934713408
        %v7840 = vunpack.c.0.s8 %v7839
        %v7841 = vlaneseq
        %v7842 = vshrl.u32 %v7841, 7
        %v7843 = vsub.s32 %v7840, %v7842
        %v7844 = vrot.slane %v7830, %v7843
        %v7845 = vcombine.low %v7789, %v7805
        %v7846 = vcombine.high %v7789, %v7805
        %v7848 = vunpack.c.l.s4 1934713408
        %v7849 = vunpack.c.0.s8 %v7848
        %v7850 = vlaneseq
        %v7851 = vshrl.u32 %v7850, 7
        %v7852 = vsub.s32 %v7849, %v7851
        %v7853 = vrot.slane %v7845, %v7852
        %v7855 = vunpack.c.l.s4 1934713408
        %v7856 = vunpack.c.0.s8 %v7855
        %v7857 = vlaneseq
        %v7858 = vshrl.u32 %v7857, 7
        %v7859 = vsub.s32 %v7856, %v7858
        %v7860 = vrot.slane %v7846, %v7859
        %v7861 = vcombine.low %v7796, %v7812
        %v7862 = vcombine.high %v7796, %v7812
        %v7864 = vunpack.c.l.s4 1934713408
        %v7865 = vunpack.c.0.s8 %v7864
        %v7866 = vlaneseq
        %v7867 = vshrl.u32 %v7866, 7
        %v7868 = vsub.s32 %v7865, %v7867
        %v7869 = vrot.slane %v7861, %v7868
        %v7871 = vunpack.c.l.s4 1934713408
        %v7872 = vunpack.c.0.s8 %v7871
        %v7873 = vlaneseq
        %v7874 = vshrl.u32 %v7873, 7
        %v7875 = vsub.s32 %v7872, %v7874
        %v7876 = vrot.slane %v7862, %v7875
        %v7877 = vcombine.low %v7821, %v7853
        %v7878 = vcombine.high %v7821, %v7853
        %v7879 = vcombine.low %v7828, %v7860
        %v7880 = vcombine.high %v7828, %v7860
        %v7881 = vcombine.low %v7837, %v7869
        %v7882 = vcombine.high %v7837, %v7869
        %v7883 = vcombine.low %v7844, %v7876
        %v7884 = vcombine.high %v7844, %v7876
        %7885 = vst.msk [vmem:[%s394] sm:$0xff] %vm543, %v7877
        %7886 = vst.msk [vmem:[%s394 + $0x8] sm:$0xff] %vm543, %v7878
        %7887 = vst.msk [vmem:[%s394 + $0x10] sm:$0xff] %vm543, %v7879
        %7888 = vst.msk [vmem:[%s394 + $0x18] sm:$0xff] %vm543, %v7880
        %7889 = vst.msk [vmem:[%s394 + $0x20] sm:$0xff] %vm543, %v7881
        %7890 = vst.msk [vmem:[%s394 + $0x28] sm:$0xff] %vm543, %v7882
        %7891 = vst.msk [vmem:[%s394 + $0x30] sm:$0xff] %vm543, %v7883
        %7892 = vst.msk [vmem:[%s394 + $0x38] sm:$0xff] %vm543, %v7884
        %s7893 = sand.u32 %s266, 1
        %s7894 = scalar_lea.sflag [#allocation4], %s7893
        %s7895 = sand.u32 %s266, 1
        %s7896 = smul.addr %s7895, 64
        %s7897 = scalar_lea.vmem [#allocation5], %s7896
        // Predicated region
        $region65: #{_tsa_impl.1} parent=59 // pred_check
          %p7898 = pneg %p276
        $region66: #{_tsa_impl.1} parent=59 // pred_check_branch
          %7900 = sbr.rel (%p7898) target = $region68
        $region67: #{_tsa_impl.1} parent=59 // pred_region
          %s7902 = ssub.s32 1024, 1024
          %7903 = vsyncadd %s7894, %s7902
          %s7904 = smul.addr %s31, 16
          %s7905 = sadd.s32 %s32, %s7904
          %s7906 = smul.addr %s7905, 128
          %s7907 = scalar_lea.hbm %s10, %s7906
          %s7908 = sshll.u32 %s7897, 4
          %s7909 = int_to_ptr.vmem [resolvable:$true] %s7908
          %7914 = dma.vmem_to_hbm [thread:$0]  %s7909, 1024, %s7907, %s7894, 128, 256, 8
        $region68: #{_tsa_impl.1} parent=59 // pred_fallthru
          _
      $region60: #{_tsa_impl.1} parent=5 // pred_fallthru
        _
      %p7915 = scmp.le.s32.totalorder 2, %s22
      // Predicated region
      $region69: #{_tsa_impl.1} parent=5 // pred_check
        %p7916 = pneg %p7915
      $region70: #{_tsa_impl.1} parent=5 // pred_check_branch
        %7918 = sbr.rel (%p7916) target = $region72
      $region71: #{_tsa_impl.1} parent=5 // pred_region
        %s7919 = ssub.s32 %s22, 2
        // Predicated region
        $region73: #{_tsa_impl.1} parent=71 // pred_check
          %p7920 = pneg %p282
        $region74: #{_tsa_impl.1} parent=71 // pred_check_branch
          %7922 = sbr.rel (%p7920) target = $region76
        $region75: #{_tsa_impl.1} parent=71 // pred_region
          %s7923 = sand.u32 %s267, 1
          %s7924 = scalar_lea.sflag [#allocation4], %s7923
          %s7925 = sand.u32 %s267, 1
          %s7926 = smul.addr %s7925, 64
          %s7927 = scalar_lea.vmem [#allocation5], %s7926
          %7928 = dma.done %s7924, 1024
        $region76: #{_tsa_impl.1} parent=71 // pred_fallthru
          _
      $region72: #{_tsa_impl.1} parent=5 // pred_fallthru
        _
    $region6: #{_tsa_impl.1} parent=1 // loop_footer
      %s26 = sadd.s32 1, %s22
    $region7: #{_tsa_impl.1} parent=1 // loop_footer_branch
      %21 = sbr.rel target = $region3
    $region8: #{_tsa_impl.1} parent=1 // loop_exit
      _
    %7929 = vsyncpa [#allocation3], 1
    %s7930 = scalar_lea.sflag [#allocation3], 1
    %7931 = vsyncpa %s7930, 1
    %7932 = vsyncpa [#allocation4], 1
    %s7933 = scalar_lea.sflag [#allocation4], 1
    %7934 = vsyncpa %s7933, 1

</llo_original>
